<compile_context>
chip_gen: v7x
topology: tpu7x:2x2x1
jax: 0.10.0
libtpu: 0.0.40
codegen_flags: <defaults>
</compile_context>

<pallas_src>
import functools
import math

import jax
import jax.numpy as jnp
from jax.experimental import pallas as pl
from jax.experimental.pallas import tpu as pltpu


VMEM_LIMIT = 32 * 1024 * 1024  # safe on v5e/v6e/v7x for the tile sizes used here


def _choose_tile(n, target):
    """Largest tile <= target that divides n (stepping by 8); falls back to the full dim."""
    t = min(target, n)
    while t > 8 and n % t != 0:
        t -= 8
    return t if (t > 0 and n % t == 0) else n


# ----------------------------------------------------------------------------
# Fused dynamic EdgeConv kernel (kNN graph + neighbor max aggregation + linear)
# ----------------------------------------------------------------------------
def _dyn_edgeconv_kernel(qpos_ref, kpos_ref, sqk_ref, cproj_ref, yk_ref, o_ref,
                         *, k, dilation, residual):
    """For one (sample, query tile):
         squared distances -> dilated kNN via iterative masked argmin ->
         neighbor selection as one-hot @ (Wd-projected keys) -> max over neighbors ->
         + center projection -> ReLU (+ residual).
    Uses: max_j ReLU(Wc x_i + Wd (x_j - x_i) + b) = ReLU((Wc - Wd) x_i + b + max_j Wd x_j).
    Distances/argmin stay f32; only MXU operands are bf16 (f32 accumulate).
    """
    q = qpos_ref[0]                                           # [tq, Dk]  f32 (query feats)
    kp = kpos_ref[0]                                          # [N, Dk]   f32 (resident keys)
    tq = q.shape[0]
    n = kp.shape[0]

    # pairwise squared distances; key squared-norms precomputed in XLA -> no in-tile transpose
    sqq = jnp.sum(q * q, axis=-1, keepdims=True)              # [tq, 1]
    cross = jax.lax.dot_general(q, kp, (((1,), (1,)), ((), ())),
                                preferred_element_type=jnp.float32)      # [tq, N]
    d = sqq + sqk_ref[0] - 2.0 * cross                        # [tq, N]

    row = jax.lax.broadcasted_iota(jnp.int32, (tq, n), 0) + pl.program_id(1) * tq
    col = jax.lax.broadcasted_iota(jnp.int32, (tq, n), 1)
    d = jnp.where(row == col, jnp.inf, d)                     # no self loops
    colf = col.astype(jnp.float32)                            # float index (exact < 2^24)

    yk = yk_ref[0]                                            # [N, Cout] bf16 = Wd @ keys
    cout = yk.shape[-1]
    acc = jnp.full((tq, cout), -jnp.inf, jnp.float32)

    # dilated kNN: take neighbor ranks 0, dilation, 2*dilation, ... (k of them).
    n_iters = (k - 1) * dilation + 1
    # TODO(synk): switch to lax.fori_loop for large k*dilation to bound unrolled code size.
    for t in range(n_iters):
        m = jnp.min(d, axis=-1, keepdims=True)                # current nearest distance
        amin = jnp.min(jnp.where(d == m, colf, jnp.float32(n)),
                       axis=-1, keepdims=True)                # lowest-index argmin (top_k tie rule)
        if t % dilation == 0:
            onehot = (colf == amin).astype(jnp.bfloat16)      # [tq, N] exact one-hot
            sel = jnp.dot(onehot, yk, preferred_element_type=jnp.float32)  # = yk[amin]  [tq, Cout]
            acc = jnp.maximum(acc, sel)
        if t + 1 < n_iters:
            d = jnp.where(colf == amin, jnp.inf, d)           # remove and continue

    out = jnp.maximum(cproj_ref[0] + acc, 0.0)                # ReLU after max (monotone)
    if residual:
        out = out + q                                         # ResDynBlock: conv(x) + x
    o_ref[0] = out.astype(o_ref.dtype)


def dyn_edgeconv(knn_feat, conv_feat, wc, wd, b, *, k, dilation, residual, tile_q=256):
    """One dynamic-graph EdgeConv layer, fully fused (kNN build + aggregation + MLP).

    knn_feat : [B, N, Dk]   features the kNN graph is built on (head: xyz only)
    conv_feat: [B, N, Cin]  features fed to the EdgeConv MLP
    returns  : [B, N, Cout] f32
    """
    B, N, Dk = knn_feat.shape
    Cin = conv_feat.shape[-1]
    Cout = wc.shape[1]
    if residual:
        assert Dk == Cout, "residual requires matching channel counts"
    tq = _choose_tile(N, tile_q)

    # Tiny XLA precomputes (one [Nt,Cin]x[Cin,Cout] matmul each):
    #   cproj_i = (Wc - Wd) x_i + b      (center projection)
    #   yk_j    = Wd x_j                 (key projection, bf16 for the one-hot selection)
    x2 = conv_feat.reshape(B * N, Cin)
    cproj = (jnp.dot(x2.astype(jnp.bfloat16), (wc - wd).astype(jnp.bfloat16),
                     preferred_element_type=jnp.float32) + b).reshape(B, N, Cout)
    yk = jnp.dot(x2.astype(jnp.bfloat16), wd.astype(jnp.bfloat16),
                 preferred_element_type=jnp.float32).astype(jnp.bfloat16).reshape(B, N, Cout)
    # per-node squared norms precomputed once, lane-major [B, 1, N]
    sqk = jnp.sum(knn_feat * knn_feat, axis=-1)[:, None, :]

    kern = functools.partial(_dyn_edgeconv_kernel, k=k, dilation=dilation, residual=residual)
    return pl.pallas_call(
        kern,
        out_shape=jax.ShapeDtypeStruct((B, N, Cout), jnp.float32),
        grid=(B, N // tq),
        in_specs=[
            pl.BlockSpec((1, tq, Dk), lambda bi, qi: (bi, qi, 0)),    # query tile
            pl.BlockSpec((1, N, Dk), lambda bi, qi: (bi, 0, 0)),      # resident key block
            pl.BlockSpec((1, 1, N), lambda bi, qi: (bi, 0, 0)),       # key sq-norms
            pl.BlockSpec((1, tq, Cout), lambda bi, qi: (bi, qi, 0)),  # center projection
            pl.BlockSpec((1, N, Cout), lambda bi, qi: (bi, 0, 0)),    # Wd-projected keys (bf16)
        ],
        out_specs=pl.BlockSpec((1, tq, Cout), lambda bi, qi: (bi, qi, 0)),
        compiler_params=pltpu.CompilerParams(
            dimension_semantics=("parallel", "parallel"),
            vmem_limit_bytes=VMEM_LIMIT),
        cost_estimate=pl.CostEstimate(
            flops=int(2 * B * N * N * Dk + 2 * B * N * N * Cout * k),
            transcendentals=0,
            bytes_accessed=int(4 * B * N * (2 * Dk + 2 * Cout + 1) + 2 * B * N * Cout)),
    )(knn_feat, knn_feat, sqk, cproj, yk)


# ----------------------------------------------------------------------------
# fusion MLP fused with per-sample max pooling
# ----------------------------------------------------------------------------
def _fusion_max_kernel(feat_ref, w_ref, b_ref, o_ref):
    h = jnp.dot(feat_ref[0].astype(jnp.bfloat16), w_ref[...],
                preferred_element_type=jnp.float32) + b_ref[...]        # [tile, 1024]
    m = jnp.max(jnp.maximum(h, 0.0), axis=0, keepdims=True)             # [1, 1024]

    @pl.when(pl.program_id(2) == 0)
    def _():
        o_ref[...] = jnp.full_like(o_ref, -jnp.inf)

    o_ref[0, 0] = jnp.maximum(o_ref[0, 0], m)


def fusion_pool(feats, w, b, tile_n=512):
    """Lin(fusion_dims, 1024) + ReLU fused with per-sample max pooling -> [B, 1024].
    The node reduction is split into two parallel halves (when possible) so both
    v7x TensorCores get work even at B == 1; halves are combined with one tiny max."""
    B, N, F = feats.shape
    Cout = w.shape[1]
    tile = _choose_tile(N, tile_n)
    steps = N // tile
    halves = 2 if steps % 2 == 0 else 1
    steps_h = steps // halves
    out = pl.pallas_call(
        _fusion_max_kernel,
        out_shape=jax.ShapeDtypeStruct((halves, B, 1, Cout), jnp.float32),
        grid=(B, halves, steps_h),
        in_specs=[
            pl.BlockSpec((1, tile, F), lambda bi, hi, ti: (bi, hi * steps_h + ti, 0)),
            pl.BlockSpec((F, Cout), lambda bi, hi, ti: (0, 0)),
            pl.BlockSpec((1, Cout), lambda bi, hi, ti: (0, 0)),
        ],
        out_specs=pl.BlockSpec((1, 1, 1, Cout), lambda bi, hi, ti: (hi, bi, 0, 0)),
        compiler_params=pltpu.CompilerParams(
            dimension_semantics=("parallel", "parallel", "arbitrary"),
            vmem_limit_bytes=VMEM_LIMIT),
        cost_estimate=pl.CostEstimate(
            flops=int(2 * B * N * F * Cout),
            transcendentals=0,
            bytes_accessed=int(4 * (B * N * F + halves * B * Cout) + 2 * F * Cout)),
    )(feats, w.astype(jnp.bfloat16), b)
    return jnp.max(out, axis=0)[:, 0, :]                                # [B, 1024]


# ----------------------------------------------------------------------------
# fused prediction head (pred1 -> ReLU -> pred2 -> ReLU -> pred3)
# ----------------------------------------------------------------------------
def _pred_kernel(fp_ref, feat_ref, w1x_ref, w2_ref, b2_ref, w3_ref, b3_ref, o_ref):
    h1 = jnp.maximum(
        fp_ref[0] + jnp.dot(feat_ref[0].astype(jnp.bfloat16), w1x_ref[...],
                            preferred_element_type=jnp.float32), 0.0)   # [tile, 512]
    h2 = jnp.maximum(
        jnp.dot(h1.astype(jnp.bfloat16), w2_ref[...],
                preferred_element_type=jnp.float32) + b2_ref[...], 0.0)  # [tile, 256]
    o_ref[0] = (jnp.dot(h2.astype(jnp.bfloat16), w3_ref[...],
                        preferred_element_type=jnp.float32) + b3_ref[...]).astype(o_ref.dtype)


def prediction_head(fusion_pooled, feats, w1, b1, w2, b2, w3, b3, tile_n=512):
    """Fused pred1/pred2/pred3; consumes the pooled fusion row directly
    (equivalent to torch repeat_interleave + concat, without the [Nt, F+1024] buffer)."""
    B, N, F = feats.shape
    tile = _choose_tile(N, tile_n)
    Hf = fusion_pooled.shape[1]                               # 1024
    H1 = w2.shape[0]                                          # 512
    H2 = w3.shape[0]                                          # 256
    n_classes = w3.shape[1]
    # torch concat order is (fusion, feats): first Hf rows of w1 act on the fusion vector.
    w1f, w1x = w1[:Hf], w1[Hf:]
    fus_proj = (jnp.dot(fusion_pooled, w1f) + b1).reshape(B, 1, H1)      # tiny, once per sample
    # lane-dense output: pad classes up to a multiple of 128, slice after
    C_pad = ((n_classes + 127) // 128) * 128
    w3p = jnp.pad(w3, ((0, 0), (0, C_pad - n_classes)))
    b3p = jnp.pad(b3, ((0, 0), (0, C_pad - n_classes)))
    out = pl.pallas_call(
        _pred_kernel,
        out_shape=jax.ShapeDtypeStruct((B, N, C_pad), jnp.float32),
        grid=(B, N // tile),
        in_specs=[
            pl.BlockSpec((1, 1, H1), lambda bi, ti: (bi, 0, 0)),
            pl.BlockSpec((1, tile, F), lambda bi, ti: (bi, ti, 0)),
            pl.BlockSpec((F, H1), lambda bi, ti: (0, 0)),
            pl.BlockSpec((H1, H2), lambda bi, ti: (0, 0)),
            pl.BlockSpec((1, H2), lambda bi, ti: (0, 0)),
            pl.BlockSpec((H2, C_pad), lambda bi, ti: (0, 0)),
            pl.BlockSpec((1, C_pad), lambda bi, ti: (0, 0)),
        ],
        out_specs=pl.BlockSpec((1, tile, C_pad), lambda bi, ti: (bi, ti, 0)),
        compiler_params=pltpu.CompilerParams(
            dimension_semantics=("parallel", "parallel"),
            vmem_limit_bytes=VMEM_LIMIT),
        cost_estimate=pl.CostEstimate(
            flops=int(2 * B * N * (F * H1 + H1 * H2 + H2 * C_pad)),
            transcendentals=0,
            bytes_accessed=int(4 * B * N * (F + C_pad)
                               + 2 * (F * H1 + H1 * H2 + H2 * C_pad))),
    )(fus_proj, feats,
      w1x.astype(jnp.bfloat16),
      w2.astype(jnp.bfloat16), b2,
      w3p.astype(jnp.bfloat16), b3p)
    return out[:, :, :n_classes].reshape(B * N, n_classes)


# ----------------------------------------------------------------------------
# Parameter init (kaiming_normal_ for Lin weights, zero biases)
# ----------------------------------------------------------------------------
def _kaiming(key, fan_in, shape):
    return jax.random.normal(key, shape, jnp.float32) * math.sqrt(2.0 / fan_in)


def init_params(key, in_ch, channels, n_blocks, n_classes):
    fusion_dims = channels + channels * (n_blocks - 1)        # 'res' block
    keys = jax.random.split(key, 2 + 2 * (n_blocks - 1) + 4)
    ki = iter(keys)
    p = {}
    # head EdgeConv MLP: Lin(2*in_ch, channels), split into (W_center, W_diff)
    p["head"] = dict(
        wc=_kaiming(next(ki), 2 * in_ch, (in_ch, channels)),
        wd=_kaiming(next(ki), 2 * in_ch, (in_ch, channels)),
        b=jnp.zeros((1, channels), jnp.float32),
    )
    # residual dynamic blocks: Lin(2*channels, channels)
    p["blocks"] = []
    for _ in range(n_blocks - 1):
        p["blocks"].append(dict(
            wc=_kaiming(next(ki), 2 * channels, (channels, channels)),
            wd=_kaiming(next(ki), 2 * channels, (channels, channels)),
            b=jnp.zeros((1, channels), jnp.float32),
        ))
    p["fusion"] = dict(w=_kaiming(next(ki), fusion_dims, (fusion_dims, 1024)),
                       b=jnp.zeros((1, 1024), jnp.float32))
    p["pred1"] = dict(w=_kaiming(next(ki), fusion_dims + 1024, (fusion_dims + 1024, 512)),
                      b=jnp.zeros((1, 512), jnp.float32))
    p["pred2"] = dict(w=_kaiming(next(ki), 512, (512, 256)),
                      b=jnp.zeros((1, 256), jnp.float32))
    p["pred3"] = dict(w=_kaiming(next(ki), 256, (256, n_classes)),
                      b=jnp.zeros((1, n_classes), jnp.float32))
    return p


# ----------------------------------------------------------------------------
# Full forward pass
# ----------------------------------------------------------------------------
def sparse_deepgcn_forward(params, pos, color, *, B, N, k, n_blocks):
    # data.pos, data.x -> x = cat(corr, color); regular batch layout (N nodes per sample).
    x = jnp.concatenate([pos, color], axis=1).reshape(B, N, -1)          # [B, N, in_ch]

    # head: kNN on xyz only (dilation 1); EdgeConv on the full feature vector.
    ph = params["head"]
    feats = [dyn_edgeconv(x[:, :, 0:3], x, ph["wc"], ph["wd"], ph["b"],
                          k=k, dilation=1, residual=False)]

    # residual dynamic blocks: kNN recomputed on current features, dilation = 1 + i;
    # the residual add is fused inside the kernel.
    for i in range(n_blocks - 1):
        h = feats[-1]
        pb = params["blocks"][i]
        feats.append(dyn_edgeconv(h, h, pb["wc"], pb["wd"], pb["b"],
                                  k=k, dilation=1 + i, residual=True))

    feats = jnp.concatenate(feats, axis=-1)                   # [B, N, fusion_dims]

    # fusion MLP + per-sample max pooling fused (no [Nt, 1024] HBM round trip)
    fusion = fusion_pool(feats, params["fusion"]["w"], params["fusion"]["b"])  # [B, 1024]

    # fused prediction head; the pooled fusion row is broadcast per sample inside the kernel.
    out = prediction_head(fusion, feats,
                          params["pred1"]["w"], params["pred1"]["b"],
                          params["pred2"]["w"], params["pred2"]["b"],
                          params["pred3"]["w"], params["pred3"]["b"])
    return out                                                # [B*N, n_classes]


# ----------------------------------------------------------------------------
if __name__ == "__main__":
    # opt: in_channels=6 (xyz + rgb), n_filters=16, k=4, n_blocks=3, block='res',
    #      conv='edge', act='relu', norm='batch', bias=True, n_classes=13
    B, N = 2, 64                 # 2 point clouds, 64 points each -> 128 nodes total
    IN_POS, IN_COL = 3, 3
    CH, K, NB, NCLS = 16, 4, 3, 13

    key = jax.random.PRNGKey(0)
    kpos, kcol, kparam = jax.random.split(key, 3)
    pos = jax.random.normal(kpos, (B * N, IN_POS), jnp.float32)
    color = jax.random.uniform(kcol, (B * N, IN_COL), jnp.float32)

    params = init_params(kparam, IN_POS + IN_COL, CH, NB, NCLS)

    fwd = jax.jit(functools.partial(sparse_deepgcn_forward, B=B, N=N, k=K, n_blocks=NB))
    out = fwd(params, pos, color)
    out = jax.block_until_ready(out)

    assert out.shape == (B * N, NCLS), out.shape
    assert jnp.all(jnp.isfinite(out))
    print("KERNEL_OK")
</pallas_src>

<mosaic_0001>
module attributes {stable_mosaic.version = 11 : i64} {
  func.func @_dyn_edgeconv_kernel(%arg0: i32, %arg1: i32, %arg2: memref<1x64x3xf32, #tpu.memory_space<vmem>>, %arg3: memref<1x64x3xf32, #tpu.memory_space<vmem>>, %arg4: memref<1x1x64xf32, #tpu.memory_space<vmem>>, %arg5: memref<1x64x16xf32, #tpu.memory_space<vmem>>, %arg6: memref<1x64x16xbf16, #tpu.memory_space<vmem>>, %arg7: memref<1x64x16xf32, #tpu.memory_space<vmem>>) attributes {dimension_semantics = [#tpu.dimension_semantics<parallel>, #tpu.dimension_semantics<parallel>], iteration_bounds = array<i64: 2, 1>, scalar_prefetch = 0 : i64, scratch_operands = 0 : i64, tpu.core_type = #tpu.core_type<tc>, window_params = [{transform_indices = @transform_0, window_bounds = array<i64: 1, 64, 3>}, {transform_indices = @transform_1, window_bounds = array<i64: 1, 64, 3>}, {transform_indices = @transform_2, window_bounds = array<i64: 1, 1, 64>}, {transform_indices = @transform_3, window_bounds = array<i64: 1, 64, 16>}, {transform_indices = @transform_4, window_bounds = array<i64: 1, 64, 16>}, {transform_indices = @transform_5, window_bounds = array<i64: 1, 64, 16>}]} {
    %c0 = arith.constant 0 : index
    %c0_0 = arith.constant 0 : index
    %c0_1 = arith.constant 0 : index
    %0 = vector.load %arg2[%c0, %c0_0, %c0_1] : memref<1x64x3xf32, #tpu.memory_space<vmem>>, vector<1x64x3xf32>
    %1 = vector.shape_cast %0 : vector<1x64x3xf32> to vector<64x3xf32>
    %c0_2 = arith.constant 0 : index
    %c0_3 = arith.constant 0 : index
    %c0_4 = arith.constant 0 : index
    %2 = vector.load %arg3[%c0_2, %c0_3, %c0_4] : memref<1x64x3xf32, #tpu.memory_space<vmem>>, vector<1x64x3xf32>
    %3 = vector.shape_cast %2 : vector<1x64x3xf32> to vector<64x3xf32>
    %4 = arith.mulf %1, %1 : vector<64x3xf32>
    %cst = arith.constant dense<0.000000e+00> : vector<64xf32>
    %5 = vector.multi_reduction <add>, %4, %cst [1] : vector<64x3xf32> to vector<64xf32>
    %6 = vector.shape_cast %5 : vector<64xf32> to vector<64x1xf32>
    %cst_5 = arith.constant dense<0.000000e+00> : vector<64x64xf32>
    %7 = tpu.matmul %1, %3, %cst_5 {dimension_numbers = #tpu.dot_dimension_numbers<[1], [1], [0], [0], [0, 0, 1, 0], [], []>} : vector<64x3xf32>, vector<64x3xf32>, vector<64x64xf32> -> vector<64x64xf32>
    %c0_6 = arith.constant 0 : index
    %c0_7 = arith.constant 0 : index
    %c0_8 = arith.constant 0 : index
    %8 = vector.load %arg4[%c0_6, %c0_7, %c0_8] : memref<1x1x64xf32, #tpu.memory_space<vmem>>, vector<1x1x64xf32>
    %9 = vector.shape_cast %8 : vector<1x1x64xf32> to vector<1x64xf32>
    %10 = vector.broadcast %6 : vector<64x1xf32> to vector<64x64xf32>
    %11 = vector.broadcast %9 : vector<1x64xf32> to vector<64x64xf32>
    %12 = arith.addf %10, %11 : vector<64x64xf32>
    %cst_9 = arith.constant 2.000000e+00 : f32
    %13 = vector.broadcast %cst_9 : f32 to vector<64x64xf32>
    %14 = arith.mulf %13, %7 : vector<64x64xf32>
    %15 = arith.subf %12, %14 : vector<64x64xf32>
    %16 = tpu.iota {dimensions = array<i32: 0>} : vector<64x64xi32>
    %c64_i32 = arith.constant 64 : i32
    %17 = arith.muli %arg1, %c64_i32 : i32
    %18 = vector.broadcast %17 : i32 to vector<64x64xi32>
    %19 = arith.addi %16, %18 : vector<64x64xi32>
    %20 = tpu.iota {dimensions = array<i32: 1>} : vector<64x64xi32>
    %21 = arith.cmpi eq, %19, %20 : vector<64x64xi32>
    %cst_10 = arith.constant 0x7F800000 : f32
    %22 = vector.broadcast %cst_10 : f32 to vector<64x64xf32>
    %23 = arith.select %21, %22, %15 : vector<64x64xi1>, vector<64x64xf32>
    %24 = arith.sitofp %20 : vector<64x64xi32> to vector<64x64xf32>
    %c0_11 = arith.constant 0 : index
    %c0_12 = arith.constant 0 : index
    %c0_13 = arith.constant 0 : index
    %25 = vector.load %arg6[%c0_11, %c0_12, %c0_13] : memref<1x64x16xbf16, #tpu.memory_space<vmem>>, vector<1x64x16xbf16>
    %26 = vector.shape_cast %25 : vector<1x64x16xbf16> to vector<64x16xbf16>
    %cst_14 = arith.constant 0xFF800000 : f32
    %27 = vector.broadcast %cst_14 : f32 to vector<64x16xf32>
    %cst_15 = arith.constant dense<0x7F800000> : vector<64xf32>
    %28 = vector.multi_reduction <minimumf>, %23, %cst_15 [1] : vector<64x64xf32> to vector<64xf32>
    %29 = vector.shape_cast %28 : vector<64xf32> to vector<64x1xf32>
    %30 = vector.broadcast %29 : vector<64x1xf32> to vector<64x64xf32>
    %31 = arith.cmpf oeq, %23, %30 : vector<64x64xf32>
    %cst_16 = arith.constant 6.400000e+01 : f32
    %32 = vector.broadcast %cst_16 : f32 to vector<64x64xf32>
    %33 = arith.select %31, %24, %32 : vector<64x64xi1>, vector<64x64xf32>
    %cst_17 = arith.constant dense<0x7F800000> : vector<64xf32>
    %34 = vector.multi_reduction <minimumf>, %33, %cst_17 [1] : vector<64x64xf32> to vector<64xf32>
    %35 = vector.shape_cast %34 : vector<64xf32> to vector<64x1xf32>
    %36 = vector.broadcast %35 : vector<64x1xf32> to vector<64x64xf32>
    %37 = arith.cmpf oeq, %24, %36 : vector<64x64xf32>
    %38 = arith.extui %37 : vector<64x64xi1> to vector<64x64xi32>
    %39 = arith.sitofp %38 : vector<64x64xi32> to vector<64x64xf32>
    %40 = arith.truncf %39 : vector<64x64xf32> to vector<64x64xbf16>
    %cst_18 = arith.constant dense<0.000000e+00> : vector<64x16xf32>
    %41 = tpu.matmul %40, %26, %cst_18 {dimension_numbers = #tpu.dot_dimension_numbers<[1], [0], [0], [1], [0, 0, 1, 1], [], []>} : vector<64x64xbf16>, vector<64x16xbf16>, vector<64x16xf32> -> vector<64x16xf32>
    %42 = arith.maximumf %27, %41 : vector<64x16xf32>
    %43 = vector.broadcast %35 : vector<64x1xf32> to vector<64x64xf32>
    %44 = arith.cmpf oeq, %24, %43 : vector<64x64xf32>
    %cst_19 = arith.constant 0x7F800000 : f32
    %45 = vector.broadcast %cst_19 : f32 to vector<64x64xf32>
    %46 = arith.select %44, %45, %23 : vector<64x64xi1>, vector<64x64xf32>
    %cst_20 = arith.constant dense<0x7F800000> : vector<64xf32>
    %47 = vector.multi_reduction <minimumf>, %46, %cst_20 [1] : vector<64x64xf32> to vector<64xf32>
    %48 = vector.shape_cast %47 : vector<64xf32> to vector<64x1xf32>
    %49 = vector.broadcast %48 : vector<64x1xf32> to vector<64x64xf32>
    %50 = arith.cmpf oeq, %46, %49 : vector<64x64xf32>
    %cst_21 = arith.constant 6.400000e+01 : f32
    %51 = vector.broadcast %cst_21 : f32 to vector<64x64xf32>
    %52 = arith.select %50, %24, %51 : vector<64x64xi1>, vector<64x64xf32>
    %cst_22 = arith.constant dense<0x7F800000> : vector<64xf32>
    %53 = vector.multi_reduction <minimumf>, %52, %cst_22 [1] : vector<64x64xf32> to vector<64xf32>
    %54 = vector.shape_cast %53 : vector<64xf32> to vector<64x1xf32>
    %55 = vector.broadcast %54 : vector<64x1xf32> to vector<64x64xf32>
    %56 = arith.cmpf oeq, %24, %55 : vector<64x64xf32>
    %57 = arith.extui %56 : vector<64x64xi1> to vector<64x64xi32>
    %58 = arith.sitofp %57 : vector<64x64xi32> to vector<64x64xf32>
    %59 = arith.truncf %58 : vector<64x64xf32> to vector<64x64xbf16>
    %cst_23 = arith.constant dense<0.000000e+00> : vector<64x16xf32>
    %60 = tpu.matmul %59, %26, %cst_23 {dimension_numbers = #tpu.dot_dimension_numbers<[1], [0], [0], [1], [0, 0, 1, 1], [], []>} : vector<64x64xbf16>, vector<64x16xbf16>, vector<64x16xf32> -> vector<64x16xf32>
    %61 = arith.maximumf %42, %60 : vector<64x16xf32>
    %62 = vector.broadcast %54 : vector<64x1xf32> to vector<64x64xf32>
    %63 = arith.cmpf oeq, %24, %62 : vector<64x64xf32>
    %cst_24 = arith.constant 0x7F800000 : f32
    %64 = vector.broadcast %cst_24 : f32 to vector<64x64xf32>
    %65 = arith.select %63, %64, %46 : vector<64x64xi1>, vector<64x64xf32>
    %cst_25 = arith.constant dense<0x7F800000> : vector<64xf32>
    %66 = vector.multi_reduction <minimumf>, %65, %cst_25 [1] : vector<64x64xf32> to vector<64xf32>
    %67 = vector.shape_cast %66 : vector<64xf32> to vector<64x1xf32>
    %68 = vector.broadcast %67 : vector<64x1xf32> to vector<64x64xf32>
    %69 = arith.cmpf oeq, %65, %68 : vector<64x64xf32>
    %cst_26 = arith.constant 6.400000e+01 : f32
    %70 = vector.broadcast %cst_26 : f32 to vector<64x64xf32>
    %71 = arith.select %69, %24, %70 : vector<64x64xi1>, vector<64x64xf32>
    %cst_27 = arith.constant dense<0x7F800000> : vector<64xf32>
    %72 = vector.multi_reduction <minimumf>, %71, %cst_27 [1] : vector<64x64xf32> to vector<64xf32>
    %73 = vector.shape_cast %72 : vector<64xf32> to vector<64x1xf32>
    %74 = vector.broadcast %73 : vector<64x1xf32> to vector<64x64xf32>
    %75 = arith.cmpf oeq, %24, %74 : vector<64x64xf32>
    %76 = arith.extui %75 : vector<64x64xi1> to vector<64x64xi32>
    %77 = arith.sitofp %76 : vector<64x64xi32> to vector<64x64xf32>
    %78 = arith.truncf %77 : vector<64x64xf32> to vector<64x64xbf16>
    %cst_28 = arith.constant dense<0.000000e+00> : vector<64x16xf32>
    %79 = tpu.matmul %78, %26, %cst_28 {dimension_numbers = #tpu.dot_dimension_numbers<[1], [0], [0], [1], [0, 0, 1, 1], [], []>} : vector<64x64xbf16>, vector<64x16xbf16>, vector<64x16xf32> -> vector<64x16xf32>
    %80 = arith.maximumf %61, %79 : vector<64x16xf32>
    %81 = vector.broadcast %73 : vector<64x1xf32> to vector<64x64xf32>
    %82 = arith.cmpf oeq, %24, %81 : vector<64x64xf32>
    %cst_29 = arith.constant 0x7F800000 : f32
    %83 = vector.broadcast %cst_29 : f32 to vector<64x64xf32>
    %84 = arith.select %82, %83, %65 : vector<64x64xi1>, vector<64x64xf32>
    %cst_30 = arith.constant dense<0x7F800000> : vector<64xf32>
    %85 = vector.multi_reduction <minimumf>, %84, %cst_30 [1] : vector<64x64xf32> to vector<64xf32>
    %86 = vector.shape_cast %85 : vector<64xf32> to vector<64x1xf32>
    %87 = vector.broadcast %86 : vector<64x1xf32> to vector<64x64xf32>
    %88 = arith.cmpf oeq, %84, %87 : vector<64x64xf32>
    %cst_31 = arith.constant 6.400000e+01 : f32
    %89 = vector.broadcast %cst_31 : f32 to vector<64x64xf32>
    %90 = arith.select %88, %24, %89 : vector<64x64xi1>, vector<64x64xf32>
    %cst_32 = arith.constant dense<0x7F800000> : vector<64xf32>
    %91 = vector.multi_reduction <minimumf>, %90, %cst_32 [1] : vector<64x64xf32> to vector<64xf32>
    %92 = vector.shape_cast %91 : vector<64xf32> to vector<64x1xf32>
    %93 = vector.broadcast %92 : vector<64x1xf32> to vector<64x64xf32>
    %94 = arith.cmpf oeq, %24, %93 : vector<64x64xf32>
    %95 = arith.extui %94 : vector<64x64xi1> to vector<64x64xi32>
    %96 = arith.sitofp %95 : vector<64x64xi32> to vector<64x64xf32>
    %97 = arith.truncf %96 : vector<64x64xf32> to vector<64x64xbf16>
    %cst_33 = arith.constant dense<0.000000e+00> : vector<64x16xf32>
    %98 = tpu.matmul %97, %26, %cst_33 {dimension_numbers = #tpu.dot_dimension_numbers<[1], [0], [0], [1], [0, 0, 1, 1], [], []>} : vector<64x64xbf16>, vector<64x16xbf16>, vector<64x16xf32> -> vector<64x16xf32>
    %99 = arith.maximumf %80, %98 : vector<64x16xf32>
    %c0_34 = arith.constant 0 : index
    %c0_35 = arith.constant 0 : index
    %c0_36 = arith.constant 0 : index
    %100 = vector.load %arg5[%c0_34, %c0_35, %c0_36] : memref<1x64x16xf32, #tpu.memory_space<vmem>>, vector<1x64x16xf32>
    %101 = vector.shape_cast %100 : vector<1x64x16xf32> to vector<64x16xf32>
    %102 = arith.addf %101, %99 : vector<64x16xf32>
    %cst_37 = arith.constant 0.000000e+00 : f32
    %103 = vector.broadcast %cst_37 : f32 to vector<64x16xf32>
    %104 = arith.maximumf %102, %103 : vector<64x16xf32>
    %c0_38 = arith.constant 0 : index
    %c0_39 = arith.constant 0 : index
    %c0_40 = arith.constant 0 : index
    %105 = vector.load %arg7[%c0_38, %c0_39, %c0_40] : memref<1x64x16xf32, #tpu.memory_space<vmem>>, vector<1x64x16xf32>
    %106 = vector.shape_cast %105 : vector<1x64x16xf32> to vector<64x16xf32>
    %107 = vector.shape_cast %104 : vector<64x16xf32> to vector<1x64x16xf32>
    tpu.vector_store %arg7[%c0_38, %c0_39, %c0_40], %107 {strides = array<i32>} : memref<1x64x16xf32, #tpu.memory_space<vmem>>, vector<1x64x16xf32>,
    return
  }
  func.func @transform_0(%arg0: i32, %arg1: i32) -> (i32, i32, i32) {
    %c0_i32 = arith.constant 0 : i32
    %c0_i32_0 = arith.constant 0 : i32
    return %arg0, %arg1, %c0_i32 : i32, i32, i32
  }
  func.func @transform_1(%arg0: i32, %arg1: i32) -> (i32, i32, i32) {
    %c0_i32 = arith.constant 0 : i32
    %c0_i32_0 = arith.constant 0 : i32
    %c0_i32_1 = arith.constant 0 : i32
    return %arg0, %c0_i32, %c0_i32_0 : i32, i32, i32
  }
  func.func @transform_2(%arg0: i32, %arg1: i32) -> (i32, i32, i32) {
    %c0_i32 = arith.constant 0 : i32
    %c0_i32_0 = arith.constant 0 : i32
    %c0_i32_1 = arith.constant 0 : i32
    return %arg0, %c0_i32, %c0_i32_0 : i32, i32, i32
  }
  func.func @transform_3(%arg0: i32, %arg1: i32) -> (i32, i32, i32) {
    %c0_i32 = arith.constant 0 : i32
    %c0_i32_0 = arith.constant 0 : i32
    return %arg0, %arg1, %c0_i32 : i32, i32, i32
  }
  func.func @transform_4(%arg0: i32, %arg1: i32) -> (i32, i32, i32) {
    %c0_i32 = arith.constant 0 : i32
    %c0_i32_0 = arith.constant 0 : i32
    %c0_i32_1 = arith.constant 0 : i32
    return %arg0, %c0_i32, %c0_i32_0 : i32, i32, i32
  }
  func.func @transform_5(%arg0: i32, %arg1: i32) -> (i32, i32, i32) {
    %c0_i32 = arith.constant 0 : i32
    %c0_i32_0 = arith.constant 0 : i32
    return %arg0, %arg1, %c0_i32 : i32, i32, i32
  }
}

module attributes {stable_mosaic.version = 11 : i64} {
  func.func @_dyn_edgeconv_kernel(%arg0: i32, %arg1: i32, %arg2: memref<1x64x16xf32, #tpu.memory_space<vmem>>, %arg3: memref<1x64x16xf32, #tpu.memory_space<vmem>>, %arg4: memref<1x1x64xf32, #tpu.memory_space<vmem>>, %arg5: memref<1x64x16xf32, #tpu.memory_space<vmem>>, %arg6: memref<1x64x16xbf16, #tpu.memory_space<vmem>>, %arg7: memref<1x64x16xf32, #tpu.memory_space<vmem>>) attributes {dimension_semantics = [#tpu.dimension_semantics<parallel>, #tpu.dimension_semantics<parallel>], iteration_bounds = array<i64: 2, 1>, scalar_prefetch = 0 : i64, scratch_operands = 0 : i64, tpu.core_type = #tpu.core_type<tc>, window_params = [{transform_indices = @transform_0, window_bounds = array<i64: 1, 64, 16>}, {transform_indices = @transform_1, window_bounds = array<i64: 1, 64, 16>}, {transform_indices = @transform_2, window_bounds = array<i64: 1, 1, 64>}, {transform_indices = @transform_3, window_bounds = array<i64: 1, 64, 16>}, {transform_indices = @transform_4, window_bounds = array<i64: 1, 64, 16>}, {transform_indices = @transform_5, window_bounds = array<i64: 1, 64, 16>}]} {
    %c0 = arith.constant 0 : index
    %c0_0 = arith.constant 0 : index
    %c0_1 = arith.constant 0 : index
    %0 = vector.load %arg2[%c0, %c0_0, %c0_1] : memref<1x64x16xf32, #tpu.memory_space<vmem>>, vector<1x64x16xf32>
    %1 = vector.shape_cast %0 : vector<1x64x16xf32> to vector<64x16xf32>
    %c0_2 = arith.constant 0 : index
    %c0_3 = arith.constant 0 : index
    %c0_4 = arith.constant 0 : index
    %2 = vector.load %arg3[%c0_2, %c0_3, %c0_4] : memref<1x64x16xf32, #tpu.memory_space<vmem>>, vector<1x64x16xf32>
    %3 = vector.shape_cast %2 : vector<1x64x16xf32> to vector<64x16xf32>
    %4 = arith.mulf %1, %1 : vector<64x16xf32>
    %cst = arith.constant dense<0.000000e+00> : vector<64xf32>
    %5 = vector.multi_reduction <add>, %4, %cst [1] : vector<64x16xf32> to vector<64xf32>
    %6 = vector.shape_cast %5 : vector<64xf32> to vector<64x1xf32>
    %cst_5 = arith.constant dense<0.000000e+00> : vector<64x64xf32>
    %7 = tpu.matmul %1, %3, %cst_5 {dimension_numbers = #tpu.dot_dimension_numbers<[1], [1], [0], [0], [0, 0, 1, 0], [], []>} : vector<64x16xf32>, vector<64x16xf32>, vector<64x64xf32> -> vector<64x64xf32>
    %c0_6 = arith.constant 0 : index
    %c0_7 = arith.constant 0 : index
    %c0_8 = arith.constant 0 : index
    %8 = vector.load %arg4[%c0_6, %c0_7, %c0_8] : memref<1x1x64xf32, #tpu.memory_space<vmem>>, vector<1x1x64xf32>
    %9 = vector.shape_cast %8 : vector<1x1x64xf32> to vector<1x64xf32>
    %10 = vector.broadcast %6 : vector<64x1xf32> to vector<64x64xf32>
    %11 = vector.broadcast %9 : vector<1x64xf32> to vector<64x64xf32>
    %12 = arith.addf %10, %11 : vector<64x64xf32>
    %cst_9 = arith.constant 2.000000e+00 : f32
    %13 = vector.broadcast %cst_9 : f32 to vector<64x64xf32>
    %14 = arith.mulf %13, %7 : vector<64x64xf32>
    %15 = arith.subf %12, %14 : vector<64x64xf32>
    %16 = tpu.iota {dimensions = array<i32: 0>} : vector<64x64xi32>
    %c64_i32 = arith.constant 64 : i32
    %17 = arith.muli %arg1, %c64_i32 : i32
    %18 = vector.broadcast %17 : i32 to vector<64x64xi32>
    %19 = arith.addi %16, %18 : vector<64x64xi32>
    %20 = tpu.iota {dimensions = array<i32: 1>} : vector<64x64xi32>
    %21 = arith.cmpi eq, %19, %20 : vector<64x64xi32>
    %cst_10 = arith.constant 0x7F800000 : f32
    %22 = vector.broadcast %cst_10 : f32 to vector<64x64xf32>
    %23 = arith.select %21, %22, %15 : vector<64x64xi1>, vector<64x64xf32>
    %24 = arith.sitofp %20 : vector<64x64xi32> to vector<64x64xf32>
    %c0_11 = arith.constant 0 : index
    %c0_12 = arith.constant 0 : index
    %c0_13 = arith.constant 0 : index
    %25 = vector.load %arg6[%c0_11, %c0_12, %c0_13] : memref<1x64x16xbf16, #tpu.memory_space<vmem>>, vector<1x64x16xbf16>
    %26 = vector.shape_cast %25 : vector<1x64x16xbf16> to vector<64x16xbf16>
    %cst_14 = arith.constant 0xFF800000 : f32
    %27 = vector.broadcast %cst_14 : f32 to vector<64x16xf32>
    %cst_15 = arith.constant dense<0x7F800000> : vector<64xf32>
    %28 = vector.multi_reduction <minimumf>, %23, %cst_15 [1] : vector<64x64xf32> to vector<64xf32>
    %29 = vector.shape_cast %28 : vector<64xf32> to vector<64x1xf32>
    %30 = vector.broadcast %29 : vector<64x1xf32> to vector<64x64xf32>
    %31 = arith.cmpf oeq, %23, %30 : vector<64x64xf32>
    %cst_16 = arith.constant 6.400000e+01 : f32
    %32 = vector.broadcast %cst_16 : f32 to vector<64x64xf32>
    %33 = arith.select %31, %24, %32 : vector<64x64xi1>, vector<64x64xf32>
    %cst_17 = arith.constant dense<0x7F800000> : vector<64xf32>
    %34 = vector.multi_reduction <minimumf>, %33, %cst_17 [1] : vector<64x64xf32> to vector<64xf32>
    %35 = vector.shape_cast %34 : vector<64xf32> to vector<64x1xf32>
    %36 = vector.broadcast %35 : vector<64x1xf32> to vector<64x64xf32>
    %37 = arith.cmpf oeq, %24, %36 : vector<64x64xf32>
    %38 = arith.extui %37 : vector<64x64xi1> to vector<64x64xi32>
    %39 = arith.sitofp %38 : vector<64x64xi32> to vector<64x64xf32>
    %40 = arith.truncf %39 : vector<64x64xf32> to vector<64x64xbf16>
    %cst_18 = arith.constant dense<0.000000e+00> : vector<64x16xf32>
    %41 = tpu.matmul %40, %26, %cst_18 {dimension_numbers = #tpu.dot_dimension_numbers<[1], [0], [0], [1], [0, 0, 1, 1], [], []>} : vector<64x64xbf16>, vector<64x16xbf16>, vector<64x16xf32> -> vector<64x16xf32>
    %42 = arith.maximumf %27, %41 : vector<64x16xf32>
    %43 = vector.broadcast %35 : vector<64x1xf32> to vector<64x64xf32>
    %44 = arith.cmpf oeq, %24, %43 : vector<64x64xf32>
    %cst_19 = arith.constant 0x7F800000 : f32
    %45 = vector.broadcast %cst_19 : f32 to vector<64x64xf32>
    %46 = arith.select %44, %45, %23 : vector<64x64xi1>, vector<64x64xf32>
    %cst_20 = arith.constant dense<0x7F800000> : vector<64xf32>
    %47 = vector.multi_reduction <minimumf>, %46, %cst_20 [1] : vector<64x64xf32> to vector<64xf32>
    %48 = vector.shape_cast %47 : vector<64xf32> to vector<64x1xf32>
    %49 = vector.broadcast %48 : vector<64x1xf32> to vector<64x64xf32>
    %50 = arith.cmpf oeq, %46, %49 : vector<64x64xf32>
    %cst_21 = arith.constant 6.400000e+01 : f32
    %51 = vector.broadcast %cst_21 : f32 to vector<64x64xf32>
    %52 = arith.select %50, %24, %51 : vector<64x64xi1>, vector<64x64xf32>
    %cst_22 = arith.constant dense<0x7F800000> : vector<64xf32>
    %53 = vector.multi_reduction <minimumf>, %52, %cst_22 [1] : vector<64x64xf32> to vector<64xf32>
    %54 = vector.shape_cast %53 : vector<64xf32> to vector<64x1xf32>
    %55 = vector.broadcast %54 : vector<64x1xf32> to vector<64x64xf32>
    %56 = arith.cmpf oeq, %24, %55 : vector<64x64xf32>
    %cst_23 = arith.constant 0x7F800000 : f32
    %57 = vector.broadcast %cst_23 : f32 to vector<64x64xf32>
    %58 = arith.select %56, %57, %46 : vector<64x64xi1>, vector<64x64xf32>
    %cst_24 = arith.constant dense<0x7F800000> : vector<64xf32>
    %59 = vector.multi_reduction <minimumf>, %58, %cst_24 [1] : vector<64x64xf32> to vector<64xf32>
    %60 = vector.shape_cast %59 : vector<64xf32> to vector<64x1xf32>
    %61 = vector.broadcast %60 : vector<64x1xf32> to vector<64x64xf32>
    %62 = arith.cmpf oeq, %58, %61 : vector<64x64xf32>
    %cst_25 = arith.constant 6.400000e+01 : f32
    %63 = vector.broadcast %cst_25 : f32 to vector<64x64xf32>
    %64 = arith.select %62, %24, %63 : vector<64x64xi1>, vector<64x64xf32>
    %cst_26 = arith.constant dense<0x7F800000> : vector<64xf32>
    %65 = vector.multi_reduction <minimumf>, %64, %cst_26 [1] : vector<64x64xf32> to vector<64xf32>
    %66 = vector.shape_cast %65 : vector<64xf32> to vector<64x1xf32>
    %67 = vector.broadcast %66 : vector<64x1xf32> to vector<64x64xf32>
    %68 = arith.cmpf oeq, %24, %67 : vector<64x64xf32>
    %69 = arith.extui %68 : vector<64x64xi1> to vector<64x64xi32>
    %70 = arith.sitofp %69 : vector<64x64xi32> to vector<64x64xf32>
    %71 = arith.truncf %70 : vector<64x64xf32> to vector<64x64xbf16>
    %cst_27 = arith.constant dense<0.000000e+00> : vector<64x16xf32>
    %72 = tpu.matmul %71, %26, %cst_27 {dimension_numbers = #tpu.dot_dimension_numbers<[1], [0], [0], [1], [0, 0, 1, 1], [], []>} : vector<64x64xbf16>, vector<64x16xbf16>, vector<64x16xf32> -> vector<64x16xf32>
    %73 = arith.maximumf %42, %72 : vector<64x16xf32>
    %74 = vector.broadcast %66 : vector<64x1xf32> to vector<64x64xf32>
    %75 = arith.cmpf oeq, %24, %74 : vector<64x64xf32>
    %cst_28 = arith.constant 0x7F800000 : f32
    %76 = vector.broadcast %cst_28 : f32 to vector<64x64xf32>
    %77 = arith.select %75, %76, %58 : vector<64x64xi1>, vector<64x64xf32>
    %cst_29 = arith.constant dense<0x7F800000> : vector<64xf32>
    %78 = vector.multi_reduction <minimumf>, %77, %cst_29 [1] : vector<64x64xf32> to vector<64xf32>
    %79 = vector.shape_cast %78 : vector<64xf32> to vector<64x1xf32>
    %80 = vector.broadcast %79 : vector<64x1xf32> to vector<64x64xf32>
    %81 = arith.cmpf oeq, %77, %80 : vector<64x64xf32>
    %cst_30 = arith.constant 6.400000e+01 : f32
    %82 = vector.broadcast %cst_30 : f32 to vector<64x64xf32>
    %83 = arith.select %81, %24, %82 : vector<64x64xi1>, vector<64x64xf32>
    %cst_31 = arith.constant dense<0x7F800000> : vector<64xf32>
    %84 = vector.multi_reduction <minimumf>, %83, %cst_31 [1] : vector<64x64xf32> to vector<64xf32>
    %85 = vector.shape_cast %84 : vector<64xf32> to vector<64x1xf32>
    %86 = vector.broadcast %85 : vector<64x1xf32> to vector<64x64xf32>
    %87 = arith.cmpf oeq, %24, %86 : vector<64x64xf32>
    %cst_32 = arith.constant 0x7F800000 : f32
    %88 = vector.broadcast %cst_32 : f32 to vector<64x64xf32>
    %89 = arith.select %87, %88, %77 : vector<64x64xi1>, vector<64x64xf32>
    %cst_33 = arith.constant dense<0x7F800000> : vector<64xf32>
    %90 = vector.multi_reduction <minimumf>, %89, %cst_33 [1] : vector<64x64xf32> to vector<64xf32>
    %91 = vector.shape_cast %90 : vector<64xf32> to vector<64x1xf32>
    %92 = vector.broadcast %91 : vector<64x1xf32> to vector<64x64xf32>
    %93 = arith.cmpf oeq, %89, %92 : vector<64x64xf32>
    %cst_34 = arith.constant 6.400000e+01 : f32
    %94 = vector.broadcast %cst_34 : f32 to vector<64x64xf32>
    %95 = arith.select %93, %24, %94 : vector<64x64xi1>, vector<64x64xf32>
    %cst_35 = arith.constant dense<0x7F800000> : vector<64xf32>
    %96 = vector.multi_reduction <minimumf>, %95, %cst_35 [1] : vector<64x64xf32> to vector<64xf32>
    %97 = vector.shape_cast %96 : vector<64xf32> to vector<64x1xf32>
    %98 = vector.broadcast %97 : vector<64x1xf32> to vector<64x64xf32>
    %99 = arith.cmpf oeq, %24, %98 : vector<64x64xf32>
    %100 = arith.extui %99 : vector<64x64xi1> to vector<64x64xi32>
    %101 = arith.sitofp %100 : vector<64x64xi32> to vector<64x64xf32>
    %102 = arith.truncf %101 : vector<64x64xf32> to vector<64x64xbf16>
    %cst_36 = arith.constant dense<0.000000e+00> : vector<64x16xf32>
    %103 = tpu.matmul %102, %26, %cst_36 {dimension_numbers = #tpu.dot_dimension_numbers<[1], [0], [0], [1], [0, 0, 1, 1], [], []>} : vector<64x64xbf16>, vector<64x16xbf16>, vector<64x16xf32> -> vector<64x16xf32>
    %104 = arith.maximumf %73, %103 : vector<64x16xf32>
    %105 = vector.broadcast %97 : vector<64x1xf32> to vector<64x64xf32>
    %106 = arith.cmpf oeq, %24, %105 : vector<64x64xf32>
    %cst_37 = arith.constant 0x7F800000 : f32
    %107 = vector.broadcast %cst_37 : f32 to vector<64x64xf32>
    %108 = arith.select %106, %107, %89 : vector<64x64xi1>, vector<64x64xf32>
    %cst_38 = arith.constant dense<0x7F800000> : vector<64xf32>
    %109 = vector.multi_reduction <minimumf>, %108, %cst_38 [1] : vector<64x64xf32> to vector<64xf32>
    %110 = vector.shape_cast %109 : vector<64xf32> to vector<64x1xf32>
    %111 = vector.broadcast %110 : vector<64x1xf32> to vector<64x64xf32>
    %112 = arith.cmpf oeq, %108, %111 : vector<64x64xf32>
    %cst_39 = arith.constant 6.400000e+01 : f32
    %113 = vector.broadcast %cst_39 : f32 to vector<64x64xf32>
    %114 = arith.select %112, %24, %113 : vector<64x64xi1>, vector<64x64xf32>
    %cst_40 = arith.constant dense<0x7F800000> : vector<64xf32>
    %115 = vector.multi_reduction <minimumf>, %114, %cst_40 [1] : vector<64x64xf32> to vector<64xf32>
    %116 = vector.shape_cast %115 : vector<64xf32> to vector<64x1xf32>
    %117 = vector.broadcast %116 : vector<64x1xf32> to vector<64x64xf32>
    %118 = arith.cmpf oeq, %24, %117 : vector<64x64xf32>
    %cst_41 = arith.constant 0x7F800000 : f32
    %119 = vector.broadcast %cst_41 : f32 to vector<64x64xf32>
    %120 = arith.select %118, %119, %108 : vector<64x64xi1>, vector<64x64xf32>
    %cst_42 = arith.constant dense<0x7F800000> : vector<64xf32>
    %121 = vector.multi_reduction <minimumf>, %120, %cst_42 [1] : vector<64x64xf32> to vector<64xf32>
    %122 = vector.shape_cast %121 : vector<64xf32> to vector<64x1xf32>
    %123 = vector.broadcast %122 : vector<64x1xf32> to vector<64x64xf32>
    %124 = arith.cmpf oeq, %120, %123 : vector<64x64xf32>
    %cst_43 = arith.constant 6.400000e+01 : f32
    %125 = vector.broadcast %cst_43 : f32 to vector<64x64xf32>
    %126 = arith.select %124, %24, %125 : vector<64x64xi1>, vector<64x64xf32>
    %cst_44 = arith.constant dense<0x7F800000> : vector<64xf32>
    %127 = vector.multi_reduction <minimumf>, %126, %cst_44 [1] : vector<64x64xf32> to vector<64xf32>
    %128 = vector.shape_cast %127 : vector<64xf32> to vector<64x1xf32>
    %129 = vector.broadcast %128 : vector<64x1xf32> to vector<64x64xf32>
    %130 = arith.cmpf oeq, %24, %129 : vector<64x64xf32>
    %131 = arith.extui %130 : vector<64x64xi1> to vector<64x64xi32>
    %132 = arith.sitofp %131 : vector<64x64xi32> to vector<64x64xf32>
    %133 = arith.truncf %132 : vector<64x64xf32> to vector<64x64xbf16>
    %cst_45 = arith.constant dense<0.000000e+00> : vector<64x16xf32>
    %134 = tpu.matmul %133, %26, %cst_45 {dimension_numbers = #tpu.dot_dimension_numbers<[1], [0], [0], [1], [0, 0, 1, 1], [], []>} : vector<64x64xbf16>, vector<64x16xbf16>, vector<64x16xf32> -> vector<64x16xf32>
    %135 = arith.maximumf %104, %134 : vector<64x16xf32>
    %c0_46 = arith.constant 0 : index
    %c0_47 = arith.constant 0 : index
    %c0_48 = arith.constant 0 : index
    %136 = vector.load %arg5[%c0_46, %c0_47, %c0_48] : memref<1x64x16xf32, #tpu.memory_space<vmem>>, vector<1x64x16xf32>
    %137 = vector.shape_cast %136 : vector<1x64x16xf32> to vector<64x16xf32>
    %138 = arith.addf %137, %135 : vector<64x16xf32>
    %cst_49 = arith.constant 0.000000e+00 : f32
    %139 = vector.broadcast %cst_49 : f32 to vector<64x16xf32>
    %140 = arith.maximumf %138, %139 : vector<64x16xf32>
    %141 = arith.addf %140, %1 : vector<64x16xf32>
    %c0_50 = arith.constant 0 : index
    %c0_51 = arith.constant 0 : index
    %c0_52 = arith.constant 0 : index
    %142 = vector.load %arg7[%c0_50, %c0_51, %c0_52] : memref<1x64x16xf32, #tpu.memory_space<vmem>>, vector<1x64x16xf32>
    %143 = vector.shape_cast %142 : vector<1x64x16xf32> to vector<64x16xf32>
    %144 = vector.shape_cast %141 : vector<64x16xf32> to vector<1x64x16xf32>
    tpu.vector_store %arg7[%c0_50, %c0_51, %c0_52], %144 {strides = array<i32>} : memref<1x64x16xf32, #tpu.memory_space<vmem>>, vector<1x64x16xf32>,
    return
  }
  func.func @transform_0(%arg0: i32, %arg1: i32) -> (i32, i32, i32) {
    %c0_i32 = arith.constant 0 : i32
    %c0_i32_0 = arith.constant 0 : i32
    return %arg0, %arg1, %c0_i32 : i32, i32, i32
  }
  func.func @transform_1(%arg0: i32, %arg1: i32) -> (i32, i32, i32) {
    %c0_i32 = arith.constant 0 : i32
    %c0_i32_0 = arith.constant 0 : i32
    %c0_i32_1 = arith.constant 0 : i32
    return %arg0, %c0_i32, %c0_i32_0 : i32, i32, i32
  }
  func.func @transform_2(%arg0: i32, %arg1: i32) -> (i32, i32, i32) {
    %c0_i32 = arith.constant 0 : i32
    %c0_i32_0 = arith.constant 0 : i32
    %c0_i32_1 = arith.constant 0 : i32
    return %arg0, %c0_i32, %c0_i32_0 : i32, i32, i32
  }
  func.func @transform_3(%arg0: i32, %arg1: i32) -> (i32, i32, i32) {
    %c0_i32 = arith.constant 0 : i32
    %c0_i32_0 = arith.constant 0 : i32
    return %arg0, %arg1, %c0_i32 : i32, i32, i32
  }
  func.func @transform_4(%arg0: i32, %arg1: i32) -> (i32, i32, i32) {
    %c0_i32 = arith.constant 0 : i32
    %c0_i32_0 = arith.constant 0 : i32
    %c0_i32_1 = arith.constant 0 : i32
    return %arg0, %c0_i32, %c0_i32_0 : i32, i32, i32
  }
  func.func @transform_5(%arg0: i32, %arg1: i32) -> (i32, i32, i32) {
    %c0_i32 = arith.constant 0 : i32
    %c0_i32_0 = arith.constant 0 : i32
    return %arg0, %arg1, %c0_i32 : i32, i32, i32
  }
}

module attributes {stable_mosaic.version = 11 : i64} {
  func.func @_dyn_edgeconv_kernel(%arg0: i32, %arg1: i32, %arg2: memref<1x64x16xf32, #tpu.memory_space<vmem>>, %arg3: memref<1x64x16xf32, #tpu.memory_space<vmem>>, %arg4: memref<1x1x64xf32, #tpu.memory_space<vmem>>, %arg5: memref<1x64x16xf32, #tpu.memory_space<vmem>>, %arg6: memref<1x64x16xbf16, #tpu.memory_space<vmem>>, %arg7: memref<1x64x16xf32, #tpu.memory_space<vmem>>) attributes {dimension_semantics = [#tpu.dimension_semantics<parallel>, #tpu.dimension_semantics<parallel>], iteration_bounds = array<i64: 2, 1>, scalar_prefetch = 0 : i64, scratch_operands = 0 : i64, tpu.core_type = #tpu.core_type<tc>, window_params = [{transform_indices = @transform_0, window_bounds = array<i64: 1, 64, 16>}, {transform_indices = @transform_1, window_bounds = array<i64: 1, 64, 16>}, {transform_indices = @transform_2, window_bounds = array<i64: 1, 1, 64>}, {transform_indices = @transform_3, window_bounds = array<i64: 1, 64, 16>}, {transform_indices = @transform_4, window_bounds = array<i64: 1, 64, 16>}, {transform_indices = @transform_5, window_bounds = array<i64: 1, 64, 16>}]} {
    %c0 = arith.constant 0 : index
    %c0_0 = arith.constant 0 : index
    %c0_1 = arith.constant 0 : index
    %0 = vector.load %arg2[%c0, %c0_0, %c0_1] : memref<1x64x16xf32, #tpu.memory_space<vmem>>, vector<1x64x16xf32>
    %1 = vector.shape_cast %0 : vector<1x64x16xf32> to vector<64x16xf32>
    %c0_2 = arith.constant 0 : index
    %c0_3 = arith.constant 0 : index
    %c0_4 = arith.constant 0 : index
    %2 = vector.load %arg3[%c0_2, %c0_3, %c0_4] : memref<1x64x16xf32, #tpu.memory_space<vmem>>, vector<1x64x16xf32>
    %3 = vector.shape_cast %2 : vector<1x64x16xf32> to vector<64x16xf32>
    %4 = arith.mulf %1, %1 : vector<64x16xf32>
    %cst = arith.constant dense<0.000000e+00> : vector<64xf32>
    %5 = vector.multi_reduction <add>, %4, %cst [1] : vector<64x16xf32> to vector<64xf32>
    %6 = vector.shape_cast %5 : vector<64xf32> to vector<64x1xf32>
    %cst_5 = arith.constant dense<0.000000e+00> : vector<64x64xf32>
    %7 = tpu.matmul %1, %3, %cst_5 {dimension_numbers = #tpu.dot_dimension_numbers<[1], [1], [0], [0], [0, 0, 1, 0], [], []>} : vector<64x16xf32>, vector<64x16xf32>, vector<64x64xf32> -> vector<64x64xf32>
    %c0_6 = arith.constant 0 : index
    %c0_7 = arith.constant 0 : index
    %c0_8 = arith.constant 0 : index
    %8 = vector.load %arg4[%c0_6, %c0_7, %c0_8] : memref<1x1x64xf32, #tpu.memory_space<vmem>>, vector<1x1x64xf32>
    %9 = vector.shape_cast %8 : vector<1x1x64xf32> to vector<1x64xf32>
    %10 = vector.broadcast %6 : vector<64x1xf32> to vector<64x64xf32>
    %11 = vector.broadcast %9 : vector<1x64xf32> to vector<64x64xf32>
    %12 = arith.addf %10, %11 : vector<64x64xf32>
    %cst_9 = arith.constant 2.000000e+00 : f32
    %13 = vector.broadcast %cst_9 : f32 to vector<64x64xf32>
    %14 = arith.mulf %13, %7 : vector<64x64xf32>
    %15 = arith.subf %12, %14 : vector<64x64xf32>
    %16 = tpu.iota {dimensions = array<i32: 0>} : vector<64x64xi32>
    %c64_i32 = arith.constant 64 : i32
    %17 = arith.muli %arg1, %c64_i32 : i32
    %18 = vector.broadcast %17 : i32 to vector<64x64xi32>
    %19 = arith.addi %16, %18 : vector<64x64xi32>
    %20 = tpu.iota {dimensions = array<i32: 1>} : vector<64x64xi32>
    %21 = arith.cmpi eq, %19, %20 : vector<64x64xi32>
    %cst_10 = arith.constant 0x7F800000 : f32
    %22 = vector.broadcast %cst_10 : f32 to vector<64x64xf32>
    %23 = arith.select %21, %22, %15 : vector<64x64xi1>, vector<64x64xf32>
    %24 = arith.sitofp %20 : vector<64x64xi32> to vector<64x64xf32>
    %c0_11 = arith.constant 0 : index
    %c0_12 = arith.constant 0 : index
    %c0_13 = arith.constant 0 : index
    %25 = vector.load %arg6[%c0_11, %c0_12, %c0_13] : memref<1x64x16xbf16, #tpu.memory_space<vmem>>, vector<1x64x16xbf16>
    %26 = vector.shape_cast %25 : vector<1x64x16xbf16> to vector<64x16xbf16>
    %cst_14 = arith.constant 0xFF800000 : f32
    %27 = vector.broadcast %cst_14 : f32 to vector<64x16xf32>
    %cst_15 = arith.constant dense<0x7F800000> : vector<64xf32>
    %28 = vector.multi_reduction <minimumf>, %23, %cst_15 [1] : vector<64x64xf32> to vector<64xf32>
    %29 = vector.shape_cast %28 : vector<64xf32> to vector<64x1xf32>
    %30 = vector.broadcast %29 : vector<64x1xf32> to vector<64x64xf32>
    %31 = arith.cmpf oeq, %23, %30 : vector<64x64xf32>
    %cst_16 = arith.constant 6.400000e+01 : f32
    %32 = vector.broadcast %cst_16 : f32 to vector<64x64xf32>
    %33 = arith.select %31, %24, %32 : vector<64x64xi1>, vector<64x64xf32>
    %cst_17 = arith.constant dense<0x7F800000> : vector<64xf32>
    %34 = vector.multi_reduction <minimumf>, %33, %cst_17 [1] : vector<64x64xf32> to vector<64xf32>
    %35 = vector.shape_cast %34 : vector<64xf32> to vector<64x1xf32>
    %36 = vector.broadcast %35 : vector<64x1xf32> to vector<64x64xf32>
    %37 = arith.cmpf oeq, %24, %36 : vector<64x64xf32>
    %38 = arith.extui %37 : vector<64x64xi1> to vector<64x64xi32>
    %39 = arith.sitofp %38 : vector<64x64xi32> to vector<64x64xf32>
    %40 = arith.truncf %39 : vector<64x64xf32> to vector<64x64xbf16>
    %cst_18 = arith.constant dense<0.000000e+00> : vector<64x16xf32>
    %41 = tpu.matmul %40, %26, %cst_18 {dimension_numbers = #tpu.dot_dimension_numbers<[1], [0], [0], [1], [0, 0, 1, 1], [], []>} : vector<64x64xbf16>, vector<64x16xbf16>, vector<64x16xf32> -> vector<64x16xf32>
    %42 = arith.maximumf %27, %41 : vector<64x16xf32>
    %43 = vector.broadcast %35 : vector<64x1xf32> to vector<64x64xf32>
    %44 = arith.cmpf oeq, %24, %43 : vector<64x64xf32>
    %cst_19 = arith.constant 0x7F800000 : f32
    %45 = vector.broadcast %cst_19 : f32 to vector<64x64xf32>
    %46 = arith.select %44, %45, %23 : vector<64x64xi1>, vector<64x64xf32>
    %cst_20 = arith.constant dense<0x7F800000> : vector<64xf32>
    %47 = vector.multi_reduction <minimumf>, %46, %cst_20 [1] : vector<64x64xf32> to vector<64xf32>
    %48 = vector.shape_cast %47 : vector<64xf32> to vector<64x1xf32>
    %49 = vector.broadcast %48 : vector<64x1xf32> to vector<64x64xf32>
    %50 = arith.cmpf oeq, %46, %49 : vector<64x64xf32>
    %cst_21 = arith.constant 6.400000e+01 : f32
    %51 = vector.broadcast %cst_21 : f32 to vector<64x64xf32>
    %52 = arith.select %50, %24, %51 : vector<64x64xi1>, vector<64x64xf32>
    %cst_22 = arith.constant dense<0x7F800000> : vector<64xf32>
    %53 = vector.multi_reduction <minimumf>, %52, %cst_22 [1] : vector<64x64xf32> to vector<64xf32>
    %54 = vector.shape_cast %53 : vector<64xf32> to vector<64x1xf32>
    %55 = vector.broadcast %54 : vector<64x1xf32> to vector<64x64xf32>
    %56 = arith.cmpf oeq, %24, %55 : vector<64x64xf32>
    %57 = arith.extui %56 : vector<64x64xi1> to vector<64x64xi32>
    %58 = arith.sitofp %57 : vector<64x64xi32> to vector<64x64xf32>
    %59 = arith.truncf %58 : vector<64x64xf32> to vector<64x64xbf16>
    %cst_23 = arith.constant dense<0.000000e+00> : vector<64x16xf32>
    %60 = tpu.matmul %59, %26, %cst_23 {dimension_numbers = #tpu.dot_dimension_numbers<[1], [0], [0], [1], [0, 0, 1, 1], [], []>} : vector<64x64xbf16>, vector<64x16xbf16>, vector<64x16xf32> -> vector<64x16xf32>
    %61 = arith.maximumf %42, %60 : vector<64x16xf32>
    %62 = vector.broadcast %54 : vector<64x1xf32> to vector<64x64xf32>
    %63 = arith.cmpf oeq, %24, %62 : vector<64x64xf32>
    %cst_24 = arith.constant 0x7F800000 : f32
    %64 = vector.broadcast %cst_24 : f32 to vector<64x64xf32>
    %65 = arith.select %63, %64, %46 : vector<64x64xi1>, vector<64x64xf32>
    %cst_25 = arith.constant dense<0x7F800000> : vector<64xf32>
    %66 = vector.multi_reduction <minimumf>, %65, %cst_25 [1] : vector<64x64xf32> to vector<64xf32>
    %67 = vector.shape_cast %66 : vector<64xf32> to vector<64x1xf32>
    %68 = vector.broadcast %67 : vector<64x1xf32> to vector<64x64xf32>
    %69 = arith.cmpf oeq, %65, %68 : vector<64x64xf32>
    %cst_26 = arith.constant 6.400000e+01 : f32
    %70 = vector.broadcast %cst_26 : f32 to vector<64x64xf32>
    %71 = arith.select %69, %24, %70 : vector<64x64xi1>, vector<64x64xf32>
    %cst_27 = arith.constant dense<0x7F800000> : vector<64xf32>
    %72 = vector.multi_reduction <minimumf>, %71, %cst_27 [1] : vector<64x64xf32> to vector<64xf32>
    %73 = vector.shape_cast %72 : vector<64xf32> to vector<64x1xf32>
    %74 = vector.broadcast %73 : vector<64x1xf32> to vector<64x64xf32>
    %75 = arith.cmpf oeq, %24, %74 : vector<64x64xf32>
    %76 = arith.extui %75 : vector<64x64xi1> to vector<64x64xi32>
    %77 = arith.sitofp %76 : vector<64x64xi32> to vector<64x64xf32>
    %78 = arith.truncf %77 : vector<64x64xf32> to vector<64x64xbf16>
    %cst_28 = arith.constant dense<0.000000e+00> : vector<64x16xf32>
    %79 = tpu.matmul %78, %26, %cst_28 {dimension_numbers = #tpu.dot_dimension_numbers<[1], [0], [0], [1], [0, 0, 1, 1], [], []>} : vector<64x64xbf16>, vector<64x16xbf16>, vector<64x16xf32> -> vector<64x16xf32>
    %80 = arith.maximumf %61, %79 : vector<64x16xf32>
    %81 = vector.broadcast %73 : vector<64x1xf32> to vector<64x64xf32>
    %82 = arith.cmpf oeq, %24, %81 : vector<64x64xf32>
    %cst_29 = arith.constant 0x7F800000 : f32
    %83 = vector.broadcast %cst_29 : f32 to vector<64x64xf32>
    %84 = arith.select %82, %83, %65 : vector<64x64xi1>, vector<64x64xf32>
    %cst_30 = arith.constant dense<0x7F800000> : vector<64xf32>
    %85 = vector.multi_reduction <minimumf>, %84, %cst_30 [1] : vector<64x64xf32> to vector<64xf32>
    %86 = vector.shape_cast %85 : vector<64xf32> to vector<64x1xf32>
    %87 = vector.broadcast %86 : vector<64x1xf32> to vector<64x64xf32>
    %88 = arith.cmpf oeq, %84, %87 : vector<64x64xf32>
    %cst_31 = arith.constant 6.400000e+01 : f32
    %89 = vector.broadcast %cst_31 : f32 to vector<64x64xf32>
    %90 = arith.select %88, %24, %89 : vector<64x64xi1>, vector<64x64xf32>
    %cst_32 = arith.constant dense<0x7F800000> : vector<64xf32>
    %91 = vector.multi_reduction <minimumf>, %90, %cst_32 [1] : vector<64x64xf32> to vector<64xf32>
    %92 = vector.shape_cast %91 : vector<64xf32> to vector<64x1xf32>
    %93 = vector.broadcast %92 : vector<64x1xf32> to vector<64x64xf32>
    %94 = arith.cmpf oeq, %24, %93 : vector<64x64xf32>
    %95 = arith.extui %94 : vector<64x64xi1> to vector<64x64xi32>
    %96 = arith.sitofp %95 : vector<64x64xi32> to vector<64x64xf32>
    %97 = arith.truncf %96 : vector<64x64xf32> to vector<64x64xbf16>
    %cst_33 = arith.constant dense<0.000000e+00> : vector<64x16xf32>
    %98 = tpu.matmul %97, %26, %cst_33 {dimension_numbers = #tpu.dot_dimension_numbers<[1], [0], [0], [1], [0, 0, 1, 1], [], []>} : vector<64x64xbf16>, vector<64x16xbf16>, vector<64x16xf32> -> vector<64x16xf32>
    %99 = arith.maximumf %80, %98 : vector<64x16xf32>
    %c0_34 = arith.constant 0 : index
    %c0_35 = arith.constant 0 : index
    %c0_36 = arith.constant 0 : index
    %100 = vector.load %arg5[%c0_34, %c0_35, %c0_36] : memref<1x64x16xf32, #tpu.memory_space<vmem>>, vector<1x64x16xf32>
    %101 = vector.shape_cast %100 : vector<1x64x16xf32> to vector<64x16xf32>
    %102 = arith.addf %101, %99 : vector<64x16xf32>
    %cst_37 = arith.constant 0.000000e+00 : f32
    %103 = vector.broadcast %cst_37 : f32 to vector<64x16xf32>
    %104 = arith.maximumf %102, %103 : vector<64x16xf32>
    %105 = arith.addf %104, %1 : vector<64x16xf32>
    %c0_38 = arith.constant 0 : index
    %c0_39 = arith.constant 0 : index
    %c0_40 = arith.constant 0 : index
    %106 = vector.load %arg7[%c0_38, %c0_39, %c0_40] : memref<1x64x16xf32, #tpu.memory_space<vmem>>, vector<1x64x16xf32>
    %107 = vector.shape_cast %106 : vector<1x64x16xf32> to vector<64x16xf32>
    %108 = vector.shape_cast %105 : vector<64x16xf32> to vector<1x64x16xf32>
    tpu.vector_store %arg7[%c0_38, %c0_39, %c0_40], %108 {strides = array<i32>} : memref<1x64x16xf32, #tpu.memory_space<vmem>>, vector<1x64x16xf32>,
    return
  }
  func.func @transform_0(%arg0: i32, %arg1: i32) -> (i32, i32, i32) {
    %c0_i32 = arith.constant 0 : i32
    %c0_i32_0 = arith.constant 0 : i32
    return %arg0, %arg1, %c0_i32 : i32, i32, i32
  }
  func.func @transform_1(%arg0: i32, %arg1: i32) -> (i32, i32, i32) {
    %c0_i32 = arith.constant 0 : i32
    %c0_i32_0 = arith.constant 0 : i32
    %c0_i32_1 = arith.constant 0 : i32
    return %arg0, %c0_i32, %c0_i32_0 : i32, i32, i32
  }
  func.func @transform_2(%arg0: i32, %arg1: i32) -> (i32, i32, i32) {
    %c0_i32 = arith.constant 0 : i32
    %c0_i32_0 = arith.constant 0 : i32
    %c0_i32_1 = arith.constant 0 : i32
    return %arg0, %c0_i32, %c0_i32_0 : i32, i32, i32
  }
  func.func @transform_3(%arg0: i32, %arg1: i32) -> (i32, i32, i32) {
    %c0_i32 = arith.constant 0 : i32
    %c0_i32_0 = arith.constant 0 : i32
    return %arg0, %arg1, %c0_i32 : i32, i32, i32
  }
  func.func @transform_4(%arg0: i32, %arg1: i32) -> (i32, i32, i32) {
    %c0_i32 = arith.constant 0 : i32
    %c0_i32_0 = arith.constant 0 : i32
    %c0_i32_1 = arith.constant 0 : i32
    return %arg0, %c0_i32, %c0_i32_0 : i32, i32, i32
  }
  func.func @transform_5(%arg0: i32, %arg1: i32) -> (i32, i32, i32) {
    %c0_i32 = arith.constant 0 : i32
    %c0_i32_0 = arith.constant 0 : i32
    return %arg0, %arg1, %c0_i32 : i32, i32, i32
  }
}

module attributes {stable_mosaic.version = 11 : i64} {
  func.func @_fusion_max_kernel(%arg0: i32, %arg1: i32, %arg2: i32, %arg3: memref<1x64x48xf32, #tpu.memory_space<vmem>>, %arg4: memref<48x1024xbf16, #tpu.memory_space<vmem>>, %arg5: memref<1x1024xf32, #tpu.memory_space<vmem>>, %arg6: memref<1x1x1x1024xf32, #tpu.memory_space<vmem>>) attributes {dimension_semantics = [#tpu.dimension_semantics<parallel>, #tpu.dimension_semantics<parallel>, #tpu.dimension_semantics<arbitrary>], iteration_bounds = array<i64: 2, 1, 1>, scalar_prefetch = 0 : i64, scratch_operands = 0 : i64, tpu.core_type = #tpu.core_type<tc>, window_params = [{transform_indices = @transform_0, window_bounds = array<i64: 1, 64, 48>}, {pipeline_mode = #tpu.pipeline_mode<synchronous>, transform_indices = @transform_1, window_bounds = array<i64: 48, 1024>}, {pipeline_mode = #tpu.pipeline_mode<synchronous>, transform_indices = @transform_2, window_bounds = array<i64: 1, 1024>}, {transform_indices = @transform_3, window_bounds = array<i64: 1, 1, 1, 1024>}]} {
    %c0 = arith.constant 0 : index
    %c0_0 = arith.constant 0 : index
    %c0_1 = arith.constant 0 : index
    %0 = vector.load %arg3[%c0, %c0_0, %c0_1] : memref<1x64x48xf32, #tpu.memory_space<vmem>>, vector<1x64x48xf32>
    %1 = vector.shape_cast %0 : vector<1x64x48xf32> to vector<64x48xf32>
    %2 = arith.truncf %1 : vector<64x48xf32> to vector<64x48xbf16>
    %c0_2 = arith.constant 0 : index
    %c0_3 = arith.constant 0 : index
    %3 = vector.load %arg4[%c0_2, %c0_3] : memref<48x1024xbf16, #tpu.memory_space<vmem>>, vector<48x1024xbf16>
    %cst = arith.constant dense<0.000000e+00> : vector<64x1024xf32>
    %4 = tpu.matmul %2, %3, %cst {dimension_numbers = #tpu.dot_dimension_numbers<[1], [0], [0], [1], [0, 0, 1, 1], [], []>} : vector<64x48xbf16>, vector<48x1024xbf16>, vector<64x1024xf32> -> vector<64x1024xf32>
    %c0_4 = arith.constant 0 : index
    %c0_5 = arith.constant 0 : index
    %5 = vector.load %arg5[%c0_4, %c0_5] : memref<1x1024xf32, #tpu.memory_space<vmem>>, vector<1x1024xf32>
    %6 = vector.broadcast %5 : vector<1x1024xf32> to vector<64x1024xf32>
    %7 = arith.addf %4, %6 : vector<64x1024xf32>
    %cst_6 = arith.constant 0.000000e+00 : f32
    %8 = vector.broadcast %cst_6 : f32 to vector<64x1024xf32>
    %9 = arith.maximumf %7, %8 : vector<64x1024xf32>
    %cst_7 = arith.constant dense<0xFF800000> : vector<1024xf32>
    %10 = vector.multi_reduction <maximumf>, %9, %cst_7 [0] : vector<64x1024xf32> to vector<1024xf32>
    %11 = vector.shape_cast %10 : vector<1024xf32> to vector<1x1024xf32>
    %c0_i32 = arith.constant 0 : i32
    %12 = arith.cmpi eq, %arg2, %c0_i32 : i32
    %13 = arith.extui %12 : i1 to i32
    %c0_i32_8 = arith.constant 0 : i32
    %14 = arith.cmpi ne, %13, %c0_i32_8 : i32
    scf.if %14 {
      %cst_17 = arith.constant 0xFF800000 : f32
      %21 = vector.broadcast %cst_17 : f32 to vector<1x1x1x1024xf32>
      %c0_18 = arith.constant 0 : index
      %c0_19 = arith.constant 0 : index
      %c0_20 = arith.constant 0 : index
      %c0_21 = arith.constant 0 : index
      %22 = vector.load %arg6[%c0_18, %c0_19, %c0_20, %c0_21] : memref<1x1x1x1024xf32, #tpu.memory_space<vmem>>, vector<1x1x1x1024xf32>
      tpu.vector_store %arg6[%c0_18, %c0_19, %c0_20, %c0_21], %21 {strides = array<i32>} : memref<1x1x1x1024xf32, #tpu.memory_space<vmem>>, vector<1x1x1x1024xf32>,
    } else {
    }
    %c0_9 = arith.constant 0 : index
    %c0_10 = arith.constant 0 : index
    %c0_11 = arith.constant 0 : index
    %c0_12 = arith.constant 0 : index
    %15 = vector.load %arg6[%c0_9, %c0_10, %c0_11, %c0_12] : memref<1x1x1x1024xf32, #tpu.memory_space<vmem>>, vector<1x1x1x1024xf32>
    %16 = vector.shape_cast %15 : vector<1x1x1x1024xf32> to vector<1x1024xf32>
    %17 = arith.maximumf %16, %11 : vector<1x1024xf32>
    %c0_13 = arith.constant 0 : index
    %c0_14 = arith.constant 0 : index
    %c0_15 = arith.constant 0 : index
    %c0_16 = arith.constant 0 : index
    %18 = vector.load %arg6[%c0_13, %c0_14, %c0_15, %c0_16] : memref<1x1x1x1024xf32, #tpu.memory_space<vmem>>, vector<1x1x1x1024xf32>
    %19 = vector.shape_cast %18 : vector<1x1x1x1024xf32> to vector<1x1024xf32>
    %20 = vector.shape_cast %17 : vector<1x1024xf32> to vector<1x1x1x1024xf32>
    tpu.vector_store %arg6[%c0_13, %c0_14, %c0_15, %c0_16], %20 {strides = array<i32>} : memref<1x1x1x1024xf32, #tpu.memory_space<vmem>>, vector<1x1x1x1024xf32>,
    return
  }
  func.func @transform_0(%arg0: i32, %arg1: i32, %arg2: i32) -> (i32, i32, i32) {
    %c1_i32 = arith.constant 1 : i32
    %0 = arith.muli %arg1, %c1_i32 : i32
    %1 = arith.addi %0, %arg2 : i32
    %c0_i32 = arith.constant 0 : i32
    %c0_i32_0 = arith.constant 0 : i32
    return %arg0, %1, %c0_i32 : i32, i32, i32
  }
  func.func @transform_1(%arg0: i32, %arg1: i32, %arg2: i32) -> (i32, i32) {
    %c0_i32 = arith.constant 0 : i32
    %c0_i32_0 = arith.constant 0 : i32
    %c0_i32_1 = arith.constant 0 : i32
    return %c0_i32, %c0_i32_0 : i32, i32
  }
  func.func @transform_2(%arg0: i32, %arg1: i32, %arg2: i32) -> (i32, i32) {
    %c0_i32 = arith.constant 0 : i32
    %c0_i32_0 = arith.constant 0 : i32
    %c0_i32_1 = arith.constant 0 : i32
    return %c0_i32, %c0_i32_0 : i32, i32
  }
  func.func @transform_3(%arg0: i32, %arg1: i32, %arg2: i32) -> (i32, i32, i32, i32) {
    %c0_i32 = arith.constant 0 : i32
    %c0_i32_0 = arith.constant 0 : i32
    %c0_i32_1 = arith.constant 0 : i32
    return %arg1, %arg0, %c0_i32, %c0_i32_0 : i32, i32, i32, i32
  }
}

module attributes {stable_mosaic.version = 11 : i64} {
  func.func @_pred_kernel(%arg0: i32, %arg1: i32, %arg2: memref<1x1x512xf32, #tpu.memory_space<vmem>>, %arg3: memref<1x64x48xf32, #tpu.memory_space<vmem>>, %arg4: memref<48x512xbf16, #tpu.memory_space<vmem>>, %arg5: memref<512x256xbf16, #tpu.memory_space<vmem>>, %arg6: memref<1x256xf32, #tpu.memory_space<vmem>>, %arg7: memref<256x128xbf16, #tpu.memory_space<vmem>>, %arg8: memref<1x128xf32, #tpu.memory_space<vmem>>, %arg9: memref<1x64x128xf32, #tpu.memory_space<vmem>>) attributes {dimension_semantics = [#tpu.dimension_semantics<parallel>, #tpu.dimension_semantics<parallel>], iteration_bounds = array<i64: 2, 1>, scalar_prefetch = 0 : i64, scratch_operands = 0 : i64, tpu.core_type = #tpu.core_type<tc>, window_params = [{transform_indices = @transform_0, window_bounds = array<i64: 1, 1, 512>}, {transform_indices = @transform_1, window_bounds = array<i64: 1, 64, 48>}, {pipeline_mode = #tpu.pipeline_mode<synchronous>, transform_indices = @transform_2, window_bounds = array<i64: 48, 512>}, {pipeline_mode = #tpu.pipeline_mode<synchronous>, transform_indices = @transform_3, window_bounds = array<i64: 512, 256>}, {pipeline_mode = #tpu.pipeline_mode<synchronous>, transform_indices = @transform_4, window_bounds = array<i64: 1, 256>}, {pipeline_mode = #tpu.pipeline_mode<synchronous>, transform_indices = @transform_5, window_bounds = array<i64: 256, 128>}, {pipeline_mode = #tpu.pipeline_mode<synchronous>, transform_indices = @transform_6, window_bounds = array<i64: 1, 128>}, {transform_indices = @transform_7, window_bounds = array<i64: 1, 64, 128>}]} {
    %c0 = arith.constant 0 : index
    %c0_0 = arith.constant 0 : index
    %c0_1 = arith.constant 0 : index
    %0 = vector.load %arg2[%c0, %c0_0, %c0_1] : memref<1x1x512xf32, #tpu.memory_space<vmem>>, vector<1x1x512xf32>
    %1 = vector.shape_cast %0 : vector<1x1x512xf32> to vector<1x512xf32>
    %c0_2 = arith.constant 0 : index
    %c0_3 = arith.constant 0 : index
    %c0_4 = arith.constant 0 : index
    %2 = vector.load %arg3[%c0_2, %c0_3, %c0_4] : memref<1x64x48xf32, #tpu.memory_space<vmem>>, vector<1x64x48xf32>
    %3 = vector.shape_cast %2 : vector<1x64x48xf32> to vector<64x48xf32>
    %4 = arith.truncf %3 : vector<64x48xf32> to vector<64x48xbf16>
    %c0_5 = arith.constant 0 : index
    %c0_6 = arith.constant 0 : index
    %5 = vector.load %arg4[%c0_5, %c0_6] : memref<48x512xbf16, #tpu.memory_space<vmem>>, vector<48x512xbf16>
    %cst = arith.constant dense<0.000000e+00> : vector<64x512xf32>
    %6 = tpu.matmul %4, %5, %cst {dimension_numbers = #tpu.dot_dimension_numbers<[1], [0], [0], [1], [0, 0, 1, 1], [], []>} : vector<64x48xbf16>, vector<48x512xbf16>, vector<64x512xf32> -> vector<64x512xf32>
    %7 = vector.broadcast %1 : vector<1x512xf32> to vector<64x512xf32>
    %8 = arith.addf %7, %6 : vector<64x512xf32>
    %cst_7 = arith.constant 0.000000e+00 : f32
    %9 = vector.broadcast %cst_7 : f32 to vector<64x512xf32>
    %10 = arith.maximumf %8, %9 : vector<64x512xf32>
    %11 = arith.truncf %10 : vector<64x512xf32> to vector<64x512xbf16>
    %c0_8 = arith.constant 0 : index
    %c0_9 = arith.constant 0 : index
    %12 = vector.load %arg5[%c0_8, %c0_9] : memref<512x256xbf16, #tpu.memory_space<vmem>>, vector<512x256xbf16>
    %cst_10 = arith.constant dense<0.000000e+00> : vector<64x256xf32>
    %13 = tpu.matmul %11, %12, %cst_10 {dimension_numbers = #tpu.dot_dimension_numbers<[1], [0], [0], [1], [0, 0, 1, 1], [], []>} : vector<64x512xbf16>, vector<512x256xbf16>, vector<64x256xf32> -> vector<64x256xf32>
    %c0_11 = arith.constant 0 : index
    %c0_12 = arith.constant 0 : index
    %14 = vector.load %arg6[%c0_11, %c0_12] : memref<1x256xf32, #tpu.memory_space<vmem>>, vector<1x256xf32>
    %15 = vector.broadcast %14 : vector<1x256xf32> to vector<64x256xf32>
    %16 = arith.addf %13, %15 : vector<64x256xf32>
    %cst_13 = arith.constant 0.000000e+00 : f32
    %17 = vector.broadcast %cst_13 : f32 to vector<64x256xf32>
    %18 = arith.maximumf %16, %17 : vector<64x256xf32>
    %19 = arith.truncf %18 : vector<64x256xf32> to vector<64x256xbf16>
    %c0_14 = arith.constant 0 : index
    %c0_15 = arith.constant 0 : index
    %20 = vector.load %arg7[%c0_14, %c0_15] : memref<256x128xbf16, #tpu.memory_space<vmem>>, vector<256x128xbf16>
    %cst_16 = arith.constant dense<0.000000e+00> : vector<64x128xf32>
    %21 = tpu.matmul %19, %20, %cst_16 {dimension_numbers = #tpu.dot_dimension_numbers<[1], [0], [0], [1], [0, 0, 1, 1], [], []>} : vector<64x256xbf16>, vector<256x128xbf16>, vector<64x128xf32> -> vector<64x128xf32>
    %c0_17 = arith.constant 0 : index
    %c0_18 = arith.constant 0 : index
    %22 = vector.load %arg8[%c0_17, %c0_18] : memref<1x128xf32, #tpu.memory_space<vmem>>, vector<1x128xf32>
    %23 = vector.broadcast %22 : vector<1x128xf32> to vector<64x128xf32>
    %24 = arith.addf %21, %23 : vector<64x128xf32>
    %c0_19 = arith.constant 0 : index
    %c0_20 = arith.constant 0 : index
    %c0_21 = arith.constant 0 : index
    %25 = vector.load %arg9[%c0_19, %c0_20, %c0_21] : memref<1x64x128xf32, #tpu.memory_space<vmem>>, vector<1x64x128xf32>
    %26 = vector.shape_cast %25 : vector<1x64x128xf32> to vector<64x128xf32>
    %27 = vector.shape_cast %24 : vector<64x128xf32> to vector<1x64x128xf32>
    tpu.vector_store %arg9[%c0_19, %c0_20, %c0_21], %27 {strides = array<i32>} : memref<1x64x128xf32, #tpu.memory_space<vmem>>, vector<1x64x128xf32>,
    return
  }
  func.func @transform_0(%arg0: i32, %arg1: i32) -> (i32, i32, i32) {
    %c0_i32 = arith.constant 0 : i32
    %c0_i32_0 = arith.constant 0 : i32
    %c0_i32_1 = arith.constant 0 : i32
    return %arg0, %c0_i32, %c0_i32_0 : i32, i32, i32
  }
  func.func @transform_1(%arg0: i32, %arg1: i32) -> (i32, i32, i32) {
    %c0_i32 = arith.constant 0 : i32
    %c0_i32_0 = arith.constant 0 : i32
    return %arg0, %arg1, %c0_i32 : i32, i32, i32
  }
  func.func @transform_2(%arg0: i32, %arg1: i32) -> (i32, i32) {
    %c0_i32 = arith.constant 0 : i32
    %c0_i32_0 = arith.constant 0 : i32
    %c0_i32_1 = arith.constant 0 : i32
    return %c0_i32, %c0_i32_0 : i32, i32
  }
  func.func @transform_3(%arg0: i32, %arg1: i32) -> (i32, i32) {
    %c0_i32 = arith.constant 0 : i32
    %c0_i32_0 = arith.constant 0 : i32
    %c0_i32_1 = arith.constant 0 : i32
    return %c0_i32, %c0_i32_0 : i32, i32
  }
  func.func @transform_4(%arg0: i32, %arg1: i32) -> (i32, i32) {
    %c0_i32 = arith.constant 0 : i32
    %c0_i32_0 = arith.constant 0 : i32
    %c0_i32_1 = arith.constant 0 : i32
    return %c0_i32, %c0_i32_0 : i32, i32
  }
  func.func @transform_5(%arg0: i32, %arg1: i32) -> (i32, i32) {
    %c0_i32 = arith.constant 0 : i32
    %c0_i32_0 = arith.constant 0 : i32
    %c0_i32_1 = arith.constant 0 : i32
    return %c0_i32, %c0_i32_0 : i32, i32
  }
  func.func @transform_6(%arg0: i32, %arg1: i32) -> (i32, i32) {
    %c0_i32 = arith.constant 0 : i32
    %c0_i32_0 = arith.constant 0 : i32
    %c0_i32_1 = arith.constant 0 : i32
    return %c0_i32, %c0_i32_0 : i32, i32
  }
  func.func @transform_7(%arg0: i32, %arg1: i32) -> (i32, i32, i32) {
    %c0_i32 = arith.constant 0 : i32
    %c0_i32_0 = arith.constant 0 : i32
    return %arg0, %arg1, %c0_i32 : i32, i32, i32
  }
}

</mosaic_0001>

<llo_original>
// kernel: sparse_deepgcn_forward.5
$region0: #{sparse_deepgcn_forward.5}
  #allocation0 [shape = 'u32[]', space=smem, size = 0x4, offset = 0x4, fixed_abs, tag = 'smem constant byte address 0x4 - core index']
  #allocation1 [shape = 'u32[144,128]{1,0:T(1,128)}', space=vmem, size = 0x12000, scoped, tag = 'internal scratch']
  %s0 = inlined_call_operand.vmem [shape: f32[2,64,3], index: 0, kind: input, shape index: {}, may-alias: {0,1}]
  %s1 = inlined_call_operand.vmem [shape: f32[2,64,3], index: 1, kind: input, shape index: {}, may-alias: {0,1}]
  %s2 = inlined_call_operand.vmem [shape: f32[2,1,64], index: 2, kind: input, shape index: {}]
  %s3 = inlined_call_operand.vmem [shape: f32[2,64,16], index: 3, kind: input, shape index: {}]
  %s4 = inlined_call_operand.vmem [shape: bf16[2,64,16], index: 4, kind: input, shape index: {}]
  %s5 = inlined_call_operand.vmem [shape: f32[2,64,16], index: 5, kind: output, shape index: {}]
  %s6 = sld [smem:[#allocation0]]
  $region53: #{sparse_deepgcn_forward.5} parent=0
    _
  %s8 = ssub.s32 1, %s6
  %s9 = scalar_select 0, %s8, %s6
  loop: start=0, step=1, limit=4
  $region2: #{sparse_deepgcn_forward.5} parent=0 // loop_pre_header
    _
  $region3: #{sparse_deepgcn_forward.5} parent=0 // loop_header
    %s11 = sphi 0, %s15
    %p12 = scmp.ge.s32.totalorder %s11, 4
    %s18 = sphi 0, %s30
    %s19 = sphi 0, %s26
    %s20 = sphi 0, %s18
    %s21 = sphi 0, %s19
    %s22 = sphi 0, %s20
    %s23 = sphi 0, %s21
    %s35 = sphi 0, %s37
    %s38 = sphi 0, %s35
    %s39 = sphi 0, %s38
    %s55 = sphi 0, %s39
    %s61 = sphi 0, %s63
    %s64 = sphi 0, %s61
    %s65 = sphi 0, %s64
    %s81 = sphi 0, %s65
    %s87 = sphi 0, %s89
    %s90 = sphi 0, %s87
    %s91 = sphi 0, %s90
    %s107 = sphi 0, %s91
    %s115 = sphi 0, %s117
    %s118 = sphi 0, %s115
    %s119 = sphi 0, %s118
    %s135 = sphi 0, %s119
    %s141 = sphi 0, %s143
    %s144 = sphi 0, %s141
    %s145 = sphi 0, %s144
    %s161 = sphi 0, %s145
    %s169 = sphi 0, %s171
    %s172 = sphi 0, %s169
    %s173 = sphi 0, %s172
    %s189 = sphi 0, %s173
  $region4: #{sparse_deepgcn_forward.5} parent=0 // loop_header_branch
    %14 = sbr.rel (%p12) target = $region8
  $region5: #{sparse_deepgcn_forward.5} parent=0 // loop_body
    %s16 = ssub.s32 %s11, 1
    %s17 = ssub.s32 %s11, 2
    %s24 = sadd.s32 1, %s19
    %p25 = scmp.ge.s32.totalorder %s24, 1
    %s26 = scalar_select %p25, 0, %s24
    %s27 = sadd.s32 1, %s18
    %s28 = scalar_select %p25, %s27, %s18
    %p29 = scmp.ge.s32.totalorder %s28, 2
    %s30 = scalar_select %p29, 0, %s28
    %s31 = ssub.s32 %s18, %s30
    %s32 = ssub.s32 %s19, %s26
    %s33 = sor.u32 %s31, %s32
    %p34 = scmp.eq.s32.totalorder %s33, 0
    %s36 = sadd.s32 %s35, 1
    %s37 = scalar_select %p34, %s35, %s36
    %p40 = pneg %p34
    %p41 = scmp.eq.s32.totalorder %s11, 1
    %p42 = por %p40, %p41
    %p43 = scmp.ne.s32.totalorder %s35, %s38
    %p44 = scmp.eq.s32.totalorder %s11, 0
    %p45 = por %p43, %p44
    %p46 = scmp.ne.s32.totalorder %s35, %s38
    %p47 = scmp.eq.s32.totalorder %s16, 1
    %p48 = por %p46, %p47
    %p49 = scmp.ne.s32.totalorder %s38, %s39
    %p50 = scmp.eq.s32.totalorder %s16, 0
    %p51 = por %p49, %p50
    %p52 = scmp.ne.s32.totalorder %s38, %s39
    %p53 = scmp.eq.s32.totalorder %s17, 1
    %p54 = por %p52, %p53
    %p56 = scmp.ne.s32.totalorder %s39, %s55
    %p57 = scmp.eq.s32.totalorder %s17, 0
    %p58 = por %p56, %p57
    %s59 = ssub.s32 %s18, %s30
    %p60 = scmp.eq.s32.totalorder %s59, 0
    %s62 = sadd.s32 %s61, 1
    %s63 = scalar_select %p60, %s61, %s62
    %p66 = pneg %p60
    %p67 = scmp.eq.s32.totalorder %s11, 1
    %p68 = por %p66, %p67
    %p69 = scmp.ne.s32.totalorder %s61, %s64
    %p70 = scmp.eq.s32.totalorder %s11, 0
    %p71 = por %p69, %p70
    %p72 = scmp.ne.s32.totalorder %s61, %s64
    %p73 = scmp.eq.s32.totalorder %s16, 1
    %p74 = por %p72, %p73
    %p75 = scmp.ne.s32.totalorder %s64, %s65
    %p76 = scmp.eq.s32.totalorder %s16, 0
    %p77 = por %p75, %p76
    %p78 = scmp.ne.s32.totalorder %s64, %s65
    %p79 = scmp.eq.s32.totalorder %s17, 1
    %p80 = por %p78, %p79
    %p82 = scmp.ne.s32.totalorder %s65, %s81
    %p83 = scmp.eq.s32.totalorder %s17, 0
    %p84 = por %p82, %p83
    %s85 = ssub.s32 %s18, %s30
    %p86 = scmp.eq.s32.totalorder %s85, 0
    %s88 = sadd.s32 %s87, 1
    %s89 = scalar_select %p86, %s87, %s88
    %p92 = pneg %p86
    %p93 = scmp.eq.s32.totalorder %s11, 1
    %p94 = por %p92, %p93
    %p95 = scmp.ne.s32.totalorder %s87, %s90
    %p96 = scmp.eq.s32.totalorder %s11, 0
    %p97 = por %p95, %p96
    %p98 = scmp.ne.s32.totalorder %s87, %s90
    %p99 = scmp.eq.s32.totalorder %s16, 1
    %p100 = por %p98, %p99
    %p101 = scmp.ne.s32.totalorder %s90, %s91
    %p102 = scmp.eq.s32.totalorder %s16, 0
    %p103 = por %p101, %p102
    %p104 = scmp.ne.s32.totalorder %s90, %s91
    %p105 = scmp.eq.s32.totalorder %s17, 1
    %p106 = por %p104, %p105
    %p108 = scmp.ne.s32.totalorder %s91, %s107
    %p109 = scmp.eq.s32.totalorder %s17, 0
    %p110 = por %p108, %p109
    %s111 = ssub.s32 %s18, %s30
    %s112 = ssub.s32 %s19, %s26
    %s113 = sor.u32 %s111, %s112
    %p114 = scmp.eq.s32.totalorder %s113, 0
    %s116 = sadd.s32 %s115, 1
    %s117 = scalar_select %p114, %s115, %s116
    %p120 = pneg %p114
    %p121 = scmp.eq.s32.totalorder %s11, 1
    %p122 = por %p120, %p121
    %p123 = scmp.ne.s32.totalorder %s115, %s118
    %p124 = scmp.eq.s32.totalorder %s11, 0
    %p125 = por %p123, %p124
    %p126 = scmp.ne.s32.totalorder %s115, %s118
    %p127 = scmp.eq.s32.totalorder %s16, 1
    %p128 = por %p126, %p127
    %p129 = scmp.ne.s32.totalorder %s118, %s119
    %p130 = scmp.eq.s32.totalorder %s16, 0
    %p131 = por %p129, %p130
    %p132 = scmp.ne.s32.totalorder %s118, %s119
    %p133 = scmp.eq.s32.totalorder %s17, 1
    %p134 = por %p132, %p133
    %p136 = scmp.ne.s32.totalorder %s119, %s135
    %p137 = scmp.eq.s32.totalorder %s17, 0
    %p138 = por %p136, %p137
    %s139 = ssub.s32 %s18, %s30
    %p140 = scmp.eq.s32.totalorder %s139, 0
    %s142 = sadd.s32 %s141, 1
    %s143 = scalar_select %p140, %s141, %s142
    %p146 = pneg %p140
    %p147 = scmp.eq.s32.totalorder %s11, 1
    %p148 = por %p146, %p147
    %p149 = scmp.ne.s32.totalorder %s141, %s144
    %p150 = scmp.eq.s32.totalorder %s11, 0
    %p151 = por %p149, %p150
    %p152 = scmp.ne.s32.totalorder %s141, %s144
    %p153 = scmp.eq.s32.totalorder %s16, 1
    %p154 = por %p152, %p153
    %p155 = scmp.ne.s32.totalorder %s144, %s145
    %p156 = scmp.eq.s32.totalorder %s16, 0
    %p157 = por %p155, %p156
    %p158 = scmp.ne.s32.totalorder %s144, %s145
    %p159 = scmp.eq.s32.totalorder %s17, 1
    %p160 = por %p158, %p159
    %p162 = scmp.ne.s32.totalorder %s145, %s161
    %p163 = scmp.eq.s32.totalorder %s17, 0
    %p164 = por %p162, %p163
    %s165 = ssub.s32 %s18, %s30
    %s166 = ssub.s32 %s19, %s26
    %s167 = sor.u32 %s165, %s166
    %p168 = scmp.eq.s32.totalorder %s167, 0
    %s170 = sadd.s32 %s169, 1
    %s171 = scalar_select %p168, %s169, %s170
    %p174 = pneg %p168
    %p175 = scmp.eq.s32.totalorder %s11, 1
    %p176 = por %p174, %p175
    %p177 = scmp.ne.s32.totalorder %s169, %s172
    %p178 = scmp.eq.s32.totalorder %s11, 0
    %p179 = por %p177, %p178
    %p180 = scmp.ne.s32.totalorder %s169, %s172
    %p181 = scmp.eq.s32.totalorder %s16, 1
    %p182 = por %p180, %p181
    %p183 = scmp.ne.s32.totalorder %s172, %s173
    %p184 = scmp.eq.s32.totalorder %s16, 0
    %p185 = por %p183, %p184
    %p186 = scmp.ne.s32.totalorder %s172, %s173
    %p187 = scmp.eq.s32.totalorder %s17, 1
    %p188 = por %p186, %p187
    %p190 = scmp.ne.s32.totalorder %s173, %s189
    %p191 = scmp.eq.s32.totalorder %s17, 0
    %p192 = por %p190, %p191
    %p193 = scmp.le.s32.totalorder 1, %s11
    %p194 = scmp.lt.s32.totalorder %s11, 3
    %p195 = pnand %p193, %p194
    %p196 = pneg %p195
    // Predicated region
    $region9: #{sparse_deepgcn_forward.5} parent=5 // pred_check
      _
    $region10: #{sparse_deepgcn_forward.5} parent=5 // pred_check_branch
      %198 = sbr.rel (%p195) target = $region12
    $region11: #{sparse_deepgcn_forward.5} parent=5 // pred_region
      %s199 = ssub.s32 %s11, 1
    $region12: #{sparse_deepgcn_forward.5} parent=5 // pred_fallthru
      _
    %p200 = scmp.lt.s32.totalorder %s11, 2
    // Predicated region
    $region13: #{sparse_deepgcn_forward.5} parent=5 // pred_check
      %p201 = pneg %p200
    $region14: #{sparse_deepgcn_forward.5} parent=5 // pred_check_branch
      %203 = sbr.rel (%p201) target = $region16
    $region15: #{sparse_deepgcn_forward.5} parent=5 // pred_region
      // Predicated region
      $region17: #{sparse_deepgcn_forward.5} parent=15 // pred_check
        %p204 = pneg %p45
      $region18: #{sparse_deepgcn_forward.5} parent=15 // pred_check_branch
        %206 = sbr.rel (%p204) target = $region20
      $region19: #{sparse_deepgcn_forward.5} parent=15 // pred_region
        %s207 = smul.u32 8, %s19
        %p208 = scmp.lt.s32.totalorder %s18, 1
        %s209 = scalar_select %p208, %s18, 1
        %p210 = scmp.lt.s32.totalorder %s207, 7
        %s211 = scalar_select %p210, %s207, 7
        %s212 = smul.addr %s209, 8
        %s213 = sadd.s32 %s211, %s212
        %s214 = smul.addr %s213, 8
        %s215 = scalar_lea.vmem %s0, %s214
        %s216 = smul.u32 8, %s19
      $region20: #{sparse_deepgcn_forward.5} parent=15 // pred_fallthru
        _
      // Predicated region
      $region21: #{sparse_deepgcn_forward.5} parent=15 // pred_check
        %p217 = pneg %p71
      $region22: #{sparse_deepgcn_forward.5} parent=15 // pred_check_branch
        %219 = sbr.rel (%p217) target = $region24
      $region23: #{sparse_deepgcn_forward.5} parent=15 // pred_region
        %p220 = scmp.lt.s32.totalorder %s18, 1
        %s221 = scalar_select %p220, %s18, 1
        %s222 = smul.addr %s221, 8
        %s223 = smul.addr %s222, 8
        %s224 = scalar_lea.vmem %s1, %s223
      $region24: #{sparse_deepgcn_forward.5} parent=15 // pred_fallthru
        _
      // Predicated region
      $region25: #{sparse_deepgcn_forward.5} parent=15 // pred_check
        %p225 = pneg %p97
      $region26: #{sparse_deepgcn_forward.5} parent=15 // pred_check_branch
        %227 = sbr.rel (%p225) target = $region28
      $region27: #{sparse_deepgcn_forward.5} parent=15 // pred_region
        %p228 = scmp.lt.s32.totalorder %s18, 1
        %s229 = scalar_select %p228, %s18, 1
        %s230 = scalar_lea.vmem %s2, %s229
      $region28: #{sparse_deepgcn_forward.5} parent=15 // pred_fallthru
        _
      // Predicated region
      $region29: #{sparse_deepgcn_forward.5} parent=15 // pred_check
        %p231 = pneg %p125
      $region30: #{sparse_deepgcn_forward.5} parent=15 // pred_check_branch
        %233 = sbr.rel (%p231) target = $region32
      $region31: #{sparse_deepgcn_forward.5} parent=15 // pred_region
        %s234 = smul.u32 8, %s19
        %p235 = scmp.lt.s32.totalorder %s18, 1
        %s236 = scalar_select %p235, %s18, 1
        %p237 = scmp.lt.s32.totalorder %s234, 7
        %s238 = scalar_select %p237, %s234, 7
        %s239 = smul.addr %s236, 8
        %s240 = sadd.s32 %s238, %s239
        %s241 = smul.addr %s240, 8
        %s242 = scalar_lea.vmem %s3, %s241
        %s243 = smul.u32 8, %s19
      $region32: #{sparse_deepgcn_forward.5} parent=15 // pred_fallthru
        _
      // Predicated region
      $region33: #{sparse_deepgcn_forward.5} parent=15 // pred_check
        %p244 = pneg %p151
      $region34: #{sparse_deepgcn_forward.5} parent=15 // pred_check_branch
        %246 = sbr.rel (%p244) target = $region36
      $region35: #{sparse_deepgcn_forward.5} parent=15 // pred_region
        %p247 = scmp.lt.s32.totalorder %s18, 1
        %s248 = scalar_select %p247, %s18, 1
        %s249 = smul.addr %s248, 8
        %s250 = smul.addr %s249, 4
        %s251 = scalar_lea.vmem %s4, %s250
      $region36: #{sparse_deepgcn_forward.5} parent=15 // pred_fallthru
        _
    $region16: #{sparse_deepgcn_forward.5} parent=5 // pred_fallthru
      _
    %p252 = scmp.le.s32.totalorder 1, %s11
    %p253 = scmp.lt.s32.totalorder %s11, 3
    %p254 = pnand %p252, %p253
    %p255 = pneg %p254
    // Predicated region
    $region37: #{sparse_deepgcn_forward.5} parent=5 // pred_check
      _
    $region38: #{sparse_deepgcn_forward.5} parent=5 // pred_check_branch
      %257 = sbr.rel (%p254) target = $region40
    $region39: #{sparse_deepgcn_forward.5} parent=5 // pred_region
      %s258 = ssub.s32 %s11, 1
      %s259 = smul.u32 8, %s21
      %p260 = scmp.lt.s32.totalorder %s20, 1
      %s261 = scalar_select %p260, %s20, 1
      %p262 = scmp.lt.s32.totalorder %s259, 7
      %s263 = scalar_select %p262, %s259, 7
      %s264 = smul.addr %s261, 8
      %s265 = sadd.s32 %s263, %s264
      %s266 = smul.addr %s265, 8
      %s267 = scalar_lea.vmem %s0, %s266
      %p268 = pneg %p51
      %p269 = pneg %p48
      %p270 = scmp.lt.s32.totalorder %s20, 1
      %s271 = scalar_select %p270, %s20, 1
      %s272 = smul.addr %s271, 8
      %s273 = smul.addr %s272, 8
      %s274 = scalar_lea.vmem %s1, %s273
      %p275 = pneg %p77
      %p276 = pneg %p74
      %p277 = scmp.lt.s32.totalorder %s20, 1
      %s278 = scalar_select %p277, %s20, 1
      %s279 = scalar_lea.vmem %s2, %s278
      %p280 = pneg %p103
      %p281 = pneg %p100
      %s282 = smul.u32 8, %s21
      %p283 = scmp.lt.s32.totalorder %s20, 1
      %s284 = scalar_select %p283, %s20, 1
      %p285 = scmp.lt.s32.totalorder %s282, 7
      %s286 = scalar_select %p285, %s282, 7
      %s287 = smul.addr %s284, 8
      %s288 = sadd.s32 %s286, %s287
      %s289 = smul.addr %s288, 8
      %s290 = scalar_lea.vmem %s3, %s289
      %p291 = pneg %p131
      %p292 = pneg %p128
      %p293 = scmp.lt.s32.totalorder %s20, 1
      %s294 = scalar_select %p293, %s20, 1
      %s295 = smul.addr %s294, 8
      %s296 = smul.addr %s295, 4
      %s297 = scalar_lea.vmem %s4, %s296
      %p298 = pneg %p157
      %p299 = pneg %p154
      %p300 = pneg %p185
      %p301 = pneg %p182
      %s302 = smul.u32 8, %s21
      %p303 = scmp.lt.s32.totalorder %s20, 1
      %s304 = scalar_select %p303, %s20, 1
      %p305 = scmp.lt.s32.totalorder %s302, 7
      %s306 = scalar_select %p305, %s302, 7
      %s307 = smul.addr %s304, 8
      %s308 = sadd.s32 %s306, %s307
      %s309 = smul.addr %s308, 8
      %s310 = scalar_lea.vmem %s5, %s309
      %s311 = smul.u32 8, %s21
      %p312 = scmp.lt.s32.totalorder %s20, 1
      %s313 = scalar_select %p312, %s20, 1
      %p314 = scmp.lt.s32.totalorder %s311, 7
      %s315 = scalar_select %p314, %s311, 7
      %s316 = smul.addr %s313, 8
      %s317 = sadd.s32 %s315, %s316
      %s318 = smul.addr %s317, 8
      %s319 = scalar_lea.vmem %s0, %s318
      %s320 = smul.u32 8, %s21
      %p321 = scmp.lt.s32.totalorder %s20, 1
      %s322 = scalar_select %p321, %s20, 1
      %s323 = smul.addr %s322, 8
      %s324 = smul.addr %s323, 8
      %s325 = scalar_lea.vmem %s1, %s324
      %p326 = scmp.lt.s32.totalorder %s20, 1
      %s327 = scalar_select %p326, %s20, 1
      %s328 = scalar_lea.vmem %s2, %s327
      %s329 = smul.u32 8, %s21
      %p330 = scmp.lt.s32.totalorder %s20, 1
      %s331 = scalar_select %p330, %s20, 1
      %p332 = scmp.lt.s32.totalorder %s329, 7
      %s333 = scalar_select %p332, %s329, 7
      %s334 = smul.addr %s331, 8
      %s335 = sadd.s32 %s333, %s334
      %s336 = smul.addr %s335, 8
      %s337 = scalar_lea.vmem %s3, %s336
      %s338 = smul.u32 8, %s21
      %p339 = scmp.lt.s32.totalorder %s20, 1
      %s340 = scalar_select %p339, %s20, 1
      %s341 = smul.addr %s340, 8
      %s342 = smul.addr %s341, 4
      %s343 = scalar_lea.vmem %s4, %s342
      %s344 = smul.u32 8, %s21
      %p345 = scmp.lt.s32.totalorder %s20, 1
      %s346 = scalar_select %p345, %s20, 1
      %p347 = scmp.lt.s32.totalorder %s344, 7
      %s348 = scalar_select %p347, %s344, 7
      %s349 = smul.addr %s346, 8
      %s350 = sadd.s32 %s348, %s349
      %s351 = smul.addr %s350, 8
      %s352 = scalar_lea.vmem %s5, %s351
      %s353 = smul.u32 8, %s21
      %v355 = vld [vmem:[%s319] sm:$0xff]
      %v356 = vld [vmem:[%s319 + $0x8] sm:$0xff]
      %v357 = vld [vmem:[%s319 + $0x10] sm:$0xff]
      %v358 = vld [vmem:[%s319 + $0x18] sm:$0xff]
      %v359 = vld [vmem:[%s319 + $0x20] sm:$0xff]
      %v360 = vld [vmem:[%s319 + $0x28] sm:$0xff]
      %v361 = vld [vmem:[%s319 + $0x30] sm:$0xff]
      %v362 = vld [vmem:[%s319 + $0x38] sm:$0xff]
      %v363 = vld [vmem:[%s325] sm:$0xff]
      %v364 = vld [vmem:[%s325 + $0x8] sm:$0xff]
      %v365 = vld [vmem:[%s325 + $0x10] sm:$0xff]
      %v366 = vld [vmem:[%s325 + $0x18] sm:$0xff]
      %v367 = vld [vmem:[%s325 + $0x20] sm:$0xff]
      %v368 = vld [vmem:[%s325 + $0x28] sm:$0xff]
      %v369 = vld [vmem:[%s325 + $0x30] sm:$0xff]
      %v370 = vld [vmem:[%s325 + $0x38] sm:$0xff]
      %v371 = vmul.f32 %v355, %v355
      %v372 = vmul.f32 %v356, %v356
      %v373 = vmul.f32 %v357, %v357
      %v374 = vmul.f32 %v358, %v358
      %v375 = vmul.f32 %v359, %v359
      %v376 = vmul.f32 %v360, %v360
      %v377 = vmul.f32 %v361, %v361
      %v378 = vmul.f32 %v362, %v362
      %vm379 = vcmask 23552
      %v380 = vsel %vm379, %v371, 0.0
      %381 = vadd.xlane.f32.xlu0 %v380
      %v382 = vpop.xlane.xlu0 %381
      %v383 = vsel %vm379, %v372, 0.0
      %384 = vadd.xlane.f32.xlu0 %v383
      %v385 = vpop.xlane.xlu0 %384
      %v386 = vsel %vm379, %v373, 0.0
      %387 = vadd.xlane.f32.xlu0 %v386
      %v388 = vpop.xlane.xlu0 %387
      %v389 = vsel %vm379, %v374, 0.0
      %390 = vadd.xlane.f32.xlu0 %v389
      %v391 = vpop.xlane.xlu0 %390
      %v392 = vsel %vm379, %v375, 0.0
      %393 = vadd.xlane.f32.xlu0 %v392
      %v394 = vpop.xlane.xlu0 %393
      %v395 = vsel %vm379, %v376, 0.0
      %396 = vadd.xlane.f32.xlu0 %v395
      %v397 = vpop.xlane.xlu0 %396
      %v398 = vsel %vm379, %v377, 0.0
      %399 = vadd.xlane.f32.xlu0 %v398
      %v400 = vpop.xlane.xlu0 %399
      %v401 = vsel %vm379, %v378, 0.0
      %402 = vadd.xlane.f32.xlu0 %v401
      %v403 = vpop.xlane.xlu0 %402
      %v405 = vsel %vm379, %v355, 0
      %v408 = vsel %vm379, %v356, 0
      %v411 = vsel %vm379, %v357, 0
      %v414 = vsel %vm379, %v358, 0
      %v417 = vsel %vm379, %v359, 0
      %v420 = vsel %vm379, %v360, 0
      %v423 = vsel %vm379, %v361, 0
      %v426 = vsel %vm379, %v362, 0
      %v429 = vsel %vm379, %v363, 0
      %v432 = vsel %vm379, %v364, 0
      %v435 = vsel %vm379, %v365, 0
      %v438 = vsel %vm379, %v366, 0
      %v441 = vsel %vm379, %v367, 0
      %v444 = vsel %vm379, %v368, 0
      %v447 = vsel %vm379, %v369, 0
      %v450 = vsel %vm379, %v370, 0
      %452 = vmatprep.subr.mxu0 0.0
      %453 = vmatpush1.xpose.msra.mxu0 %v429
      %454 = vmatprep.subr.mxu0 0.0
      %455 = vmatpush1.xpose.msra.mxu0 %v432
      %456 = vmatprep.subr.mxu0 0.0
      %457 = vmatpush1.xpose.msra.mxu0 %v435
      %458 = vmatprep.subr.mxu0 0.0
      %459 = vmatpush1.xpose.msra.mxu0 %v438
      %460 = vmatprep.subr.mxu0 0.0
      %461 = vmatpush1.xpose.msra.mxu0 %v441
      %462 = vmatprep.subr.mxu0 0.0
      %463 = vmatpush1.xpose.msra.mxu0 %v444
      %464 = vmatprep.subr.mxu0 0.0
      %465 = vmatpush1.xpose.msra.mxu0 %v447
      %466 = vmatprep.subr.mxu0 0.0
      %467 = vmatpush1.xpose.msra.mxu0 %v450
      %468 = vmatprep.subr.mxu0 0.0
      %469 = vmatpush1.xpose.msra.mxu0 0.0
      %470 = vmatprep.subr.mxu0 0.0
      %471 = vmatpush1.xpose.msra.mxu0 0.0
      %472 = vmatprep.subr.mxu0 0.0
      %473 = vmatpush1.xpose.msra.mxu0 0.0
      %474 = vmatprep.subr.mxu0 0.0
      %475 = vmatpush1.xpose.msra.mxu0 0.0
      %476 = vmatprep.subr.mxu0 0.0
      %477 = vmatpush1.xpose.msra.mxu0 0.0
      %478 = vmatprep.subr.mxu0 0.0
      %479 = vmatpush1.xpose.msra.mxu0 0.0
      %480 = vmatprep.subr.mxu0 0.0
      %481 = vmatpush1.xpose.msra.mxu0 0.0
      %482 = vmatprep.subr.mxu0 0.0
      %483 = vmatpush1.xpose.msra.mxu0 0.0
      %484 = vmatprep.subr.mxu0 0.0
      %485 = vmatpush1.xpose.msra.mxu0 0.0
      %486 = vmatprep.subr.mxu0 0.0
      %487 = vmatpush1.xpose.msra.mxu0 0.0
      %488 = vmatprep.subr.mxu0 0.0
      %489 = vmatpush1.xpose.msra.mxu0 0.0
      %490 = vmatprep.subr.mxu0 0.0
      %491 = vmatpush1.xpose.msra.mxu0 0.0
      %492 = vmatprep.subr.mxu0 0.0
      %493 = vmatpush1.xpose.msra.mxu0 0.0
      %494 = vmatprep.subr.mxu0 0.0
      %495 = vmatpush1.xpose.msra.mxu0 0.0
      %496 = vmatprep.subr.mxu0 0.0
      %497 = vmatpush1.xpose.msra.mxu0 0.0
      %498 = vmatprep.subr.mxu0 0.0
      %499 = vmatpush1.xpose.msra.mxu0 0.0
      %500 = vmatprep.subr.mxu0 0.0
      %501 = vmatpush1.xpose.msra.mxu0 0.0
      %502 = vmatprep.subr.mxu0 0.0
      %503 = vmatpush1.xpose.msra.mxu0 0.0
      %504 = vmatprep.subr.mxu0 0.0
      %505 = vmatpush1.xpose.msra.mxu0 0.0
      %506 = vmatprep.subr.mxu0 0.0
      %507 = vmatpush1.xpose.msra.mxu0 0.0
      %508 = vmatprep.subr.mxu0 0.0
      %509 = vmatpush1.xpose.msra.mxu0 0.0
      %510 = vmatprep.subr.mxu0 0.0
      %511 = vmatpush1.xpose.msra.mxu0 0.0
      %512 = vmatprep.subr.mxu0 0.0
      %513 = vmatpush1.xpose.msra.mxu0 0.0
      %514 = vmatprep.subr.mxu0 0.0
      %515 = vmatpush1.xpose.msra.mxu0 0.0
      %516 = vmatprep.mubr.f32.mxu0 0.0
      %517 = vmatmul.mubr.f32.gmra.mrb[0].mxu0 %v405
      %v518 = vpop.f32.mrb[0].mxu0
      %v519 = vadd.f32 0.0, %v518
      %v520 = vpop.f32.mrb[0].mxu0
      %521 = vmatprep.mubr.f32.mxu0 0.0
      %522 = vmatmul.mubr.f32.gmra.mrb[0].mxu0 %v408
      %v523 = vpop.f32.mrb[0].mxu0
      %v524 = vadd.f32 0.0, %v523
      %v525 = vpop.f32.mrb[0].mxu0
      %526 = vmatprep.mubr.f32.mxu0 0.0
      %527 = vmatmul.mubr.f32.gmra.mrb[0].mxu0 %v411
      %v528 = vpop.f32.mrb[0].mxu0
      %v529 = vadd.f32 0.0, %v528
      %v530 = vpop.f32.mrb[0].mxu0
      %531 = vmatprep.mubr.f32.mxu0 0.0
      %532 = vmatmul.mubr.f32.gmra.mrb[0].mxu0 %v414
      %v533 = vpop.f32.mrb[0].mxu0
      %v534 = vadd.f32 0.0, %v533
      %v535 = vpop.f32.mrb[0].mxu0
      %536 = vmatprep.mubr.f32.mxu0 0.0
      %537 = vmatmul.mubr.f32.gmra.mrb[0].mxu0 %v417
      %v538 = vpop.f32.mrb[0].mxu0
      %v539 = vadd.f32 0.0, %v538
      %v540 = vpop.f32.mrb[0].mxu0
      %541 = vmatprep.mubr.f32.mxu0 0.0
      %542 = vmatmul.mubr.f32.gmra.mrb[0].mxu0 %v420
      %v543 = vpop.f32.mrb[0].mxu0
      %v544 = vadd.f32 0.0, %v543
      %v545 = vpop.f32.mrb[0].mxu0
      %546 = vmatprep.mubr.f32.mxu0 0.0
      %547 = vmatmul.mubr.f32.gmra.mrb[0].mxu0 %v423
      %v548 = vpop.f32.mrb[0].mxu0
      %v549 = vadd.f32 0.0, %v548
      %v550 = vpop.f32.mrb[0].mxu0
      %551 = vmatprep.mubr.f32.mxu0 0.0
      %552 = vmatmul.mubr.f32.gmra.mrb[0].mxu0 %v426
      %v553 = vpop.f32.mrb[0].mxu0
      %v554 = vadd.f32 0.0, %v553
      %v555 = vpop.f32.mrb[0].mxu0
      %556 = vdwg.mxu0
      %v557 = vld [vmem:[%s328] sm:$0x1]
      %v559 = vlaneseq
      %v560 = vshrl.u32 %v559, 7
      %v561 = vsub.s32 0, %v560
      %v562 = vrot.slane %v557, %v561
      %v564 = vadd.f32 %v382, %v562
      %v565 = vadd.f32 %v385, %v562
      %v566 = vadd.f32 %v388, %v562
      %v567 = vadd.f32 %v391, %v562
      %v568 = vadd.f32 %v394, %v562
      %v569 = vadd.f32 %v397, %v562
      %v570 = vadd.f32 %v400, %v562
      %v571 = vadd.f32 %v403, %v562
      %v572 = vmul.f32 %v519, 2.0
      %v573 = vmul.f32 %v524, 2.0
      %v574 = vmul.f32 %v529, 2.0
      %v575 = vmul.f32 %v534, 2.0
      %v576 = vmul.f32 %v539, 2.0
      %v577 = vmul.f32 %v544, 2.0
      %v578 = vmul.f32 %v549, 2.0
      %v579 = vmul.f32 %v554, 2.0
      %v580 = vsub.f32 %v564, %v572
      %v581 = vsub.f32 %v565, %v573
      %v582 = vsub.f32 %v566, %v574
      %v583 = vsub.f32 %v567, %v575
      %v584 = vsub.f32 %v568, %v576
      %v585 = vsub.f32 %v569, %v577
      %v586 = vsub.f32 %v570, %v578
      %v587 = vsub.f32 %v571, %v579
      %v588 = vlaneseq
      %v589 = vshrl.u32 %v588, 7
      %v590 = vadd.s32 %v589, 8
      %v591 = vadd.s32 %v589, 16
      %v592 = vadd.s32 %v589, 24
      %v593 = vadd.s32 %v589, 32
      %v594 = vadd.s32 %v589, 40
      %v595 = vadd.s32 %v589, 48
      %v596 = vadd.s32 %v589, 56
      %s597 = smul.u32 %s21, 64
      %v598 = vstv %s597
      %v599 = vadd.s32 %v589, %v598
      %v600 = vadd.s32 %v590, %v598
      %v601 = vadd.s32 %v591, %v598
      %v602 = vadd.s32 %v592, %v598
      %v603 = vadd.s32 %v593, %v598
      %v604 = vadd.s32 %v594, %v598
      %v605 = vadd.s32 %v595, %v598
      %v606 = vadd.s32 %v596, %v598
      %v607 = vlaneseq
      %v608 = vand.u32 %v607, 127
      %vm609 = vcmp.eq.s32.totalorder %v599, %v608
      %vm610 = vcmp.eq.s32.totalorder %v600, %v608
      %vm611 = vcmp.eq.s32.totalorder %v601, %v608
      %vm612 = vcmp.eq.s32.totalorder %v602, %v608
      %vm613 = vcmp.eq.s32.totalorder %v603, %v608
      %vm614 = vcmp.eq.s32.totalorder %v604, %v608
      %vm615 = vcmp.eq.s32.totalorder %v605, %v608
      %vm616 = vcmp.eq.s32.totalorder %v606, %v608
      %v617 = vsel %vm609, inf, %v580
      %v618 = vsel %vm610, inf, %v581
      %v619 = vsel %vm611, inf, %v582
      %v620 = vsel %vm612, inf, %v583
      %v621 = vsel %vm613, inf, %v584
      %v622 = vsel %vm614, inf, %v585
      %v623 = vsel %vm615, inf, %v586
      %v624 = vsel %vm616, inf, %v587
      %v625 = vcvt.s32.f32 %v608
      %v626 = vld [vmem:[%s343] sm:$0xf]
      %v627 = vld [vmem:[%s343 + $0x4] sm:$0xf]
      %v628 = vld [vmem:[%s343 + $0x8] sm:$0xf]
      %v629 = vld [vmem:[%s343 + $0xc] sm:$0xf]
      %v630 = vld [vmem:[%s343 + $0x10] sm:$0xf]
      %v631 = vld [vmem:[%s343 + $0x14] sm:$0xf]
      %v632 = vld [vmem:[%s343 + $0x18] sm:$0xf]
      %v633 = vld [vmem:[%s343 + $0x1c] sm:$0xf]
      %vm634 = vcmask 523264
      %v635 = vsel %vm634, %v617, inf
      %636 = vmin.xlane.f32.xlu0 %v635
      %v637 = vpop.xlane.xlu0 %636
      %v638 = vsel %vm634, %v618, inf
      %639 = vmin.xlane.f32.xlu0 %v638
      %v640 = vpop.xlane.xlu0 %639
      %v641 = vsel %vm634, %v619, inf
      %642 = vmin.xlane.f32.xlu0 %v641
      %v643 = vpop.xlane.xlu0 %642
      %v644 = vsel %vm634, %v620, inf
      %645 = vmin.xlane.f32.xlu0 %v644
      %v646 = vpop.xlane.xlu0 %645
      %v647 = vsel %vm634, %v621, inf
      %648 = vmin.xlane.f32.xlu0 %v647
      %v649 = vpop.xlane.xlu0 %648
      %v650 = vsel %vm634, %v622, inf
      %651 = vmin.xlane.f32.xlu0 %v650
      %v652 = vpop.xlane.xlu0 %651
      %v653 = vsel %vm634, %v623, inf
      %654 = vmin.xlane.f32.xlu0 %v653
      %v655 = vpop.xlane.xlu0 %654
      %v656 = vsel %vm634, %v624, inf
      %657 = vmin.xlane.f32.xlu0 %v656
      %v658 = vpop.xlane.xlu0 %657
      %vm659 = vcmp.eq.f32.partialorder %v617, %v637
      %vm660 = vcmp.eq.f32.partialorder %v618, %v640
      %vm661 = vcmp.eq.f32.partialorder %v619, %v643
      %vm662 = vcmp.eq.f32.partialorder %v620, %v646
      %vm663 = vcmp.eq.f32.partialorder %v621, %v649
      %vm664 = vcmp.eq.f32.partialorder %v622, %v652
      %vm665 = vcmp.eq.f32.partialorder %v623, %v655
      %vm666 = vcmp.eq.f32.partialorder %v624, %v658
      %v667 = vsel %vm659, %v625, 64.0
      %v668 = vsel %vm660, %v625, 64.0
      %v669 = vsel %vm661, %v625, 64.0
      %v670 = vsel %vm662, %v625, 64.0
      %v671 = vsel %vm663, %v625, 64.0
      %v672 = vsel %vm664, %v625, 64.0
      %v673 = vsel %vm665, %v625, 64.0
      %v674 = vsel %vm666, %v625, 64.0
      %v675 = vsel %vm634, %v667, inf
      %676 = vmin.xlane.f32.xlu0 %v675
      %v677 = vpop.xlane.xlu0 %676
      %v678 = vsel %vm634, %v668, inf
      %679 = vmin.xlane.f32.xlu0 %v678
      %v680 = vpop.xlane.xlu0 %679
      %v681 = vsel %vm634, %v669, inf
      %682 = vmin.xlane.f32.xlu0 %v681
      %v683 = vpop.xlane.xlu0 %682
      %v684 = vsel %vm634, %v670, inf
      %685 = vmin.xlane.f32.xlu0 %v684
      %v686 = vpop.xlane.xlu0 %685
      %v687 = vsel %vm634, %v671, inf
      %688 = vmin.xlane.f32.xlu0 %v687
      %v689 = vpop.xlane.xlu0 %688
      %v690 = vsel %vm634, %v672, inf
      %691 = vmin.xlane.f32.xlu0 %v690
      %v692 = vpop.xlane.xlu0 %691
      %v693 = vsel %vm634, %v673, inf
      %694 = vmin.xlane.f32.xlu0 %v693
      %v695 = vpop.xlane.xlu0 %694
      %v696 = vsel %vm634, %v674, inf
      %697 = vmin.xlane.f32.xlu0 %v696
      %v698 = vpop.xlane.xlu0 %697
      %vm699 = vcmp.eq.f32.partialorder %v625, %v677
      %vm700 = vcmp.eq.f32.partialorder %v625, %v680
      %vm701 = vcmp.eq.f32.partialorder %v625, %v683
      %vm702 = vcmp.eq.f32.partialorder %v625, %v686
      %vm703 = vcmp.eq.f32.partialorder %v625, %v689
      %vm704 = vcmp.eq.f32.partialorder %v625, %v692
      %vm705 = vcmp.eq.f32.partialorder %v625, %v695
      %vm706 = vcmp.eq.f32.partialorder %v625, %v698
      %v707 = vsel %vm699, 1, 0
      %v708 = vsel %vm700, 1, 0
      %v709 = vsel %vm701, 1, 0
      %v710 = vsel %vm702, 1, 0
      %v711 = vsel %vm703, 1, 0
      %v712 = vsel %vm704, 1, 0
      %v713 = vsel %vm705, 1, 0
      %v714 = vsel %vm706, 1, 0
      %v715 = vcvt.s32.f32 %v707
      %v716 = vcvt.s32.f32 %v708
      %v717 = vcvt.s32.f32 %v709
      %v718 = vcvt.s32.f32 %v710
      %v719 = vcvt.s32.f32 %v711
      %v720 = vcvt.s32.f32 %v712
      %v721 = vcvt.s32.f32 %v713
      %v722 = vcvt.s32.f32 %v714
      %v723 = vpack.c.bf16 %v716, %v715
      %v724 = vpack.c.bf16 %v718, %v717
      %v725 = vpack.c.bf16 %v720, %v719
      %v726 = vpack.c.bf16 %v722, %v721
      %v735 = vunpack.c.l.b16 %v626
      %v736 = vunpack.c.l.b16 %v627
      %v737 = vunpack.c.l.b16 %v628
      %v738 = vunpack.c.l.b16 %v629
      %v739 = vunpack.c.l.b16 %v630
      %v740 = vunpack.c.l.b16 %v631
      %v741 = vunpack.c.l.b16 %v632
      %v742 = vunpack.c.l.b16 %v633
      %v743 = vpack.c.b16 %v736, %v735
      %v744 = vpack.c.b16 %v738, %v737
      %v745 = vpack.c.b16 %v740, %v739
      %v746 = vpack.c.b16 %v742, %v741
      %v752 = vsel %vm634, %v723, 0
      %v755 = vsel %vm634, %v724, 0
      %v758 = vsel %vm634, %v725, 0
      %v761 = vsel %vm634, %v726, 0
      %763 = vmatprep.subr.bf16.mxu0 0
      %764 = vmatpush1.bf16.msra.mxu0 %v743
      %765 = vmatprep.subr.bf16.mxu0 0
      %766 = vmatpush1.bf16.msra.mxu0 %v744
      %767 = vmatprep.subr.bf16.mxu0 0
      %768 = vmatpush1.bf16.msra.mxu0 %v745
      %769 = vmatprep.subr.bf16.mxu0 0
      %770 = vmatpush1.bf16.msra.mxu0 %v746
      %771 = vmatprep.subr.bf16.mxu0 0
      %772 = vmatpush1.bf16.msra.mxu0 0
      %773 = vmatprep.subr.bf16.mxu0 0
      %774 = vmatpush1.bf16.msra.mxu0 0
      %775 = vmatprep.subr.bf16.mxu0 0
      %776 = vmatpush1.bf16.msra.mxu0 0
      %777 = vmatprep.subr.bf16.mxu0 0
      %778 = vmatpush1.bf16.msra.mxu0 0
      %779 = vmatprep.subr.bf16.mxu0 0
      %780 = vmatpush1.bf16.msra.mxu0 0
      %781 = vmatprep.subr.bf16.mxu0 0
      %782 = vmatpush1.bf16.msra.mxu0 0
      %783 = vmatprep.subr.bf16.mxu0 0
      %784 = vmatpush1.bf16.msra.mxu0 0
      %785 = vmatprep.subr.bf16.mxu0 0
      %786 = vmatpush1.bf16.msra.mxu0 0
      %787 = vmatprep.subr.bf16.mxu0 0
      %788 = vmatpush1.bf16.msra.mxu0 0
      %789 = vmatprep.subr.bf16.mxu0 0
      %790 = vmatpush1.bf16.msra.mxu0 0
      %791 = vmatprep.subr.bf16.mxu0 0
      %792 = vmatpush1.bf16.msra.mxu0 0
      %793 = vmatprep.subr.bf16.mxu0 0
      %794 = vmatpush1.bf16.msra.mxu0 0
      %795 = vmatprep.mubr.bf16.mxu0 0
      %796 = vmatmul.mubr.bf16.gmra.mrb[0].mxu0 %v752
      %v797 = vpop.f32.mrb[0].mxu0
      %v798 = vadd.f32 0.0, %v797
      %v799 = vpop.f32.mrb[0].mxu0
      %v800 = vpop.f32.mrb[0].mxu0
      %v801 = vadd.f32 0.0, %v800
      %v802 = vpop.f32.mrb[0].mxu0
      %803 = vmatprep.mubr.bf16.mxu0 0
      %804 = vmatmul.mubr.bf16.gmra.mrb[0].mxu0 %v755
      %v805 = vpop.f32.mrb[0].mxu0
      %v806 = vadd.f32 0.0, %v805
      %v807 = vpop.f32.mrb[0].mxu0
      %v808 = vpop.f32.mrb[0].mxu0
      %v809 = vadd.f32 0.0, %v808
      %v810 = vpop.f32.mrb[0].mxu0
      %811 = vmatprep.mubr.bf16.mxu0 0
      %812 = vmatmul.mubr.bf16.gmra.mrb[0].mxu0 %v758
      %v813 = vpop.f32.mrb[0].mxu0
      %v814 = vadd.f32 0.0, %v813
      %v815 = vpop.f32.mrb[0].mxu0
      %v816 = vpop.f32.mrb[0].mxu0
      %v817 = vadd.f32 0.0, %v816
      %v818 = vpop.f32.mrb[0].mxu0
      %819 = vmatprep.mubr.bf16.mxu0 0
      %820 = vmatmul.mubr.bf16.gmra.mrb[0].mxu0 %v761
      %v821 = vpop.f32.mrb[0].mxu0
      %v822 = vadd.f32 0.0, %v821
      %v823 = vpop.f32.mrb[0].mxu0
      %v824 = vpop.f32.mrb[0].mxu0
      %v825 = vadd.f32 0.0, %v824
      %v826 = vpop.f32.mrb[0].mxu0
      %827 = vdwg.mxu0
      %v828 = vsel %vm699, inf, %v617
      %v829 = vsel %vm700, inf, %v618
      %v830 = vsel %vm701, inf, %v619
      %v831 = vsel %vm702, inf, %v620
      %v832 = vsel %vm703, inf, %v621
      %v833 = vsel %vm704, inf, %v622
      %v834 = vsel %vm705, inf, %v623
      %v835 = vsel %vm706, inf, %v624
      %v836 = vsel %vm634, %v828, inf
      %837 = vmin.xlane.f32.xlu0 %v836
      %v838 = vpop.xlane.xlu0 %837
      %v839 = vsel %vm634, %v829, inf
      %840 = vmin.xlane.f32.xlu0 %v839
      %v841 = vpop.xlane.xlu0 %840
      %v842 = vsel %vm634, %v830, inf
      %843 = vmin.xlane.f32.xlu0 %v842
      %v844 = vpop.xlane.xlu0 %843
      %v845 = vsel %vm634, %v831, inf
      %846 = vmin.xlane.f32.xlu0 %v845
      %v847 = vpop.xlane.xlu0 %846
      %v848 = vsel %vm634, %v832, inf
      %849 = vmin.xlane.f32.xlu0 %v848
      %v850 = vpop.xlane.xlu0 %849
      %v851 = vsel %vm634, %v833, inf
      %852 = vmin.xlane.f32.xlu0 %v851
      %v853 = vpop.xlane.xlu0 %852
      %v854 = vsel %vm634, %v834, inf
      %855 = vmin.xlane.f32.xlu0 %v854
      %v856 = vpop.xlane.xlu0 %855
      %v857 = vsel %vm634, %v835, inf
      %858 = vmin.xlane.f32.xlu0 %v857
      %v859 = vpop.xlane.xlu0 %858
      %vm860 = vcmp.eq.f32.partialorder %v828, %v838
      %vm861 = vcmp.eq.f32.partialorder %v829, %v841
      %vm862 = vcmp.eq.f32.partialorder %v830, %v844
      %vm863 = vcmp.eq.f32.partialorder %v831, %v847
      %vm864 = vcmp.eq.f32.partialorder %v832, %v850
      %vm865 = vcmp.eq.f32.partialorder %v833, %v853
      %vm866 = vcmp.eq.f32.partialorder %v834, %v856
      %vm867 = vcmp.eq.f32.partialorder %v835, %v859
      %v868 = vsel %vm860, %v625, 64.0
      %v869 = vsel %vm861, %v625, 64.0
      %v870 = vsel %vm862, %v625, 64.0
      %v871 = vsel %vm863, %v625, 64.0
      %v872 = vsel %vm864, %v625, 64.0
      %v873 = vsel %vm865, %v625, 64.0
      %v874 = vsel %vm866, %v625, 64.0
      %v875 = vsel %vm867, %v625, 64.0
      %v876 = vsel %vm634, %v868, inf
      %877 = vmin.xlane.f32.xlu0 %v876
      %v878 = vpop.xlane.xlu0 %877
      %v879 = vsel %vm634, %v869, inf
      %880 = vmin.xlane.f32.xlu0 %v879
      %v881 = vpop.xlane.xlu0 %880
      %v882 = vsel %vm634, %v870, inf
      %883 = vmin.xlane.f32.xlu0 %v882
      %v884 = vpop.xlane.xlu0 %883
      %v885 = vsel %vm634, %v871, inf
      %886 = vmin.xlane.f32.xlu0 %v885
      %v887 = vpop.xlane.xlu0 %886
      %v888 = vsel %vm634, %v872, inf
      %889 = vmin.xlane.f32.xlu0 %v888
      %v890 = vpop.xlane.xlu0 %889
      %v891 = vsel %vm634, %v873, inf
      %892 = vmin.xlane.f32.xlu0 %v891
      %v893 = vpop.xlane.xlu0 %892
      %v894 = vsel %vm634, %v874, inf
      %895 = vmin.xlane.f32.xlu0 %v894
      %v896 = vpop.xlane.xlu0 %895
      %v897 = vsel %vm634, %v875, inf
      %898 = vmin.xlane.f32.xlu0 %v897
      %v899 = vpop.xlane.xlu0 %898
      %vm900 = vcmp.eq.f32.partialorder %v625, %v878
      %vm901 = vcmp.eq.f32.partialorder %v625, %v881
      %vm902 = vcmp.eq.f32.partialorder %v625, %v884
      %vm903 = vcmp.eq.f32.partialorder %v625, %v887
      %vm904 = vcmp.eq.f32.partialorder %v625, %v890
      %vm905 = vcmp.eq.f32.partialorder %v625, %v893
      %vm906 = vcmp.eq.f32.partialorder %v625, %v896
      %vm907 = vcmp.eq.f32.partialorder %v625, %v899
      %v908 = vsel %vm900, 1, 0
      %v909 = vsel %vm901, 1, 0
      %v910 = vsel %vm902, 1, 0
      %v911 = vsel %vm903, 1, 0
      %v912 = vsel %vm904, 1, 0
      %v913 = vsel %vm905, 1, 0
      %v914 = vsel %vm906, 1, 0
      %v915 = vsel %vm907, 1, 0
      %v916 = vcvt.s32.f32 %v908
      %v917 = vcvt.s32.f32 %v909
      %v918 = vcvt.s32.f32 %v910
      %v919 = vcvt.s32.f32 %v911
      %v920 = vcvt.s32.f32 %v912
      %v921 = vcvt.s32.f32 %v913
      %v922 = vcvt.s32.f32 %v914
      %v923 = vcvt.s32.f32 %v915
      %v924 = vpack.c.bf16 %v917, %v916
      %v925 = vpack.c.bf16 %v919, %v918
      %v926 = vpack.c.bf16 %v921, %v920
      %v927 = vpack.c.bf16 %v923, %v922
      %v929 = vsel %vm634, %v924, 0
      %v932 = vsel %vm634, %v925, 0
      %v935 = vsel %vm634, %v926, 0
      %v938 = vsel %vm634, %v927, 0
      %940 = vmatprep.subr.bf16.mxu0 0
      %941 = vmatpush1.bf16.msra.mxu0 %v743
      %942 = vmatprep.subr.bf16.mxu0 0
      %943 = vmatpush1.bf16.msra.mxu0 %v744
      %944 = vmatprep.subr.bf16.mxu0 0
      %945 = vmatpush1.bf16.msra.mxu0 %v745
      %946 = vmatprep.subr.bf16.mxu0 0
      %947 = vmatpush1.bf16.msra.mxu0 %v746
      %948 = vmatprep.subr.bf16.mxu0 0
      %949 = vmatpush1.bf16.msra.mxu0 0
      %950 = vmatprep.subr.bf16.mxu0 0
      %951 = vmatpush1.bf16.msra.mxu0 0
      %952 = vmatprep.subr.bf16.mxu0 0
      %953 = vmatpush1.bf16.msra.mxu0 0
      %954 = vmatprep.subr.bf16.mxu0 0
      %955 = vmatpush1.bf16.msra.mxu0 0
      %956 = vmatprep.subr.bf16.mxu0 0
      %957 = vmatpush1.bf16.msra.mxu0 0
      %958 = vmatprep.subr.bf16.mxu0 0
      %959 = vmatpush1.bf16.msra.mxu0 0
      %960 = vmatprep.subr.bf16.mxu0 0
      %961 = vmatpush1.bf16.msra.mxu0 0
      %962 = vmatprep.subr.bf16.mxu0 0
      %963 = vmatpush1.bf16.msra.mxu0 0
      %964 = vmatprep.subr.bf16.mxu0 0
      %965 = vmatpush1.bf16.msra.mxu0 0
      %966 = vmatprep.subr.bf16.mxu0 0
      %967 = vmatpush1.bf16.msra.mxu0 0
      %968 = vmatprep.subr.bf16.mxu0 0
      %969 = vmatpush1.bf16.msra.mxu0 0
      %970 = vmatprep.subr.bf16.mxu0 0
      %971 = vmatpush1.bf16.msra.mxu0 0
      %972 = vmatprep.mubr.bf16.mxu0 0
      %973 = vmatmul.mubr.bf16.gmra.mrb[0].mxu0 %v929
      %v974 = vpop.f32.mrb[0].mxu0
      %v975 = vadd.f32 0.0, %v974
      %v976 = vpop.f32.mrb[0].mxu0
      %v977 = vpop.f32.mrb[0].mxu0
      %v978 = vadd.f32 0.0, %v977
      %v979 = vpop.f32.mrb[0].mxu0
      %980 = vmatprep.mubr.bf16.mxu0 0
      %981 = vmatmul.mubr.bf16.gmra.mrb[0].mxu0 %v932
      %v982 = vpop.f32.mrb[0].mxu0
      %v983 = vadd.f32 0.0, %v982
      %v984 = vpop.f32.mrb[0].mxu0
      %v985 = vpop.f32.mrb[0].mxu0
      %v986 = vadd.f32 0.0, %v985
      %v987 = vpop.f32.mrb[0].mxu0
      %988 = vmatprep.mubr.bf16.mxu0 0
      %989 = vmatmul.mubr.bf16.gmra.mrb[0].mxu0 %v935
      %v990 = vpop.f32.mrb[0].mxu0
      %v991 = vadd.f32 0.0, %v990
      %v992 = vpop.f32.mrb[0].mxu0
      %v993 = vpop.f32.mrb[0].mxu0
      %v994 = vadd.f32 0.0, %v993
      %v995 = vpop.f32.mrb[0].mxu0
      %996 = vmatprep.mubr.bf16.mxu0 0
      %997 = vmatmul.mubr.bf16.gmra.mrb[0].mxu0 %v938
      %v998 = vpop.f32.mrb[0].mxu0
      %v999 = vadd.f32 0.0, %v998
      %v1000 = vpop.f32.mrb[0].mxu0
      %v1001 = vpop.f32.mrb[0].mxu0
      %v1002 = vadd.f32 0.0, %v1001
      %v1003 = vpop.f32.mrb[0].mxu0
      %1004 = vdwg.mxu0
      %v1005 = vmax.f32 %v798, %v975
      %v1006 = vmax.f32 %v801, %v978
      %v1007 = vmax.f32 %v806, %v983
      %v1008 = vmax.f32 %v809, %v986
      %v1009 = vmax.f32 %v814, %v991
      %v1010 = vmax.f32 %v817, %v994
      %v1011 = vmax.f32 %v822, %v999
      %v1012 = vmax.f32 %v825, %v1002
      %v1013 = vsel %vm900, inf, %v828
      %v1014 = vsel %vm901, inf, %v829
      %v1015 = vsel %vm902, inf, %v830
      %v1016 = vsel %vm903, inf, %v831
      %v1017 = vsel %vm904, inf, %v832
      %v1018 = vsel %vm905, inf, %v833
      %v1019 = vsel %vm906, inf, %v834
      %v1020 = vsel %vm907, inf, %v835
      %v1021 = vsel %vm634, %v1013, inf
      %1022 = vmin.xlane.f32.xlu0 %v1021
      %v1023 = vpop.xlane.xlu0 %1022
      %v1024 = vsel %vm634, %v1014, inf
      %1025 = vmin.xlane.f32.xlu0 %v1024
      %v1026 = vpop.xlane.xlu0 %1025
      %v1027 = vsel %vm634, %v1015, inf
      %1028 = vmin.xlane.f32.xlu0 %v1027
      %v1029 = vpop.xlane.xlu0 %1028
      %v1030 = vsel %vm634, %v1016, inf
      %1031 = vmin.xlane.f32.xlu0 %v1030
      %v1032 = vpop.xlane.xlu0 %1031
      %v1033 = vsel %vm634, %v1017, inf
      %1034 = vmin.xlane.f32.xlu0 %v1033
      %v1035 = vpop.xlane.xlu0 %1034
      %v1036 = vsel %vm634, %v1018, inf
      %1037 = vmin.xlane.f32.xlu0 %v1036
      %v1038 = vpop.xlane.xlu0 %1037
      %v1039 = vsel %vm634, %v1019, inf
      %1040 = vmin.xlane.f32.xlu0 %v1039
      %v1041 = vpop.xlane.xlu0 %1040
      %v1042 = vsel %vm634, %v1020, inf
      %1043 = vmin.xlane.f32.xlu0 %v1042
      %v1044 = vpop.xlane.xlu0 %1043
      %vm1045 = vcmp.eq.f32.partialorder %v1013, %v1023
      %vm1046 = vcmp.eq.f32.partialorder %v1014, %v1026
      %vm1047 = vcmp.eq.f32.partialorder %v1015, %v1029
      %vm1048 = vcmp.eq.f32.partialorder %v1016, %v1032
      %vm1049 = vcmp.eq.f32.partialorder %v1017, %v1035
      %vm1050 = vcmp.eq.f32.partialorder %v1018, %v1038
      %vm1051 = vcmp.eq.f32.partialorder %v1019, %v1041
      %vm1052 = vcmp.eq.f32.partialorder %v1020, %v1044
      %v1053 = vsel %vm1045, %v625, 64.0
      %v1054 = vsel %vm1046, %v625, 64.0
      %v1055 = vsel %vm1047, %v625, 64.0
      %v1056 = vsel %vm1048, %v625, 64.0
      %v1057 = vsel %vm1049, %v625, 64.0
      %v1058 = vsel %vm1050, %v625, 64.0
      %v1059 = vsel %vm1051, %v625, 64.0
      %v1060 = vsel %vm1052, %v625, 64.0
      %v1061 = vsel %vm634, %v1053, inf
      %1062 = vmin.xlane.f32.xlu0 %v1061
      %v1063 = vpop.xlane.xlu0 %1062
      %v1064 = vsel %vm634, %v1054, inf
      %1065 = vmin.xlane.f32.xlu0 %v1064
      %v1066 = vpop.xlane.xlu0 %1065
      %v1067 = vsel %vm634, %v1055, inf
      %1068 = vmin.xlane.f32.xlu0 %v1067
      %v1069 = vpop.xlane.xlu0 %1068
      %v1070 = vsel %vm634, %v1056, inf
      %1071 = vmin.xlane.f32.xlu0 %v1070
      %v1072 = vpop.xlane.xlu0 %1071
      %v1073 = vsel %vm634, %v1057, inf
      %1074 = vmin.xlane.f32.xlu0 %v1073
      %v1075 = vpop.xlane.xlu0 %1074
      %v1076 = vsel %vm634, %v1058, inf
      %1077 = vmin.xlane.f32.xlu0 %v1076
      %v1078 = vpop.xlane.xlu0 %1077
      %v1079 = vsel %vm634, %v1059, inf
      %1080 = vmin.xlane.f32.xlu0 %v1079
      %v1081 = vpop.xlane.xlu0 %1080
      %v1082 = vsel %vm634, %v1060, inf
      %1083 = vmin.xlane.f32.xlu0 %v1082
      %v1084 = vpop.xlane.xlu0 %1083
      %vm1085 = vcmp.eq.f32.partialorder %v625, %v1063
      %vm1086 = vcmp.eq.f32.partialorder %v625, %v1066
      %vm1087 = vcmp.eq.f32.partialorder %v625, %v1069
      %vm1088 = vcmp.eq.f32.partialorder %v625, %v1072
      %vm1089 = vcmp.eq.f32.partialorder %v625, %v1075
      %vm1090 = vcmp.eq.f32.partialorder %v625, %v1078
      %vm1091 = vcmp.eq.f32.partialorder %v625, %v1081
      %vm1092 = vcmp.eq.f32.partialorder %v625, %v1084
      %v1093 = vsel %vm1085, 1, 0
      %v1094 = vsel %vm1086, 1, 0
      %v1095 = vsel %vm1087, 1, 0
      %v1096 = vsel %vm1088, 1, 0
      %v1097 = vsel %vm1089, 1, 0
      %v1098 = vsel %vm1090, 1, 0
      %v1099 = vsel %vm1091, 1, 0
      %v1100 = vsel %vm1092, 1, 0
      %v1101 = vcvt.s32.f32 %v1093
      %v1102 = vcvt.s32.f32 %v1094
      %v1103 = vcvt.s32.f32 %v1095
      %v1104 = vcvt.s32.f32 %v1096
      %v1105 = vcvt.s32.f32 %v1097
      %v1106 = vcvt.s32.f32 %v1098
      %v1107 = vcvt.s32.f32 %v1099
      %v1108 = vcvt.s32.f32 %v1100
      %v1109 = vpack.c.bf16 %v1102, %v1101
      %v1110 = vpack.c.bf16 %v1104, %v1103
      %v1111 = vpack.c.bf16 %v1106, %v1105
      %v1112 = vpack.c.bf16 %v1108, %v1107
      %v1114 = vsel %vm634, %v1109, 0
      %v1117 = vsel %vm634, %v1110, 0
      %v1120 = vsel %vm634, %v1111, 0
      %v1123 = vsel %vm634, %v1112, 0
      %1125 = vmatprep.subr.bf16.mxu0 0
      %1126 = vmatpush1.bf16.msra.mxu0 %v743
      %1127 = vmatprep.subr.bf16.mxu0 0
      %1128 = vmatpush1.bf16.msra.mxu0 %v744
      %1129 = vmatprep.subr.bf16.mxu0 0
      %1130 = vmatpush1.bf16.msra.mxu0 %v745
      %1131 = vmatprep.subr.bf16.mxu0 0
      %1132 = vmatpush1.bf16.msra.mxu0 %v746
      %1133 = vmatprep.subr.bf16.mxu0 0
      %1134 = vmatpush1.bf16.msra.mxu0 0
      %1135 = vmatprep.subr.bf16.mxu0 0
      %1136 = vmatpush1.bf16.msra.mxu0 0
      %1137 = vmatprep.subr.bf16.mxu0 0
      %1138 = vmatpush1.bf16.msra.mxu0 0
      %1139 = vmatprep.subr.bf16.mxu0 0
      %1140 = vmatpush1.bf16.msra.mxu0 0
      %1141 = vmatprep.subr.bf16.mxu0 0
      %1142 = vmatpush1.bf16.msra.mxu0 0
      %1143 = vmatprep.subr.bf16.mxu0 0
      %1144 = vmatpush1.bf16.msra.mxu0 0
      %1145 = vmatprep.subr.bf16.mxu0 0
      %1146 = vmatpush1.bf16.msra.mxu0 0
      %1147 = vmatprep.subr.bf16.mxu0 0
      %1148 = vmatpush1.bf16.msra.mxu0 0
      %1149 = vmatprep.subr.bf16.mxu0 0
      %1150 = vmatpush1.bf16.msra.mxu0 0
      %1151 = vmatprep.subr.bf16.mxu0 0
      %1152 = vmatpush1.bf16.msra.mxu0 0
      %1153 = vmatprep.subr.bf16.mxu0 0
      %1154 = vmatpush1.bf16.msra.mxu0 0
      %1155 = vmatprep.subr.bf16.mxu0 0
      %1156 = vmatpush1.bf16.msra.mxu0 0
      %1157 = vmatprep.mubr.bf16.mxu0 0
      %1158 = vmatmul.mubr.bf16.gmra.mrb[0].mxu0 %v1114
      %v1159 = vpop.f32.mrb[0].mxu0
      %v1160 = vadd.f32 0.0, %v1159
      %v1161 = vpop.f32.mrb[0].mxu0
      %v1162 = vpop.f32.mrb[0].mxu0
      %v1163 = vadd.f32 0.0, %v1162
      %v1164 = vpop.f32.mrb[0].mxu0
      %1165 = vmatprep.mubr.bf16.mxu0 0
      %1166 = vmatmul.mubr.bf16.gmra.mrb[0].mxu0 %v1117
      %v1167 = vpop.f32.mrb[0].mxu0
      %v1168 = vadd.f32 0.0, %v1167
      %v1169 = vpop.f32.mrb[0].mxu0
      %v1170 = vpop.f32.mrb[0].mxu0
      %v1171 = vadd.f32 0.0, %v1170
      %v1172 = vpop.f32.mrb[0].mxu0
      %1173 = vmatprep.mubr.bf16.mxu0 0
      %1174 = vmatmul.mubr.bf16.gmra.mrb[0].mxu0 %v1120
      %v1175 = vpop.f32.mrb[0].mxu0
      %v1176 = vadd.f32 0.0, %v1175
      %v1177 = vpop.f32.mrb[0].mxu0
      %v1178 = vpop.f32.mrb[0].mxu0
      %v1179 = vadd.f32 0.0, %v1178
      %v1180 = vpop.f32.mrb[0].mxu0
      %1181 = vmatprep.mubr.bf16.mxu0 0
      %1182 = vmatmul.mubr.bf16.gmra.mrb[0].mxu0 %v1123
      %v1183 = vpop.f32.mrb[0].mxu0
      %v1184 = vadd.f32 0.0, %v1183
      %v1185 = vpop.f32.mrb[0].mxu0
      %v1186 = vpop.f32.mrb[0].mxu0
      %v1187 = vadd.f32 0.0, %v1186
      %v1188 = vpop.f32.mrb[0].mxu0
      %1189 = vdwg.mxu0
      %v1190 = vmax.f32 %v1005, %v1160
      %v1191 = vmax.f32 %v1006, %v1163
      %v1192 = vmax.f32 %v1007, %v1168
      %v1193 = vmax.f32 %v1008, %v1171
      %v1194 = vmax.f32 %v1009, %v1176
      %v1195 = vmax.f32 %v1010, %v1179
      %v1196 = vmax.f32 %v1011, %v1184
      %v1197 = vmax.f32 %v1012, %v1187
      %v1198 = vsel %vm1085, inf, %v1013
      %v1199 = vsel %vm1086, inf, %v1014
      %v1200 = vsel %vm1087, inf, %v1015
      %v1201 = vsel %vm1088, inf, %v1016
      %v1202 = vsel %vm1089, inf, %v1017
      %v1203 = vsel %vm1090, inf, %v1018
      %v1204 = vsel %vm1091, inf, %v1019
      %v1205 = vsel %vm1092, inf, %v1020
      %v1206 = vsel %vm634, %v1198, inf
      %1207 = vmin.xlane.f32.xlu0 %v1206
      %v1208 = vpop.xlane.xlu0 %1207
      %v1209 = vsel %vm634, %v1199, inf
      %1210 = vmin.xlane.f32.xlu0 %v1209
      %v1211 = vpop.xlane.xlu0 %1210
      %v1212 = vsel %vm634, %v1200, inf
      %1213 = vmin.xlane.f32.xlu0 %v1212
      %v1214 = vpop.xlane.xlu0 %1213
      %v1215 = vsel %vm634, %v1201, inf
      %1216 = vmin.xlane.f32.xlu0 %v1215
      %v1217 = vpop.xlane.xlu0 %1216
      %v1218 = vsel %vm634, %v1202, inf
      %1219 = vmin.xlane.f32.xlu0 %v1218
      %v1220 = vpop.xlane.xlu0 %1219
      %v1221 = vsel %vm634, %v1203, inf
      %1222 = vmin.xlane.f32.xlu0 %v1221
      %v1223 = vpop.xlane.xlu0 %1222
      %v1224 = vsel %vm634, %v1204, inf
      %1225 = vmin.xlane.f32.xlu0 %v1224
      %v1226 = vpop.xlane.xlu0 %1225
      %v1227 = vsel %vm634, %v1205, inf
      %1228 = vmin.xlane.f32.xlu0 %v1227
      %v1229 = vpop.xlane.xlu0 %1228
      %vm1230 = vcmp.eq.f32.partialorder %v1198, %v1208
      %vm1231 = vcmp.eq.f32.partialorder %v1199, %v1211
      %vm1232 = vcmp.eq.f32.partialorder %v1200, %v1214
      %vm1233 = vcmp.eq.f32.partialorder %v1201, %v1217
      %vm1234 = vcmp.eq.f32.partialorder %v1202, %v1220
      %vm1235 = vcmp.eq.f32.partialorder %v1203, %v1223
      %vm1236 = vcmp.eq.f32.partialorder %v1204, %v1226
      %vm1237 = vcmp.eq.f32.partialorder %v1205, %v1229
      %v1238 = vsel %vm1230, %v625, 64.0
      %v1239 = vsel %vm1231, %v625, 64.0
      %v1240 = vsel %vm1232, %v625, 64.0
      %v1241 = vsel %vm1233, %v625, 64.0
      %v1242 = vsel %vm1234, %v625, 64.0
      %v1243 = vsel %vm1235, %v625, 64.0
      %v1244 = vsel %vm1236, %v625, 64.0
      %v1245 = vsel %vm1237, %v625, 64.0
      %v1246 = vsel %vm634, %v1238, inf
      %1247 = vmin.xlane.f32.xlu0 %v1246
      %v1248 = vpop.xlane.xlu0 %1247
      %v1249 = vsel %vm634, %v1239, inf
      %1250 = vmin.xlane.f32.xlu0 %v1249
      %v1251 = vpop.xlane.xlu0 %1250
      %v1252 = vsel %vm634, %v1240, inf
      %1253 = vmin.xlane.f32.xlu0 %v1252
      %v1254 = vpop.xlane.xlu0 %1253
      %v1255 = vsel %vm634, %v1241, inf
      %1256 = vmin.xlane.f32.xlu0 %v1255
      %v1257 = vpop.xlane.xlu0 %1256
      %v1258 = vsel %vm634, %v1242, inf
      %1259 = vmin.xlane.f32.xlu0 %v1258
      %v1260 = vpop.xlane.xlu0 %1259
      %v1261 = vsel %vm634, %v1243, inf
      %1262 = vmin.xlane.f32.xlu0 %v1261
      %v1263 = vpop.xlane.xlu0 %1262
      %v1264 = vsel %vm634, %v1244, inf
      %1265 = vmin.xlane.f32.xlu0 %v1264
      %v1266 = vpop.xlane.xlu0 %1265
      %v1267 = vsel %vm634, %v1245, inf
      %1268 = vmin.xlane.f32.xlu0 %v1267
      %v1269 = vpop.xlane.xlu0 %1268
      %vm1270 = vcmp.eq.f32.partialorder %v625, %v1248
      %vm1271 = vcmp.eq.f32.partialorder %v625, %v1251
      %vm1272 = vcmp.eq.f32.partialorder %v625, %v1254
      %vm1273 = vcmp.eq.f32.partialorder %v625, %v1257
      %vm1274 = vcmp.eq.f32.partialorder %v625, %v1260
      %vm1275 = vcmp.eq.f32.partialorder %v625, %v1263
      %vm1276 = vcmp.eq.f32.partialorder %v625, %v1266
      %vm1277 = vcmp.eq.f32.partialorder %v625, %v1269
      %v1278 = vsel %vm1270, 1, 0
      %v1279 = vsel %vm1271, 1, 0
      %v1280 = vsel %vm1272, 1, 0
      %v1281 = vsel %vm1273, 1, 0
      %v1282 = vsel %vm1274, 1, 0
      %v1283 = vsel %vm1275, 1, 0
      %v1284 = vsel %vm1276, 1, 0
      %v1285 = vsel %vm1277, 1, 0
      %v1286 = vcvt.s32.f32 %v1278
      %v1287 = vcvt.s32.f32 %v1279
      %v1288 = vcvt.s32.f32 %v1280
      %v1289 = vcvt.s32.f32 %v1281
      %v1290 = vcvt.s32.f32 %v1282
      %v1291 = vcvt.s32.f32 %v1283
      %v1292 = vcvt.s32.f32 %v1284
      %v1293 = vcvt.s32.f32 %v1285
      %v1294 = vpack.c.bf16 %v1287, %v1286
      %v1295 = vpack.c.bf16 %v1289, %v1288
      %v1296 = vpack.c.bf16 %v1291, %v1290
      %v1297 = vpack.c.bf16 %v1293, %v1292
      %v1299 = vsel %vm634, %v1294, 0
      %v1302 = vsel %vm634, %v1295, 0
      %v1305 = vsel %vm634, %v1296, 0
      %v1308 = vsel %vm634, %v1297, 0
      %1310 = vmatprep.subr.bf16.mxu0 0
      %1311 = vmatpush1.bf16.msra.mxu0 %v743
      %1312 = vmatprep.subr.bf16.mxu0 0
      %1313 = vmatpush1.bf16.msra.mxu0 %v744
      %1314 = vmatprep.subr.bf16.mxu0 0
      %1315 = vmatpush1.bf16.msra.mxu0 %v745
      %1316 = vmatprep.subr.bf16.mxu0 0
      %1317 = vmatpush1.bf16.msra.mxu0 %v746
      %1318 = vmatprep.subr.bf16.mxu0 0
      %1319 = vmatpush1.bf16.msra.mxu0 0
      %1320 = vmatprep.subr.bf16.mxu0 0
      %1321 = vmatpush1.bf16.msra.mxu0 0
      %1322 = vmatprep.subr.bf16.mxu0 0
      %1323 = vmatpush1.bf16.msra.mxu0 0
      %1324 = vmatprep.subr.bf16.mxu0 0
      %1325 = vmatpush1.bf16.msra.mxu0 0
      %1326 = vmatprep.subr.bf16.mxu0 0
      %1327 = vmatpush1.bf16.msra.mxu0 0
      %1328 = vmatprep.subr.bf16.mxu0 0
      %1329 = vmatpush1.bf16.msra.mxu0 0
      %1330 = vmatprep.subr.bf16.mxu0 0
      %1331 = vmatpush1.bf16.msra.mxu0 0
      %1332 = vmatprep.subr.bf16.mxu0 0
      %1333 = vmatpush1.bf16.msra.mxu0 0
      %1334 = vmatprep.subr.bf16.mxu0 0
      %1335 = vmatpush1.bf16.msra.mxu0 0
      %1336 = vmatprep.subr.bf16.mxu0 0
      %1337 = vmatpush1.bf16.msra.mxu0 0
      %1338 = vmatprep.subr.bf16.mxu0 0
      %1339 = vmatpush1.bf16.msra.mxu0 0
      %1340 = vmatprep.subr.bf16.mxu0 0
      %1341 = vmatpush1.bf16.msra.mxu0 0
      %1342 = vmatprep.mubr.bf16.mxu0 0
      %1343 = vmatmul.mubr.bf16.gmra.mrb[0].mxu0 %v1299
      %v1344 = vpop.f32.mrb[0].mxu0
      %v1345 = vadd.f32 0.0, %v1344
      %v1346 = vpop.f32.mrb[0].mxu0
      %v1347 = vpop.f32.mrb[0].mxu0
      %v1348 = vadd.f32 0.0, %v1347
      %v1349 = vpop.f32.mrb[0].mxu0
      %1350 = vmatprep.mubr.bf16.mxu0 0
      %1351 = vmatmul.mubr.bf16.gmra.mrb[0].mxu0 %v1302
      %v1352 = vpop.f32.mrb[0].mxu0
      %v1353 = vadd.f32 0.0, %v1352
      %v1354 = vpop.f32.mrb[0].mxu0
      %v1355 = vpop.f32.mrb[0].mxu0
      %v1356 = vadd.f32 0.0, %v1355
      %v1357 = vpop.f32.mrb[0].mxu0
      %1358 = vmatprep.mubr.bf16.mxu0 0
      %1359 = vmatmul.mubr.bf16.gmra.mrb[0].mxu0 %v1305
      %v1360 = vpop.f32.mrb[0].mxu0
      %v1361 = vadd.f32 0.0, %v1360
      %v1362 = vpop.f32.mrb[0].mxu0
      %v1363 = vpop.f32.mrb[0].mxu0
      %v1364 = vadd.f32 0.0, %v1363
      %v1365 = vpop.f32.mrb[0].mxu0
      %1366 = vmatprep.mubr.bf16.mxu0 0
      %1367 = vmatmul.mubr.bf16.gmra.mrb[0].mxu0 %v1308
      %v1368 = vpop.f32.mrb[0].mxu0
      %v1369 = vadd.f32 0.0, %v1368
      %v1370 = vpop.f32.mrb[0].mxu0
      %v1371 = vpop.f32.mrb[0].mxu0
      %v1372 = vadd.f32 0.0, %v1371
      %v1373 = vpop.f32.mrb[0].mxu0
      %1374 = vdwg.mxu0
      %v1375 = vmax.f32 %v1190, %v1345
      %v1376 = vmax.f32 %v1191, %v1348
      %v1377 = vmax.f32 %v1192, %v1353
      %v1378 = vmax.f32 %v1193, %v1356
      %v1379 = vmax.f32 %v1194, %v1361
      %v1380 = vmax.f32 %v1195, %v1364
      %v1381 = vmax.f32 %v1196, %v1369
      %v1382 = vmax.f32 %v1197, %v1372
      %v1383 = vld [vmem:[%s337] sm:$0xff]
      %v1384 = vld [vmem:[%s337 + $0x8] sm:$0xff]
      %v1385 = vld [vmem:[%s337 + $0x10] sm:$0xff]
      %v1386 = vld [vmem:[%s337 + $0x18] sm:$0xff]
      %v1387 = vld [vmem:[%s337 + $0x20] sm:$0xff]
      %v1388 = vld [vmem:[%s337 + $0x28] sm:$0xff]
      %v1389 = vld [vmem:[%s337 + $0x30] sm:$0xff]
      %v1390 = vld [vmem:[%s337 + $0x38] sm:$0xff]
      %v1391 = vadd.f32 %v1383, %v1375
      %v1392 = vadd.f32 %v1384, %v1376
      %v1393 = vadd.f32 %v1385, %v1377
      %v1394 = vadd.f32 %v1386, %v1378
      %v1395 = vadd.f32 %v1387, %v1379
      %v1396 = vadd.f32 %v1388, %v1380
      %v1397 = vadd.f32 %v1389, %v1381
      %v1398 = vadd.f32 %v1390, %v1382
      %v1399 = vmax.f32 %v1391, 0.0
      %v1400 = vmax.f32 %v1392, 0.0
      %v1401 = vmax.f32 %v1393, 0.0
      %v1402 = vmax.f32 %v1394, 0.0
      %v1403 = vmax.f32 %v1395, 0.0
      %v1404 = vmax.f32 %v1396, 0.0
      %v1405 = vmax.f32 %v1397, 0.0
      %v1406 = vmax.f32 %v1398, 0.0
      %vm1407 = vcmask 130048
      %1408 = vst.msk [vmem:[%s352] sm:$0xff] %vm1407, %v1399
      %1409 = vst.msk [vmem:[%s352 + $0x8] sm:$0xff] %vm1407, %v1400
      %1410 = vst.msk [vmem:[%s352 + $0x10] sm:$0xff] %vm1407, %v1401
      %1411 = vst.msk [vmem:[%s352 + $0x18] sm:$0xff] %vm1407, %v1402
      %1412 = vst.msk [vmem:[%s352 + $0x20] sm:$0xff] %vm1407, %v1403
      %1413 = vst.msk [vmem:[%s352 + $0x28] sm:$0xff] %vm1407, %v1404
      %1414 = vst.msk [vmem:[%s352 + $0x30] sm:$0xff] %vm1407, %v1405
      %1415 = vst.msk [vmem:[%s352 + $0x38] sm:$0xff] %vm1407, %v1406
      %s1416 = smul.u32 8, %s21
      %p1417 = scmp.lt.s32.totalorder %s20, 1
      %s1418 = scalar_select %p1417, %s20, 1
      %p1419 = scmp.lt.s32.totalorder %s1416, 7
      %s1420 = scalar_select %p1419, %s1416, 7
      %s1421 = smul.addr %s1418, 8
      %s1422 = sadd.s32 %s1420, %s1421
      %s1423 = smul.addr %s1422, 8
      %s1424 = scalar_lea.vmem %s5, %s1423
      // Predicated region
      $region41: #{sparse_deepgcn_forward.5} parent=39 // pred_check
        %p1425 = pneg %p182
      $region42: #{sparse_deepgcn_forward.5} parent=39 // pred_check_branch
        %1427 = sbr.rel (%p1425) target = $region44
      $region43: #{sparse_deepgcn_forward.5} parent=39 // pred_region
        %s1428 = smul.u32 8, %s21
      $region44: #{sparse_deepgcn_forward.5} parent=39 // pred_fallthru
        _
    $region40: #{sparse_deepgcn_forward.5} parent=5 // pred_fallthru
      _
    %p1429 = scmp.le.s32.totalorder 2, %s11
    // Predicated region
    $region45: #{sparse_deepgcn_forward.5} parent=5 // pred_check
      %p1430 = pneg %p1429
    $region46: #{sparse_deepgcn_forward.5} parent=5 // pred_check_branch
      %1432 = sbr.rel (%p1430) target = $region48
    $region47: #{sparse_deepgcn_forward.5} parent=5 // pred_region
      %s1433 = ssub.s32 %s11, 2
      // Predicated region
      $region49: #{sparse_deepgcn_forward.5} parent=47 // pred_check
        %p1434 = pneg %p188
      $region50: #{sparse_deepgcn_forward.5} parent=47 // pred_check_branch
        %1436 = sbr.rel (%p1434) target = $region52
      $region51: #{sparse_deepgcn_forward.5} parent=47 // pred_region
        %s1437 = smul.u32 8, %s23
        %p1438 = scmp.lt.s32.totalorder %s22, 1
        %s1439 = scalar_select %p1438, %s22, 1
        %p1440 = scmp.lt.s32.totalorder %s1437, 7
        %s1441 = scalar_select %p1440, %s1437, 7
        %s1442 = smul.addr %s1439, 8
        %s1443 = sadd.s32 %s1441, %s1442
        %s1444 = smul.addr %s1443, 8
        %s1445 = scalar_lea.vmem %s5, %s1444
      $region52: #{sparse_deepgcn_forward.5} parent=47 // pred_fallthru
        _
    $region48: #{sparse_deepgcn_forward.5} parent=5 // pred_fallthru
      _
  $region6: #{sparse_deepgcn_forward.5} parent=0 // loop_footer
    %s15 = sadd.s32 1, %s11
  $region7: #{sparse_deepgcn_forward.5} parent=0 // loop_footer_branch
    %10 = sbr.rel target = $region3
  $region8: #{sparse_deepgcn_forward.5} parent=0 // loop_exit
    _

// kernel: sparse_deepgcn_forward.8
$region0: #{sparse_deepgcn_forward.8}
  #allocation0 [shape = 'u32[]', space=smem, size = 0x4, offset = 0x4, fixed_abs, tag = 'smem constant byte address 0x4 - core index']
  #allocation1 [shape = 'u32[144,128]{1,0:T(1,128)}', space=vmem, size = 0x12000, scoped, tag = 'internal scratch']
  %s0 = inlined_call_operand.vmem [shape: f32[2,64,48], index: 0, kind: input, shape index: {}]
  %s1 = inlined_call_operand.vmem [shape: bf16[48,1024], index: 1, kind: input, shape index: {}]
  %s2 = inlined_call_operand.vmem [shape: f32[1,1024], index: 2, kind: input, shape index: {}]
  %s3 = inlined_call_operand.vmem [shape: f32[1,2,1,1024], index: 3, kind: output, shape index: {}]
  %s4 = sld [smem:[#allocation0]]
  $region49: #{sparse_deepgcn_forward.8} parent=0
    _
  %s6 = ssub.s32 1, %s4
  %s7 = scalar_select 0, %s6, %s4
  loop: start=0, step=1, limit=4
  $region2: #{sparse_deepgcn_forward.8} parent=0 // loop_pre_header
    _
  $region3: #{sparse_deepgcn_forward.8} parent=0 // loop_header
    %s9 = sphi 0, %s13
    %p10 = scmp.ge.s32.totalorder %s9, 4
    %s16 = sphi 0, %s35
    %s17 = sphi 0, %s31
    %s18 = sphi 0, %s27
    %s19 = sphi 0, %s16
    %s20 = sphi 0, %s17
    %s21 = sphi 0, %s18
    %s22 = sphi 0, %s19
    %s23 = sphi 0, %s20
    %s24 = sphi 0, %s21
    %s42 = sphi 0, %s44
    %s45 = sphi 0, %s42
    %s46 = sphi 0, %s45
    %s62 = sphi 0, %s46
    %s66 = sphi 0, %s66
    %s68 = sphi 0, %s66
    %s69 = sphi 0, %s68
    %s83 = sphi 0, %s69
    %s87 = sphi 0, %s87
    %s89 = sphi 0, %s87
    %s90 = sphi 0, %s89
    %s104 = sphi 0, %s90
    %s112 = sphi 0, %s114
    %s115 = sphi 0, %s112
    %s116 = sphi 0, %s115
    %s132 = sphi 0, %s116
  $region4: #{sparse_deepgcn_forward.8} parent=0 // loop_header_branch
    %12 = sbr.rel (%p10) target = $region8
  $region5: #{sparse_deepgcn_forward.8} parent=0 // loop_body
    %s14 = ssub.s32 %s9, 1
    %s15 = ssub.s32 %s9, 2
    %s25 = sadd.s32 1, %s18
    %p26 = scmp.ge.s32.totalorder %s25, 1
    %s27 = scalar_select %p26, 0, %s25
    %s28 = sadd.s32 1, %s17
    %s29 = scalar_select %p26, %s28, %s17
    %p30 = scmp.ge.s32.totalorder %s29, 1
    %s31 = scalar_select %p30, 0, %s29
    %s32 = sadd.s32 1, %s16
    %s33 = scalar_select %p30, %s32, %s16
    %p34 = scmp.ge.s32.totalorder %s33, 2
    %s35 = scalar_select %p34, 0, %s33
    %s36 = sadd.s32 %s17, %s18
    %s37 = sadd.s32 %s31, %s27
    %s38 = ssub.s32 %s16, %s35
    %s39 = ssub.s32 %s36, %s37
    %s40 = sor.u32 %s38, %s39
    %p41 = scmp.eq.s32.totalorder %s40, 0
    %s43 = sadd.s32 %s42, 1
    %s44 = scalar_select %p41, %s42, %s43
    %p47 = pneg %p41
    %p48 = scmp.eq.s32.totalorder %s9, 1
    %p49 = por %p47, %p48
    %p50 = scmp.ne.s32.totalorder %s42, %s45
    %p51 = scmp.eq.s32.totalorder %s9, 0
    %p52 = por %p50, %p51
    %p53 = scmp.ne.s32.totalorder %s42, %s45
    %p54 = scmp.eq.s32.totalorder %s14, 1
    %p55 = por %p53, %p54
    %p56 = scmp.ne.s32.totalorder %s45, %s46
    %p57 = scmp.eq.s32.totalorder %s14, 0
    %p58 = por %p56, %p57
    %p59 = scmp.ne.s32.totalorder %s45, %s46
    %p60 = scmp.eq.s32.totalorder %s15, 1
    %p61 = por %p59, %p60
    %p63 = scmp.ne.s32.totalorder %s46, %s62
    %p64 = scmp.eq.s32.totalorder %s15, 0
    %p65 = por %p63, %p64
    %s67 = sadd.s32 %s66, 1
    %p70 = scmp.eq.s32.totalorder %s9, 1
    %p71 = scmp.ne.s32.totalorder %s66, %s68
    %p72 = scmp.eq.s32.totalorder %s9, 0
    %p73 = por %p71, %p72
    %p74 = scmp.ne.s32.totalorder %s66, %s68
    %p75 = scmp.eq.s32.totalorder %s14, 1
    %p76 = por %p74, %p75
    %p77 = scmp.ne.s32.totalorder %s68, %s69
    %p78 = scmp.eq.s32.totalorder %s14, 0
    %p79 = por %p77, %p78
    %p80 = scmp.ne.s32.totalorder %s68, %s69
    %p81 = scmp.eq.s32.totalorder %s15, 1
    %p82 = por %p80, %p81
    %p84 = scmp.ne.s32.totalorder %s69, %s83
    %p85 = scmp.eq.s32.totalorder %s15, 0
    %p86 = por %p84, %p85
    %s88 = sadd.s32 %s87, 1
    %p91 = scmp.eq.s32.totalorder %s9, 1
    %p92 = scmp.ne.s32.totalorder %s87, %s89
    %p93 = scmp.eq.s32.totalorder %s9, 0
    %p94 = por %p92, %p93
    %p95 = scmp.ne.s32.totalorder %s87, %s89
    %p96 = scmp.eq.s32.totalorder %s14, 1
    %p97 = por %p95, %p96
    %p98 = scmp.ne.s32.totalorder %s89, %s90
    %p99 = scmp.eq.s32.totalorder %s14, 0
    %p100 = por %p98, %p99
    %p101 = scmp.ne.s32.totalorder %s89, %s90
    %p102 = scmp.eq.s32.totalorder %s15, 1
    %p103 = por %p101, %p102
    %p105 = scmp.ne.s32.totalorder %s90, %s104
    %p106 = scmp.eq.s32.totalorder %s15, 0
    %p107 = por %p105, %p106
    %s108 = ssub.s32 %s17, %s31
    %s109 = ssub.s32 %s16, %s35
    %s110 = sor.u32 %s108, %s109
    %p111 = scmp.eq.s32.totalorder %s110, 0
    %s113 = sadd.s32 %s112, 1
    %s114 = scalar_select %p111, %s112, %s113
    %p117 = pneg %p111
    %p118 = scmp.eq.s32.totalorder %s9, 1
    %p119 = por %p117, %p118
    %p120 = scmp.ne.s32.totalorder %s112, %s115
    %p121 = scmp.eq.s32.totalorder %s9, 0
    %p122 = por %p120, %p121
    %p123 = scmp.ne.s32.totalorder %s112, %s115
    %p124 = scmp.eq.s32.totalorder %s14, 1
    %p125 = por %p123, %p124
    %p126 = scmp.ne.s32.totalorder %s115, %s116
    %p127 = scmp.eq.s32.totalorder %s14, 0
    %p128 = por %p126, %p127
    %p129 = scmp.ne.s32.totalorder %s115, %s116
    %p130 = scmp.eq.s32.totalorder %s15, 1
    %p131 = por %p129, %p130
    %p133 = scmp.ne.s32.totalorder %s116, %s132
    %p134 = scmp.eq.s32.totalorder %s15, 0
    %p135 = por %p133, %p134
    %p136 = scmp.le.s32.totalorder 1, %s9
    %p137 = scmp.lt.s32.totalorder %s9, 3
    %p138 = pnand %p136, %p137
    %p139 = pneg %p138
    // Predicated region
    $region9: #{sparse_deepgcn_forward.8} parent=5 // pred_check
      _
    $region10: #{sparse_deepgcn_forward.8} parent=5 // pred_check_branch
      %141 = sbr.rel (%p138) target = $region12
    $region11: #{sparse_deepgcn_forward.8} parent=5 // pred_region
      %s142 = ssub.s32 %s9, 1
      // Predicated region
      $region13: #{sparse_deepgcn_forward.8} parent=11 // pred_check
        %p143 = pneg %p79
      $region14: #{sparse_deepgcn_forward.8} parent=11 // pred_check_branch
        %145 = sbr.rel (%p143) target = $region16
      $region15: #{sparse_deepgcn_forward.8} parent=11 // pred_region
        _
      $region16: #{sparse_deepgcn_forward.8} parent=11 // pred_fallthru
        _
      // Predicated region
      $region17: #{sparse_deepgcn_forward.8} parent=11 // pred_check
        %p146 = pneg %p100
      $region18: #{sparse_deepgcn_forward.8} parent=11 // pred_check_branch
        %148 = sbr.rel (%p146) target = $region20
      $region19: #{sparse_deepgcn_forward.8} parent=11 // pred_region
        _
      $region20: #{sparse_deepgcn_forward.8} parent=11 // pred_fallthru
        _
    $region12: #{sparse_deepgcn_forward.8} parent=5 // pred_fallthru
      _
    %p149 = scmp.lt.s32.totalorder %s9, 2
    // Predicated region
    $region21: #{sparse_deepgcn_forward.8} parent=5 // pred_check
      %p150 = pneg %p149
    $region22: #{sparse_deepgcn_forward.8} parent=5 // pred_check_branch
      %152 = sbr.rel (%p150) target = $region24
    $region23: #{sparse_deepgcn_forward.8} parent=5 // pred_region
      // Predicated region
      $region25: #{sparse_deepgcn_forward.8} parent=23 // pred_check
        %p153 = pneg %p52
      $region26: #{sparse_deepgcn_forward.8} parent=23 // pred_check_branch
        %155 = sbr.rel (%p153) target = $region28
      $region27: #{sparse_deepgcn_forward.8} parent=23 // pred_region
        %s156 = sadd.s32 %s17, %s18
        %s157 = smul.u32 8, %s156
        %p158 = scmp.lt.s32.totalorder %s16, 1
        %s159 = scalar_select %p158, %s16, 1
        %p160 = scmp.lt.s32.totalorder %s157, 7
        %s161 = scalar_select %p160, %s157, 7
        %s162 = smul.addr %s159, 8
        %s163 = sadd.s32 %s161, %s162
        %s164 = smul.addr %s163, 8
        %s165 = scalar_lea.vmem %s0, %s164
        %s166 = sadd.s32 %s17, %s18
        %s167 = smul.u32 8, %s166
      $region28: #{sparse_deepgcn_forward.8} parent=23 // pred_fallthru
        _
    $region24: #{sparse_deepgcn_forward.8} parent=5 // pred_fallthru
      _
    %p168 = scmp.le.s32.totalorder 1, %s9
    %p169 = scmp.lt.s32.totalorder %s9, 3
    %p170 = pnand %p168, %p169
    %p171 = pneg %p170
    // Predicated region
    $region29: #{sparse_deepgcn_forward.8} parent=5 // pred_check
      _
    $region30: #{sparse_deepgcn_forward.8} parent=5 // pred_check_branch
      %173 = sbr.rel (%p170) target = $region32
    $region31: #{sparse_deepgcn_forward.8} parent=5 // pred_region
      %s174 = ssub.s32 %s9, 1
      %s175 = sadd.s32 %s20, %s21
      %s176 = smul.u32 8, %s175
      %p177 = scmp.lt.s32.totalorder %s19, 1
      %s178 = scalar_select %p177, %s19, 1
      %p179 = scmp.lt.s32.totalorder %s176, 7
      %s180 = scalar_select %p179, %s176, 7
      %s181 = smul.addr %s178, 8
      %s182 = sadd.s32 %s180, %s181
      %s183 = smul.addr %s182, 8
      %s184 = scalar_lea.vmem %s0, %s183
      %p185 = pneg %p58
      %p186 = pneg %p55
      %p187 = pneg %p79
      %p188 = pneg %p76
      %p189 = pneg %p100
      %p190 = pneg %p97
      %p191 = pneg %p128
      %p192 = pneg %p125
      %p193 = scmp.lt.s32.totalorder %s20, 0
      %s194 = scalar_select %p193, %s20, 0
      %p195 = scmp.lt.s32.totalorder %s19, 1
      %s196 = scalar_select %p195, %s19, 1
      %s197 = smul.addr %s196, 8
      %s198 = smul.addr %s194, 16
      %s199 = sadd.s32 %s197, %s198
      %s200 = scalar_lea.vmem %s3, %s199
      %s201 = sadd.s32 %s20, %s21
      %s202 = smul.u32 8, %s201
      %p203 = scmp.lt.s32.totalorder %s19, 1
      %s204 = scalar_select %p203, %s19, 1
      %p205 = scmp.lt.s32.totalorder %s202, 7
      %s206 = scalar_select %p205, %s202, 7
      %s207 = smul.addr %s204, 8
      %s208 = sadd.s32 %s206, %s207
      %s209 = smul.addr %s208, 8
      %s210 = scalar_lea.vmem %s0, %s209
      %s211 = sadd.s32 %s20, %s21
      %s212 = smul.u32 8, %s211
      %p213 = scmp.lt.s32.totalorder %s20, 0
      %s214 = scalar_select %p213, %s20, 0
      %p215 = scmp.lt.s32.totalorder %s19, 1
      %s216 = scalar_select %p215, %s19, 1
      %s217 = smul.addr %s216, 8
      %s218 = smul.addr %s214, 16
      %s219 = sadd.s32 %s217, %s218
      %s220 = scalar_lea.vmem %s3, %s219
      %v222 = vld [vmem:[%s210] sm:$0xff]
      %v223 = vld [vmem:[%s210 + $0x8] sm:$0xff]
      %v224 = vld [vmem:[%s210 + $0x10] sm:$0xff]
      %v225 = vld [vmem:[%s210 + $0x18] sm:$0xff]
      %v226 = vld [vmem:[%s210 + $0x20] sm:$0xff]
      %v227 = vld [vmem:[%s210 + $0x28] sm:$0xff]
      %v228 = vld [vmem:[%s210 + $0x30] sm:$0xff]
      %v229 = vld [vmem:[%s210 + $0x38] sm:$0xff]
      %v230 = vpack.c.bf16 %v223, %v222
      %v231 = vpack.c.bf16 %v225, %v224
      %v232 = vpack.c.bf16 %v227, %v226
      %v233 = vpack.c.bf16 %v229, %v228
      %v234 = vld [vmem:[%s1] sm:$0xff]
      %v235 = vld [vmem:[%s1 + $0x8] sm:$0xff]
      %v236 = vld [vmem:[%s1 + $0x10] sm:$0xff]
      %v237 = vld [vmem:[%s1 + $0x18] sm:$0xff]
      %v238 = vld [vmem:[%s1 + $0x20] sm:$0xff]
      %v239 = vld [vmem:[%s1 + $0x28] sm:$0xff]
      %v240 = vld [vmem:[%s1 + $0x30] sm:$0xff]
      %v241 = vld [vmem:[%s1 + $0x38] sm:$0xff]
      %v242 = vld [vmem:[%s1 + $0x40] sm:$0xff]
      %v243 = vld [vmem:[%s1 + $0x48] sm:$0xff]
      %v244 = vld [vmem:[%s1 + $0x50] sm:$0xff]
      %v245 = vld [vmem:[%s1 + $0x58] sm:$0xff]
      %v246 = vld [vmem:[%s1 + $0x60] sm:$0xff]
      %v247 = vld [vmem:[%s1 + $0x68] sm:$0xff]
      %v248 = vld [vmem:[%s1 + $0x70] sm:$0xff]
      %v249 = vld [vmem:[%s1 + $0x78] sm:$0xff]
      %v250 = vld [vmem:[%s1 + $0x80] sm:$0xff]
      %v251 = vld [vmem:[%s1 + $0x88] sm:$0xff]
      %v252 = vld [vmem:[%s1 + $0x90] sm:$0xff]
      %v253 = vld [vmem:[%s1 + $0x98] sm:$0xff]
      %v254 = vld [vmem:[%s1 + $0xa0] sm:$0xff]
      %v255 = vld [vmem:[%s1 + $0xa8] sm:$0xff]
      %v256 = vld [vmem:[%s1 + $0xb0] sm:$0xff]
      %v257 = vld [vmem:[%s1 + $0xb8] sm:$0xff]
      %v258 = vld [vmem:[%s2] sm:$0xff]
      %v260 = vlaneseq
      %v261 = vshrl.u32 %v260, 7
      %v262 = vsub.s32 0, %v261
      %v263 = vrot.slane %v258, %v262
      %v264 = vlaneseq
      %v265 = vshrl.u32 %v264, 7
      %v266 = vsub.s32 1, %v265
      %v267 = vrot.slane %v258, %v266
      %v268 = vlaneseq
      %v269 = vshrl.u32 %v268, 7
      %v270 = vsub.s32 2, %v269
      %v271 = vrot.slane %v258, %v270
      %v272 = vlaneseq
      %v273 = vshrl.u32 %v272, 7
      %v274 = vsub.s32 3, %v273
      %v275 = vrot.slane %v258, %v274
      %v276 = vlaneseq
      %v277 = vshrl.u32 %v276, 7
      %v278 = vsub.s32 4, %v277
      %v279 = vrot.slane %v258, %v278
      %v280 = vlaneseq
      %v281 = vshrl.u32 %v280, 7
      %v282 = vsub.s32 5, %v281
      %v283 = vrot.slane %v258, %v282
      %v284 = vlaneseq
      %v285 = vshrl.u32 %v284, 7
      %v286 = vsub.s32 6, %v285
      %v287 = vrot.slane %v258, %v286
      %v288 = vlaneseq
      %v289 = vshrl.u32 %v288, 7
      %v290 = vsub.s32 7, %v289
      %v291 = vrot.slane %v258, %v290
      %v324 = vunpack.c.l.b16 %v234
      %v325 = vunpack.c.h.b16 %v234
      %v326 = vunpack.c.l.b16 %v235
      %v327 = vunpack.c.h.b16 %v235
      %v328 = vunpack.c.l.b16 %v236
      %v329 = vunpack.c.h.b16 %v236
      %v330 = vunpack.c.l.b16 %v237
      %v331 = vunpack.c.h.b16 %v237
      %v332 = vunpack.c.l.b16 %v238
      %v333 = vunpack.c.h.b16 %v238
      %v334 = vunpack.c.l.b16 %v239
      %v335 = vunpack.c.h.b16 %v239
      %v336 = vunpack.c.l.b16 %v240
      %v337 = vunpack.c.h.b16 %v240
      %v338 = vunpack.c.l.b16 %v241
      %v339 = vunpack.c.h.b16 %v241
      %v340 = vunpack.c.l.b16 %v242
      %v341 = vunpack.c.h.b16 %v242
      %v342 = vunpack.c.l.b16 %v243
      %v343 = vunpack.c.h.b16 %v243
      %v344 = vunpack.c.l.b16 %v244
      %v345 = vunpack.c.h.b16 %v244
      %v346 = vunpack.c.l.b16 %v245
      %v347 = vunpack.c.h.b16 %v245
      %v348 = vunpack.c.l.b16 %v246
      %v349 = vunpack.c.h.b16 %v246
      %v350 = vunpack.c.l.b16 %v247
      %v351 = vunpack.c.h.b16 %v247
      %v352 = vunpack.c.l.b16 %v248
      %v353 = vunpack.c.h.b16 %v248
      %v354 = vunpack.c.l.b16 %v249
      %v355 = vunpack.c.h.b16 %v249
      %v356 = vunpack.c.l.b16 %v250
      %v357 = vunpack.c.h.b16 %v250
      %v358 = vunpack.c.l.b16 %v251
      %v359 = vunpack.c.h.b16 %v251
      %v360 = vunpack.c.l.b16 %v252
      %v361 = vunpack.c.h.b16 %v252
      %v362 = vunpack.c.l.b16 %v253
      %v363 = vunpack.c.h.b16 %v253
      %v364 = vunpack.c.l.b16 %v254
      %v365 = vunpack.c.h.b16 %v254
      %v366 = vunpack.c.l.b16 %v255
      %v367 = vunpack.c.h.b16 %v255
      %v368 = vunpack.c.l.b16 %v256
      %v369 = vunpack.c.h.b16 %v256
      %v370 = vunpack.c.l.b16 %v257
      %v371 = vunpack.c.h.b16 %v257
      %v372 = vpack.c.b16 %v332, %v324
      %v373 = vpack.c.b16 %v333, %v325
      %v374 = vpack.c.b16 %v334, %v326
      %v375 = vpack.c.b16 %v335, %v327
      %v376 = vpack.c.b16 %v336, %v328
      %v377 = vpack.c.b16 %v337, %v329
      %v378 = vpack.c.b16 %v338, %v330
      %v379 = vpack.c.b16 %v339, %v331
      %v380 = vpack.c.b16 %v348, %v340
      %v381 = vpack.c.b16 %v349, %v341
      %v382 = vpack.c.b16 %v350, %v342
      %v383 = vpack.c.b16 %v351, %v343
      %v384 = vpack.c.b16 %v352, %v344
      %v385 = vpack.c.b16 %v353, %v345
      %v386 = vpack.c.b16 %v354, %v346
      %v387 = vpack.c.b16 %v355, %v347
      %v388 = vpack.c.b16 %v364, %v356
      %v389 = vpack.c.b16 %v365, %v357
      %v390 = vpack.c.b16 %v366, %v358
      %v391 = vpack.c.b16 %v367, %v359
      %v392 = vpack.c.b16 %v368, %v360
      %v393 = vpack.c.b16 %v369, %v361
      %v394 = vpack.c.b16 %v370, %v362
      %v395 = vpack.c.b16 %v371, %v363
      %vm420 = vcmask 392192
      %v422 = vsel %vm420, %v230, 0
      %v425 = vsel %vm420, %v231, 0
      %v428 = vsel %vm420, %v232, 0
      %v431 = vsel %vm420, %v233, 0
      %433 = vmatprep.subr.bf16.mxu0 %v373
      %434 = vmatpush1.bf16.msra.mxu0 %v372
      %435 = vmatprep.subr.bf16.mxu0 %v381
      %436 = vmatpush1.bf16.msra.mxu0 %v380
      %437 = vmatprep.subr.bf16.mxu0 %v389
      %438 = vmatpush1.bf16.msra.mxu0 %v388
      %439 = vmatprep.subr.bf16.mxu0 0
      %440 = vmatpush1.bf16.msra.mxu0 0
      %441 = vmatprep.subr.bf16.mxu0 0
      %442 = vmatpush1.bf16.msra.mxu0 0
      %443 = vmatprep.subr.bf16.mxu0 0
      %444 = vmatpush1.bf16.msra.mxu0 0
      %445 = vmatprep.subr.bf16.mxu0 0
      %446 = vmatpush1.bf16.msra.mxu0 0
      %447 = vmatprep.subr.bf16.mxu0 0
      %448 = vmatpush1.bf16.msra.mxu0 0
      %449 = vmatprep.subr.bf16.mxu0 0
      %450 = vmatpush1.bf16.msra.mxu0 0
      %451 = vmatprep.subr.bf16.mxu0 0
      %452 = vmatpush1.bf16.msra.mxu0 0
      %453 = vmatprep.subr.bf16.mxu0 0
      %454 = vmatpush1.bf16.msra.mxu0 0
      %455 = vmatprep.subr.bf16.mxu0 0
      %456 = vmatpush1.bf16.msra.mxu0 0
      %457 = vmatprep.subr.bf16.mxu0 0
      %458 = vmatpush1.bf16.msra.mxu0 0
      %459 = vmatprep.subr.bf16.mxu0 0
      %460 = vmatpush1.bf16.msra.mxu0 0
      %461 = vmatprep.subr.bf16.mxu0 0
      %462 = vmatpush1.bf16.msra.mxu0 0
      %463 = vmatprep.subr.bf16.mxu0 0
      %464 = vmatpush1.bf16.msra.mxu0 0
      %465 = vmatprep.mubr.bf16.mxu0 0
      %466 = vmatmul.mubr.bf16.gmra.mrb[0].mxu0 %v422
      %v467 = vpop.f32.mrb[0].mxu0
      %v468 = vadd.f32 %v263, %v467
      %v469 = vpop.f32.mrb[0].mxu0
      %v470 = vadd.f32 %v267, %v469
      %v471 = vpop.f32.mrb[0].mxu0
      %v472 = vadd.f32 %v263, %v471
      %v473 = vpop.f32.mrb[0].mxu0
      %v474 = vadd.f32 %v267, %v473
      %475 = vmatprep.mubr.bf16.mxu0 0
      %476 = vmatmul.mubr.bf16.gmra.mrb[0].mxu0 %v425
      %v477 = vpop.f32.mrb[0].mxu0
      %v478 = vadd.f32 %v263, %v477
      %v479 = vpop.f32.mrb[0].mxu0
      %v480 = vadd.f32 %v267, %v479
      %v481 = vpop.f32.mrb[0].mxu0
      %v482 = vadd.f32 %v263, %v481
      %v483 = vpop.f32.mrb[0].mxu0
      %v484 = vadd.f32 %v267, %v483
      %485 = vmatprep.mubr.bf16.mxu0 0
      %486 = vmatmul.mubr.bf16.gmra.mrb[0].mxu0 %v428
      %v487 = vpop.f32.mrb[0].mxu0
      %v488 = vadd.f32 %v263, %v487
      %v489 = vpop.f32.mrb[0].mxu0
      %v490 = vadd.f32 %v267, %v489
      %v491 = vpop.f32.mrb[0].mxu0
      %v492 = vadd.f32 %v263, %v491
      %v493 = vpop.f32.mrb[0].mxu0
      %v494 = vadd.f32 %v267, %v493
      %495 = vmatprep.mubr.bf16.mxu0 0
      %496 = vmatmul.mubr.bf16.gmra.mrb[0].mxu0 %v431
      %v497 = vpop.f32.mrb[0].mxu0
      %v498 = vadd.f32 %v263, %v497
      %v499 = vpop.f32.mrb[0].mxu0
      %v500 = vadd.f32 %v267, %v499
      %v501 = vpop.f32.mrb[0].mxu0
      %v502 = vadd.f32 %v263, %v501
      %v503 = vpop.f32.mrb[0].mxu0
      %v504 = vadd.f32 %v267, %v503
      %505 = vdwg.mxu0
      %506 = vmatprep.subr.bf16.mxu0 %v375
      %507 = vmatpush1.bf16.msra.mxu0 %v374
      %508 = vmatprep.subr.bf16.mxu0 %v383
      %509 = vmatpush1.bf16.msra.mxu0 %v382
      %510 = vmatprep.subr.bf16.mxu0 %v391
      %511 = vmatpush1.bf16.msra.mxu0 %v390
      %512 = vmatprep.subr.bf16.mxu0 0
      %513 = vmatpush1.bf16.msra.mxu0 0
      %514 = vmatprep.subr.bf16.mxu0 0
      %515 = vmatpush1.bf16.msra.mxu0 0
      %516 = vmatprep.subr.bf16.mxu0 0
      %517 = vmatpush1.bf16.msra.mxu0 0
      %518 = vmatprep.subr.bf16.mxu0 0
      %519 = vmatpush1.bf16.msra.mxu0 0
      %520 = vmatprep.subr.bf16.mxu0 0
      %521 = vmatpush1.bf16.msra.mxu0 0
      %522 = vmatprep.subr.bf16.mxu0 0
      %523 = vmatpush1.bf16.msra.mxu0 0
      %524 = vmatprep.subr.bf16.mxu0 0
      %525 = vmatpush1.bf16.msra.mxu0 0
      %526 = vmatprep.subr.bf16.mxu0 0
      %527 = vmatpush1.bf16.msra.mxu0 0
      %528 = vmatprep.subr.bf16.mxu0 0
      %529 = vmatpush1.bf16.msra.mxu0 0
      %530 = vmatprep.subr.bf16.mxu0 0
      %531 = vmatpush1.bf16.msra.mxu0 0
      %532 = vmatprep.subr.bf16.mxu0 0
      %533 = vmatpush1.bf16.msra.mxu0 0
      %534 = vmatprep.subr.bf16.mxu0 0
      %535 = vmatpush1.bf16.msra.mxu0 0
      %536 = vmatprep.subr.bf16.mxu0 0
      %537 = vmatpush1.bf16.msra.mxu0 0
      %538 = vmatprep.mubr.bf16.mxu0 0
      %539 = vmatmul.mubr.bf16.gmra.mrb[0].mxu0 %v422
      %v540 = vpop.f32.mrb[0].mxu0
      %v541 = vadd.f32 %v271, %v540
      %v542 = vpop.f32.mrb[0].mxu0
      %v543 = vadd.f32 %v275, %v542
      %v544 = vpop.f32.mrb[0].mxu0
      %v545 = vadd.f32 %v271, %v544
      %v546 = vpop.f32.mrb[0].mxu0
      %v547 = vadd.f32 %v275, %v546
      %548 = vmatprep.mubr.bf16.mxu0 0
      %549 = vmatmul.mubr.bf16.gmra.mrb[0].mxu0 %v425
      %v550 = vpop.f32.mrb[0].mxu0
      %v551 = vadd.f32 %v271, %v550
      %v552 = vpop.f32.mrb[0].mxu0
      %v553 = vadd.f32 %v275, %v552
      %v554 = vpop.f32.mrb[0].mxu0
      %v555 = vadd.f32 %v271, %v554
      %v556 = vpop.f32.mrb[0].mxu0
      %v557 = vadd.f32 %v275, %v556
      %558 = vmatprep.mubr.bf16.mxu0 0
      %559 = vmatmul.mubr.bf16.gmra.mrb[0].mxu0 %v428
      %v560 = vpop.f32.mrb[0].mxu0
      %v561 = vadd.f32 %v271, %v560
      %v562 = vpop.f32.mrb[0].mxu0
      %v563 = vadd.f32 %v275, %v562
      %v564 = vpop.f32.mrb[0].mxu0
      %v565 = vadd.f32 %v271, %v564
      %v566 = vpop.f32.mrb[0].mxu0
      %v567 = vadd.f32 %v275, %v566
      %568 = vmatprep.mubr.bf16.mxu0 0
      %569 = vmatmul.mubr.bf16.gmra.mrb[0].mxu0 %v431
      %v570 = vpop.f32.mrb[0].mxu0
      %v571 = vadd.f32 %v271, %v570
      %v572 = vpop.f32.mrb[0].mxu0
      %v573 = vadd.f32 %v275, %v572
      %v574 = vpop.f32.mrb[0].mxu0
      %v575 = vadd.f32 %v271, %v574
      %v576 = vpop.f32.mrb[0].mxu0
      %v577 = vadd.f32 %v275, %v576
      %578 = vdwg.mxu0
      %579 = vmatprep.subr.bf16.mxu0 %v377
      %580 = vmatpush1.bf16.msra.mxu0 %v376
      %581 = vmatprep.subr.bf16.mxu0 %v385
      %582 = vmatpush1.bf16.msra.mxu0 %v384
      %583 = vmatprep.subr.bf16.mxu0 %v393
      %584 = vmatpush1.bf16.msra.mxu0 %v392
      %585 = vmatprep.subr.bf16.mxu0 0
      %586 = vmatpush1.bf16.msra.mxu0 0
      %587 = vmatprep.subr.bf16.mxu0 0
      %588 = vmatpush1.bf16.msra.mxu0 0
      %589 = vmatprep.subr.bf16.mxu0 0
      %590 = vmatpush1.bf16.msra.mxu0 0
      %591 = vmatprep.subr.bf16.mxu0 0
      %592 = vmatpush1.bf16.msra.mxu0 0
      %593 = vmatprep.subr.bf16.mxu0 0
      %594 = vmatpush1.bf16.msra.mxu0 0
      %595 = vmatprep.subr.bf16.mxu0 0
      %596 = vmatpush1.bf16.msra.mxu0 0
      %597 = vmatprep.subr.bf16.mxu0 0
      %598 = vmatpush1.bf16.msra.mxu0 0
      %599 = vmatprep.subr.bf16.mxu0 0
      %600 = vmatpush1.bf16.msra.mxu0 0
      %601 = vmatprep.subr.bf16.mxu0 0
      %602 = vmatpush1.bf16.msra.mxu0 0
      %603 = vmatprep.subr.bf16.mxu0 0
      %604 = vmatpush1.bf16.msra.mxu0 0
      %605 = vmatprep.subr.bf16.mxu0 0
      %606 = vmatpush1.bf16.msra.mxu0 0
      %607 = vmatprep.subr.bf16.mxu0 0
      %608 = vmatpush1.bf16.msra.mxu0 0
      %609 = vmatprep.subr.bf16.mxu0 0
      %610 = vmatpush1.bf16.msra.mxu0 0
      %611 = vmatprep.mubr.bf16.mxu0 0
      %612 = vmatmul.mubr.bf16.gmra.mrb[0].mxu0 %v422
      %v613 = vpop.f32.mrb[0].mxu0
      %v614 = vadd.f32 %v279, %v613
      %v615 = vpop.f32.mrb[0].mxu0
      %v616 = vadd.f32 %v283, %v615
      %v617 = vpop.f32.mrb[0].mxu0
      %v618 = vadd.f32 %v279, %v617
      %v619 = vpop.f32.mrb[0].mxu0
      %v620 = vadd.f32 %v283, %v619
      %621 = vmatprep.mubr.bf16.mxu0 0
      %622 = vmatmul.mubr.bf16.gmra.mrb[0].mxu0 %v425
      %v623 = vpop.f32.mrb[0].mxu0
      %v624 = vadd.f32 %v279, %v623
      %v625 = vpop.f32.mrb[0].mxu0
      %v626 = vadd.f32 %v283, %v625
      %v627 = vpop.f32.mrb[0].mxu0
      %v628 = vadd.f32 %v279, %v627
      %v629 = vpop.f32.mrb[0].mxu0
      %v630 = vadd.f32 %v283, %v629
      %631 = vmatprep.mubr.bf16.mxu0 0
      %632 = vmatmul.mubr.bf16.gmra.mrb[0].mxu0 %v428
      %v633 = vpop.f32.mrb[0].mxu0
      %v634 = vadd.f32 %v279, %v633
      %v635 = vpop.f32.mrb[0].mxu0
      %v636 = vadd.f32 %v283, %v635
      %v637 = vpop.f32.mrb[0].mxu0
      %v638 = vadd.f32 %v279, %v637
      %v639 = vpop.f32.mrb[0].mxu0
      %v640 = vadd.f32 %v283, %v639
      %641 = vmatprep.mubr.bf16.mxu0 0
      %642 = vmatmul.mubr.bf16.gmra.mrb[0].mxu0 %v431
      %v643 = vpop.f32.mrb[0].mxu0
      %v644 = vadd.f32 %v279, %v643
      %v645 = vpop.f32.mrb[0].mxu0
      %v646 = vadd.f32 %v283, %v645
      %v647 = vpop.f32.mrb[0].mxu0
      %v648 = vadd.f32 %v279, %v647
      %v649 = vpop.f32.mrb[0].mxu0
      %v650 = vadd.f32 %v283, %v649
      %651 = vdwg.mxu0
      %652 = vmatprep.subr.bf16.mxu0 %v379
      %653 = vmatpush1.bf16.msra.mxu0 %v378
      %654 = vmatprep.subr.bf16.mxu0 %v387
      %655 = vmatpush1.bf16.msra.mxu0 %v386
      %656 = vmatprep.subr.bf16.mxu0 %v395
      %657 = vmatpush1.bf16.msra.mxu0 %v394
      %658 = vmatprep.subr.bf16.mxu0 0
      %659 = vmatpush1.bf16.msra.mxu0 0
      %660 = vmatprep.subr.bf16.mxu0 0
      %661 = vmatpush1.bf16.msra.mxu0 0
      %662 = vmatprep.subr.bf16.mxu0 0
      %663 = vmatpush1.bf16.msra.mxu0 0
      %664 = vmatprep.subr.bf16.mxu0 0
      %665 = vmatpush1.bf16.msra.mxu0 0
      %666 = vmatprep.subr.bf16.mxu0 0
      %667 = vmatpush1.bf16.msra.mxu0 0
      %668 = vmatprep.subr.bf16.mxu0 0
      %669 = vmatpush1.bf16.msra.mxu0 0
      %670 = vmatprep.subr.bf16.mxu0 0
      %671 = vmatpush1.bf16.msra.mxu0 0
      %672 = vmatprep.subr.bf16.mxu0 0
      %673 = vmatpush1.bf16.msra.mxu0 0
      %674 = vmatprep.subr.bf16.mxu0 0
      %675 = vmatpush1.bf16.msra.mxu0 0
      %676 = vmatprep.subr.bf16.mxu0 0
      %677 = vmatpush1.bf16.msra.mxu0 0
      %678 = vmatprep.subr.bf16.mxu0 0
      %679 = vmatpush1.bf16.msra.mxu0 0
      %680 = vmatprep.subr.bf16.mxu0 0
      %681 = vmatpush1.bf16.msra.mxu0 0
      %682 = vmatprep.subr.bf16.mxu0 0
      %683 = vmatpush1.bf16.msra.mxu0 0
      %684 = vmatprep.mubr.bf16.mxu0 0
      %685 = vmatmul.mubr.bf16.gmra.mrb[0].mxu0 %v422
      %v686 = vpop.f32.mrb[0].mxu0
      %v687 = vadd.f32 %v287, %v686
      %v688 = vpop.f32.mrb[0].mxu0
      %v689 = vadd.f32 %v291, %v688
      %v690 = vpop.f32.mrb[0].mxu0
      %v691 = vadd.f32 %v287, %v690
      %v692 = vpop.f32.mrb[0].mxu0
      %v693 = vadd.f32 %v291, %v692
      %694 = vmatprep.mubr.bf16.mxu0 0
      %695 = vmatmul.mubr.bf16.gmra.mrb[0].mxu0 %v425
      %v696 = vpop.f32.mrb[0].mxu0
      %v697 = vadd.f32 %v287, %v696
      %v698 = vpop.f32.mrb[0].mxu0
      %v699 = vadd.f32 %v291, %v698
      %v700 = vpop.f32.mrb[0].mxu0
      %v701 = vadd.f32 %v287, %v700
      %v702 = vpop.f32.mrb[0].mxu0
      %v703 = vadd.f32 %v291, %v702
      %704 = vmatprep.mubr.bf16.mxu0 0
      %705 = vmatmul.mubr.bf16.gmra.mrb[0].mxu0 %v428
      %v706 = vpop.f32.mrb[0].mxu0
      %v707 = vadd.f32 %v287, %v706
      %v708 = vpop.f32.mrb[0].mxu0
      %v709 = vadd.f32 %v291, %v708
      %v710 = vpop.f32.mrb[0].mxu0
      %v711 = vadd.f32 %v287, %v710
      %v712 = vpop.f32.mrb[0].mxu0
      %v713 = vadd.f32 %v291, %v712
      %714 = vmatprep.mubr.bf16.mxu0 0
      %715 = vmatmul.mubr.bf16.gmra.mrb[0].mxu0 %v431
      %v716 = vpop.f32.mrb[0].mxu0
      %v717 = vadd.f32 %v287, %v716
      %v718 = vpop.f32.mrb[0].mxu0
      %v719 = vadd.f32 %v291, %v718
      %v720 = vpop.f32.mrb[0].mxu0
      %v721 = vadd.f32 %v287, %v720
      %v722 = vpop.f32.mrb[0].mxu0
      %v723 = vadd.f32 %v291, %v722
      %724 = vdwg.mxu0
      %v725 = vmax.f32 %v468, 0.0
      %v726 = vmax.f32 %v470, 0.0
      %v727 = vmax.f32 %v541, 0.0
      %v728 = vmax.f32 %v543, 0.0
      %v729 = vmax.f32 %v614, 0.0
      %v730 = vmax.f32 %v616, 0.0
      %v731 = vmax.f32 %v687, 0.0
      %v732 = vmax.f32 %v689, 0.0
      %v733 = vmax.f32 %v472, 0.0
      %v734 = vmax.f32 %v474, 0.0
      %v735 = vmax.f32 %v545, 0.0
      %v736 = vmax.f32 %v547, 0.0
      %v737 = vmax.f32 %v618, 0.0
      %v738 = vmax.f32 %v620, 0.0
      %v739 = vmax.f32 %v691, 0.0
      %v740 = vmax.f32 %v693, 0.0
      %v741 = vmax.f32 %v478, 0.0
      %v742 = vmax.f32 %v480, 0.0
      %v743 = vmax.f32 %v551, 0.0
      %v744 = vmax.f32 %v553, 0.0
      %v745 = vmax.f32 %v624, 0.0
      %v746 = vmax.f32 %v626, 0.0
      %v747 = vmax.f32 %v697, 0.0
      %v748 = vmax.f32 %v699, 0.0
      %v749 = vmax.f32 %v482, 0.0
      %v750 = vmax.f32 %v484, 0.0
      %v751 = vmax.f32 %v555, 0.0
      %v752 = vmax.f32 %v557, 0.0
      %v753 = vmax.f32 %v628, 0.0
      %v754 = vmax.f32 %v630, 0.0
      %v755 = vmax.f32 %v701, 0.0
      %v756 = vmax.f32 %v703, 0.0
      %v757 = vmax.f32 %v488, 0.0
      %v758 = vmax.f32 %v490, 0.0
      %v759 = vmax.f32 %v561, 0.0
      %v760 = vmax.f32 %v563, 0.0
      %v761 = vmax.f32 %v634, 0.0
      %v762 = vmax.f32 %v636, 0.0
      %v763 = vmax.f32 %v707, 0.0
      %v764 = vmax.f32 %v709, 0.0
      %v765 = vmax.f32 %v492, 0.0
      %v766 = vmax.f32 %v494, 0.0
      %v767 = vmax.f32 %v565, 0.0
      %v768 = vmax.f32 %v567, 0.0
      %v769 = vmax.f32 %v638, 0.0
      %v770 = vmax.f32 %v640, 0.0
      %v771 = vmax.f32 %v711, 0.0
      %v772 = vmax.f32 %v713, 0.0
      %v773 = vmax.f32 %v498, 0.0
      %v774 = vmax.f32 %v500, 0.0
      %v775 = vmax.f32 %v571, 0.0
      %v776 = vmax.f32 %v573, 0.0
      %v777 = vmax.f32 %v644, 0.0
      %v778 = vmax.f32 %v646, 0.0
      %v779 = vmax.f32 %v717, 0.0
      %v780 = vmax.f32 %v719, 0.0
      %v781 = vmax.f32 %v502, 0.0
      %v782 = vmax.f32 %v504, 0.0
      %v783 = vmax.f32 %v575, 0.0
      %v784 = vmax.f32 %v577, 0.0
      %v785 = vmax.f32 %v648, 0.0
      %v786 = vmax.f32 %v650, 0.0
      %v787 = vmax.f32 %v721, 0.0
      %v788 = vmax.f32 %v723, 0.0
      %v789 = vmax.f32 %v725, %v733
      %v790 = vmax.f32 %v789, %v741
      %v791 = vmax.f32 %v790, %v749
      %v792 = vmax.f32 %v791, %v757
      %v793 = vmax.f32 %v792, %v765
      %v794 = vmax.f32 %v793, %v773
      %v795 = vmax.f32 %v794, %v781
      %v796 = vrot.slane %v795, 4
      %v797 = vmax.f32 %v795, %v796
      %v798 = vrot.slane %v797, 2
      %v799 = vmax.f32 %v797, %v798
      %v800 = vrot.slane %v799, 1
      %v801 = vmax.f32 %v799, %v800
      %v802 = vmax.f32 %v726, %v734
      %v803 = vmax.f32 %v802, %v742
      %v804 = vmax.f32 %v803, %v750
      %v805 = vmax.f32 %v804, %v758
      %v806 = vmax.f32 %v805, %v766
      %v807 = vmax.f32 %v806, %v774
      %v808 = vmax.f32 %v807, %v782
      %v809 = vrot.slane %v808, 4
      %v810 = vmax.f32 %v808, %v809
      %v811 = vrot.slane %v810, 2
      %v812 = vmax.f32 %v810, %v811
      %v813 = vrot.slane %v812, 1
      %v814 = vmax.f32 %v812, %v813
      %v815 = vmax.f32 %v727, %v735
      %v816 = vmax.f32 %v815, %v743
      %v817 = vmax.f32 %v816, %v751
      %v818 = vmax.f32 %v817, %v759
      %v819 = vmax.f32 %v818, %v767
      %v820 = vmax.f32 %v819, %v775
      %v821 = vmax.f32 %v820, %v783
      %v822 = vrot.slane %v821, 4
      %v823 = vmax.f32 %v821, %v822
      %v824 = vrot.slane %v823, 2
      %v825 = vmax.f32 %v823, %v824
      %v826 = vrot.slane %v825, 1
      %v827 = vmax.f32 %v825, %v826
      %v828 = vmax.f32 %v728, %v736
      %v829 = vmax.f32 %v828, %v744
      %v830 = vmax.f32 %v829, %v752
      %v831 = vmax.f32 %v830, %v760
      %v832 = vmax.f32 %v831, %v768
      %v833 = vmax.f32 %v832, %v776
      %v834 = vmax.f32 %v833, %v784
      %v835 = vrot.slane %v834, 4
      %v836 = vmax.f32 %v834, %v835
      %v837 = vrot.slane %v836, 2
      %v838 = vmax.f32 %v836, %v837
      %v839 = vrot.slane %v838, 1
      %v840 = vmax.f32 %v838, %v839
      %v841 = vmax.f32 %v729, %v737
      %v842 = vmax.f32 %v841, %v745
      %v843 = vmax.f32 %v842, %v753
      %v844 = vmax.f32 %v843, %v761
      %v845 = vmax.f32 %v844, %v769
      %v846 = vmax.f32 %v845, %v777
      %v847 = vmax.f32 %v846, %v785
      %v848 = vrot.slane %v847, 4
      %v849 = vmax.f32 %v847, %v848
      %v850 = vrot.slane %v849, 2
      %v851 = vmax.f32 %v849, %v850
      %v852 = vrot.slane %v851, 1
      %v853 = vmax.f32 %v851, %v852
      %v854 = vmax.f32 %v730, %v738
      %v855 = vmax.f32 %v854, %v746
      %v856 = vmax.f32 %v855, %v754
      %v857 = vmax.f32 %v856, %v762
      %v858 = vmax.f32 %v857, %v770
      %v859 = vmax.f32 %v858, %v778
      %v860 = vmax.f32 %v859, %v786
      %v861 = vrot.slane %v860, 4
      %v862 = vmax.f32 %v860, %v861
      %v863 = vrot.slane %v862, 2
      %v864 = vmax.f32 %v862, %v863
      %v865 = vrot.slane %v864, 1
      %v866 = vmax.f32 %v864, %v865
      %v867 = vmax.f32 %v731, %v739
      %v868 = vmax.f32 %v867, %v747
      %v869 = vmax.f32 %v868, %v755
      %v870 = vmax.f32 %v869, %v763
      %v871 = vmax.f32 %v870, %v771
      %v872 = vmax.f32 %v871, %v779
      %v873 = vmax.f32 %v872, %v787
      %v874 = vrot.slane %v873, 4
      %v875 = vmax.f32 %v873, %v874
      %v876 = vrot.slane %v875, 2
      %v877 = vmax.f32 %v875, %v876
      %v878 = vrot.slane %v877, 1
      %v879 = vmax.f32 %v877, %v878
      %v880 = vmax.f32 %v732, %v740
      %v881 = vmax.f32 %v880, %v748
      %v882 = vmax.f32 %v881, %v756
      %v883 = vmax.f32 %v882, %v764
      %v884 = vmax.f32 %v883, %v772
      %v885 = vmax.f32 %v884, %v780
      %v886 = vmax.f32 %v885, %v788
      %v887 = vrot.slane %v886, 4
      %v888 = vmax.f32 %v886, %v887
      %v889 = vrot.slane %v888, 2
      %v890 = vmax.f32 %v888, %v889
      %v891 = vrot.slane %v890, 1
      %v892 = vmax.f32 %v890, %v891
      %p893 = scmp.eq.s32.totalorder %s21, 0
      // Predicated region
      $region33: #{sparse_deepgcn_forward.8} parent=31 // pred_check
        %p894 = pneg %p893
      $region34: #{sparse_deepgcn_forward.8} parent=31 // pred_check_branch
        %896 = sbr.rel (%p894) target = $region36
      $region35: #{sparse_deepgcn_forward.8} parent=31 // pred_region
        %897 = vst [vmem:[%s220] sm:$0xff] -inf
      $region36: #{sparse_deepgcn_forward.8} parent=31 // pred_fallthru
        _
      %v898 = vld [vmem:[%s220] sm:$0xff]
      %v907 = vcombine.low %v801, %v814
      %v908 = vcombine.low %v827, %v840
      %v909 = vcombine.low %v853, %v866
      %v910 = vcombine.low %v879, %v892
      %v912 = vunpack.c.l.s4 1966171168
      %v913 = vunpack.c.0.s8 %v912
      %v914 = vlaneseq
      %v915 = vshrl.u32 %v914, 7
      %v916 = vsub.s32 %v913, %v915
      %v917 = vrot.slane %v907, %v916
      %v919 = vunpack.c.l.s4 1966171168
      %v920 = vunpack.c.0.s8 %v919
      %v921 = vlaneseq
      %v922 = vshrl.u32 %v921, 7
      %v923 = vsub.s32 %v920, %v922
      %v924 = vrot.slane %v908, %v923
      %v926 = vunpack.c.l.s4 1966171168
      %v927 = vunpack.c.0.s8 %v926
      %v928 = vlaneseq
      %v929 = vshrl.u32 %v928, 7
      %v930 = vsub.s32 %v927, %v929
      %v931 = vrot.slane %v909, %v930
      %v933 = vunpack.c.l.s4 1966171168
      %v934 = vunpack.c.0.s8 %v933
      %v935 = vlaneseq
      %v936 = vshrl.u32 %v935, 7
      %v937 = vsub.s32 %v934, %v936
      %v938 = vrot.slane %v910, %v937
      %v939 = vcombine.low %v917, %v924
      %v940 = vcombine.low %v931, %v938
      %v942 = vunpack.c.l.s4 1966171168
      %v943 = vunpack.c.0.s8 %v942
      %v944 = vlaneseq
      %v945 = vshrl.u32 %v944, 7
      %v946 = vsub.s32 %v943, %v945
      %v947 = vrot.slane %v939, %v946
      %v949 = vunpack.c.l.s4 1966171168
      %v950 = vunpack.c.0.s8 %v949
      %v951 = vlaneseq
      %v952 = vshrl.u32 %v951, 7
      %v953 = vsub.s32 %v950, %v952
      %v954 = vrot.slane %v940, %v953
      %v955 = vcombine.low %v947, %v954
      %v957 = vmax.f32 %v898, %v955
      %958 = vst [vmem:[%s220] sm:$0xff] %v957
      %p959 = scmp.lt.s32.totalorder %s20, 0
      %s960 = scalar_select %p959, %s20, 0
      %p961 = scmp.lt.s32.totalorder %s19, 1
      %s962 = scalar_select %p961, %s19, 1
      %s963 = smul.addr %s962, 8
      %s964 = smul.addr %s960, 16
      %s965 = sadd.s32 %s963, %s964
      %s966 = scalar_lea.vmem %s3, %s965
      // Predicated region
      $region37: #{sparse_deepgcn_forward.8} parent=31 // pred_check
        %p967 = pneg %p125
      $region38: #{sparse_deepgcn_forward.8} parent=31 // pred_check_branch
        %969 = sbr.rel (%p967) target = $region40
      $region39: #{sparse_deepgcn_forward.8} parent=31 // pred_region
        _
      $region40: #{sparse_deepgcn_forward.8} parent=31 // pred_fallthru
        _
    $region32: #{sparse_deepgcn_forward.8} parent=5 // pred_fallthru
      _
    %p970 = scmp.le.s32.totalorder 2, %s9
    // Predicated region
    $region41: #{sparse_deepgcn_forward.8} parent=5 // pred_check
      %p971 = pneg %p970
    $region42: #{sparse_deepgcn_forward.8} parent=5 // pred_check_branch
      %973 = sbr.rel (%p971) target = $region44
    $region43: #{sparse_deepgcn_forward.8} parent=5 // pred_region
      %s974 = ssub.s32 %s9, 2
      // Predicated region
      $region45: #{sparse_deepgcn_forward.8} parent=43 // pred_check
        %p975 = pneg %p131
      $region46: #{sparse_deepgcn_forward.8} parent=43 // pred_check_branch
        %977 = sbr.rel (%p975) target = $region48
      $region47: #{sparse_deepgcn_forward.8} parent=43 // pred_region
        %p978 = scmp.lt.s32.totalorder %s23, 0
        %s979 = scalar_select %p978, %s23, 0
        %p980 = scmp.lt.s32.totalorder %s22, 1
        %s981 = scalar_select %p980, %s22, 1
        %s982 = smul.addr %s981, 8
        %s983 = smul.addr %s979, 16
        %s984 = sadd.s32 %s982, %s983
        %s985 = scalar_lea.vmem %s3, %s984
      $region48: #{sparse_deepgcn_forward.8} parent=43 // pred_fallthru
        _
    $region44: #{sparse_deepgcn_forward.8} parent=5 // pred_fallthru
      _
  $region6: #{sparse_deepgcn_forward.8} parent=0 // loop_footer
    %s13 = sadd.s32 1, %s9
  $region7: #{sparse_deepgcn_forward.8} parent=0 // loop_footer_branch
    %8 = sbr.rel target = $region3
  $region8: #{sparse_deepgcn_forward.8} parent=0 // loop_exit
    _

// kernel: sparse_deepgcn_forward.7
$region0: #{sparse_deepgcn_forward.7}
  #allocation0 [shape = 'u32[]', space=smem, size = 0x4, offset = 0x4, fixed_abs, tag = 'smem constant byte address 0x4 - core index']
  #allocation1 [shape = 'u32[144,128]{1,0:T(1,128)}', space=vmem, size = 0x12000, scoped, tag = 'internal scratch']
  %s0 = inlined_call_operand.vmem [shape: f32[2,64,16], index: 0, kind: input, shape index: {}, may-alias: {0,1}]
  %s1 = inlined_call_operand.vmem [shape: f32[2,64,16], index: 1, kind: input, shape index: {}, may-alias: {0,1}]
  %s2 = inlined_call_operand.vmem [shape: f32[2,1,64], index: 2, kind: input, shape index: {}]
  %s3 = inlined_call_operand.vmem [shape: f32[2,64,16], index: 3, kind: input, shape index: {}]
  %s4 = inlined_call_operand.vmem [shape: bf16[2,64,16], index: 4, kind: input, shape index: {}]
  %s5 = inlined_call_operand.vmem [shape: f32[2,64,16], index: 5, kind: output, shape index: {}]
  %s6 = sld [smem:[#allocation0]]
  $region53: #{sparse_deepgcn_forward.7} parent=0
    _
  %s8 = ssub.s32 1, %s6
  %s9 = scalar_select 0, %s8, %s6
  loop: start=0, step=1, limit=4
  $region2: #{sparse_deepgcn_forward.7} parent=0 // loop_pre_header
    _
  $region3: #{sparse_deepgcn_forward.7} parent=0 // loop_header
    %s11 = sphi 0, %s15
    %p12 = scmp.ge.s32.totalorder %s11, 4
    %s18 = sphi 0, %s30
    %s19 = sphi 0, %s26
    %s20 = sphi 0, %s18
    %s21 = sphi 0, %s19
    %s22 = sphi 0, %s20
    %s23 = sphi 0, %s21
    %s35 = sphi 0, %s37
    %s38 = sphi 0, %s35
    %s39 = sphi 0, %s38
    %s55 = sphi 0, %s39
    %s61 = sphi 0, %s63
    %s64 = sphi 0, %s61
    %s65 = sphi 0, %s64
    %s81 = sphi 0, %s65
    %s87 = sphi 0, %s89
    %s90 = sphi 0, %s87
    %s91 = sphi 0, %s90
    %s107 = sphi 0, %s91
    %s115 = sphi 0, %s117
    %s118 = sphi 0, %s115
    %s119 = sphi 0, %s118
    %s135 = sphi 0, %s119
    %s141 = sphi 0, %s143
    %s144 = sphi 0, %s141
    %s145 = sphi 0, %s144
    %s161 = sphi 0, %s145
    %s169 = sphi 0, %s171
    %s172 = sphi 0, %s169
    %s173 = sphi 0, %s172
    %s189 = sphi 0, %s173
  $region4: #{sparse_deepgcn_forward.7} parent=0 // loop_header_branch
    %14 = sbr.rel (%p12) target = $region8
  $region5: #{sparse_deepgcn_forward.7} parent=0 // loop_body
    %s16 = ssub.s32 %s11, 1
    %s17 = ssub.s32 %s11, 2
    %s24 = sadd.s32 1, %s19
    %p25 = scmp.ge.s32.totalorder %s24, 1
    %s26 = scalar_select %p25, 0, %s24
    %s27 = sadd.s32 1, %s18
    %s28 = scalar_select %p25, %s27, %s18
    %p29 = scmp.ge.s32.totalorder %s28, 2
    %s30 = scalar_select %p29, 0, %s28
    %s31 = ssub.s32 %s18, %s30
    %s32 = ssub.s32 %s19, %s26
    %s33 = sor.u32 %s31, %s32
    %p34 = scmp.eq.s32.totalorder %s33, 0
    %s36 = sadd.s32 %s35, 1
    %s37 = scalar_select %p34, %s35, %s36
    %p40 = pneg %p34
    %p41 = scmp.eq.s32.totalorder %s11, 1
    %p42 = por %p40, %p41
    %p43 = scmp.ne.s32.totalorder %s35, %s38
    %p44 = scmp.eq.s32.totalorder %s11, 0
    %p45 = por %p43, %p44
    %p46 = scmp.ne.s32.totalorder %s35, %s38
    %p47 = scmp.eq.s32.totalorder %s16, 1
    %p48 = por %p46, %p47
    %p49 = scmp.ne.s32.totalorder %s38, %s39
    %p50 = scmp.eq.s32.totalorder %s16, 0
    %p51 = por %p49, %p50
    %p52 = scmp.ne.s32.totalorder %s38, %s39
    %p53 = scmp.eq.s32.totalorder %s17, 1
    %p54 = por %p52, %p53
    %p56 = scmp.ne.s32.totalorder %s39, %s55
    %p57 = scmp.eq.s32.totalorder %s17, 0
    %p58 = por %p56, %p57
    %s59 = ssub.s32 %s18, %s30
    %p60 = scmp.eq.s32.totalorder %s59, 0
    %s62 = sadd.s32 %s61, 1
    %s63 = scalar_select %p60, %s61, %s62
    %p66 = pneg %p60
    %p67 = scmp.eq.s32.totalorder %s11, 1
    %p68 = por %p66, %p67
    %p69 = scmp.ne.s32.totalorder %s61, %s64
    %p70 = scmp.eq.s32.totalorder %s11, 0
    %p71 = por %p69, %p70
    %p72 = scmp.ne.s32.totalorder %s61, %s64
    %p73 = scmp.eq.s32.totalorder %s16, 1
    %p74 = por %p72, %p73
    %p75 = scmp.ne.s32.totalorder %s64, %s65
    %p76 = scmp.eq.s32.totalorder %s16, 0
    %p77 = por %p75, %p76
    %p78 = scmp.ne.s32.totalorder %s64, %s65
    %p79 = scmp.eq.s32.totalorder %s17, 1
    %p80 = por %p78, %p79
    %p82 = scmp.ne.s32.totalorder %s65, %s81
    %p83 = scmp.eq.s32.totalorder %s17, 0
    %p84 = por %p82, %p83
    %s85 = ssub.s32 %s18, %s30
    %p86 = scmp.eq.s32.totalorder %s85, 0
    %s88 = sadd.s32 %s87, 1
    %s89 = scalar_select %p86, %s87, %s88
    %p92 = pneg %p86
    %p93 = scmp.eq.s32.totalorder %s11, 1
    %p94 = por %p92, %p93
    %p95 = scmp.ne.s32.totalorder %s87, %s90
    %p96 = scmp.eq.s32.totalorder %s11, 0
    %p97 = por %p95, %p96
    %p98 = scmp.ne.s32.totalorder %s87, %s90
    %p99 = scmp.eq.s32.totalorder %s16, 1
    %p100 = por %p98, %p99
    %p101 = scmp.ne.s32.totalorder %s90, %s91
    %p102 = scmp.eq.s32.totalorder %s16, 0
    %p103 = por %p101, %p102
    %p104 = scmp.ne.s32.totalorder %s90, %s91
    %p105 = scmp.eq.s32.totalorder %s17, 1
    %p106 = por %p104, %p105
    %p108 = scmp.ne.s32.totalorder %s91, %s107
    %p109 = scmp.eq.s32.totalorder %s17, 0
    %p110 = por %p108, %p109
    %s111 = ssub.s32 %s18, %s30
    %s112 = ssub.s32 %s19, %s26
    %s113 = sor.u32 %s111, %s112
    %p114 = scmp.eq.s32.totalorder %s113, 0
    %s116 = sadd.s32 %s115, 1
    %s117 = scalar_select %p114, %s115, %s116
    %p120 = pneg %p114
    %p121 = scmp.eq.s32.totalorder %s11, 1
    %p122 = por %p120, %p121
    %p123 = scmp.ne.s32.totalorder %s115, %s118
    %p124 = scmp.eq.s32.totalorder %s11, 0
    %p125 = por %p123, %p124
    %p126 = scmp.ne.s32.totalorder %s115, %s118
    %p127 = scmp.eq.s32.totalorder %s16, 1
    %p128 = por %p126, %p127
    %p129 = scmp.ne.s32.totalorder %s118, %s119
    %p130 = scmp.eq.s32.totalorder %s16, 0
    %p131 = por %p129, %p130
    %p132 = scmp.ne.s32.totalorder %s118, %s119
    %p133 = scmp.eq.s32.totalorder %s17, 1
    %p134 = por %p132, %p133
    %p136 = scmp.ne.s32.totalorder %s119, %s135
    %p137 = scmp.eq.s32.totalorder %s17, 0
    %p138 = por %p136, %p137
    %s139 = ssub.s32 %s18, %s30
    %p140 = scmp.eq.s32.totalorder %s139, 0
    %s142 = sadd.s32 %s141, 1
    %s143 = scalar_select %p140, %s141, %s142
    %p146 = pneg %p140
    %p147 = scmp.eq.s32.totalorder %s11, 1
    %p148 = por %p146, %p147
    %p149 = scmp.ne.s32.totalorder %s141, %s144
    %p150 = scmp.eq.s32.totalorder %s11, 0
    %p151 = por %p149, %p150
    %p152 = scmp.ne.s32.totalorder %s141, %s144
    %p153 = scmp.eq.s32.totalorder %s16, 1
    %p154 = por %p152, %p153
    %p155 = scmp.ne.s32.totalorder %s144, %s145
    %p156 = scmp.eq.s32.totalorder %s16, 0
    %p157 = por %p155, %p156
    %p158 = scmp.ne.s32.totalorder %s144, %s145
    %p159 = scmp.eq.s32.totalorder %s17, 1
    %p160 = por %p158, %p159
    %p162 = scmp.ne.s32.totalorder %s145, %s161
    %p163 = scmp.eq.s32.totalorder %s17, 0
    %p164 = por %p162, %p163
    %s165 = ssub.s32 %s18, %s30
    %s166 = ssub.s32 %s19, %s26
    %s167 = sor.u32 %s165, %s166
    %p168 = scmp.eq.s32.totalorder %s167, 0
    %s170 = sadd.s32 %s169, 1
    %s171 = scalar_select %p168, %s169, %s170
    %p174 = pneg %p168
    %p175 = scmp.eq.s32.totalorder %s11, 1
    %p176 = por %p174, %p175
    %p177 = scmp.ne.s32.totalorder %s169, %s172
    %p178 = scmp.eq.s32.totalorder %s11, 0
    %p179 = por %p177, %p178
    %p180 = scmp.ne.s32.totalorder %s169, %s172
    %p181 = scmp.eq.s32.totalorder %s16, 1
    %p182 = por %p180, %p181
    %p183 = scmp.ne.s32.totalorder %s172, %s173
    %p184 = scmp.eq.s32.totalorder %s16, 0
    %p185 = por %p183, %p184
    %p186 = scmp.ne.s32.totalorder %s172, %s173
    %p187 = scmp.eq.s32.totalorder %s17, 1
    %p188 = por %p186, %p187
    %p190 = scmp.ne.s32.totalorder %s173, %s189
    %p191 = scmp.eq.s32.totalorder %s17, 0
    %p192 = por %p190, %p191
    %p193 = scmp.le.s32.totalorder 1, %s11
    %p194 = scmp.lt.s32.totalorder %s11, 3
    %p195 = pnand %p193, %p194
    %p196 = pneg %p195
    // Predicated region
    $region9: #{sparse_deepgcn_forward.7} parent=5 // pred_check
      _
    $region10: #{sparse_deepgcn_forward.7} parent=5 // pred_check_branch
      %198 = sbr.rel (%p195) target = $region12
    $region11: #{sparse_deepgcn_forward.7} parent=5 // pred_region
      %s199 = ssub.s32 %s11, 1
    $region12: #{sparse_deepgcn_forward.7} parent=5 // pred_fallthru
      _
    %p200 = scmp.lt.s32.totalorder %s11, 2
    // Predicated region
    $region13: #{sparse_deepgcn_forward.7} parent=5 // pred_check
      %p201 = pneg %p200
    $region14: #{sparse_deepgcn_forward.7} parent=5 // pred_check_branch
      %203 = sbr.rel (%p201) target = $region16
    $region15: #{sparse_deepgcn_forward.7} parent=5 // pred_region
      // Predicated region
      $region17: #{sparse_deepgcn_forward.7} parent=15 // pred_check
        %p204 = pneg %p45
      $region18: #{sparse_deepgcn_forward.7} parent=15 // pred_check_branch
        %206 = sbr.rel (%p204) target = $region20
      $region19: #{sparse_deepgcn_forward.7} parent=15 // pred_region
        %s207 = smul.u32 8, %s19
        %p208 = scmp.lt.s32.totalorder %s18, 1
        %s209 = scalar_select %p208, %s18, 1
        %p210 = scmp.lt.s32.totalorder %s207, 7
        %s211 = scalar_select %p210, %s207, 7
        %s212 = smul.addr %s209, 8
        %s213 = sadd.s32 %s211, %s212
        %s214 = smul.addr %s213, 8
        %s215 = scalar_lea.vmem %s0, %s214
        %s216 = smul.u32 8, %s19
      $region20: #{sparse_deepgcn_forward.7} parent=15 // pred_fallthru
        _
      // Predicated region
      $region21: #{sparse_deepgcn_forward.7} parent=15 // pred_check
        %p217 = pneg %p71
      $region22: #{sparse_deepgcn_forward.7} parent=15 // pred_check_branch
        %219 = sbr.rel (%p217) target = $region24
      $region23: #{sparse_deepgcn_forward.7} parent=15 // pred_region
        %p220 = scmp.lt.s32.totalorder %s18, 1
        %s221 = scalar_select %p220, %s18, 1
        %s222 = smul.addr %s221, 8
        %s223 = smul.addr %s222, 8
        %s224 = scalar_lea.vmem %s1, %s223
      $region24: #{sparse_deepgcn_forward.7} parent=15 // pred_fallthru
        _
      // Predicated region
      $region25: #{sparse_deepgcn_forward.7} parent=15 // pred_check
        %p225 = pneg %p97
      $region26: #{sparse_deepgcn_forward.7} parent=15 // pred_check_branch
        %227 = sbr.rel (%p225) target = $region28
      $region27: #{sparse_deepgcn_forward.7} parent=15 // pred_region
        %p228 = scmp.lt.s32.totalorder %s18, 1
        %s229 = scalar_select %p228, %s18, 1
        %s230 = scalar_lea.vmem %s2, %s229
      $region28: #{sparse_deepgcn_forward.7} parent=15 // pred_fallthru
        _
      // Predicated region
      $region29: #{sparse_deepgcn_forward.7} parent=15 // pred_check
        %p231 = pneg %p125
      $region30: #{sparse_deepgcn_forward.7} parent=15 // pred_check_branch
        %233 = sbr.rel (%p231) target = $region32
      $region31: #{sparse_deepgcn_forward.7} parent=15 // pred_region
        %s234 = smul.u32 8, %s19
        %p235 = scmp.lt.s32.totalorder %s18, 1
        %s236 = scalar_select %p235, %s18, 1
        %p237 = scmp.lt.s32.totalorder %s234, 7
        %s238 = scalar_select %p237, %s234, 7
        %s239 = smul.addr %s236, 8
        %s240 = sadd.s32 %s238, %s239
        %s241 = smul.addr %s240, 8
        %s242 = scalar_lea.vmem %s3, %s241
        %s243 = smul.u32 8, %s19
      $region32: #{sparse_deepgcn_forward.7} parent=15 // pred_fallthru
        _
      // Predicated region
      $region33: #{sparse_deepgcn_forward.7} parent=15 // pred_check
        %p244 = pneg %p151
      $region34: #{sparse_deepgcn_forward.7} parent=15 // pred_check_branch
        %246 = sbr.rel (%p244) target = $region36
      $region35: #{sparse_deepgcn_forward.7} parent=15 // pred_region
        %p247 = scmp.lt.s32.totalorder %s18, 1
        %s248 = scalar_select %p247, %s18, 1
        %s249 = smul.addr %s248, 8
        %s250 = smul.addr %s249, 4
        %s251 = scalar_lea.vmem %s4, %s250
      $region36: #{sparse_deepgcn_forward.7} parent=15 // pred_fallthru
        _
    $region16: #{sparse_deepgcn_forward.7} parent=5 // pred_fallthru
      _
    %p252 = scmp.le.s32.totalorder 1, %s11
    %p253 = scmp.lt.s32.totalorder %s11, 3
    %p254 = pnand %p252, %p253
    %p255 = pneg %p254
    // Predicated region
    $region37: #{sparse_deepgcn_forward.7} parent=5 // pred_check
      _
    $region38: #{sparse_deepgcn_forward.7} parent=5 // pred_check_branch
      %257 = sbr.rel (%p254) target = $region40
    $region39: #{sparse_deepgcn_forward.7} parent=5 // pred_region
      %s258 = ssub.s32 %s11, 1
      %s259 = smul.u32 8, %s21
      %p260 = scmp.lt.s32.totalorder %s20, 1
      %s261 = scalar_select %p260, %s20, 1
      %p262 = scmp.lt.s32.totalorder %s259, 7
      %s263 = scalar_select %p262, %s259, 7
      %s264 = smul.addr %s261, 8
      %s265 = sadd.s32 %s263, %s264
      %s266 = smul.addr %s265, 8
      %s267 = scalar_lea.vmem %s0, %s266
      %p268 = pneg %p51
      %p269 = pneg %p48
      %p270 = scmp.lt.s32.totalorder %s20, 1
      %s271 = scalar_select %p270, %s20, 1
      %s272 = smul.addr %s271, 8
      %s273 = smul.addr %s272, 8
      %s274 = scalar_lea.vmem %s1, %s273
      %p275 = pneg %p77
      %p276 = pneg %p74
      %p277 = scmp.lt.s32.totalorder %s20, 1
      %s278 = scalar_select %p277, %s20, 1
      %s279 = scalar_lea.vmem %s2, %s278
      %p280 = pneg %p103
      %p281 = pneg %p100
      %s282 = smul.u32 8, %s21
      %p283 = scmp.lt.s32.totalorder %s20, 1
      %s284 = scalar_select %p283, %s20, 1
      %p285 = scmp.lt.s32.totalorder %s282, 7
      %s286 = scalar_select %p285, %s282, 7
      %s287 = smul.addr %s284, 8
      %s288 = sadd.s32 %s286, %s287
      %s289 = smul.addr %s288, 8
      %s290 = scalar_lea.vmem %s3, %s289
      %p291 = pneg %p131
      %p292 = pneg %p128
      %p293 = scmp.lt.s32.totalorder %s20, 1
      %s294 = scalar_select %p293, %s20, 1
      %s295 = smul.addr %s294, 8
      %s296 = smul.addr %s295, 4
      %s297 = scalar_lea.vmem %s4, %s296
      %p298 = pneg %p157
      %p299 = pneg %p154
      %p300 = pneg %p185
      %p301 = pneg %p182
      %s302 = smul.u32 8, %s21
      %p303 = scmp.lt.s32.totalorder %s20, 1
      %s304 = scalar_select %p303, %s20, 1
      %p305 = scmp.lt.s32.totalorder %s302, 7
      %s306 = scalar_select %p305, %s302, 7
      %s307 = smul.addr %s304, 8
      %s308 = sadd.s32 %s306, %s307
      %s309 = smul.addr %s308, 8
      %s310 = scalar_lea.vmem %s5, %s309
      %s311 = smul.u32 8, %s21
      %p312 = scmp.lt.s32.totalorder %s20, 1
      %s313 = scalar_select %p312, %s20, 1
      %p314 = scmp.lt.s32.totalorder %s311, 7
      %s315 = scalar_select %p314, %s311, 7
      %s316 = smul.addr %s313, 8
      %s317 = sadd.s32 %s315, %s316
      %s318 = smul.addr %s317, 8
      %s319 = scalar_lea.vmem %s0, %s318
      %s320 = smul.u32 8, %s21
      %p321 = scmp.lt.s32.totalorder %s20, 1
      %s322 = scalar_select %p321, %s20, 1
      %s323 = smul.addr %s322, 8
      %s324 = smul.addr %s323, 8
      %s325 = scalar_lea.vmem %s1, %s324
      %p326 = scmp.lt.s32.totalorder %s20, 1
      %s327 = scalar_select %p326, %s20, 1
      %s328 = scalar_lea.vmem %s2, %s327
      %s329 = smul.u32 8, %s21
      %p330 = scmp.lt.s32.totalorder %s20, 1
      %s331 = scalar_select %p330, %s20, 1
      %p332 = scmp.lt.s32.totalorder %s329, 7
      %s333 = scalar_select %p332, %s329, 7
      %s334 = smul.addr %s331, 8
      %s335 = sadd.s32 %s333, %s334
      %s336 = smul.addr %s335, 8
      %s337 = scalar_lea.vmem %s3, %s336
      %s338 = smul.u32 8, %s21
      %p339 = scmp.lt.s32.totalorder %s20, 1
      %s340 = scalar_select %p339, %s20, 1
      %s341 = smul.addr %s340, 8
      %s342 = smul.addr %s341, 4
      %s343 = scalar_lea.vmem %s4, %s342
      %s344 = smul.u32 8, %s21
      %p345 = scmp.lt.s32.totalorder %s20, 1
      %s346 = scalar_select %p345, %s20, 1
      %p347 = scmp.lt.s32.totalorder %s344, 7
      %s348 = scalar_select %p347, %s344, 7
      %s349 = smul.addr %s346, 8
      %s350 = sadd.s32 %s348, %s349
      %s351 = smul.addr %s350, 8
      %s352 = scalar_lea.vmem %s5, %s351
      %s353 = smul.u32 8, %s21
      %v355 = vld [vmem:[%s319] sm:$0xff]
      %v356 = vld [vmem:[%s319 + $0x8] sm:$0xff]
      %v357 = vld [vmem:[%s319 + $0x10] sm:$0xff]
      %v358 = vld [vmem:[%s319 + $0x18] sm:$0xff]
      %v359 = vld [vmem:[%s319 + $0x20] sm:$0xff]
      %v360 = vld [vmem:[%s319 + $0x28] sm:$0xff]
      %v361 = vld [vmem:[%s319 + $0x30] sm:$0xff]
      %v362 = vld [vmem:[%s319 + $0x38] sm:$0xff]
      %v363 = vld [vmem:[%s325] sm:$0xff]
      %v364 = vld [vmem:[%s325 + $0x8] sm:$0xff]
      %v365 = vld [vmem:[%s325 + $0x10] sm:$0xff]
      %v366 = vld [vmem:[%s325 + $0x18] sm:$0xff]
      %v367 = vld [vmem:[%s325 + $0x20] sm:$0xff]
      %v368 = vld [vmem:[%s325 + $0x28] sm:$0xff]
      %v369 = vld [vmem:[%s325 + $0x30] sm:$0xff]
      %v370 = vld [vmem:[%s325 + $0x38] sm:$0xff]
      %v371 = vmul.f32 %v355, %v355
      %v372 = vmul.f32 %v356, %v356
      %v373 = vmul.f32 %v357, %v357
      %v374 = vmul.f32 %v358, %v358
      %v375 = vmul.f32 %v359, %v359
      %v376 = vmul.f32 %v360, %v360
      %v377 = vmul.f32 %v361, %v361
      %v378 = vmul.f32 %v362, %v362
      %vm379 = vcmask 130048
      %v380 = vsel %vm379, %v371, 0.0
      %381 = vadd.xlane.f32.xlu0 %v380
      %v382 = vpop.xlane.xlu0 %381
      %v383 = vsel %vm379, %v372, 0.0
      %384 = vadd.xlane.f32.xlu0 %v383
      %v385 = vpop.xlane.xlu0 %384
      %v386 = vsel %vm379, %v373, 0.0
      %387 = vadd.xlane.f32.xlu0 %v386
      %v388 = vpop.xlane.xlu0 %387
      %v389 = vsel %vm379, %v374, 0.0
      %390 = vadd.xlane.f32.xlu0 %v389
      %v391 = vpop.xlane.xlu0 %390
      %v392 = vsel %vm379, %v375, 0.0
      %393 = vadd.xlane.f32.xlu0 %v392
      %v394 = vpop.xlane.xlu0 %393
      %v395 = vsel %vm379, %v376, 0.0
      %396 = vadd.xlane.f32.xlu0 %v395
      %v397 = vpop.xlane.xlu0 %396
      %v398 = vsel %vm379, %v377, 0.0
      %399 = vadd.xlane.f32.xlu0 %v398
      %v400 = vpop.xlane.xlu0 %399
      %v401 = vsel %vm379, %v378, 0.0
      %402 = vadd.xlane.f32.xlu0 %v401
      %v403 = vpop.xlane.xlu0 %402
      %v405 = vsel %vm379, %v355, 0
      %v408 = vsel %vm379, %v356, 0
      %v411 = vsel %vm379, %v357, 0
      %v414 = vsel %vm379, %v358, 0
      %v417 = vsel %vm379, %v359, 0
      %v420 = vsel %vm379, %v360, 0
      %v423 = vsel %vm379, %v361, 0
      %v426 = vsel %vm379, %v362, 0
      %v429 = vsel %vm379, %v363, 0
      %v432 = vsel %vm379, %v364, 0
      %v435 = vsel %vm379, %v365, 0
      %v438 = vsel %vm379, %v366, 0
      %v441 = vsel %vm379, %v367, 0
      %v444 = vsel %vm379, %v368, 0
      %v447 = vsel %vm379, %v369, 0
      %v450 = vsel %vm379, %v370, 0
      %452 = vmatprep.subr.mxu0 0.0
      %453 = vmatpush1.xpose.msra.mxu0 %v429
      %454 = vmatprep.subr.mxu0 0.0
      %455 = vmatpush1.xpose.msra.mxu0 %v432
      %456 = vmatprep.subr.mxu0 0.0
      %457 = vmatpush1.xpose.msra.mxu0 %v435
      %458 = vmatprep.subr.mxu0 0.0
      %459 = vmatpush1.xpose.msra.mxu0 %v438
      %460 = vmatprep.subr.mxu0 0.0
      %461 = vmatpush1.xpose.msra.mxu0 %v441
      %462 = vmatprep.subr.mxu0 0.0
      %463 = vmatpush1.xpose.msra.mxu0 %v444
      %464 = vmatprep.subr.mxu0 0.0
      %465 = vmatpush1.xpose.msra.mxu0 %v447
      %466 = vmatprep.subr.mxu0 0.0
      %467 = vmatpush1.xpose.msra.mxu0 %v450
      %468 = vmatprep.subr.mxu0 0.0
      %469 = vmatpush1.xpose.msra.mxu0 0.0
      %470 = vmatprep.subr.mxu0 0.0
      %471 = vmatpush1.xpose.msra.mxu0 0.0
      %472 = vmatprep.subr.mxu0 0.0
      %473 = vmatpush1.xpose.msra.mxu0 0.0
      %474 = vmatprep.subr.mxu0 0.0
      %475 = vmatpush1.xpose.msra.mxu0 0.0
      %476 = vmatprep.subr.mxu0 0.0
      %477 = vmatpush1.xpose.msra.mxu0 0.0
      %478 = vmatprep.subr.mxu0 0.0
      %479 = vmatpush1.xpose.msra.mxu0 0.0
      %480 = vmatprep.subr.mxu0 0.0
      %481 = vmatpush1.xpose.msra.mxu0 0.0
      %482 = vmatprep.subr.mxu0 0.0
      %483 = vmatpush1.xpose.msra.mxu0 0.0
      %484 = vmatprep.subr.mxu0 0.0
      %485 = vmatpush1.xpose.msra.mxu0 0.0
      %486 = vmatprep.subr.mxu0 0.0
      %487 = vmatpush1.xpose.msra.mxu0 0.0
      %488 = vmatprep.subr.mxu0 0.0
      %489 = vmatpush1.xpose.msra.mxu0 0.0
      %490 = vmatprep.subr.mxu0 0.0
      %491 = vmatpush1.xpose.msra.mxu0 0.0
      %492 = vmatprep.subr.mxu0 0.0
      %493 = vmatpush1.xpose.msra.mxu0 0.0
      %494 = vmatprep.subr.mxu0 0.0
      %495 = vmatpush1.xpose.msra.mxu0 0.0
      %496 = vmatprep.subr.mxu0 0.0
      %497 = vmatpush1.xpose.msra.mxu0 0.0
      %498 = vmatprep.subr.mxu0 0.0
      %499 = vmatpush1.xpose.msra.mxu0 0.0
      %500 = vmatprep.subr.mxu0 0.0
      %501 = vmatpush1.xpose.msra.mxu0 0.0
      %502 = vmatprep.subr.mxu0 0.0
      %503 = vmatpush1.xpose.msra.mxu0 0.0
      %504 = vmatprep.subr.mxu0 0.0
      %505 = vmatpush1.xpose.msra.mxu0 0.0
      %506 = vmatprep.subr.mxu0 0.0
      %507 = vmatpush1.xpose.msra.mxu0 0.0
      %508 = vmatprep.subr.mxu0 0.0
      %509 = vmatpush1.xpose.msra.mxu0 0.0
      %510 = vmatprep.subr.mxu0 0.0
      %511 = vmatpush1.xpose.msra.mxu0 0.0
      %512 = vmatprep.subr.mxu0 0.0
      %513 = vmatpush1.xpose.msra.mxu0 0.0
      %514 = vmatprep.subr.mxu0 0.0
      %515 = vmatpush1.xpose.msra.mxu0 0.0
      %516 = vmatprep.mubr.f32.mxu0 0.0
      %517 = vmatmul.mubr.f32.gmra.mrb[0].mxu0 %v405
      %v518 = vpop.f32.mrb[0].mxu0
      %v519 = vadd.f32 0.0, %v518
      %v520 = vpop.f32.mrb[0].mxu0
      %521 = vmatprep.mubr.f32.mxu0 0.0
      %522 = vmatmul.mubr.f32.gmra.mrb[0].mxu0 %v408
      %v523 = vpop.f32.mrb[0].mxu0
      %v524 = vadd.f32 0.0, %v523
      %v525 = vpop.f32.mrb[0].mxu0
      %526 = vmatprep.mubr.f32.mxu0 0.0
      %527 = vmatmul.mubr.f32.gmra.mrb[0].mxu0 %v411
      %v528 = vpop.f32.mrb[0].mxu0
      %v529 = vadd.f32 0.0, %v528
      %v530 = vpop.f32.mrb[0].mxu0
      %531 = vmatprep.mubr.f32.mxu0 0.0
      %532 = vmatmul.mubr.f32.gmra.mrb[0].mxu0 %v414
      %v533 = vpop.f32.mrb[0].mxu0
      %v534 = vadd.f32 0.0, %v533
      %v535 = vpop.f32.mrb[0].mxu0
      %536 = vmatprep.mubr.f32.mxu0 0.0
      %537 = vmatmul.mubr.f32.gmra.mrb[0].mxu0 %v417
      %v538 = vpop.f32.mrb[0].mxu0
      %v539 = vadd.f32 0.0, %v538
      %v540 = vpop.f32.mrb[0].mxu0
      %541 = vmatprep.mubr.f32.mxu0 0.0
      %542 = vmatmul.mubr.f32.gmra.mrb[0].mxu0 %v420
      %v543 = vpop.f32.mrb[0].mxu0
      %v544 = vadd.f32 0.0, %v543
      %v545 = vpop.f32.mrb[0].mxu0
      %546 = vmatprep.mubr.f32.mxu0 0.0
      %547 = vmatmul.mubr.f32.gmra.mrb[0].mxu0 %v423
      %v548 = vpop.f32.mrb[0].mxu0
      %v549 = vadd.f32 0.0, %v548
      %v550 = vpop.f32.mrb[0].mxu0
      %551 = vmatprep.mubr.f32.mxu0 0.0
      %552 = vmatmul.mubr.f32.gmra.mrb[0].mxu0 %v426
      %v553 = vpop.f32.mrb[0].mxu0
      %v554 = vadd.f32 0.0, %v553
      %v555 = vpop.f32.mrb[0].mxu0
      %556 = vdwg.mxu0
      %v557 = vld [vmem:[%s328] sm:$0x1]
      %v559 = vlaneseq
      %v560 = vshrl.u32 %v559, 7
      %v561 = vsub.s32 0, %v560
      %v562 = vrot.slane %v557, %v561
      %v564 = vadd.f32 %v382, %v562
      %v565 = vadd.f32 %v385, %v562
      %v566 = vadd.f32 %v388, %v562
      %v567 = vadd.f32 %v391, %v562
      %v568 = vadd.f32 %v394, %v562
      %v569 = vadd.f32 %v397, %v562
      %v570 = vadd.f32 %v400, %v562
      %v571 = vadd.f32 %v403, %v562
      %v572 = vmul.f32 %v519, 2.0
      %v573 = vmul.f32 %v524, 2.0
      %v574 = vmul.f32 %v529, 2.0
      %v575 = vmul.f32 %v534, 2.0
      %v576 = vmul.f32 %v539, 2.0
      %v577 = vmul.f32 %v544, 2.0
      %v578 = vmul.f32 %v549, 2.0
      %v579 = vmul.f32 %v554, 2.0
      %v580 = vsub.f32 %v564, %v572
      %v581 = vsub.f32 %v565, %v573
      %v582 = vsub.f32 %v566, %v574
      %v583 = vsub.f32 %v567, %v575
      %v584 = vsub.f32 %v568, %v576
      %v585 = vsub.f32 %v569, %v577
      %v586 = vsub.f32 %v570, %v578
      %v587 = vsub.f32 %v571, %v579
      %v588 = vlaneseq
      %v589 = vshrl.u32 %v588, 7
      %v590 = vadd.s32 %v589, 8
      %v591 = vadd.s32 %v589, 16
      %v592 = vadd.s32 %v589, 24
      %v593 = vadd.s32 %v589, 32
      %v594 = vadd.s32 %v589, 40
      %v595 = vadd.s32 %v589, 48
      %v596 = vadd.s32 %v589, 56
      %s597 = smul.u32 %s21, 64
      %v598 = vstv %s597
      %v599 = vadd.s32 %v589, %v598
      %v600 = vadd.s32 %v590, %v598
      %v601 = vadd.s32 %v591, %v598
      %v602 = vadd.s32 %v592, %v598
      %v603 = vadd.s32 %v593, %v598
      %v604 = vadd.s32 %v594, %v598
      %v605 = vadd.s32 %v595, %v598
      %v606 = vadd.s32 %v596, %v598
      %v607 = vlaneseq
      %v608 = vand.u32 %v607, 127
      %vm609 = vcmp.eq.s32.totalorder %v599, %v608
      %vm610 = vcmp.eq.s32.totalorder %v600, %v608
      %vm611 = vcmp.eq.s32.totalorder %v601, %v608
      %vm612 = vcmp.eq.s32.totalorder %v602, %v608
      %vm613 = vcmp.eq.s32.totalorder %v603, %v608
      %vm614 = vcmp.eq.s32.totalorder %v604, %v608
      %vm615 = vcmp.eq.s32.totalorder %v605, %v608
      %vm616 = vcmp.eq.s32.totalorder %v606, %v608
      %v617 = vsel %vm609, inf, %v580
      %v618 = vsel %vm610, inf, %v581
      %v619 = vsel %vm611, inf, %v582
      %v620 = vsel %vm612, inf, %v583
      %v621 = vsel %vm613, inf, %v584
      %v622 = vsel %vm614, inf, %v585
      %v623 = vsel %vm615, inf, %v586
      %v624 = vsel %vm616, inf, %v587
      %v625 = vcvt.s32.f32 %v608
      %v626 = vld [vmem:[%s343] sm:$0xf]
      %v627 = vld [vmem:[%s343 + $0x4] sm:$0xf]
      %v628 = vld [vmem:[%s343 + $0x8] sm:$0xf]
      %v629 = vld [vmem:[%s343 + $0xc] sm:$0xf]
      %v630 = vld [vmem:[%s343 + $0x10] sm:$0xf]
      %v631 = vld [vmem:[%s343 + $0x14] sm:$0xf]
      %v632 = vld [vmem:[%s343 + $0x18] sm:$0xf]
      %v633 = vld [vmem:[%s343 + $0x1c] sm:$0xf]
      %vm634 = vcmask 523264
      %v635 = vsel %vm634, %v617, inf
      %636 = vmin.xlane.f32.xlu0 %v635
      %v637 = vpop.xlane.xlu0 %636
      %v638 = vsel %vm634, %v618, inf
      %639 = vmin.xlane.f32.xlu0 %v638
      %v640 = vpop.xlane.xlu0 %639
      %v641 = vsel %vm634, %v619, inf
      %642 = vmin.xlane.f32.xlu0 %v641
      %v643 = vpop.xlane.xlu0 %642
      %v644 = vsel %vm634, %v620, inf
      %645 = vmin.xlane.f32.xlu0 %v644
      %v646 = vpop.xlane.xlu0 %645
      %v647 = vsel %vm634, %v621, inf
      %648 = vmin.xlane.f32.xlu0 %v647
      %v649 = vpop.xlane.xlu0 %648
      %v650 = vsel %vm634, %v622, inf
      %651 = vmin.xlane.f32.xlu0 %v650
      %v652 = vpop.xlane.xlu0 %651
      %v653 = vsel %vm634, %v623, inf
      %654 = vmin.xlane.f32.xlu0 %v653
      %v655 = vpop.xlane.xlu0 %654
      %v656 = vsel %vm634, %v624, inf
      %657 = vmin.xlane.f32.xlu0 %v656
      %v658 = vpop.xlane.xlu0 %657
      %vm659 = vcmp.eq.f32.partialorder %v617, %v637
      %vm660 = vcmp.eq.f32.partialorder %v618, %v640
      %vm661 = vcmp.eq.f32.partialorder %v619, %v643
      %vm662 = vcmp.eq.f32.partialorder %v620, %v646
      %vm663 = vcmp.eq.f32.partialorder %v621, %v649
      %vm664 = vcmp.eq.f32.partialorder %v622, %v652
      %vm665 = vcmp.eq.f32.partialorder %v623, %v655
      %vm666 = vcmp.eq.f32.partialorder %v624, %v658
      %v667 = vsel %vm659, %v625, 64.0
      %v668 = vsel %vm660, %v625, 64.0
      %v669 = vsel %vm661, %v625, 64.0
      %v670 = vsel %vm662, %v625, 64.0
      %v671 = vsel %vm663, %v625, 64.0
      %v672 = vsel %vm664, %v625, 64.0
      %v673 = vsel %vm665, %v625, 64.0
      %v674 = vsel %vm666, %v625, 64.0
      %v675 = vsel %vm634, %v667, inf
      %676 = vmin.xlane.f32.xlu0 %v675
      %v677 = vpop.xlane.xlu0 %676
      %v678 = vsel %vm634, %v668, inf
      %679 = vmin.xlane.f32.xlu0 %v678
      %v680 = vpop.xlane.xlu0 %679
      %v681 = vsel %vm634, %v669, inf
      %682 = vmin.xlane.f32.xlu0 %v681
      %v683 = vpop.xlane.xlu0 %682
      %v684 = vsel %vm634, %v670, inf
      %685 = vmin.xlane.f32.xlu0 %v684
      %v686 = vpop.xlane.xlu0 %685
      %v687 = vsel %vm634, %v671, inf
      %688 = vmin.xlane.f32.xlu0 %v687
      %v689 = vpop.xlane.xlu0 %688
      %v690 = vsel %vm634, %v672, inf
      %691 = vmin.xlane.f32.xlu0 %v690
      %v692 = vpop.xlane.xlu0 %691
      %v693 = vsel %vm634, %v673, inf
      %694 = vmin.xlane.f32.xlu0 %v693
      %v695 = vpop.xlane.xlu0 %694
      %v696 = vsel %vm634, %v674, inf
      %697 = vmin.xlane.f32.xlu0 %v696
      %v698 = vpop.xlane.xlu0 %697
      %vm699 = vcmp.eq.f32.partialorder %v625, %v677
      %vm700 = vcmp.eq.f32.partialorder %v625, %v680
      %vm701 = vcmp.eq.f32.partialorder %v625, %v683
      %vm702 = vcmp.eq.f32.partialorder %v625, %v686
      %vm703 = vcmp.eq.f32.partialorder %v625, %v689
      %vm704 = vcmp.eq.f32.partialorder %v625, %v692
      %vm705 = vcmp.eq.f32.partialorder %v625, %v695
      %vm706 = vcmp.eq.f32.partialorder %v625, %v698
      %v707 = vsel %vm699, 1, 0
      %v708 = vsel %vm700, 1, 0
      %v709 = vsel %vm701, 1, 0
      %v710 = vsel %vm702, 1, 0
      %v711 = vsel %vm703, 1, 0
      %v712 = vsel %vm704, 1, 0
      %v713 = vsel %vm705, 1, 0
      %v714 = vsel %vm706, 1, 0
      %v715 = vcvt.s32.f32 %v707
      %v716 = vcvt.s32.f32 %v708
      %v717 = vcvt.s32.f32 %v709
      %v718 = vcvt.s32.f32 %v710
      %v719 = vcvt.s32.f32 %v711
      %v720 = vcvt.s32.f32 %v712
      %v721 = vcvt.s32.f32 %v713
      %v722 = vcvt.s32.f32 %v714
      %v723 = vpack.c.bf16 %v716, %v715
      %v724 = vpack.c.bf16 %v718, %v717
      %v725 = vpack.c.bf16 %v720, %v719
      %v726 = vpack.c.bf16 %v722, %v721
      %v735 = vunpack.c.l.b16 %v626
      %v736 = vunpack.c.l.b16 %v627
      %v737 = vunpack.c.l.b16 %v628
      %v738 = vunpack.c.l.b16 %v629
      %v739 = vunpack.c.l.b16 %v630
      %v740 = vunpack.c.l.b16 %v631
      %v741 = vunpack.c.l.b16 %v632
      %v742 = vunpack.c.l.b16 %v633
      %v743 = vpack.c.b16 %v736, %v735
      %v744 = vpack.c.b16 %v738, %v737
      %v745 = vpack.c.b16 %v740, %v739
      %v746 = vpack.c.b16 %v742, %v741
      %v752 = vsel %vm634, %v723, 0
      %v755 = vsel %vm634, %v724, 0
      %v758 = vsel %vm634, %v725, 0
      %v761 = vsel %vm634, %v726, 0
      %763 = vmatprep.subr.bf16.mxu0 0
      %764 = vmatpush1.bf16.msra.mxu0 %v743
      %765 = vmatprep.subr.bf16.mxu0 0
      %766 = vmatpush1.bf16.msra.mxu0 %v744
      %767 = vmatprep.subr.bf16.mxu0 0
      %768 = vmatpush1.bf16.msra.mxu0 %v745
      %769 = vmatprep.subr.bf16.mxu0 0
      %770 = vmatpush1.bf16.msra.mxu0 %v746
      %771 = vmatprep.subr.bf16.mxu0 0
      %772 = vmatpush1.bf16.msra.mxu0 0
      %773 = vmatprep.subr.bf16.mxu0 0
      %774 = vmatpush1.bf16.msra.mxu0 0
      %775 = vmatprep.subr.bf16.mxu0 0
      %776 = vmatpush1.bf16.msra.mxu0 0
      %777 = vmatprep.subr.bf16.mxu0 0
      %778 = vmatpush1.bf16.msra.mxu0 0
      %779 = vmatprep.subr.bf16.mxu0 0
      %780 = vmatpush1.bf16.msra.mxu0 0
      %781 = vmatprep.subr.bf16.mxu0 0
      %782 = vmatpush1.bf16.msra.mxu0 0
      %783 = vmatprep.subr.bf16.mxu0 0
      %784 = vmatpush1.bf16.msra.mxu0 0
      %785 = vmatprep.subr.bf16.mxu0 0
      %786 = vmatpush1.bf16.msra.mxu0 0
      %787 = vmatprep.subr.bf16.mxu0 0
      %788 = vmatpush1.bf16.msra.mxu0 0
      %789 = vmatprep.subr.bf16.mxu0 0
      %790 = vmatpush1.bf16.msra.mxu0 0
      %791 = vmatprep.subr.bf16.mxu0 0
      %792 = vmatpush1.bf16.msra.mxu0 0
      %793 = vmatprep.subr.bf16.mxu0 0
      %794 = vmatpush1.bf16.msra.mxu0 0
      %795 = vmatprep.mubr.bf16.mxu0 0
      %796 = vmatmul.mubr.bf16.gmra.mrb[0].mxu0 %v752
      %v797 = vpop.f32.mrb[0].mxu0
      %v798 = vadd.f32 0.0, %v797
      %v799 = vpop.f32.mrb[0].mxu0
      %v800 = vpop.f32.mrb[0].mxu0
      %v801 = vadd.f32 0.0, %v800
      %v802 = vpop.f32.mrb[0].mxu0
      %803 = vmatprep.mubr.bf16.mxu0 0
      %804 = vmatmul.mubr.bf16.gmra.mrb[0].mxu0 %v755
      %v805 = vpop.f32.mrb[0].mxu0
      %v806 = vadd.f32 0.0, %v805
      %v807 = vpop.f32.mrb[0].mxu0
      %v808 = vpop.f32.mrb[0].mxu0
      %v809 = vadd.f32 0.0, %v808
      %v810 = vpop.f32.mrb[0].mxu0
      %811 = vmatprep.mubr.bf16.mxu0 0
      %812 = vmatmul.mubr.bf16.gmra.mrb[0].mxu0 %v758
      %v813 = vpop.f32.mrb[0].mxu0
      %v814 = vadd.f32 0.0, %v813
      %v815 = vpop.f32.mrb[0].mxu0
      %v816 = vpop.f32.mrb[0].mxu0
      %v817 = vadd.f32 0.0, %v816
      %v818 = vpop.f32.mrb[0].mxu0
      %819 = vmatprep.mubr.bf16.mxu0 0
      %820 = vmatmul.mubr.bf16.gmra.mrb[0].mxu0 %v761
      %v821 = vpop.f32.mrb[0].mxu0
      %v822 = vadd.f32 0.0, %v821
      %v823 = vpop.f32.mrb[0].mxu0
      %v824 = vpop.f32.mrb[0].mxu0
      %v825 = vadd.f32 0.0, %v824
      %v826 = vpop.f32.mrb[0].mxu0
      %827 = vdwg.mxu0
      %v828 = vsel %vm699, inf, %v617
      %v829 = vsel %vm700, inf, %v618
      %v830 = vsel %vm701, inf, %v619
      %v831 = vsel %vm702, inf, %v620
      %v832 = vsel %vm703, inf, %v621
      %v833 = vsel %vm704, inf, %v622
      %v834 = vsel %vm705, inf, %v623
      %v835 = vsel %vm706, inf, %v624
      %v836 = vsel %vm634, %v828, inf
      %837 = vmin.xlane.f32.xlu0 %v836
      %v838 = vpop.xlane.xlu0 %837
      %v839 = vsel %vm634, %v829, inf
      %840 = vmin.xlane.f32.xlu0 %v839
      %v841 = vpop.xlane.xlu0 %840
      %v842 = vsel %vm634, %v830, inf
      %843 = vmin.xlane.f32.xlu0 %v842
      %v844 = vpop.xlane.xlu0 %843
      %v845 = vsel %vm634, %v831, inf
      %846 = vmin.xlane.f32.xlu0 %v845
      %v847 = vpop.xlane.xlu0 %846
      %v848 = vsel %vm634, %v832, inf
      %849 = vmin.xlane.f32.xlu0 %v848
      %v850 = vpop.xlane.xlu0 %849
      %v851 = vsel %vm634, %v833, inf
      %852 = vmin.xlane.f32.xlu0 %v851
      %v853 = vpop.xlane.xlu0 %852
      %v854 = vsel %vm634, %v834, inf
      %855 = vmin.xlane.f32.xlu0 %v854
      %v856 = vpop.xlane.xlu0 %855
      %v857 = vsel %vm634, %v835, inf
      %858 = vmin.xlane.f32.xlu0 %v857
      %v859 = vpop.xlane.xlu0 %858
      %vm860 = vcmp.eq.f32.partialorder %v828, %v838
      %vm861 = vcmp.eq.f32.partialorder %v829, %v841
      %vm862 = vcmp.eq.f32.partialorder %v830, %v844
      %vm863 = vcmp.eq.f32.partialorder %v831, %v847
      %vm864 = vcmp.eq.f32.partialorder %v832, %v850
      %vm865 = vcmp.eq.f32.partialorder %v833, %v853
      %vm866 = vcmp.eq.f32.partialorder %v834, %v856
      %vm867 = vcmp.eq.f32.partialorder %v835, %v859
      %v868 = vsel %vm860, %v625, 64.0
      %v869 = vsel %vm861, %v625, 64.0
      %v870 = vsel %vm862, %v625, 64.0
      %v871 = vsel %vm863, %v625, 64.0
      %v872 = vsel %vm864, %v625, 64.0
      %v873 = vsel %vm865, %v625, 64.0
      %v874 = vsel %vm866, %v625, 64.0
      %v875 = vsel %vm867, %v625, 64.0
      %v876 = vsel %vm634, %v868, inf
      %877 = vmin.xlane.f32.xlu0 %v876
      %v878 = vpop.xlane.xlu0 %877
      %v879 = vsel %vm634, %v869, inf
      %880 = vmin.xlane.f32.xlu0 %v879
      %v881 = vpop.xlane.xlu0 %880
      %v882 = vsel %vm634, %v870, inf
      %883 = vmin.xlane.f32.xlu0 %v882
      %v884 = vpop.xlane.xlu0 %883
      %v885 = vsel %vm634, %v871, inf
      %886 = vmin.xlane.f32.xlu0 %v885
      %v887 = vpop.xlane.xlu0 %886
      %v888 = vsel %vm634, %v872, inf
      %889 = vmin.xlane.f32.xlu0 %v888
      %v890 = vpop.xlane.xlu0 %889
      %v891 = vsel %vm634, %v873, inf
      %892 = vmin.xlane.f32.xlu0 %v891
      %v893 = vpop.xlane.xlu0 %892
      %v894 = vsel %vm634, %v874, inf
      %895 = vmin.xlane.f32.xlu0 %v894
      %v896 = vpop.xlane.xlu0 %895
      %v897 = vsel %vm634, %v875, inf
      %898 = vmin.xlane.f32.xlu0 %v897
      %v899 = vpop.xlane.xlu0 %898
      %vm900 = vcmp.eq.f32.partialorder %v625, %v878
      %vm901 = vcmp.eq.f32.partialorder %v625, %v881
      %vm902 = vcmp.eq.f32.partialorder %v625, %v884
      %vm903 = vcmp.eq.f32.partialorder %v625, %v887
      %vm904 = vcmp.eq.f32.partialorder %v625, %v890
      %vm905 = vcmp.eq.f32.partialorder %v625, %v893
      %vm906 = vcmp.eq.f32.partialorder %v625, %v896
      %vm907 = vcmp.eq.f32.partialorder %v625, %v899
      %v908 = vsel %vm900, inf, %v828
      %v909 = vsel %vm901, inf, %v829
      %v910 = vsel %vm902, inf, %v830
      %v911 = vsel %vm903, inf, %v831
      %v912 = vsel %vm904, inf, %v832
      %v913 = vsel %vm905, inf, %v833
      %v914 = vsel %vm906, inf, %v834
      %v915 = vsel %vm907, inf, %v835
      %v916 = vsel %vm634, %v908, inf
      %917 = vmin.xlane.f32.xlu0 %v916
      %v918 = vpop.xlane.xlu0 %917
      %v919 = vsel %vm634, %v909, inf
      %920 = vmin.xlane.f32.xlu0 %v919
      %v921 = vpop.xlane.xlu0 %920
      %v922 = vsel %vm634, %v910, inf
      %923 = vmin.xlane.f32.xlu0 %v922
      %v924 = vpop.xlane.xlu0 %923
      %v925 = vsel %vm634, %v911, inf
      %926 = vmin.xlane.f32.xlu0 %v925
      %v927 = vpop.xlane.xlu0 %926
      %v928 = vsel %vm634, %v912, inf
      %929 = vmin.xlane.f32.xlu0 %v928
      %v930 = vpop.xlane.xlu0 %929
      %v931 = vsel %vm634, %v913, inf
      %932 = vmin.xlane.f32.xlu0 %v931
      %v933 = vpop.xlane.xlu0 %932
      %v934 = vsel %vm634, %v914, inf
      %935 = vmin.xlane.f32.xlu0 %v934
      %v936 = vpop.xlane.xlu0 %935
      %v937 = vsel %vm634, %v915, inf
      %938 = vmin.xlane.f32.xlu0 %v937
      %v939 = vpop.xlane.xlu0 %938
      %vm940 = vcmp.eq.f32.partialorder %v908, %v918
      %vm941 = vcmp.eq.f32.partialorder %v909, %v921
      %vm942 = vcmp.eq.f32.partialorder %v910, %v924
      %vm943 = vcmp.eq.f32.partialorder %v911, %v927
      %vm944 = vcmp.eq.f32.partialorder %v912, %v930
      %vm945 = vcmp.eq.f32.partialorder %v913, %v933
      %vm946 = vcmp.eq.f32.partialorder %v914, %v936
      %vm947 = vcmp.eq.f32.partialorder %v915, %v939
      %v948 = vsel %vm940, %v625, 64.0
      %v949 = vsel %vm941, %v625, 64.0
      %v950 = vsel %vm942, %v625, 64.0
      %v951 = vsel %vm943, %v625, 64.0
      %v952 = vsel %vm944, %v625, 64.0
      %v953 = vsel %vm945, %v625, 64.0
      %v954 = vsel %vm946, %v625, 64.0
      %v955 = vsel %vm947, %v625, 64.0
      %v956 = vsel %vm634, %v948, inf
      %957 = vmin.xlane.f32.xlu0 %v956
      %v958 = vpop.xlane.xlu0 %957
      %v959 = vsel %vm634, %v949, inf
      %960 = vmin.xlane.f32.xlu0 %v959
      %v961 = vpop.xlane.xlu0 %960
      %v962 = vsel %vm634, %v950, inf
      %963 = vmin.xlane.f32.xlu0 %v962
      %v964 = vpop.xlane.xlu0 %963
      %v965 = vsel %vm634, %v951, inf
      %966 = vmin.xlane.f32.xlu0 %v965
      %v967 = vpop.xlane.xlu0 %966
      %v968 = vsel %vm634, %v952, inf
      %969 = vmin.xlane.f32.xlu0 %v968
      %v970 = vpop.xlane.xlu0 %969
      %v971 = vsel %vm634, %v953, inf
      %972 = vmin.xlane.f32.xlu0 %v971
      %v973 = vpop.xlane.xlu0 %972
      %v974 = vsel %vm634, %v954, inf
      %975 = vmin.xlane.f32.xlu0 %v974
      %v976 = vpop.xlane.xlu0 %975
      %v977 = vsel %vm634, %v955, inf
      %978 = vmin.xlane.f32.xlu0 %v977
      %v979 = vpop.xlane.xlu0 %978
      %vm980 = vcmp.eq.f32.partialorder %v625, %v958
      %vm981 = vcmp.eq.f32.partialorder %v625, %v961
      %vm982 = vcmp.eq.f32.partialorder %v625, %v964
      %vm983 = vcmp.eq.f32.partialorder %v625, %v967
      %vm984 = vcmp.eq.f32.partialorder %v625, %v970
      %vm985 = vcmp.eq.f32.partialorder %v625, %v973
      %vm986 = vcmp.eq.f32.partialorder %v625, %v976
      %vm987 = vcmp.eq.f32.partialorder %v625, %v979
      %v988 = vsel %vm980, 1, 0
      %v989 = vsel %vm981, 1, 0
      %v990 = vsel %vm982, 1, 0
      %v991 = vsel %vm983, 1, 0
      %v992 = vsel %vm984, 1, 0
      %v993 = vsel %vm985, 1, 0
      %v994 = vsel %vm986, 1, 0
      %v995 = vsel %vm987, 1, 0
      %v996 = vcvt.s32.f32 %v988
      %v997 = vcvt.s32.f32 %v989
      %v998 = vcvt.s32.f32 %v990
      %v999 = vcvt.s32.f32 %v991
      %v1000 = vcvt.s32.f32 %v992
      %v1001 = vcvt.s32.f32 %v993
      %v1002 = vcvt.s32.f32 %v994
      %v1003 = vcvt.s32.f32 %v995
      %v1004 = vpack.c.bf16 %v997, %v996
      %v1005 = vpack.c.bf16 %v999, %v998
      %v1006 = vpack.c.bf16 %v1001, %v1000
      %v1007 = vpack.c.bf16 %v1003, %v1002
      %v1009 = vsel %vm634, %v1004, 0
      %v1012 = vsel %vm634, %v1005, 0
      %v1015 = vsel %vm634, %v1006, 0
      %v1018 = vsel %vm634, %v1007, 0
      %1020 = vmatprep.subr.bf16.mxu0 0
      %1021 = vmatpush1.bf16.msra.mxu0 %v743
      %1022 = vmatprep.subr.bf16.mxu0 0
      %1023 = vmatpush1.bf16.msra.mxu0 %v744
      %1024 = vmatprep.subr.bf16.mxu0 0
      %1025 = vmatpush1.bf16.msra.mxu0 %v745
      %1026 = vmatprep.subr.bf16.mxu0 0
      %1027 = vmatpush1.bf16.msra.mxu0 %v746
      %1028 = vmatprep.subr.bf16.mxu0 0
      %1029 = vmatpush1.bf16.msra.mxu0 0
      %1030 = vmatprep.subr.bf16.mxu0 0
      %1031 = vmatpush1.bf16.msra.mxu0 0
      %1032 = vmatprep.subr.bf16.mxu0 0
      %1033 = vmatpush1.bf16.msra.mxu0 0
      %1034 = vmatprep.subr.bf16.mxu0 0
      %1035 = vmatpush1.bf16.msra.mxu0 0
      %1036 = vmatprep.subr.bf16.mxu0 0
      %1037 = vmatpush1.bf16.msra.mxu0 0
      %1038 = vmatprep.subr.bf16.mxu0 0
      %1039 = vmatpush1.bf16.msra.mxu0 0
      %1040 = vmatprep.subr.bf16.mxu0 0
      %1041 = vmatpush1.bf16.msra.mxu0 0
      %1042 = vmatprep.subr.bf16.mxu0 0
      %1043 = vmatpush1.bf16.msra.mxu0 0
      %1044 = vmatprep.subr.bf16.mxu0 0
      %1045 = vmatpush1.bf16.msra.mxu0 0
      %1046 = vmatprep.subr.bf16.mxu0 0
      %1047 = vmatpush1.bf16.msra.mxu0 0
      %1048 = vmatprep.subr.bf16.mxu0 0
      %1049 = vmatpush1.bf16.msra.mxu0 0
      %1050 = vmatprep.subr.bf16.mxu0 0
      %1051 = vmatpush1.bf16.msra.mxu0 0
      %1052 = vmatprep.mubr.bf16.mxu0 0
      %1053 = vmatmul.mubr.bf16.gmra.mrb[0].mxu0 %v1009
      %v1054 = vpop.f32.mrb[0].mxu0
      %v1055 = vadd.f32 0.0, %v1054
      %v1056 = vpop.f32.mrb[0].mxu0
      %v1057 = vpop.f32.mrb[0].mxu0
      %v1058 = vadd.f32 0.0, %v1057
      %v1059 = vpop.f32.mrb[0].mxu0
      %1060 = vmatprep.mubr.bf16.mxu0 0
      %1061 = vmatmul.mubr.bf16.gmra.mrb[0].mxu0 %v1012
      %v1062 = vpop.f32.mrb[0].mxu0
      %v1063 = vadd.f32 0.0, %v1062
      %v1064 = vpop.f32.mrb[0].mxu0
      %v1065 = vpop.f32.mrb[0].mxu0
      %v1066 = vadd.f32 0.0, %v1065
      %v1067 = vpop.f32.mrb[0].mxu0
      %1068 = vmatprep.mubr.bf16.mxu0 0
      %1069 = vmatmul.mubr.bf16.gmra.mrb[0].mxu0 %v1015
      %v1070 = vpop.f32.mrb[0].mxu0
      %v1071 = vadd.f32 0.0, %v1070
      %v1072 = vpop.f32.mrb[0].mxu0
      %v1073 = vpop.f32.mrb[0].mxu0
      %v1074 = vadd.f32 0.0, %v1073
      %v1075 = vpop.f32.mrb[0].mxu0
      %1076 = vmatprep.mubr.bf16.mxu0 0
      %1077 = vmatmul.mubr.bf16.gmra.mrb[0].mxu0 %v1018
      %v1078 = vpop.f32.mrb[0].mxu0
      %v1079 = vadd.f32 0.0, %v1078
      %v1080 = vpop.f32.mrb[0].mxu0
      %v1081 = vpop.f32.mrb[0].mxu0
      %v1082 = vadd.f32 0.0, %v1081
      %v1083 = vpop.f32.mrb[0].mxu0
      %1084 = vdwg.mxu0
      %v1085 = vmax.f32 %v798, %v1055
      %v1086 = vmax.f32 %v801, %v1058
      %v1087 = vmax.f32 %v806, %v1063
      %v1088 = vmax.f32 %v809, %v1066
      %v1089 = vmax.f32 %v814, %v1071
      %v1090 = vmax.f32 %v817, %v1074
      %v1091 = vmax.f32 %v822, %v1079
      %v1092 = vmax.f32 %v825, %v1082
      %v1093 = vsel %vm980, inf, %v908
      %v1094 = vsel %vm981, inf, %v909
      %v1095 = vsel %vm982, inf, %v910
      %v1096 = vsel %vm983, inf, %v911
      %v1097 = vsel %vm984, inf, %v912
      %v1098 = vsel %vm985, inf, %v913
      %v1099 = vsel %vm986, inf, %v914
      %v1100 = vsel %vm987, inf, %v915
      %v1101 = vsel %vm634, %v1093, inf
      %1102 = vmin.xlane.f32.xlu0 %v1101
      %v1103 = vpop.xlane.xlu0 %1102
      %v1104 = vsel %vm634, %v1094, inf
      %1105 = vmin.xlane.f32.xlu0 %v1104
      %v1106 = vpop.xlane.xlu0 %1105
      %v1107 = vsel %vm634, %v1095, inf
      %1108 = vmin.xlane.f32.xlu0 %v1107
      %v1109 = vpop.xlane.xlu0 %1108
      %v1110 = vsel %vm634, %v1096, inf
      %1111 = vmin.xlane.f32.xlu0 %v1110
      %v1112 = vpop.xlane.xlu0 %1111
      %v1113 = vsel %vm634, %v1097, inf
      %1114 = vmin.xlane.f32.xlu0 %v1113
      %v1115 = vpop.xlane.xlu0 %1114
      %v1116 = vsel %vm634, %v1098, inf
      %1117 = vmin.xlane.f32.xlu0 %v1116
      %v1118 = vpop.xlane.xlu0 %1117
      %v1119 = vsel %vm634, %v1099, inf
      %1120 = vmin.xlane.f32.xlu0 %v1119
      %v1121 = vpop.xlane.xlu0 %1120
      %v1122 = vsel %vm634, %v1100, inf
      %1123 = vmin.xlane.f32.xlu0 %v1122
      %v1124 = vpop.xlane.xlu0 %1123
      %vm1125 = vcmp.eq.f32.partialorder %v1093, %v1103
      %vm1126 = vcmp.eq.f32.partialorder %v1094, %v1106
      %vm1127 = vcmp.eq.f32.partialorder %v1095, %v1109
      %vm1128 = vcmp.eq.f32.partialorder %v1096, %v1112
      %vm1129 = vcmp.eq.f32.partialorder %v1097, %v1115
      %vm1130 = vcmp.eq.f32.partialorder %v1098, %v1118
      %vm1131 = vcmp.eq.f32.partialorder %v1099, %v1121
      %vm1132 = vcmp.eq.f32.partialorder %v1100, %v1124
      %v1133 = vsel %vm1125, %v625, 64.0
      %v1134 = vsel %vm1126, %v625, 64.0
      %v1135 = vsel %vm1127, %v625, 64.0
      %v1136 = vsel %vm1128, %v625, 64.0
      %v1137 = vsel %vm1129, %v625, 64.0
      %v1138 = vsel %vm1130, %v625, 64.0
      %v1139 = vsel %vm1131, %v625, 64.0
      %v1140 = vsel %vm1132, %v625, 64.0
      %v1141 = vsel %vm634, %v1133, inf
      %1142 = vmin.xlane.f32.xlu0 %v1141
      %v1143 = vpop.xlane.xlu0 %1142
      %v1144 = vsel %vm634, %v1134, inf
      %1145 = vmin.xlane.f32.xlu0 %v1144
      %v1146 = vpop.xlane.xlu0 %1145
      %v1147 = vsel %vm634, %v1135, inf
      %1148 = vmin.xlane.f32.xlu0 %v1147
      %v1149 = vpop.xlane.xlu0 %1148
      %v1150 = vsel %vm634, %v1136, inf
      %1151 = vmin.xlane.f32.xlu0 %v1150
      %v1152 = vpop.xlane.xlu0 %1151
      %v1153 = vsel %vm634, %v1137, inf
      %1154 = vmin.xlane.f32.xlu0 %v1153
      %v1155 = vpop.xlane.xlu0 %1154
      %v1156 = vsel %vm634, %v1138, inf
      %1157 = vmin.xlane.f32.xlu0 %v1156
      %v1158 = vpop.xlane.xlu0 %1157
      %v1159 = vsel %vm634, %v1139, inf
      %1160 = vmin.xlane.f32.xlu0 %v1159
      %v1161 = vpop.xlane.xlu0 %1160
      %v1162 = vsel %vm634, %v1140, inf
      %1163 = vmin.xlane.f32.xlu0 %v1162
      %v1164 = vpop.xlane.xlu0 %1163
      %vm1165 = vcmp.eq.f32.partialorder %v625, %v1143
      %vm1166 = vcmp.eq.f32.partialorder %v625, %v1146
      %vm1167 = vcmp.eq.f32.partialorder %v625, %v1149
      %vm1168 = vcmp.eq.f32.partialorder %v625, %v1152
      %vm1169 = vcmp.eq.f32.partialorder %v625, %v1155
      %vm1170 = vcmp.eq.f32.partialorder %v625, %v1158
      %vm1171 = vcmp.eq.f32.partialorder %v625, %v1161
      %vm1172 = vcmp.eq.f32.partialorder %v625, %v1164
      %v1173 = vsel %vm1165, inf, %v1093
      %v1174 = vsel %vm1166, inf, %v1094
      %v1175 = vsel %vm1167, inf, %v1095
      %v1176 = vsel %vm1168, inf, %v1096
      %v1177 = vsel %vm1169, inf, %v1097
      %v1178 = vsel %vm1170, inf, %v1098
      %v1179 = vsel %vm1171, inf, %v1099
      %v1180 = vsel %vm1172, inf, %v1100
      %v1181 = vsel %vm634, %v1173, inf
      %1182 = vmin.xlane.f32.xlu0 %v1181
      %v1183 = vpop.xlane.xlu0 %1182
      %v1184 = vsel %vm634, %v1174, inf
      %1185 = vmin.xlane.f32.xlu0 %v1184
      %v1186 = vpop.xlane.xlu0 %1185
      %v1187 = vsel %vm634, %v1175, inf
      %1188 = vmin.xlane.f32.xlu0 %v1187
      %v1189 = vpop.xlane.xlu0 %1188
      %v1190 = vsel %vm634, %v1176, inf
      %1191 = vmin.xlane.f32.xlu0 %v1190
      %v1192 = vpop.xlane.xlu0 %1191
      %v1193 = vsel %vm634, %v1177, inf
      %1194 = vmin.xlane.f32.xlu0 %v1193
      %v1195 = vpop.xlane.xlu0 %1194
      %v1196 = vsel %vm634, %v1178, inf
      %1197 = vmin.xlane.f32.xlu0 %v1196
      %v1198 = vpop.xlane.xlu0 %1197
      %v1199 = vsel %vm634, %v1179, inf
      %1200 = vmin.xlane.f32.xlu0 %v1199
      %v1201 = vpop.xlane.xlu0 %1200
      %v1202 = vsel %vm634, %v1180, inf
      %1203 = vmin.xlane.f32.xlu0 %v1202
      %v1204 = vpop.xlane.xlu0 %1203
      %vm1205 = vcmp.eq.f32.partialorder %v1173, %v1183
      %vm1206 = vcmp.eq.f32.partialorder %v1174, %v1186
      %vm1207 = vcmp.eq.f32.partialorder %v1175, %v1189
      %vm1208 = vcmp.eq.f32.partialorder %v1176, %v1192
      %vm1209 = vcmp.eq.f32.partialorder %v1177, %v1195
      %vm1210 = vcmp.eq.f32.partialorder %v1178, %v1198
      %vm1211 = vcmp.eq.f32.partialorder %v1179, %v1201
      %vm1212 = vcmp.eq.f32.partialorder %v1180, %v1204
      %v1213 = vsel %vm1205, %v625, 64.0
      %v1214 = vsel %vm1206, %v625, 64.0
      %v1215 = vsel %vm1207, %v625, 64.0
      %v1216 = vsel %vm1208, %v625, 64.0
      %v1217 = vsel %vm1209, %v625, 64.0
      %v1218 = vsel %vm1210, %v625, 64.0
      %v1219 = vsel %vm1211, %v625, 64.0
      %v1220 = vsel %vm1212, %v625, 64.0
      %v1221 = vsel %vm634, %v1213, inf
      %1222 = vmin.xlane.f32.xlu0 %v1221
      %v1223 = vpop.xlane.xlu0 %1222
      %v1224 = vsel %vm634, %v1214, inf
      %1225 = vmin.xlane.f32.xlu0 %v1224
      %v1226 = vpop.xlane.xlu0 %1225
      %v1227 = vsel %vm634, %v1215, inf
      %1228 = vmin.xlane.f32.xlu0 %v1227
      %v1229 = vpop.xlane.xlu0 %1228
      %v1230 = vsel %vm634, %v1216, inf
      %1231 = vmin.xlane.f32.xlu0 %v1230
      %v1232 = vpop.xlane.xlu0 %1231
      %v1233 = vsel %vm634, %v1217, inf
      %1234 = vmin.xlane.f32.xlu0 %v1233
      %v1235 = vpop.xlane.xlu0 %1234
      %v1236 = vsel %vm634, %v1218, inf
      %1237 = vmin.xlane.f32.xlu0 %v1236
      %v1238 = vpop.xlane.xlu0 %1237
      %v1239 = vsel %vm634, %v1219, inf
      %1240 = vmin.xlane.f32.xlu0 %v1239
      %v1241 = vpop.xlane.xlu0 %1240
      %v1242 = vsel %vm634, %v1220, inf
      %1243 = vmin.xlane.f32.xlu0 %v1242
      %v1244 = vpop.xlane.xlu0 %1243
      %vm1245 = vcmp.eq.f32.partialorder %v625, %v1223
      %vm1246 = vcmp.eq.f32.partialorder %v625, %v1226
      %vm1247 = vcmp.eq.f32.partialorder %v625, %v1229
      %vm1248 = vcmp.eq.f32.partialorder %v625, %v1232
      %vm1249 = vcmp.eq.f32.partialorder %v625, %v1235
      %vm1250 = vcmp.eq.f32.partialorder %v625, %v1238
      %vm1251 = vcmp.eq.f32.partialorder %v625, %v1241
      %vm1252 = vcmp.eq.f32.partialorder %v625, %v1244
      %v1253 = vsel %vm1245, 1, 0
      %v1254 = vsel %vm1246, 1, 0
      %v1255 = vsel %vm1247, 1, 0
      %v1256 = vsel %vm1248, 1, 0
      %v1257 = vsel %vm1249, 1, 0
      %v1258 = vsel %vm1250, 1, 0
      %v1259 = vsel %vm1251, 1, 0
      %v1260 = vsel %vm1252, 1, 0
      %v1261 = vcvt.s32.f32 %v1253
      %v1262 = vcvt.s32.f32 %v1254
      %v1263 = vcvt.s32.f32 %v1255
      %v1264 = vcvt.s32.f32 %v1256
      %v1265 = vcvt.s32.f32 %v1257
      %v1266 = vcvt.s32.f32 %v1258
      %v1267 = vcvt.s32.f32 %v1259
      %v1268 = vcvt.s32.f32 %v1260
      %v1269 = vpack.c.bf16 %v1262, %v1261
      %v1270 = vpack.c.bf16 %v1264, %v1263
      %v1271 = vpack.c.bf16 %v1266, %v1265
      %v1272 = vpack.c.bf16 %v1268, %v1267
      %v1274 = vsel %vm634, %v1269, 0
      %v1277 = vsel %vm634, %v1270, 0
      %v1280 = vsel %vm634, %v1271, 0
      %v1283 = vsel %vm634, %v1272, 0
      %1285 = vmatprep.subr.bf16.mxu0 0
      %1286 = vmatpush1.bf16.msra.mxu0 %v743
      %1287 = vmatprep.subr.bf16.mxu0 0
      %1288 = vmatpush1.bf16.msra.mxu0 %v744
      %1289 = vmatprep.subr.bf16.mxu0 0
      %1290 = vmatpush1.bf16.msra.mxu0 %v745
      %1291 = vmatprep.subr.bf16.mxu0 0
      %1292 = vmatpush1.bf16.msra.mxu0 %v746
      %1293 = vmatprep.subr.bf16.mxu0 0
      %1294 = vmatpush1.bf16.msra.mxu0 0
      %1295 = vmatprep.subr.bf16.mxu0 0
      %1296 = vmatpush1.bf16.msra.mxu0 0
      %1297 = vmatprep.subr.bf16.mxu0 0
      %1298 = vmatpush1.bf16.msra.mxu0 0
      %1299 = vmatprep.subr.bf16.mxu0 0
      %1300 = vmatpush1.bf16.msra.mxu0 0
      %1301 = vmatprep.subr.bf16.mxu0 0
      %1302 = vmatpush1.bf16.msra.mxu0 0
      %1303 = vmatprep.subr.bf16.mxu0 0
      %1304 = vmatpush1.bf16.msra.mxu0 0
      %1305 = vmatprep.subr.bf16.mxu0 0
      %1306 = vmatpush1.bf16.msra.mxu0 0
      %1307 = vmatprep.subr.bf16.mxu0 0
      %1308 = vmatpush1.bf16.msra.mxu0 0
      %1309 = vmatprep.subr.bf16.mxu0 0
      %1310 = vmatpush1.bf16.msra.mxu0 0
      %1311 = vmatprep.subr.bf16.mxu0 0
      %1312 = vmatpush1.bf16.msra.mxu0 0
      %1313 = vmatprep.subr.bf16.mxu0 0
      %1314 = vmatpush1.bf16.msra.mxu0 0
      %1315 = vmatprep.subr.bf16.mxu0 0
      %1316 = vmatpush1.bf16.msra.mxu0 0
      %1317 = vmatprep.mubr.bf16.mxu0 0
      %1318 = vmatmul.mubr.bf16.gmra.mrb[0].mxu0 %v1274
      %v1319 = vpop.f32.mrb[0].mxu0
      %v1320 = vadd.f32 0.0, %v1319
      %v1321 = vpop.f32.mrb[0].mxu0
      %v1322 = vpop.f32.mrb[0].mxu0
      %v1323 = vadd.f32 0.0, %v1322
      %v1324 = vpop.f32.mrb[0].mxu0
      %1325 = vmatprep.mubr.bf16.mxu0 0
      %1326 = vmatmul.mubr.bf16.gmra.mrb[0].mxu0 %v1277
      %v1327 = vpop.f32.mrb[0].mxu0
      %v1328 = vadd.f32 0.0, %v1327
      %v1329 = vpop.f32.mrb[0].mxu0
      %v1330 = vpop.f32.mrb[0].mxu0
      %v1331 = vadd.f32 0.0, %v1330
      %v1332 = vpop.f32.mrb[0].mxu0
      %1333 = vmatprep.mubr.bf16.mxu0 0
      %1334 = vmatmul.mubr.bf16.gmra.mrb[0].mxu0 %v1280
      %v1335 = vpop.f32.mrb[0].mxu0
      %v1336 = vadd.f32 0.0, %v1335
      %v1337 = vpop.f32.mrb[0].mxu0
      %v1338 = vpop.f32.mrb[0].mxu0
      %v1339 = vadd.f32 0.0, %v1338
      %v1340 = vpop.f32.mrb[0].mxu0
      %1341 = vmatprep.mubr.bf16.mxu0 0
      %1342 = vmatmul.mubr.bf16.gmra.mrb[0].mxu0 %v1283
      %v1343 = vpop.f32.mrb[0].mxu0
      %v1344 = vadd.f32 0.0, %v1343
      %v1345 = vpop.f32.mrb[0].mxu0
      %v1346 = vpop.f32.mrb[0].mxu0
      %v1347 = vadd.f32 0.0, %v1346
      %v1348 = vpop.f32.mrb[0].mxu0
      %1349 = vdwg.mxu0
      %v1350 = vmax.f32 %v1085, %v1320
      %v1351 = vmax.f32 %v1086, %v1323
      %v1352 = vmax.f32 %v1087, %v1328
      %v1353 = vmax.f32 %v1088, %v1331
      %v1354 = vmax.f32 %v1089, %v1336
      %v1355 = vmax.f32 %v1090, %v1339
      %v1356 = vmax.f32 %v1091, %v1344
      %v1357 = vmax.f32 %v1092, %v1347
      %v1358 = vsel %vm1245, inf, %v1173
      %v1359 = vsel %vm1246, inf, %v1174
      %v1360 = vsel %vm1247, inf, %v1175
      %v1361 = vsel %vm1248, inf, %v1176
      %v1362 = vsel %vm1249, inf, %v1177
      %v1363 = vsel %vm1250, inf, %v1178
      %v1364 = vsel %vm1251, inf, %v1179
      %v1365 = vsel %vm1252, inf, %v1180
      %v1366 = vsel %vm634, %v1358, inf
      %1367 = vmin.xlane.f32.xlu0 %v1366
      %v1368 = vpop.xlane.xlu0 %1367
      %v1369 = vsel %vm634, %v1359, inf
      %1370 = vmin.xlane.f32.xlu0 %v1369
      %v1371 = vpop.xlane.xlu0 %1370
      %v1372 = vsel %vm634, %v1360, inf
      %1373 = vmin.xlane.f32.xlu0 %v1372
      %v1374 = vpop.xlane.xlu0 %1373
      %v1375 = vsel %vm634, %v1361, inf
      %1376 = vmin.xlane.f32.xlu0 %v1375
      %v1377 = vpop.xlane.xlu0 %1376
      %v1378 = vsel %vm634, %v1362, inf
      %1379 = vmin.xlane.f32.xlu0 %v1378
      %v1380 = vpop.xlane.xlu0 %1379
      %v1381 = vsel %vm634, %v1363, inf
      %1382 = vmin.xlane.f32.xlu0 %v1381
      %v1383 = vpop.xlane.xlu0 %1382
      %v1384 = vsel %vm634, %v1364, inf
      %1385 = vmin.xlane.f32.xlu0 %v1384
      %v1386 = vpop.xlane.xlu0 %1385
      %v1387 = vsel %vm634, %v1365, inf
      %1388 = vmin.xlane.f32.xlu0 %v1387
      %v1389 = vpop.xlane.xlu0 %1388
      %vm1390 = vcmp.eq.f32.partialorder %v1358, %v1368
      %vm1391 = vcmp.eq.f32.partialorder %v1359, %v1371
      %vm1392 = vcmp.eq.f32.partialorder %v1360, %v1374
      %vm1393 = vcmp.eq.f32.partialorder %v1361, %v1377
      %vm1394 = vcmp.eq.f32.partialorder %v1362, %v1380
      %vm1395 = vcmp.eq.f32.partialorder %v1363, %v1383
      %vm1396 = vcmp.eq.f32.partialorder %v1364, %v1386
      %vm1397 = vcmp.eq.f32.partialorder %v1365, %v1389
      %v1398 = vsel %vm1390, %v625, 64.0
      %v1399 = vsel %vm1391, %v625, 64.0
      %v1400 = vsel %vm1392, %v625, 64.0
      %v1401 = vsel %vm1393, %v625, 64.0
      %v1402 = vsel %vm1394, %v625, 64.0
      %v1403 = vsel %vm1395, %v625, 64.0
      %v1404 = vsel %vm1396, %v625, 64.0
      %v1405 = vsel %vm1397, %v625, 64.0
      %v1406 = vsel %vm634, %v1398, inf
      %1407 = vmin.xlane.f32.xlu0 %v1406
      %v1408 = vpop.xlane.xlu0 %1407
      %v1409 = vsel %vm634, %v1399, inf
      %1410 = vmin.xlane.f32.xlu0 %v1409
      %v1411 = vpop.xlane.xlu0 %1410
      %v1412 = vsel %vm634, %v1400, inf
      %1413 = vmin.xlane.f32.xlu0 %v1412
      %v1414 = vpop.xlane.xlu0 %1413
      %v1415 = vsel %vm634, %v1401, inf
      %1416 = vmin.xlane.f32.xlu0 %v1415
      %v1417 = vpop.xlane.xlu0 %1416
      %v1418 = vsel %vm634, %v1402, inf
      %1419 = vmin.xlane.f32.xlu0 %v1418
      %v1420 = vpop.xlane.xlu0 %1419
      %v1421 = vsel %vm634, %v1403, inf
      %1422 = vmin.xlane.f32.xlu0 %v1421
      %v1423 = vpop.xlane.xlu0 %1422
      %v1424 = vsel %vm634, %v1404, inf
      %1425 = vmin.xlane.f32.xlu0 %v1424
      %v1426 = vpop.xlane.xlu0 %1425
      %v1427 = vsel %vm634, %v1405, inf
      %1428 = vmin.xlane.f32.xlu0 %v1427
      %v1429 = vpop.xlane.xlu0 %1428
      %vm1430 = vcmp.eq.f32.partialorder %v625, %v1408
      %vm1431 = vcmp.eq.f32.partialorder %v625, %v1411
      %vm1432 = vcmp.eq.f32.partialorder %v625, %v1414
      %vm1433 = vcmp.eq.f32.partialorder %v625, %v1417
      %vm1434 = vcmp.eq.f32.partialorder %v625, %v1420
      %vm1435 = vcmp.eq.f32.partialorder %v625, %v1423
      %vm1436 = vcmp.eq.f32.partialorder %v625, %v1426
      %vm1437 = vcmp.eq.f32.partialorder %v625, %v1429
      %v1438 = vsel %vm1430, inf, %v1358
      %v1439 = vsel %vm1431, inf, %v1359
      %v1440 = vsel %vm1432, inf, %v1360
      %v1441 = vsel %vm1433, inf, %v1361
      %v1442 = vsel %vm1434, inf, %v1362
      %v1443 = vsel %vm1435, inf, %v1363
      %v1444 = vsel %vm1436, inf, %v1364
      %v1445 = vsel %vm1437, inf, %v1365
      %v1446 = vsel %vm634, %v1438, inf
      %1447 = vmin.xlane.f32.xlu0 %v1446
      %v1448 = vpop.xlane.xlu0 %1447
      %v1449 = vsel %vm634, %v1439, inf
      %1450 = vmin.xlane.f32.xlu0 %v1449
      %v1451 = vpop.xlane.xlu0 %1450
      %v1452 = vsel %vm634, %v1440, inf
      %1453 = vmin.xlane.f32.xlu0 %v1452
      %v1454 = vpop.xlane.xlu0 %1453
      %v1455 = vsel %vm634, %v1441, inf
      %1456 = vmin.xlane.f32.xlu0 %v1455
      %v1457 = vpop.xlane.xlu0 %1456
      %v1458 = vsel %vm634, %v1442, inf
      %1459 = vmin.xlane.f32.xlu0 %v1458
      %v1460 = vpop.xlane.xlu0 %1459
      %v1461 = vsel %vm634, %v1443, inf
      %1462 = vmin.xlane.f32.xlu0 %v1461
      %v1463 = vpop.xlane.xlu0 %1462
      %v1464 = vsel %vm634, %v1444, inf
      %1465 = vmin.xlane.f32.xlu0 %v1464
      %v1466 = vpop.xlane.xlu0 %1465
      %v1467 = vsel %vm634, %v1445, inf
      %1468 = vmin.xlane.f32.xlu0 %v1467
      %v1469 = vpop.xlane.xlu0 %1468
      %vm1470 = vcmp.eq.f32.partialorder %v1438, %v1448
      %vm1471 = vcmp.eq.f32.partialorder %v1439, %v1451
      %vm1472 = vcmp.eq.f32.partialorder %v1440, %v1454
      %vm1473 = vcmp.eq.f32.partialorder %v1441, %v1457
      %vm1474 = vcmp.eq.f32.partialorder %v1442, %v1460
      %vm1475 = vcmp.eq.f32.partialorder %v1443, %v1463
      %vm1476 = vcmp.eq.f32.partialorder %v1444, %v1466
      %vm1477 = vcmp.eq.f32.partialorder %v1445, %v1469
      %v1478 = vsel %vm1470, %v625, 64.0
      %v1479 = vsel %vm1471, %v625, 64.0
      %v1480 = vsel %vm1472, %v625, 64.0
      %v1481 = vsel %vm1473, %v625, 64.0
      %v1482 = vsel %vm1474, %v625, 64.0
      %v1483 = vsel %vm1475, %v625, 64.0
      %v1484 = vsel %vm1476, %v625, 64.0
      %v1485 = vsel %vm1477, %v625, 64.0
      %v1486 = vsel %vm634, %v1478, inf
      %1487 = vmin.xlane.f32.xlu0 %v1486
      %v1488 = vpop.xlane.xlu0 %1487
      %v1489 = vsel %vm634, %v1479, inf
      %1490 = vmin.xlane.f32.xlu0 %v1489
      %v1491 = vpop.xlane.xlu0 %1490
      %v1492 = vsel %vm634, %v1480, inf
      %1493 = vmin.xlane.f32.xlu0 %v1492
      %v1494 = vpop.xlane.xlu0 %1493
      %v1495 = vsel %vm634, %v1481, inf
      %1496 = vmin.xlane.f32.xlu0 %v1495
      %v1497 = vpop.xlane.xlu0 %1496
      %v1498 = vsel %vm634, %v1482, inf
      %1499 = vmin.xlane.f32.xlu0 %v1498
      %v1500 = vpop.xlane.xlu0 %1499
      %v1501 = vsel %vm634, %v1483, inf
      %1502 = vmin.xlane.f32.xlu0 %v1501
      %v1503 = vpop.xlane.xlu0 %1502
      %v1504 = vsel %vm634, %v1484, inf
      %1505 = vmin.xlane.f32.xlu0 %v1504
      %v1506 = vpop.xlane.xlu0 %1505
      %v1507 = vsel %vm634, %v1485, inf
      %1508 = vmin.xlane.f32.xlu0 %v1507
      %v1509 = vpop.xlane.xlu0 %1508
      %vm1510 = vcmp.eq.f32.partialorder %v625, %v1488
      %vm1511 = vcmp.eq.f32.partialorder %v625, %v1491
      %vm1512 = vcmp.eq.f32.partialorder %v625, %v1494
      %vm1513 = vcmp.eq.f32.partialorder %v625, %v1497
      %vm1514 = vcmp.eq.f32.partialorder %v625, %v1500
      %vm1515 = vcmp.eq.f32.partialorder %v625, %v1503
      %vm1516 = vcmp.eq.f32.partialorder %v625, %v1506
      %vm1517 = vcmp.eq.f32.partialorder %v625, %v1509
      %v1518 = vsel %vm1510, 1, 0
      %v1519 = vsel %vm1511, 1, 0
      %v1520 = vsel %vm1512, 1, 0
      %v1521 = vsel %vm1513, 1, 0
      %v1522 = vsel %vm1514, 1, 0
      %v1523 = vsel %vm1515, 1, 0
      %v1524 = vsel %vm1516, 1, 0
      %v1525 = vsel %vm1517, 1, 0
      %v1526 = vcvt.s32.f32 %v1518
      %v1527 = vcvt.s32.f32 %v1519
      %v1528 = vcvt.s32.f32 %v1520
      %v1529 = vcvt.s32.f32 %v1521
      %v1530 = vcvt.s32.f32 %v1522
      %v1531 = vcvt.s32.f32 %v1523
      %v1532 = vcvt.s32.f32 %v1524
      %v1533 = vcvt.s32.f32 %v1525
      %v1534 = vpack.c.bf16 %v1527, %v1526
      %v1535 = vpack.c.bf16 %v1529, %v1528
      %v1536 = vpack.c.bf16 %v1531, %v1530
      %v1537 = vpack.c.bf16 %v1533, %v1532
      %v1539 = vsel %vm634, %v1534, 0
      %v1542 = vsel %vm634, %v1535, 0
      %v1545 = vsel %vm634, %v1536, 0
      %v1548 = vsel %vm634, %v1537, 0
      %1550 = vmatprep.subr.bf16.mxu0 0
      %1551 = vmatpush1.bf16.msra.mxu0 %v743
      %1552 = vmatprep.subr.bf16.mxu0 0
      %1553 = vmatpush1.bf16.msra.mxu0 %v744
      %1554 = vmatprep.subr.bf16.mxu0 0
      %1555 = vmatpush1.bf16.msra.mxu0 %v745
      %1556 = vmatprep.subr.bf16.mxu0 0
      %1557 = vmatpush1.bf16.msra.mxu0 %v746
      %1558 = vmatprep.subr.bf16.mxu0 0
      %1559 = vmatpush1.bf16.msra.mxu0 0
      %1560 = vmatprep.subr.bf16.mxu0 0
      %1561 = vmatpush1.bf16.msra.mxu0 0
      %1562 = vmatprep.subr.bf16.mxu0 0
      %1563 = vmatpush1.bf16.msra.mxu0 0
      %1564 = vmatprep.subr.bf16.mxu0 0
      %1565 = vmatpush1.bf16.msra.mxu0 0
      %1566 = vmatprep.subr.bf16.mxu0 0
      %1567 = vmatpush1.bf16.msra.mxu0 0
      %1568 = vmatprep.subr.bf16.mxu0 0
      %1569 = vmatpush1.bf16.msra.mxu0 0
      %1570 = vmatprep.subr.bf16.mxu0 0
      %1571 = vmatpush1.bf16.msra.mxu0 0
      %1572 = vmatprep.subr.bf16.mxu0 0
      %1573 = vmatpush1.bf16.msra.mxu0 0
      %1574 = vmatprep.subr.bf16.mxu0 0
      %1575 = vmatpush1.bf16.msra.mxu0 0
      %1576 = vmatprep.subr.bf16.mxu0 0
      %1577 = vmatpush1.bf16.msra.mxu0 0
      %1578 = vmatprep.subr.bf16.mxu0 0
      %1579 = vmatpush1.bf16.msra.mxu0 0
      %1580 = vmatprep.subr.bf16.mxu0 0
      %1581 = vmatpush1.bf16.msra.mxu0 0
      %1582 = vmatprep.mubr.bf16.mxu0 0
      %1583 = vmatmul.mubr.bf16.gmra.mrb[0].mxu0 %v1539
      %v1584 = vpop.f32.mrb[0].mxu0
      %v1585 = vadd.f32 0.0, %v1584
      %v1586 = vpop.f32.mrb[0].mxu0
      %v1587 = vpop.f32.mrb[0].mxu0
      %v1588 = vadd.f32 0.0, %v1587
      %v1589 = vpop.f32.mrb[0].mxu0
      %1590 = vmatprep.mubr.bf16.mxu0 0
      %1591 = vmatmul.mubr.bf16.gmra.mrb[0].mxu0 %v1542
      %v1592 = vpop.f32.mrb[0].mxu0
      %v1593 = vadd.f32 0.0, %v1592
      %v1594 = vpop.f32.mrb[0].mxu0
      %v1595 = vpop.f32.mrb[0].mxu0
      %v1596 = vadd.f32 0.0, %v1595
      %v1597 = vpop.f32.mrb[0].mxu0
      %1598 = vmatprep.mubr.bf16.mxu0 0
      %1599 = vmatmul.mubr.bf16.gmra.mrb[0].mxu0 %v1545
      %v1600 = vpop.f32.mrb[0].mxu0
      %v1601 = vadd.f32 0.0, %v1600
      %v1602 = vpop.f32.mrb[0].mxu0
      %v1603 = vpop.f32.mrb[0].mxu0
      %v1604 = vadd.f32 0.0, %v1603
      %v1605 = vpop.f32.mrb[0].mxu0
      %1606 = vmatprep.mubr.bf16.mxu0 0
      %1607 = vmatmul.mubr.bf16.gmra.mrb[0].mxu0 %v1548
      %v1608 = vpop.f32.mrb[0].mxu0
      %v1609 = vadd.f32 0.0, %v1608
      %v1610 = vpop.f32.mrb[0].mxu0
      %v1611 = vpop.f32.mrb[0].mxu0
      %v1612 = vadd.f32 0.0, %v1611
      %v1613 = vpop.f32.mrb[0].mxu0
      %1614 = vdwg.mxu0
      %v1615 = vmax.f32 %v1350, %v1585
      %v1616 = vmax.f32 %v1351, %v1588
      %v1617 = vmax.f32 %v1352, %v1593
      %v1618 = vmax.f32 %v1353, %v1596
      %v1619 = vmax.f32 %v1354, %v1601
      %v1620 = vmax.f32 %v1355, %v1604
      %v1621 = vmax.f32 %v1356, %v1609
      %v1622 = vmax.f32 %v1357, %v1612
      %v1623 = vld [vmem:[%s337] sm:$0xff]
      %v1624 = vld [vmem:[%s337 + $0x8] sm:$0xff]
      %v1625 = vld [vmem:[%s337 + $0x10] sm:$0xff]
      %v1626 = vld [vmem:[%s337 + $0x18] sm:$0xff]
      %v1627 = vld [vmem:[%s337 + $0x20] sm:$0xff]
      %v1628 = vld [vmem:[%s337 + $0x28] sm:$0xff]
      %v1629 = vld [vmem:[%s337 + $0x30] sm:$0xff]
      %v1630 = vld [vmem:[%s337 + $0x38] sm:$0xff]
      %v1631 = vadd.f32 %v1623, %v1615
      %v1632 = vadd.f32 %v1624, %v1616
      %v1633 = vadd.f32 %v1625, %v1617
      %v1634 = vadd.f32 %v1626, %v1618
      %v1635 = vadd.f32 %v1627, %v1619
      %v1636 = vadd.f32 %v1628, %v1620
      %v1637 = vadd.f32 %v1629, %v1621
      %v1638 = vadd.f32 %v1630, %v1622
      %v1639 = vmax.f32 %v1631, 0.0
      %v1640 = vmax.f32 %v1632, 0.0
      %v1641 = vmax.f32 %v1633, 0.0
      %v1642 = vmax.f32 %v1634, 0.0
      %v1643 = vmax.f32 %v1635, 0.0
      %v1644 = vmax.f32 %v1636, 0.0
      %v1645 = vmax.f32 %v1637, 0.0
      %v1646 = vmax.f32 %v1638, 0.0
      %v1647 = vadd.f32 %v1639, %v355
      %v1648 = vadd.f32 %v1640, %v356
      %v1649 = vadd.f32 %v1641, %v357
      %v1650 = vadd.f32 %v1642, %v358
      %v1651 = vadd.f32 %v1643, %v359
      %v1652 = vadd.f32 %v1644, %v360
      %v1653 = vadd.f32 %v1645, %v361
      %v1654 = vadd.f32 %v1646, %v362
      %1655 = vst.msk [vmem:[%s352] sm:$0xff] %vm379, %v1647
      %1656 = vst.msk [vmem:[%s352 + $0x8] sm:$0xff] %vm379, %v1648
      %1657 = vst.msk [vmem:[%s352 + $0x10] sm:$0xff] %vm379, %v1649
      %1658 = vst.msk [vmem:[%s352 + $0x18] sm:$0xff] %vm379, %v1650
      %1659 = vst.msk [vmem:[%s352 + $0x20] sm:$0xff] %vm379, %v1651
      %1660 = vst.msk [vmem:[%s352 + $0x28] sm:$0xff] %vm379, %v1652
      %1661 = vst.msk [vmem:[%s352 + $0x30] sm:$0xff] %vm379, %v1653
      %1662 = vst.msk [vmem:[%s352 + $0x38] sm:$0xff] %vm379, %v1654
      %s1663 = smul.u32 8, %s21
      %p1664 = scmp.lt.s32.totalorder %s20, 1
      %s1665 = scalar_select %p1664, %s20, 1
      %p1666 = scmp.lt.s32.totalorder %s1663, 7
      %s1667 = scalar_select %p1666, %s1663, 7
      %s1668 = smul.addr %s1665, 8
      %s1669 = sadd.s32 %s1667, %s1668
      %s1670 = smul.addr %s1669, 8
      %s1671 = scalar_lea.vmem %s5, %s1670
      // Predicated region
      $region41: #{sparse_deepgcn_forward.7} parent=39 // pred_check
        %p1672 = pneg %p182
      $region42: #{sparse_deepgcn_forward.7} parent=39 // pred_check_branch
        %1674 = sbr.rel (%p1672) target = $region44
      $region43: #{sparse_deepgcn_forward.7} parent=39 // pred_region
        %s1675 = smul.u32 8, %s21
      $region44: #{sparse_deepgcn_forward.7} parent=39 // pred_fallthru
        _
    $region40: #{sparse_deepgcn_forward.7} parent=5 // pred_fallthru
      _
    %p1676 = scmp.le.s32.totalorder 2, %s11
    // Predicated region
    $region45: #{sparse_deepgcn_forward.7} parent=5 // pred_check
      %p1677 = pneg %p1676
    $region46: #{sparse_deepgcn_forward.7} parent=5 // pred_check_branch
      %1679 = sbr.rel (%p1677) target = $region48
    $region47: #{sparse_deepgcn_forward.7} parent=5 // pred_region
      %s1680 = ssub.s32 %s11, 2
      // Predicated region
      $region49: #{sparse_deepgcn_forward.7} parent=47 // pred_check
        %p1681 = pneg %p188
      $region50: #{sparse_deepgcn_forward.7} parent=47 // pred_check_branch
        %1683 = sbr.rel (%p1681) target = $region52
      $region51: #{sparse_deepgcn_forward.7} parent=47 // pred_region
        %s1684 = smul.u32 8, %s23
        %p1685 = scmp.lt.s32.totalorder %s22, 1
        %s1686 = scalar_select %p1685, %s22, 1
        %p1687 = scmp.lt.s32.totalorder %s1684, 7
        %s1688 = scalar_select %p1687, %s1684, 7
        %s1689 = smul.addr %s1686, 8
        %s1690 = sadd.s32 %s1688, %s1689
        %s1691 = smul.addr %s1690, 8
        %s1692 = scalar_lea.vmem %s5, %s1691
      $region52: #{sparse_deepgcn_forward.7} parent=47 // pred_fallthru
        _
    $region48: #{sparse_deepgcn_forward.7} parent=5 // pred_fallthru
      _
  $region6: #{sparse_deepgcn_forward.7} parent=0 // loop_footer
    %s15 = sadd.s32 1, %s11
  $region7: #{sparse_deepgcn_forward.7} parent=0 // loop_footer_branch
    %10 = sbr.rel target = $region3
  $region8: #{sparse_deepgcn_forward.7} parent=0 // loop_exit
    _

// kernel: sparse_deepgcn_forward.6
$region0: #{sparse_deepgcn_forward.6}
  #allocation0 [shape = 'u32[]', space=smem, size = 0x4, offset = 0x4, fixed_abs, tag = 'smem constant byte address 0x4 - core index']
  #allocation1 [shape = 'u32[144,128]{1,0:T(1,128)}', space=vmem, size = 0x12000, scoped, tag = 'internal scratch']
  %s0 = inlined_call_operand.vmem [shape: f32[2,64,16], index: 0, kind: input, shape index: {}, may-alias: {0,1}]
  %s1 = inlined_call_operand.vmem [shape: f32[2,64,16], index: 1, kind: input, shape index: {}, may-alias: {0,1}]
  %s2 = inlined_call_operand.vmem [shape: f32[2,1,64], index: 2, kind: input, shape index: {}]
  %s3 = inlined_call_operand.vmem [shape: f32[2,64,16], index: 3, kind: input, shape index: {}]
  %s4 = inlined_call_operand.vmem [shape: bf16[2,64,16], index: 4, kind: input, shape index: {}]
  %s5 = inlined_call_operand.vmem [shape: f32[2,64,16], index: 5, kind: output, shape index: {}]
  %s6 = sld [smem:[#allocation0]]
  $region53: #{sparse_deepgcn_forward.6} parent=0
    _
  %s8 = ssub.s32 1, %s6
  %s9 = scalar_select 0, %s8, %s6
  loop: start=0, step=1, limit=4
  $region2: #{sparse_deepgcn_forward.6} parent=0 // loop_pre_header
    _
  $region3: #{sparse_deepgcn_forward.6} parent=0 // loop_header
    %s11 = sphi 0, %s15
    %p12 = scmp.ge.s32.totalorder %s11, 4
    %s18 = sphi 0, %s30
    %s19 = sphi 0, %s26
    %s20 = sphi 0, %s18
    %s21 = sphi 0, %s19
    %s22 = sphi 0, %s20
    %s23 = sphi 0, %s21
    %s35 = sphi 0, %s37
    %s38 = sphi 0, %s35
    %s39 = sphi 0, %s38
    %s55 = sphi 0, %s39
    %s61 = sphi 0, %s63
    %s64 = sphi 0, %s61
    %s65 = sphi 0, %s64
    %s81 = sphi 0, %s65
    %s87 = sphi 0, %s89
    %s90 = sphi 0, %s87
    %s91 = sphi 0, %s90
    %s107 = sphi 0, %s91
    %s115 = sphi 0, %s117
    %s118 = sphi 0, %s115
    %s119 = sphi 0, %s118
    %s135 = sphi 0, %s119
    %s141 = sphi 0, %s143
    %s144 = sphi 0, %s141
    %s145 = sphi 0, %s144
    %s161 = sphi 0, %s145
    %s169 = sphi 0, %s171
    %s172 = sphi 0, %s169
    %s173 = sphi 0, %s172
    %s189 = sphi 0, %s173
  $region4: #{sparse_deepgcn_forward.6} parent=0 // loop_header_branch
    %14 = sbr.rel (%p12) target = $region8
  $region5: #{sparse_deepgcn_forward.6} parent=0 // loop_body
    %s16 = ssub.s32 %s11, 1
    %s17 = ssub.s32 %s11, 2
    %s24 = sadd.s32 1, %s19
    %p25 = scmp.ge.s32.totalorder %s24, 1
    %s26 = scalar_select %p25, 0, %s24
    %s27 = sadd.s32 1, %s18
    %s28 = scalar_select %p25, %s27, %s18
    %p29 = scmp.ge.s32.totalorder %s28, 2
    %s30 = scalar_select %p29, 0, %s28
    %s31 = ssub.s32 %s18, %s30
    %s32 = ssub.s32 %s19, %s26
    %s33 = sor.u32 %s31, %s32
    %p34 = scmp.eq.s32.totalorder %s33, 0
    %s36 = sadd.s32 %s35, 1
    %s37 = scalar_select %p34, %s35, %s36
    %p40 = pneg %p34
    %p41 = scmp.eq.s32.totalorder %s11, 1
    %p42 = por %p40, %p41
    %p43 = scmp.ne.s32.totalorder %s35, %s38
    %p44 = scmp.eq.s32.totalorder %s11, 0
    %p45 = por %p43, %p44
    %p46 = scmp.ne.s32.totalorder %s35, %s38
    %p47 = scmp.eq.s32.totalorder %s16, 1
    %p48 = por %p46, %p47
    %p49 = scmp.ne.s32.totalorder %s38, %s39
    %p50 = scmp.eq.s32.totalorder %s16, 0
    %p51 = por %p49, %p50
    %p52 = scmp.ne.s32.totalorder %s38, %s39
    %p53 = scmp.eq.s32.totalorder %s17, 1
    %p54 = por %p52, %p53
    %p56 = scmp.ne.s32.totalorder %s39, %s55
    %p57 = scmp.eq.s32.totalorder %s17, 0
    %p58 = por %p56, %p57
    %s59 = ssub.s32 %s18, %s30
    %p60 = scmp.eq.s32.totalorder %s59, 0
    %s62 = sadd.s32 %s61, 1
    %s63 = scalar_select %p60, %s61, %s62
    %p66 = pneg %p60
    %p67 = scmp.eq.s32.totalorder %s11, 1
    %p68 = por %p66, %p67
    %p69 = scmp.ne.s32.totalorder %s61, %s64
    %p70 = scmp.eq.s32.totalorder %s11, 0
    %p71 = por %p69, %p70
    %p72 = scmp.ne.s32.totalorder %s61, %s64
    %p73 = scmp.eq.s32.totalorder %s16, 1
    %p74 = por %p72, %p73
    %p75 = scmp.ne.s32.totalorder %s64, %s65
    %p76 = scmp.eq.s32.totalorder %s16, 0
    %p77 = por %p75, %p76
    %p78 = scmp.ne.s32.totalorder %s64, %s65
    %p79 = scmp.eq.s32.totalorder %s17, 1
    %p80 = por %p78, %p79
    %p82 = scmp.ne.s32.totalorder %s65, %s81
    %p83 = scmp.eq.s32.totalorder %s17, 0
    %p84 = por %p82, %p83
    %s85 = ssub.s32 %s18, %s30
    %p86 = scmp.eq.s32.totalorder %s85, 0
    %s88 = sadd.s32 %s87, 1
    %s89 = scalar_select %p86, %s87, %s88
    %p92 = pneg %p86
    %p93 = scmp.eq.s32.totalorder %s11, 1
    %p94 = por %p92, %p93
    %p95 = scmp.ne.s32.totalorder %s87, %s90
    %p96 = scmp.eq.s32.totalorder %s11, 0
    %p97 = por %p95, %p96
    %p98 = scmp.ne.s32.totalorder %s87, %s90
    %p99 = scmp.eq.s32.totalorder %s16, 1
    %p100 = por %p98, %p99
    %p101 = scmp.ne.s32.totalorder %s90, %s91
    %p102 = scmp.eq.s32.totalorder %s16, 0
    %p103 = por %p101, %p102
    %p104 = scmp.ne.s32.totalorder %s90, %s91
    %p105 = scmp.eq.s32.totalorder %s17, 1
    %p106 = por %p104, %p105
    %p108 = scmp.ne.s32.totalorder %s91, %s107
    %p109 = scmp.eq.s32.totalorder %s17, 0
    %p110 = por %p108, %p109
    %s111 = ssub.s32 %s18, %s30
    %s112 = ssub.s32 %s19, %s26
    %s113 = sor.u32 %s111, %s112
    %p114 = scmp.eq.s32.totalorder %s113, 0
    %s116 = sadd.s32 %s115, 1
    %s117 = scalar_select %p114, %s115, %s116
    %p120 = pneg %p114
    %p121 = scmp.eq.s32.totalorder %s11, 1
    %p122 = por %p120, %p121
    %p123 = scmp.ne.s32.totalorder %s115, %s118
    %p124 = scmp.eq.s32.totalorder %s11, 0
    %p125 = por %p123, %p124
    %p126 = scmp.ne.s32.totalorder %s115, %s118
    %p127 = scmp.eq.s32.totalorder %s16, 1
    %p128 = por %p126, %p127
    %p129 = scmp.ne.s32.totalorder %s118, %s119
    %p130 = scmp.eq.s32.totalorder %s16, 0
    %p131 = por %p129, %p130
    %p132 = scmp.ne.s32.totalorder %s118, %s119
    %p133 = scmp.eq.s32.totalorder %s17, 1
    %p134 = por %p132, %p133
    %p136 = scmp.ne.s32.totalorder %s119, %s135
    %p137 = scmp.eq.s32.totalorder %s17, 0
    %p138 = por %p136, %p137
    %s139 = ssub.s32 %s18, %s30
    %p140 = scmp.eq.s32.totalorder %s139, 0
    %s142 = sadd.s32 %s141, 1
    %s143 = scalar_select %p140, %s141, %s142
    %p146 = pneg %p140
    %p147 = scmp.eq.s32.totalorder %s11, 1
    %p148 = por %p146, %p147
    %p149 = scmp.ne.s32.totalorder %s141, %s144
    %p150 = scmp.eq.s32.totalorder %s11, 0
    %p151 = por %p149, %p150
    %p152 = scmp.ne.s32.totalorder %s141, %s144
    %p153 = scmp.eq.s32.totalorder %s16, 1
    %p154 = por %p152, %p153
    %p155 = scmp.ne.s32.totalorder %s144, %s145
    %p156 = scmp.eq.s32.totalorder %s16, 0
    %p157 = por %p155, %p156
    %p158 = scmp.ne.s32.totalorder %s144, %s145
    %p159 = scmp.eq.s32.totalorder %s17, 1
    %p160 = por %p158, %p159
    %p162 = scmp.ne.s32.totalorder %s145, %s161
    %p163 = scmp.eq.s32.totalorder %s17, 0
    %p164 = por %p162, %p163
    %s165 = ssub.s32 %s18, %s30
    %s166 = ssub.s32 %s19, %s26
    %s167 = sor.u32 %s165, %s166
    %p168 = scmp.eq.s32.totalorder %s167, 0
    %s170 = sadd.s32 %s169, 1
    %s171 = scalar_select %p168, %s169, %s170
    %p174 = pneg %p168
    %p175 = scmp.eq.s32.totalorder %s11, 1
    %p176 = por %p174, %p175
    %p177 = scmp.ne.s32.totalorder %s169, %s172
    %p178 = scmp.eq.s32.totalorder %s11, 0
    %p179 = por %p177, %p178
    %p180 = scmp.ne.s32.totalorder %s169, %s172
    %p181 = scmp.eq.s32.totalorder %s16, 1
    %p182 = por %p180, %p181
    %p183 = scmp.ne.s32.totalorder %s172, %s173
    %p184 = scmp.eq.s32.totalorder %s16, 0
    %p185 = por %p183, %p184
    %p186 = scmp.ne.s32.totalorder %s172, %s173
    %p187 = scmp.eq.s32.totalorder %s17, 1
    %p188 = por %p186, %p187
    %p190 = scmp.ne.s32.totalorder %s173, %s189
    %p191 = scmp.eq.s32.totalorder %s17, 0
    %p192 = por %p190, %p191
    %p193 = scmp.le.s32.totalorder 1, %s11
    %p194 = scmp.lt.s32.totalorder %s11, 3
    %p195 = pnand %p193, %p194
    %p196 = pneg %p195
    // Predicated region
    $region9: #{sparse_deepgcn_forward.6} parent=5 // pred_check
      _
    $region10: #{sparse_deepgcn_forward.6} parent=5 // pred_check_branch
      %198 = sbr.rel (%p195) target = $region12
    $region11: #{sparse_deepgcn_forward.6} parent=5 // pred_region
      %s199 = ssub.s32 %s11, 1
    $region12: #{sparse_deepgcn_forward.6} parent=5 // pred_fallthru
      _
    %p200 = scmp.lt.s32.totalorder %s11, 2
    // Predicated region
    $region13: #{sparse_deepgcn_forward.6} parent=5 // pred_check
      %p201 = pneg %p200
    $region14: #{sparse_deepgcn_forward.6} parent=5 // pred_check_branch
      %203 = sbr.rel (%p201) target = $region16
    $region15: #{sparse_deepgcn_forward.6} parent=5 // pred_region
      // Predicated region
      $region17: #{sparse_deepgcn_forward.6} parent=15 // pred_check
        %p204 = pneg %p45
      $region18: #{sparse_deepgcn_forward.6} parent=15 // pred_check_branch
        %206 = sbr.rel (%p204) target = $region20
      $region19: #{sparse_deepgcn_forward.6} parent=15 // pred_region
        %s207 = smul.u32 8, %s19
        %p208 = scmp.lt.s32.totalorder %s18, 1
        %s209 = scalar_select %p208, %s18, 1
        %p210 = scmp.lt.s32.totalorder %s207, 7
        %s211 = scalar_select %p210, %s207, 7
        %s212 = smul.addr %s209, 8
        %s213 = sadd.s32 %s211, %s212
        %s214 = smul.addr %s213, 8
        %s215 = scalar_lea.vmem %s0, %s214
        %s216 = smul.u32 8, %s19
      $region20: #{sparse_deepgcn_forward.6} parent=15 // pred_fallthru
        _
      // Predicated region
      $region21: #{sparse_deepgcn_forward.6} parent=15 // pred_check
        %p217 = pneg %p71
      $region22: #{sparse_deepgcn_forward.6} parent=15 // pred_check_branch
        %219 = sbr.rel (%p217) target = $region24
      $region23: #{sparse_deepgcn_forward.6} parent=15 // pred_region
        %p220 = scmp.lt.s32.totalorder %s18, 1
        %s221 = scalar_select %p220, %s18, 1
        %s222 = smul.addr %s221, 8
        %s223 = smul.addr %s222, 8
        %s224 = scalar_lea.vmem %s1, %s223
      $region24: #{sparse_deepgcn_forward.6} parent=15 // pred_fallthru
        _
      // Predicated region
      $region25: #{sparse_deepgcn_forward.6} parent=15 // pred_check
        %p225 = pneg %p97
      $region26: #{sparse_deepgcn_forward.6} parent=15 // pred_check_branch
        %227 = sbr.rel (%p225) target = $region28
      $region27: #{sparse_deepgcn_forward.6} parent=15 // pred_region
        %p228 = scmp.lt.s32.totalorder %s18, 1
        %s229 = scalar_select %p228, %s18, 1
        %s230 = scalar_lea.vmem %s2, %s229
      $region28: #{sparse_deepgcn_forward.6} parent=15 // pred_fallthru
        _
      // Predicated region
      $region29: #{sparse_deepgcn_forward.6} parent=15 // pred_check
        %p231 = pneg %p125
      $region30: #{sparse_deepgcn_forward.6} parent=15 // pred_check_branch
        %233 = sbr.rel (%p231) target = $region32
      $region31: #{sparse_deepgcn_forward.6} parent=15 // pred_region
        %s234 = smul.u32 8, %s19
        %p235 = scmp.lt.s32.totalorder %s18, 1
        %s236 = scalar_select %p235, %s18, 1
        %p237 = scmp.lt.s32.totalorder %s234, 7
        %s238 = scalar_select %p237, %s234, 7
        %s239 = smul.addr %s236, 8
        %s240 = sadd.s32 %s238, %s239
        %s241 = smul.addr %s240, 8
        %s242 = scalar_lea.vmem %s3, %s241
        %s243 = smul.u32 8, %s19
      $region32: #{sparse_deepgcn_forward.6} parent=15 // pred_fallthru
        _
      // Predicated region
      $region33: #{sparse_deepgcn_forward.6} parent=15 // pred_check
        %p244 = pneg %p151
      $region34: #{sparse_deepgcn_forward.6} parent=15 // pred_check_branch
        %246 = sbr.rel (%p244) target = $region36
      $region35: #{sparse_deepgcn_forward.6} parent=15 // pred_region
        %p247 = scmp.lt.s32.totalorder %s18, 1
        %s248 = scalar_select %p247, %s18, 1
        %s249 = smul.addr %s248, 8
        %s250 = smul.addr %s249, 4
        %s251 = scalar_lea.vmem %s4, %s250
      $region36: #{sparse_deepgcn_forward.6} parent=15 // pred_fallthru
        _
    $region16: #{sparse_deepgcn_forward.6} parent=5 // pred_fallthru
      _
    %p252 = scmp.le.s32.totalorder 1, %s11
    %p253 = scmp.lt.s32.totalorder %s11, 3
    %p254 = pnand %p252, %p253
    %p255 = pneg %p254
    // Predicated region
    $region37: #{sparse_deepgcn_forward.6} parent=5 // pred_check
      _
    $region38: #{sparse_deepgcn_forward.6} parent=5 // pred_check_branch
      %257 = sbr.rel (%p254) target = $region40
    $region39: #{sparse_deepgcn_forward.6} parent=5 // pred_region
      %s258 = ssub.s32 %s11, 1
      %s259 = smul.u32 8, %s21
      %p260 = scmp.lt.s32.totalorder %s20, 1
      %s261 = scalar_select %p260, %s20, 1
      %p262 = scmp.lt.s32.totalorder %s259, 7
      %s263 = scalar_select %p262, %s259, 7
      %s264 = smul.addr %s261, 8
      %s265 = sadd.s32 %s263, %s264
      %s266 = smul.addr %s265, 8
      %s267 = scalar_lea.vmem %s0, %s266
      %p268 = pneg %p51
      %p269 = pneg %p48
      %p270 = scmp.lt.s32.totalorder %s20, 1
      %s271 = scalar_select %p270, %s20, 1
      %s272 = smul.addr %s271, 8
      %s273 = smul.addr %s272, 8
      %s274 = scalar_lea.vmem %s1, %s273
      %p275 = pneg %p77
      %p276 = pneg %p74
      %p277 = scmp.lt.s32.totalorder %s20, 1
      %s278 = scalar_select %p277, %s20, 1
      %s279 = scalar_lea.vmem %s2, %s278
      %p280 = pneg %p103
      %p281 = pneg %p100
      %s282 = smul.u32 8, %s21
      %p283 = scmp.lt.s32.totalorder %s20, 1
      %s284 = scalar_select %p283, %s20, 1
      %p285 = scmp.lt.s32.totalorder %s282, 7
      %s286 = scalar_select %p285, %s282, 7
      %s287 = smul.addr %s284, 8
      %s288 = sadd.s32 %s286, %s287
      %s289 = smul.addr %s288, 8
      %s290 = scalar_lea.vmem %s3, %s289
      %p291 = pneg %p131
      %p292 = pneg %p128
      %p293 = scmp.lt.s32.totalorder %s20, 1
      %s294 = scalar_select %p293, %s20, 1
      %s295 = smul.addr %s294, 8
      %s296 = smul.addr %s295, 4
      %s297 = scalar_lea.vmem %s4, %s296
      %p298 = pneg %p157
      %p299 = pneg %p154
      %p300 = pneg %p185
      %p301 = pneg %p182
      %s302 = smul.u32 8, %s21
      %p303 = scmp.lt.s32.totalorder %s20, 1
      %s304 = scalar_select %p303, %s20, 1
      %p305 = scmp.lt.s32.totalorder %s302, 7
      %s306 = scalar_select %p305, %s302, 7
      %s307 = smul.addr %s304, 8
      %s308 = sadd.s32 %s306, %s307
      %s309 = smul.addr %s308, 8
      %s310 = scalar_lea.vmem %s5, %s309
      %s311 = smul.u32 8, %s21
      %p312 = scmp.lt.s32.totalorder %s20, 1
      %s313 = scalar_select %p312, %s20, 1
      %p314 = scmp.lt.s32.totalorder %s311, 7
      %s315 = scalar_select %p314, %s311, 7
      %s316 = smul.addr %s313, 8
      %s317 = sadd.s32 %s315, %s316
      %s318 = smul.addr %s317, 8
      %s319 = scalar_lea.vmem %s0, %s318
      %s320 = smul.u32 8, %s21
      %p321 = scmp.lt.s32.totalorder %s20, 1
      %s322 = scalar_select %p321, %s20, 1
      %s323 = smul.addr %s322, 8
      %s324 = smul.addr %s323, 8
      %s325 = scalar_lea.vmem %s1, %s324
      %p326 = scmp.lt.s32.totalorder %s20, 1
      %s327 = scalar_select %p326, %s20, 1
      %s328 = scalar_lea.vmem %s2, %s327
      %s329 = smul.u32 8, %s21
      %p330 = scmp.lt.s32.totalorder %s20, 1
      %s331 = scalar_select %p330, %s20, 1
      %p332 = scmp.lt.s32.totalorder %s329, 7
      %s333 = scalar_select %p332, %s329, 7
      %s334 = smul.addr %s331, 8
      %s335 = sadd.s32 %s333, %s334
      %s336 = smul.addr %s335, 8
      %s337 = scalar_lea.vmem %s3, %s336
      %s338 = smul.u32 8, %s21
      %p339 = scmp.lt.s32.totalorder %s20, 1
      %s340 = scalar_select %p339, %s20, 1
      %s341 = smul.addr %s340, 8
      %s342 = smul.addr %s341, 4
      %s343 = scalar_lea.vmem %s4, %s342
      %s344 = smul.u32 8, %s21
      %p345 = scmp.lt.s32.totalorder %s20, 1
      %s346 = scalar_select %p345, %s20, 1
      %p347 = scmp.lt.s32.totalorder %s344, 7
      %s348 = scalar_select %p347, %s344, 7
      %s349 = smul.addr %s346, 8
      %s350 = sadd.s32 %s348, %s349
      %s351 = smul.addr %s350, 8
      %s352 = scalar_lea.vmem %s5, %s351
      %s353 = smul.u32 8, %s21
      %v355 = vld [vmem:[%s319] sm:$0xff]
      %v356 = vld [vmem:[%s319 + $0x8] sm:$0xff]
      %v357 = vld [vmem:[%s319 + $0x10] sm:$0xff]
      %v358 = vld [vmem:[%s319 + $0x18] sm:$0xff]
      %v359 = vld [vmem:[%s319 + $0x20] sm:$0xff]
      %v360 = vld [vmem:[%s319 + $0x28] sm:$0xff]
      %v361 = vld [vmem:[%s319 + $0x30] sm:$0xff]
      %v362 = vld [vmem:[%s319 + $0x38] sm:$0xff]
      %v363 = vld [vmem:[%s325] sm:$0xff]
      %v364 = vld [vmem:[%s325 + $0x8] sm:$0xff]
      %v365 = vld [vmem:[%s325 + $0x10] sm:$0xff]
      %v366 = vld [vmem:[%s325 + $0x18] sm:$0xff]
      %v367 = vld [vmem:[%s325 + $0x20] sm:$0xff]
      %v368 = vld [vmem:[%s325 + $0x28] sm:$0xff]
      %v369 = vld [vmem:[%s325 + $0x30] sm:$0xff]
      %v370 = vld [vmem:[%s325 + $0x38] sm:$0xff]
      %v371 = vmul.f32 %v355, %v355
      %v372 = vmul.f32 %v356, %v356
      %v373 = vmul.f32 %v357, %v357
      %v374 = vmul.f32 %v358, %v358
      %v375 = vmul.f32 %v359, %v359
      %v376 = vmul.f32 %v360, %v360
      %v377 = vmul.f32 %v361, %v361
      %v378 = vmul.f32 %v362, %v362
      %vm379 = vcmask 130048
      %v380 = vsel %vm379, %v371, 0.0
      %381 = vadd.xlane.f32.xlu0 %v380
      %v382 = vpop.xlane.xlu0 %381
      %v383 = vsel %vm379, %v372, 0.0
      %384 = vadd.xlane.f32.xlu0 %v383
      %v385 = vpop.xlane.xlu0 %384
      %v386 = vsel %vm379, %v373, 0.0
      %387 = vadd.xlane.f32.xlu0 %v386
      %v388 = vpop.xlane.xlu0 %387
      %v389 = vsel %vm379, %v374, 0.0
      %390 = vadd.xlane.f32.xlu0 %v389
      %v391 = vpop.xlane.xlu0 %390
      %v392 = vsel %vm379, %v375, 0.0
      %393 = vadd.xlane.f32.xlu0 %v392
      %v394 = vpop.xlane.xlu0 %393
      %v395 = vsel %vm379, %v376, 0.0
      %396 = vadd.xlane.f32.xlu0 %v395
      %v397 = vpop.xlane.xlu0 %396
      %v398 = vsel %vm379, %v377, 0.0
      %399 = vadd.xlane.f32.xlu0 %v398
      %v400 = vpop.xlane.xlu0 %399
      %v401 = vsel %vm379, %v378, 0.0
      %402 = vadd.xlane.f32.xlu0 %v401
      %v403 = vpop.xlane.xlu0 %402
      %v405 = vsel %vm379, %v355, 0
      %v408 = vsel %vm379, %v356, 0
      %v411 = vsel %vm379, %v357, 0
      %v414 = vsel %vm379, %v358, 0
      %v417 = vsel %vm379, %v359, 0
      %v420 = vsel %vm379, %v360, 0
      %v423 = vsel %vm379, %v361, 0
      %v426 = vsel %vm379, %v362, 0
      %v429 = vsel %vm379, %v363, 0
      %v432 = vsel %vm379, %v364, 0
      %v435 = vsel %vm379, %v365, 0
      %v438 = vsel %vm379, %v366, 0
      %v441 = vsel %vm379, %v367, 0
      %v444 = vsel %vm379, %v368, 0
      %v447 = vsel %vm379, %v369, 0
      %v450 = vsel %vm379, %v370, 0
      %452 = vmatprep.subr.mxu0 0.0
      %453 = vmatpush1.xpose.msra.mxu0 %v429
      %454 = vmatprep.subr.mxu0 0.0
      %455 = vmatpush1.xpose.msra.mxu0 %v432
      %456 = vmatprep.subr.mxu0 0.0
      %457 = vmatpush1.xpose.msra.mxu0 %v435
      %458 = vmatprep.subr.mxu0 0.0
      %459 = vmatpush1.xpose.msra.mxu0 %v438
      %460 = vmatprep.subr.mxu0 0.0
      %461 = vmatpush1.xpose.msra.mxu0 %v441
      %462 = vmatprep.subr.mxu0 0.0
      %463 = vmatpush1.xpose.msra.mxu0 %v444
      %464 = vmatprep.subr.mxu0 0.0
      %465 = vmatpush1.xpose.msra.mxu0 %v447
      %466 = vmatprep.subr.mxu0 0.0
      %467 = vmatpush1.xpose.msra.mxu0 %v450
      %468 = vmatprep.subr.mxu0 0.0
      %469 = vmatpush1.xpose.msra.mxu0 0.0
      %470 = vmatprep.subr.mxu0 0.0
      %471 = vmatpush1.xpose.msra.mxu0 0.0
      %472 = vmatprep.subr.mxu0 0.0
      %473 = vmatpush1.xpose.msra.mxu0 0.0
      %474 = vmatprep.subr.mxu0 0.0
      %475 = vmatpush1.xpose.msra.mxu0 0.0
      %476 = vmatprep.subr.mxu0 0.0
      %477 = vmatpush1.xpose.msra.mxu0 0.0
      %478 = vmatprep.subr.mxu0 0.0
      %479 = vmatpush1.xpose.msra.mxu0 0.0
      %480 = vmatprep.subr.mxu0 0.0
      %481 = vmatpush1.xpose.msra.mxu0 0.0
      %482 = vmatprep.subr.mxu0 0.0
      %483 = vmatpush1.xpose.msra.mxu0 0.0
      %484 = vmatprep.subr.mxu0 0.0
      %485 = vmatpush1.xpose.msra.mxu0 0.0
      %486 = vmatprep.subr.mxu0 0.0
      %487 = vmatpush1.xpose.msra.mxu0 0.0
      %488 = vmatprep.subr.mxu0 0.0
      %489 = vmatpush1.xpose.msra.mxu0 0.0
      %490 = vmatprep.subr.mxu0 0.0
      %491 = vmatpush1.xpose.msra.mxu0 0.0
      %492 = vmatprep.subr.mxu0 0.0
      %493 = vmatpush1.xpose.msra.mxu0 0.0
      %494 = vmatprep.subr.mxu0 0.0
      %495 = vmatpush1.xpose.msra.mxu0 0.0
      %496 = vmatprep.subr.mxu0 0.0
      %497 = vmatpush1.xpose.msra.mxu0 0.0
      %498 = vmatprep.subr.mxu0 0.0
      %499 = vmatpush1.xpose.msra.mxu0 0.0
      %500 = vmatprep.subr.mxu0 0.0
      %501 = vmatpush1.xpose.msra.mxu0 0.0
      %502 = vmatprep.subr.mxu0 0.0
      %503 = vmatpush1.xpose.msra.mxu0 0.0
      %504 = vmatprep.subr.mxu0 0.0
      %505 = vmatpush1.xpose.msra.mxu0 0.0
      %506 = vmatprep.subr.mxu0 0.0
      %507 = vmatpush1.xpose.msra.mxu0 0.0
      %508 = vmatprep.subr.mxu0 0.0
      %509 = vmatpush1.xpose.msra.mxu0 0.0
      %510 = vmatprep.subr.mxu0 0.0
      %511 = vmatpush1.xpose.msra.mxu0 0.0
      %512 = vmatprep.subr.mxu0 0.0
      %513 = vmatpush1.xpose.msra.mxu0 0.0
      %514 = vmatprep.subr.mxu0 0.0
      %515 = vmatpush1.xpose.msra.mxu0 0.0
      %516 = vmatprep.mubr.f32.mxu0 0.0
      %517 = vmatmul.mubr.f32.gmra.mrb[0].mxu0 %v405
      %v518 = vpop.f32.mrb[0].mxu0
      %v519 = vadd.f32 0.0, %v518
      %v520 = vpop.f32.mrb[0].mxu0
      %521 = vmatprep.mubr.f32.mxu0 0.0
      %522 = vmatmul.mubr.f32.gmra.mrb[0].mxu0 %v408
      %v523 = vpop.f32.mrb[0].mxu0
      %v524 = vadd.f32 0.0, %v523
      %v525 = vpop.f32.mrb[0].mxu0
      %526 = vmatprep.mubr.f32.mxu0 0.0
      %527 = vmatmul.mubr.f32.gmra.mrb[0].mxu0 %v411
      %v528 = vpop.f32.mrb[0].mxu0
      %v529 = vadd.f32 0.0, %v528
      %v530 = vpop.f32.mrb[0].mxu0
      %531 = vmatprep.mubr.f32.mxu0 0.0
      %532 = vmatmul.mubr.f32.gmra.mrb[0].mxu0 %v414
      %v533 = vpop.f32.mrb[0].mxu0
      %v534 = vadd.f32 0.0, %v533
      %v535 = vpop.f32.mrb[0].mxu0
      %536 = vmatprep.mubr.f32.mxu0 0.0
      %537 = vmatmul.mubr.f32.gmra.mrb[0].mxu0 %v417
      %v538 = vpop.f32.mrb[0].mxu0
      %v539 = vadd.f32 0.0, %v538
      %v540 = vpop.f32.mrb[0].mxu0
      %541 = vmatprep.mubr.f32.mxu0 0.0
      %542 = vmatmul.mubr.f32.gmra.mrb[0].mxu0 %v420
      %v543 = vpop.f32.mrb[0].mxu0
      %v544 = vadd.f32 0.0, %v543
      %v545 = vpop.f32.mrb[0].mxu0
      %546 = vmatprep.mubr.f32.mxu0 0.0
      %547 = vmatmul.mubr.f32.gmra.mrb[0].mxu0 %v423
      %v548 = vpop.f32.mrb[0].mxu0
      %v549 = vadd.f32 0.0, %v548
      %v550 = vpop.f32.mrb[0].mxu0
      %551 = vmatprep.mubr.f32.mxu0 0.0
      %552 = vmatmul.mubr.f32.gmra.mrb[0].mxu0 %v426
      %v553 = vpop.f32.mrb[0].mxu0
      %v554 = vadd.f32 0.0, %v553
      %v555 = vpop.f32.mrb[0].mxu0
      %556 = vdwg.mxu0
      %v557 = vld [vmem:[%s328] sm:$0x1]
      %v559 = vlaneseq
      %v560 = vshrl.u32 %v559, 7
      %v561 = vsub.s32 0, %v560
      %v562 = vrot.slane %v557, %v561
      %v564 = vadd.f32 %v382, %v562
      %v565 = vadd.f32 %v385, %v562
      %v566 = vadd.f32 %v388, %v562
      %v567 = vadd.f32 %v391, %v562
      %v568 = vadd.f32 %v394, %v562
      %v569 = vadd.f32 %v397, %v562
      %v570 = vadd.f32 %v400, %v562
      %v571 = vadd.f32 %v403, %v562
      %v572 = vmul.f32 %v519, 2.0
      %v573 = vmul.f32 %v524, 2.0
      %v574 = vmul.f32 %v529, 2.0
      %v575 = vmul.f32 %v534, 2.0
      %v576 = vmul.f32 %v539, 2.0
      %v577 = vmul.f32 %v544, 2.0
      %v578 = vmul.f32 %v549, 2.0
      %v579 = vmul.f32 %v554, 2.0
      %v580 = vsub.f32 %v564, %v572
      %v581 = vsub.f32 %v565, %v573
      %v582 = vsub.f32 %v566, %v574
      %v583 = vsub.f32 %v567, %v575
      %v584 = vsub.f32 %v568, %v576
      %v585 = vsub.f32 %v569, %v577
      %v586 = vsub.f32 %v570, %v578
      %v587 = vsub.f32 %v571, %v579
      %v588 = vlaneseq
      %v589 = vshrl.u32 %v588, 7
      %v590 = vadd.s32 %v589, 8
      %v591 = vadd.s32 %v589, 16
      %v592 = vadd.s32 %v589, 24
      %v593 = vadd.s32 %v589, 32
      %v594 = vadd.s32 %v589, 40
      %v595 = vadd.s32 %v589, 48
      %v596 = vadd.s32 %v589, 56
      %s597 = smul.u32 %s21, 64
      %v598 = vstv %s597
      %v599 = vadd.s32 %v589, %v598
      %v600 = vadd.s32 %v590, %v598
      %v601 = vadd.s32 %v591, %v598
      %v602 = vadd.s32 %v592, %v598
      %v603 = vadd.s32 %v593, %v598
      %v604 = vadd.s32 %v594, %v598
      %v605 = vadd.s32 %v595, %v598
      %v606 = vadd.s32 %v596, %v598
      %v607 = vlaneseq
      %v608 = vand.u32 %v607, 127
      %vm609 = vcmp.eq.s32.totalorder %v599, %v608
      %vm610 = vcmp.eq.s32.totalorder %v600, %v608
      %vm611 = vcmp.eq.s32.totalorder %v601, %v608
      %vm612 = vcmp.eq.s32.totalorder %v602, %v608
      %vm613 = vcmp.eq.s32.totalorder %v603, %v608
      %vm614 = vcmp.eq.s32.totalorder %v604, %v608
      %vm615 = vcmp.eq.s32.totalorder %v605, %v608
      %vm616 = vcmp.eq.s32.totalorder %v606, %v608
      %v617 = vsel %vm609, inf, %v580
      %v618 = vsel %vm610, inf, %v581
      %v619 = vsel %vm611, inf, %v582
      %v620 = vsel %vm612, inf, %v583
      %v621 = vsel %vm613, inf, %v584
      %v622 = vsel %vm614, inf, %v585
      %v623 = vsel %vm615, inf, %v586
      %v624 = vsel %vm616, inf, %v587
      %v625 = vcvt.s32.f32 %v608
      %v626 = vld [vmem:[%s343] sm:$0xf]
      %v627 = vld [vmem:[%s343 + $0x4] sm:$0xf]
      %v628 = vld [vmem:[%s343 + $0x8] sm:$0xf]
      %v629 = vld [vmem:[%s343 + $0xc] sm:$0xf]
      %v630 = vld [vmem:[%s343 + $0x10] sm:$0xf]
      %v631 = vld [vmem:[%s343 + $0x14] sm:$0xf]
      %v632 = vld [vmem:[%s343 + $0x18] sm:$0xf]
      %v633 = vld [vmem:[%s343 + $0x1c] sm:$0xf]
      %vm634 = vcmask 523264
      %v635 = vsel %vm634, %v617, inf
      %636 = vmin.xlane.f32.xlu0 %v635
      %v637 = vpop.xlane.xlu0 %636
      %v638 = vsel %vm634, %v618, inf
      %639 = vmin.xlane.f32.xlu0 %v638
      %v640 = vpop.xlane.xlu0 %639
      %v641 = vsel %vm634, %v619, inf
      %642 = vmin.xlane.f32.xlu0 %v641
      %v643 = vpop.xlane.xlu0 %642
      %v644 = vsel %vm634, %v620, inf
      %645 = vmin.xlane.f32.xlu0 %v644
      %v646 = vpop.xlane.xlu0 %645
      %v647 = vsel %vm634, %v621, inf
      %648 = vmin.xlane.f32.xlu0 %v647
      %v649 = vpop.xlane.xlu0 %648
      %v650 = vsel %vm634, %v622, inf
      %651 = vmin.xlane.f32.xlu0 %v650
      %v652 = vpop.xlane.xlu0 %651
      %v653 = vsel %vm634, %v623, inf
      %654 = vmin.xlane.f32.xlu0 %v653
      %v655 = vpop.xlane.xlu0 %654
      %v656 = vsel %vm634, %v624, inf
      %657 = vmin.xlane.f32.xlu0 %v656
      %v658 = vpop.xlane.xlu0 %657
      %vm659 = vcmp.eq.f32.partialorder %v617, %v637
      %vm660 = vcmp.eq.f32.partialorder %v618, %v640
      %vm661 = vcmp.eq.f32.partialorder %v619, %v643
      %vm662 = vcmp.eq.f32.partialorder %v620, %v646
      %vm663 = vcmp.eq.f32.partialorder %v621, %v649
      %vm664 = vcmp.eq.f32.partialorder %v622, %v652
      %vm665 = vcmp.eq.f32.partialorder %v623, %v655
      %vm666 = vcmp.eq.f32.partialorder %v624, %v658
      %v667 = vsel %vm659, %v625, 64.0
      %v668 = vsel %vm660, %v625, 64.0
      %v669 = vsel %vm661, %v625, 64.0
      %v670 = vsel %vm662, %v625, 64.0
      %v671 = vsel %vm663, %v625, 64.0
      %v672 = vsel %vm664, %v625, 64.0
      %v673 = vsel %vm665, %v625, 64.0
      %v674 = vsel %vm666, %v625, 64.0
      %v675 = vsel %vm634, %v667, inf
      %676 = vmin.xlane.f32.xlu0 %v675
      %v677 = vpop.xlane.xlu0 %676
      %v678 = vsel %vm634, %v668, inf
      %679 = vmin.xlane.f32.xlu0 %v678
      %v680 = vpop.xlane.xlu0 %679
      %v681 = vsel %vm634, %v669, inf
      %682 = vmin.xlane.f32.xlu0 %v681
      %v683 = vpop.xlane.xlu0 %682
      %v684 = vsel %vm634, %v670, inf
      %685 = vmin.xlane.f32.xlu0 %v684
      %v686 = vpop.xlane.xlu0 %685
      %v687 = vsel %vm634, %v671, inf
      %688 = vmin.xlane.f32.xlu0 %v687
      %v689 = vpop.xlane.xlu0 %688
      %v690 = vsel %vm634, %v672, inf
      %691 = vmin.xlane.f32.xlu0 %v690
      %v692 = vpop.xlane.xlu0 %691
      %v693 = vsel %vm634, %v673, inf
      %694 = vmin.xlane.f32.xlu0 %v693
      %v695 = vpop.xlane.xlu0 %694
      %v696 = vsel %vm634, %v674, inf
      %697 = vmin.xlane.f32.xlu0 %v696
      %v698 = vpop.xlane.xlu0 %697
      %vm699 = vcmp.eq.f32.partialorder %v625, %v677
      %vm700 = vcmp.eq.f32.partialorder %v625, %v680
      %vm701 = vcmp.eq.f32.partialorder %v625, %v683
      %vm702 = vcmp.eq.f32.partialorder %v625, %v686
      %vm703 = vcmp.eq.f32.partialorder %v625, %v689
      %vm704 = vcmp.eq.f32.partialorder %v625, %v692
      %vm705 = vcmp.eq.f32.partialorder %v625, %v695
      %vm706 = vcmp.eq.f32.partialorder %v625, %v698
      %v707 = vsel %vm699, 1, 0
      %v708 = vsel %vm700, 1, 0
      %v709 = vsel %vm701, 1, 0
      %v710 = vsel %vm702, 1, 0
      %v711 = vsel %vm703, 1, 0
      %v712 = vsel %vm704, 1, 0
      %v713 = vsel %vm705, 1, 0
      %v714 = vsel %vm706, 1, 0
      %v715 = vcvt.s32.f32 %v707
      %v716 = vcvt.s32.f32 %v708
      %v717 = vcvt.s32.f32 %v709
      %v718 = vcvt.s32.f32 %v710
      %v719 = vcvt.s32.f32 %v711
      %v720 = vcvt.s32.f32 %v712
      %v721 = vcvt.s32.f32 %v713
      %v722 = vcvt.s32.f32 %v714
      %v723 = vpack.c.bf16 %v716, %v715
      %v724 = vpack.c.bf16 %v718, %v717
      %v725 = vpack.c.bf16 %v720, %v719
      %v726 = vpack.c.bf16 %v722, %v721
      %v735 = vunpack.c.l.b16 %v626
      %v736 = vunpack.c.l.b16 %v627
      %v737 = vunpack.c.l.b16 %v628
      %v738 = vunpack.c.l.b16 %v629
      %v739 = vunpack.c.l.b16 %v630
      %v740 = vunpack.c.l.b16 %v631
      %v741 = vunpack.c.l.b16 %v632
      %v742 = vunpack.c.l.b16 %v633
      %v743 = vpack.c.b16 %v736, %v735
      %v744 = vpack.c.b16 %v738, %v737
      %v745 = vpack.c.b16 %v740, %v739
      %v746 = vpack.c.b16 %v742, %v741
      %v752 = vsel %vm634, %v723, 0
      %v755 = vsel %vm634, %v724, 0
      %v758 = vsel %vm634, %v725, 0
      %v761 = vsel %vm634, %v726, 0
      %763 = vmatprep.subr.bf16.mxu0 0
      %764 = vmatpush1.bf16.msra.mxu0 %v743
      %765 = vmatprep.subr.bf16.mxu0 0
      %766 = vmatpush1.bf16.msra.mxu0 %v744
      %767 = vmatprep.subr.bf16.mxu0 0
      %768 = vmatpush1.bf16.msra.mxu0 %v745
      %769 = vmatprep.subr.bf16.mxu0 0
      %770 = vmatpush1.bf16.msra.mxu0 %v746
      %771 = vmatprep.subr.bf16.mxu0 0
      %772 = vmatpush1.bf16.msra.mxu0 0
      %773 = vmatprep.subr.bf16.mxu0 0
      %774 = vmatpush1.bf16.msra.mxu0 0
      %775 = vmatprep.subr.bf16.mxu0 0
      %776 = vmatpush1.bf16.msra.mxu0 0
      %777 = vmatprep.subr.bf16.mxu0 0
      %778 = vmatpush1.bf16.msra.mxu0 0
      %779 = vmatprep.subr.bf16.mxu0 0
      %780 = vmatpush1.bf16.msra.mxu0 0
      %781 = vmatprep.subr.bf16.mxu0 0
      %782 = vmatpush1.bf16.msra.mxu0 0
      %783 = vmatprep.subr.bf16.mxu0 0
      %784 = vmatpush1.bf16.msra.mxu0 0
      %785 = vmatprep.subr.bf16.mxu0 0
      %786 = vmatpush1.bf16.msra.mxu0 0
      %787 = vmatprep.subr.bf16.mxu0 0
      %788 = vmatpush1.bf16.msra.mxu0 0
      %789 = vmatprep.subr.bf16.mxu0 0
      %790 = vmatpush1.bf16.msra.mxu0 0
      %791 = vmatprep.subr.bf16.mxu0 0
      %792 = vmatpush1.bf16.msra.mxu0 0
      %793 = vmatprep.subr.bf16.mxu0 0
      %794 = vmatpush1.bf16.msra.mxu0 0
      %795 = vmatprep.mubr.bf16.mxu0 0
      %796 = vmatmul.mubr.bf16.gmra.mrb[0].mxu0 %v752
      %v797 = vpop.f32.mrb[0].mxu0
      %v798 = vadd.f32 0.0, %v797
      %v799 = vpop.f32.mrb[0].mxu0
      %v800 = vpop.f32.mrb[0].mxu0
      %v801 = vadd.f32 0.0, %v800
      %v802 = vpop.f32.mrb[0].mxu0
      %803 = vmatprep.mubr.bf16.mxu0 0
      %804 = vmatmul.mubr.bf16.gmra.mrb[0].mxu0 %v755
      %v805 = vpop.f32.mrb[0].mxu0
      %v806 = vadd.f32 0.0, %v805
      %v807 = vpop.f32.mrb[0].mxu0
      %v808 = vpop.f32.mrb[0].mxu0
      %v809 = vadd.f32 0.0, %v808
      %v810 = vpop.f32.mrb[0].mxu0
      %811 = vmatprep.mubr.bf16.mxu0 0
      %812 = vmatmul.mubr.bf16.gmra.mrb[0].mxu0 %v758
      %v813 = vpop.f32.mrb[0].mxu0
      %v814 = vadd.f32 0.0, %v813
      %v815 = vpop.f32.mrb[0].mxu0
      %v816 = vpop.f32.mrb[0].mxu0
      %v817 = vadd.f32 0.0, %v816
      %v818 = vpop.f32.mrb[0].mxu0
      %819 = vmatprep.mubr.bf16.mxu0 0
      %820 = vmatmul.mubr.bf16.gmra.mrb[0].mxu0 %v761
      %v821 = vpop.f32.mrb[0].mxu0
      %v822 = vadd.f32 0.0, %v821
      %v823 = vpop.f32.mrb[0].mxu0
      %v824 = vpop.f32.mrb[0].mxu0
      %v825 = vadd.f32 0.0, %v824
      %v826 = vpop.f32.mrb[0].mxu0
      %827 = vdwg.mxu0
      %v828 = vsel %vm699, inf, %v617
      %v829 = vsel %vm700, inf, %v618
      %v830 = vsel %vm701, inf, %v619
      %v831 = vsel %vm702, inf, %v620
      %v832 = vsel %vm703, inf, %v621
      %v833 = vsel %vm704, inf, %v622
      %v834 = vsel %vm705, inf, %v623
      %v835 = vsel %vm706, inf, %v624
      %v836 = vsel %vm634, %v828, inf
      %837 = vmin.xlane.f32.xlu0 %v836
      %v838 = vpop.xlane.xlu0 %837
      %v839 = vsel %vm634, %v829, inf
      %840 = vmin.xlane.f32.xlu0 %v839
      %v841 = vpop.xlane.xlu0 %840
      %v842 = vsel %vm634, %v830, inf
      %843 = vmin.xlane.f32.xlu0 %v842
      %v844 = vpop.xlane.xlu0 %843
      %v845 = vsel %vm634, %v831, inf
      %846 = vmin.xlane.f32.xlu0 %v845
      %v847 = vpop.xlane.xlu0 %846
      %v848 = vsel %vm634, %v832, inf
      %849 = vmin.xlane.f32.xlu0 %v848
      %v850 = vpop.xlane.xlu0 %849
      %v851 = vsel %vm634, %v833, inf
      %852 = vmin.xlane.f32.xlu0 %v851
      %v853 = vpop.xlane.xlu0 %852
      %v854 = vsel %vm634, %v834, inf
      %855 = vmin.xlane.f32.xlu0 %v854
      %v856 = vpop.xlane.xlu0 %855
      %v857 = vsel %vm634, %v835, inf
      %858 = vmin.xlane.f32.xlu0 %v857
      %v859 = vpop.xlane.xlu0 %858
      %vm860 = vcmp.eq.f32.partialorder %v828, %v838
      %vm861 = vcmp.eq.f32.partialorder %v829, %v841
      %vm862 = vcmp.eq.f32.partialorder %v830, %v844
      %vm863 = vcmp.eq.f32.partialorder %v831, %v847
      %vm864 = vcmp.eq.f32.partialorder %v832, %v850
      %vm865 = vcmp.eq.f32.partialorder %v833, %v853
      %vm866 = vcmp.eq.f32.partialorder %v834, %v856
      %vm867 = vcmp.eq.f32.partialorder %v835, %v859
      %v868 = vsel %vm860, %v625, 64.0
      %v869 = vsel %vm861, %v625, 64.0
      %v870 = vsel %vm862, %v625, 64.0
      %v871 = vsel %vm863, %v625, 64.0
      %v872 = vsel %vm864, %v625, 64.0
      %v873 = vsel %vm865, %v625, 64.0
      %v874 = vsel %vm866, %v625, 64.0
      %v875 = vsel %vm867, %v625, 64.0
      %v876 = vsel %vm634, %v868, inf
      %877 = vmin.xlane.f32.xlu0 %v876
      %v878 = vpop.xlane.xlu0 %877
      %v879 = vsel %vm634, %v869, inf
      %880 = vmin.xlane.f32.xlu0 %v879
      %v881 = vpop.xlane.xlu0 %880
      %v882 = vsel %vm634, %v870, inf
      %883 = vmin.xlane.f32.xlu0 %v882
      %v884 = vpop.xlane.xlu0 %883
      %v885 = vsel %vm634, %v871, inf
      %886 = vmin.xlane.f32.xlu0 %v885
      %v887 = vpop.xlane.xlu0 %886
      %v888 = vsel %vm634, %v872, inf
      %889 = vmin.xlane.f32.xlu0 %v888
      %v890 = vpop.xlane.xlu0 %889
      %v891 = vsel %vm634, %v873, inf
      %892 = vmin.xlane.f32.xlu0 %v891
      %v893 = vpop.xlane.xlu0 %892
      %v894 = vsel %vm634, %v874, inf
      %895 = vmin.xlane.f32.xlu0 %v894
      %v896 = vpop.xlane.xlu0 %895
      %v897 = vsel %vm634, %v875, inf
      %898 = vmin.xlane.f32.xlu0 %v897
      %v899 = vpop.xlane.xlu0 %898
      %vm900 = vcmp.eq.f32.partialorder %v625, %v878
      %vm901 = vcmp.eq.f32.partialorder %v625, %v881
      %vm902 = vcmp.eq.f32.partialorder %v625, %v884
      %vm903 = vcmp.eq.f32.partialorder %v625, %v887
      %vm904 = vcmp.eq.f32.partialorder %v625, %v890
      %vm905 = vcmp.eq.f32.partialorder %v625, %v893
      %vm906 = vcmp.eq.f32.partialorder %v625, %v896
      %vm907 = vcmp.eq.f32.partialorder %v625, %v899
      %v908 = vsel %vm900, 1, 0
      %v909 = vsel %vm901, 1, 0
      %v910 = vsel %vm902, 1, 0
      %v911 = vsel %vm903, 1, 0
      %v912 = vsel %vm904, 1, 0
      %v913 = vsel %vm905, 1, 0
      %v914 = vsel %vm906, 1, 0
      %v915 = vsel %vm907, 1, 0
      %v916 = vcvt.s32.f32 %v908
      %v917 = vcvt.s32.f32 %v909
      %v918 = vcvt.s32.f32 %v910
      %v919 = vcvt.s32.f32 %v911
      %v920 = vcvt.s32.f32 %v912
      %v921 = vcvt.s32.f32 %v913
      %v922 = vcvt.s32.f32 %v914
      %v923 = vcvt.s32.f32 %v915
      %v924 = vpack.c.bf16 %v917, %v916
      %v925 = vpack.c.bf16 %v919, %v918
      %v926 = vpack.c.bf16 %v921, %v920
      %v927 = vpack.c.bf16 %v923, %v922
      %v929 = vsel %vm634, %v924, 0
      %v932 = vsel %vm634, %v925, 0
      %v935 = vsel %vm634, %v926, 0
      %v938 = vsel %vm634, %v927, 0
      %940 = vmatprep.subr.bf16.mxu0 0
      %941 = vmatpush1.bf16.msra.mxu0 %v743
      %942 = vmatprep.subr.bf16.mxu0 0
      %943 = vmatpush1.bf16.msra.mxu0 %v744
      %944 = vmatprep.subr.bf16.mxu0 0
      %945 = vmatpush1.bf16.msra.mxu0 %v745
      %946 = vmatprep.subr.bf16.mxu0 0
      %947 = vmatpush1.bf16.msra.mxu0 %v746
      %948 = vmatprep.subr.bf16.mxu0 0
      %949 = vmatpush1.bf16.msra.mxu0 0
      %950 = vmatprep.subr.bf16.mxu0 0
      %951 = vmatpush1.bf16.msra.mxu0 0
      %952 = vmatprep.subr.bf16.mxu0 0
      %953 = vmatpush1.bf16.msra.mxu0 0
      %954 = vmatprep.subr.bf16.mxu0 0
      %955 = vmatpush1.bf16.msra.mxu0 0
      %956 = vmatprep.subr.bf16.mxu0 0
      %957 = vmatpush1.bf16.msra.mxu0 0
      %958 = vmatprep.subr.bf16.mxu0 0
      %959 = vmatpush1.bf16.msra.mxu0 0
      %960 = vmatprep.subr.bf16.mxu0 0
      %961 = vmatpush1.bf16.msra.mxu0 0
      %962 = vmatprep.subr.bf16.mxu0 0
      %963 = vmatpush1.bf16.msra.mxu0 0
      %964 = vmatprep.subr.bf16.mxu0 0
      %965 = vmatpush1.bf16.msra.mxu0 0
      %966 = vmatprep.subr.bf16.mxu0 0
      %967 = vmatpush1.bf16.msra.mxu0 0
      %968 = vmatprep.subr.bf16.mxu0 0
      %969 = vmatpush1.bf16.msra.mxu0 0
      %970 = vmatprep.subr.bf16.mxu0 0
      %971 = vmatpush1.bf16.msra.mxu0 0
      %972 = vmatprep.mubr.bf16.mxu0 0
      %973 = vmatmul.mubr.bf16.gmra.mrb[0].mxu0 %v929
      %v974 = vpop.f32.mrb[0].mxu0
      %v975 = vadd.f32 0.0, %v974
      %v976 = vpop.f32.mrb[0].mxu0
      %v977 = vpop.f32.mrb[0].mxu0
      %v978 = vadd.f32 0.0, %v977
      %v979 = vpop.f32.mrb[0].mxu0
      %980 = vmatprep.mubr.bf16.mxu0 0
      %981 = vmatmul.mubr.bf16.gmra.mrb[0].mxu0 %v932
      %v982 = vpop.f32.mrb[0].mxu0
      %v983 = vadd.f32 0.0, %v982
      %v984 = vpop.f32.mrb[0].mxu0
      %v985 = vpop.f32.mrb[0].mxu0
      %v986 = vadd.f32 0.0, %v985
      %v987 = vpop.f32.mrb[0].mxu0
      %988 = vmatprep.mubr.bf16.mxu0 0
      %989 = vmatmul.mubr.bf16.gmra.mrb[0].mxu0 %v935
      %v990 = vpop.f32.mrb[0].mxu0
      %v991 = vadd.f32 0.0, %v990
      %v992 = vpop.f32.mrb[0].mxu0
      %v993 = vpop.f32.mrb[0].mxu0
      %v994 = vadd.f32 0.0, %v993
      %v995 = vpop.f32.mrb[0].mxu0
      %996 = vmatprep.mubr.bf16.mxu0 0
      %997 = vmatmul.mubr.bf16.gmra.mrb[0].mxu0 %v938
      %v998 = vpop.f32.mrb[0].mxu0
      %v999 = vadd.f32 0.0, %v998
      %v1000 = vpop.f32.mrb[0].mxu0
      %v1001 = vpop.f32.mrb[0].mxu0
      %v1002 = vadd.f32 0.0, %v1001
      %v1003 = vpop.f32.mrb[0].mxu0
      %1004 = vdwg.mxu0
      %v1005 = vmax.f32 %v798, %v975
      %v1006 = vmax.f32 %v801, %v978
      %v1007 = vmax.f32 %v806, %v983
      %v1008 = vmax.f32 %v809, %v986
      %v1009 = vmax.f32 %v814, %v991
      %v1010 = vmax.f32 %v817, %v994
      %v1011 = vmax.f32 %v822, %v999
      %v1012 = vmax.f32 %v825, %v1002
      %v1013 = vsel %vm900, inf, %v828
      %v1014 = vsel %vm901, inf, %v829
      %v1015 = vsel %vm902, inf, %v830
      %v1016 = vsel %vm903, inf, %v831
      %v1017 = vsel %vm904, inf, %v832
      %v1018 = vsel %vm905, inf, %v833
      %v1019 = vsel %vm906, inf, %v834
      %v1020 = vsel %vm907, inf, %v835
      %v1021 = vsel %vm634, %v1013, inf
      %1022 = vmin.xlane.f32.xlu0 %v1021
      %v1023 = vpop.xlane.xlu0 %1022
      %v1024 = vsel %vm634, %v1014, inf
      %1025 = vmin.xlane.f32.xlu0 %v1024
      %v1026 = vpop.xlane.xlu0 %1025
      %v1027 = vsel %vm634, %v1015, inf
      %1028 = vmin.xlane.f32.xlu0 %v1027
      %v1029 = vpop.xlane.xlu0 %1028
      %v1030 = vsel %vm634, %v1016, inf
      %1031 = vmin.xlane.f32.xlu0 %v1030
      %v1032 = vpop.xlane.xlu0 %1031
      %v1033 = vsel %vm634, %v1017, inf
      %1034 = vmin.xlane.f32.xlu0 %v1033
      %v1035 = vpop.xlane.xlu0 %1034
      %v1036 = vsel %vm634, %v1018, inf
      %1037 = vmin.xlane.f32.xlu0 %v1036
      %v1038 = vpop.xlane.xlu0 %1037
      %v1039 = vsel %vm634, %v1019, inf
      %1040 = vmin.xlane.f32.xlu0 %v1039
      %v1041 = vpop.xlane.xlu0 %1040
      %v1042 = vsel %vm634, %v1020, inf
      %1043 = vmin.xlane.f32.xlu0 %v1042
      %v1044 = vpop.xlane.xlu0 %1043
      %vm1045 = vcmp.eq.f32.partialorder %v1013, %v1023
      %vm1046 = vcmp.eq.f32.partialorder %v1014, %v1026
      %vm1047 = vcmp.eq.f32.partialorder %v1015, %v1029
      %vm1048 = vcmp.eq.f32.partialorder %v1016, %v1032
      %vm1049 = vcmp.eq.f32.partialorder %v1017, %v1035
      %vm1050 = vcmp.eq.f32.partialorder %v1018, %v1038
      %vm1051 = vcmp.eq.f32.partialorder %v1019, %v1041
      %vm1052 = vcmp.eq.f32.partialorder %v1020, %v1044
      %v1053 = vsel %vm1045, %v625, 64.0
      %v1054 = vsel %vm1046, %v625, 64.0
      %v1055 = vsel %vm1047, %v625, 64.0
      %v1056 = vsel %vm1048, %v625, 64.0
      %v1057 = vsel %vm1049, %v625, 64.0
      %v1058 = vsel %vm1050, %v625, 64.0
      %v1059 = vsel %vm1051, %v625, 64.0
      %v1060 = vsel %vm1052, %v625, 64.0
      %v1061 = vsel %vm634, %v1053, inf
      %1062 = vmin.xlane.f32.xlu0 %v1061
      %v1063 = vpop.xlane.xlu0 %1062
      %v1064 = vsel %vm634, %v1054, inf
      %1065 = vmin.xlane.f32.xlu0 %v1064
      %v1066 = vpop.xlane.xlu0 %1065
      %v1067 = vsel %vm634, %v1055, inf
      %1068 = vmin.xlane.f32.xlu0 %v1067
      %v1069 = vpop.xlane.xlu0 %1068
      %v1070 = vsel %vm634, %v1056, inf
      %1071 = vmin.xlane.f32.xlu0 %v1070
      %v1072 = vpop.xlane.xlu0 %1071
      %v1073 = vsel %vm634, %v1057, inf
      %1074 = vmin.xlane.f32.xlu0 %v1073
      %v1075 = vpop.xlane.xlu0 %1074
      %v1076 = vsel %vm634, %v1058, inf
      %1077 = vmin.xlane.f32.xlu0 %v1076
      %v1078 = vpop.xlane.xlu0 %1077
      %v1079 = vsel %vm634, %v1059, inf
      %1080 = vmin.xlane.f32.xlu0 %v1079
      %v1081 = vpop.xlane.xlu0 %1080
      %v1082 = vsel %vm634, %v1060, inf
      %1083 = vmin.xlane.f32.xlu0 %v1082
      %v1084 = vpop.xlane.xlu0 %1083
      %vm1085 = vcmp.eq.f32.partialorder %v625, %v1063
      %vm1086 = vcmp.eq.f32.partialorder %v625, %v1066
      %vm1087 = vcmp.eq.f32.partialorder %v625, %v1069
      %vm1088 = vcmp.eq.f32.partialorder %v625, %v1072
      %vm1089 = vcmp.eq.f32.partialorder %v625, %v1075
      %vm1090 = vcmp.eq.f32.partialorder %v625, %v1078
      %vm1091 = vcmp.eq.f32.partialorder %v625, %v1081
      %vm1092 = vcmp.eq.f32.partialorder %v625, %v1084
      %v1093 = vsel %vm1085, 1, 0
      %v1094 = vsel %vm1086, 1, 0
      %v1095 = vsel %vm1087, 1, 0
      %v1096 = vsel %vm1088, 1, 0
      %v1097 = vsel %vm1089, 1, 0
      %v1098 = vsel %vm1090, 1, 0
      %v1099 = vsel %vm1091, 1, 0
      %v1100 = vsel %vm1092, 1, 0
      %v1101 = vcvt.s32.f32 %v1093
      %v1102 = vcvt.s32.f32 %v1094
      %v1103 = vcvt.s32.f32 %v1095
      %v1104 = vcvt.s32.f32 %v1096
      %v1105 = vcvt.s32.f32 %v1097
      %v1106 = vcvt.s32.f32 %v1098
      %v1107 = vcvt.s32.f32 %v1099
      %v1108 = vcvt.s32.f32 %v1100
      %v1109 = vpack.c.bf16 %v1102, %v1101
      %v1110 = vpack.c.bf16 %v1104, %v1103
      %v1111 = vpack.c.bf16 %v1106, %v1105
      %v1112 = vpack.c.bf16 %v1108, %v1107
      %v1114 = vsel %vm634, %v1109, 0
      %v1117 = vsel %vm634, %v1110, 0
      %v1120 = vsel %vm634, %v1111, 0
      %v1123 = vsel %vm634, %v1112, 0
      %1125 = vmatprep.subr.bf16.mxu0 0
      %1126 = vmatpush1.bf16.msra.mxu0 %v743
      %1127 = vmatprep.subr.bf16.mxu0 0
      %1128 = vmatpush1.bf16.msra.mxu0 %v744
      %1129 = vmatprep.subr.bf16.mxu0 0
      %1130 = vmatpush1.bf16.msra.mxu0 %v745
      %1131 = vmatprep.subr.bf16.mxu0 0
      %1132 = vmatpush1.bf16.msra.mxu0 %v746
      %1133 = vmatprep.subr.bf16.mxu0 0
      %1134 = vmatpush1.bf16.msra.mxu0 0
      %1135 = vmatprep.subr.bf16.mxu0 0
      %1136 = vmatpush1.bf16.msra.mxu0 0
      %1137 = vmatprep.subr.bf16.mxu0 0
      %1138 = vmatpush1.bf16.msra.mxu0 0
      %1139 = vmatprep.subr.bf16.mxu0 0
      %1140 = vmatpush1.bf16.msra.mxu0 0
      %1141 = vmatprep.subr.bf16.mxu0 0
      %1142 = vmatpush1.bf16.msra.mxu0 0
      %1143 = vmatprep.subr.bf16.mxu0 0
      %1144 = vmatpush1.bf16.msra.mxu0 0
      %1145 = vmatprep.subr.bf16.mxu0 0
      %1146 = vmatpush1.bf16.msra.mxu0 0
      %1147 = vmatprep.subr.bf16.mxu0 0
      %1148 = vmatpush1.bf16.msra.mxu0 0
      %1149 = vmatprep.subr.bf16.mxu0 0
      %1150 = vmatpush1.bf16.msra.mxu0 0
      %1151 = vmatprep.subr.bf16.mxu0 0
      %1152 = vmatpush1.bf16.msra.mxu0 0
      %1153 = vmatprep.subr.bf16.mxu0 0
      %1154 = vmatpush1.bf16.msra.mxu0 0
      %1155 = vmatprep.subr.bf16.mxu0 0
      %1156 = vmatpush1.bf16.msra.mxu0 0
      %1157 = vmatprep.mubr.bf16.mxu0 0
      %1158 = vmatmul.mubr.bf16.gmra.mrb[0].mxu0 %v1114
      %v1159 = vpop.f32.mrb[0].mxu0
      %v1160 = vadd.f32 0.0, %v1159
      %v1161 = vpop.f32.mrb[0].mxu0
      %v1162 = vpop.f32.mrb[0].mxu0
      %v1163 = vadd.f32 0.0, %v1162
      %v1164 = vpop.f32.mrb[0].mxu0
      %1165 = vmatprep.mubr.bf16.mxu0 0
      %1166 = vmatmul.mubr.bf16.gmra.mrb[0].mxu0 %v1117
      %v1167 = vpop.f32.mrb[0].mxu0
      %v1168 = vadd.f32 0.0, %v1167
      %v1169 = vpop.f32.mrb[0].mxu0
      %v1170 = vpop.f32.mrb[0].mxu0
      %v1171 = vadd.f32 0.0, %v1170
      %v1172 = vpop.f32.mrb[0].mxu0
      %1173 = vmatprep.mubr.bf16.mxu0 0
      %1174 = vmatmul.mubr.bf16.gmra.mrb[0].mxu0 %v1120
      %v1175 = vpop.f32.mrb[0].mxu0
      %v1176 = vadd.f32 0.0, %v1175
      %v1177 = vpop.f32.mrb[0].mxu0
      %v1178 = vpop.f32.mrb[0].mxu0
      %v1179 = vadd.f32 0.0, %v1178
      %v1180 = vpop.f32.mrb[0].mxu0
      %1181 = vmatprep.mubr.bf16.mxu0 0
      %1182 = vmatmul.mubr.bf16.gmra.mrb[0].mxu0 %v1123
      %v1183 = vpop.f32.mrb[0].mxu0
      %v1184 = vadd.f32 0.0, %v1183
      %v1185 = vpop.f32.mrb[0].mxu0
      %v1186 = vpop.f32.mrb[0].mxu0
      %v1187 = vadd.f32 0.0, %v1186
      %v1188 = vpop.f32.mrb[0].mxu0
      %1189 = vdwg.mxu0
      %v1190 = vmax.f32 %v1005, %v1160
      %v1191 = vmax.f32 %v1006, %v1163
      %v1192 = vmax.f32 %v1007, %v1168
      %v1193 = vmax.f32 %v1008, %v1171
      %v1194 = vmax.f32 %v1009, %v1176
      %v1195 = vmax.f32 %v1010, %v1179
      %v1196 = vmax.f32 %v1011, %v1184
      %v1197 = vmax.f32 %v1012, %v1187
      %v1198 = vsel %vm1085, inf, %v1013
      %v1199 = vsel %vm1086, inf, %v1014
      %v1200 = vsel %vm1087, inf, %v1015
      %v1201 = vsel %vm1088, inf, %v1016
      %v1202 = vsel %vm1089, inf, %v1017
      %v1203 = vsel %vm1090, inf, %v1018
      %v1204 = vsel %vm1091, inf, %v1019
      %v1205 = vsel %vm1092, inf, %v1020
      %v1206 = vsel %vm634, %v1198, inf
      %1207 = vmin.xlane.f32.xlu0 %v1206
      %v1208 = vpop.xlane.xlu0 %1207
      %v1209 = vsel %vm634, %v1199, inf
      %1210 = vmin.xlane.f32.xlu0 %v1209
      %v1211 = vpop.xlane.xlu0 %1210
      %v1212 = vsel %vm634, %v1200, inf
      %1213 = vmin.xlane.f32.xlu0 %v1212
      %v1214 = vpop.xlane.xlu0 %1213
      %v1215 = vsel %vm634, %v1201, inf
      %1216 = vmin.xlane.f32.xlu0 %v1215
      %v1217 = vpop.xlane.xlu0 %1216
      %v1218 = vsel %vm634, %v1202, inf
      %1219 = vmin.xlane.f32.xlu0 %v1218
      %v1220 = vpop.xlane.xlu0 %1219
      %v1221 = vsel %vm634, %v1203, inf
      %1222 = vmin.xlane.f32.xlu0 %v1221
      %v1223 = vpop.xlane.xlu0 %1222
      %v1224 = vsel %vm634, %v1204, inf
      %1225 = vmin.xlane.f32.xlu0 %v1224
      %v1226 = vpop.xlane.xlu0 %1225
      %v1227 = vsel %vm634, %v1205, inf
      %1228 = vmin.xlane.f32.xlu0 %v1227
      %v1229 = vpop.xlane.xlu0 %1228
      %vm1230 = vcmp.eq.f32.partialorder %v1198, %v1208
      %vm1231 = vcmp.eq.f32.partialorder %v1199, %v1211
      %vm1232 = vcmp.eq.f32.partialorder %v1200, %v1214
      %vm1233 = vcmp.eq.f32.partialorder %v1201, %v1217
      %vm1234 = vcmp.eq.f32.partialorder %v1202, %v1220
      %vm1235 = vcmp.eq.f32.partialorder %v1203, %v1223
      %vm1236 = vcmp.eq.f32.partialorder %v1204, %v1226
      %vm1237 = vcmp.eq.f32.partialorder %v1205, %v1229
      %v1238 = vsel %vm1230, %v625, 64.0
      %v1239 = vsel %vm1231, %v625, 64.0
      %v1240 = vsel %vm1232, %v625, 64.0
      %v1241 = vsel %vm1233, %v625, 64.0
      %v1242 = vsel %vm1234, %v625, 64.0
      %v1243 = vsel %vm1235, %v625, 64.0
      %v1244 = vsel %vm1236, %v625, 64.0
      %v1245 = vsel %vm1237, %v625, 64.0
      %v1246 = vsel %vm634, %v1238, inf
      %1247 = vmin.xlane.f32.xlu0 %v1246
      %v1248 = vpop.xlane.xlu0 %1247
      %v1249 = vsel %vm634, %v1239, inf
      %1250 = vmin.xlane.f32.xlu0 %v1249
      %v1251 = vpop.xlane.xlu0 %1250
      %v1252 = vsel %vm634, %v1240, inf
      %1253 = vmin.xlane.f32.xlu0 %v1252
      %v1254 = vpop.xlane.xlu0 %1253
      %v1255 = vsel %vm634, %v1241, inf
      %1256 = vmin.xlane.f32.xlu0 %v1255
      %v1257 = vpop.xlane.xlu0 %1256
      %v1258 = vsel %vm634, %v1242, inf
      %1259 = vmin.xlane.f32.xlu0 %v1258
      %v1260 = vpop.xlane.xlu0 %1259
      %v1261 = vsel %vm634, %v1243, inf
      %1262 = vmin.xlane.f32.xlu0 %v1261
      %v1263 = vpop.xlane.xlu0 %1262
      %v1264 = vsel %vm634, %v1244, inf
      %1265 = vmin.xlane.f32.xlu0 %v1264
      %v1266 = vpop.xlane.xlu0 %1265
      %v1267 = vsel %vm634, %v1245, inf
      %1268 = vmin.xlane.f32.xlu0 %v1267
      %v1269 = vpop.xlane.xlu0 %1268
      %vm1270 = vcmp.eq.f32.partialorder %v625, %v1248
      %vm1271 = vcmp.eq.f32.partialorder %v625, %v1251
      %vm1272 = vcmp.eq.f32.partialorder %v625, %v1254
      %vm1273 = vcmp.eq.f32.partialorder %v625, %v1257
      %vm1274 = vcmp.eq.f32.partialorder %v625, %v1260
      %vm1275 = vcmp.eq.f32.partialorder %v625, %v1263
      %vm1276 = vcmp.eq.f32.partialorder %v625, %v1266
      %vm1277 = vcmp.eq.f32.partialorder %v625, %v1269
      %v1278 = vsel %vm1270, 1, 0
      %v1279 = vsel %vm1271, 1, 0
      %v1280 = vsel %vm1272, 1, 0
      %v1281 = vsel %vm1273, 1, 0
      %v1282 = vsel %vm1274, 1, 0
      %v1283 = vsel %vm1275, 1, 0
      %v1284 = vsel %vm1276, 1, 0
      %v1285 = vsel %vm1277, 1, 0
      %v1286 = vcvt.s32.f32 %v1278
      %v1287 = vcvt.s32.f32 %v1279
      %v1288 = vcvt.s32.f32 %v1280
      %v1289 = vcvt.s32.f32 %v1281
      %v1290 = vcvt.s32.f32 %v1282
      %v1291 = vcvt.s32.f32 %v1283
      %v1292 = vcvt.s32.f32 %v1284
      %v1293 = vcvt.s32.f32 %v1285
      %v1294 = vpack.c.bf16 %v1287, %v1286
      %v1295 = vpack.c.bf16 %v1289, %v1288
      %v1296 = vpack.c.bf16 %v1291, %v1290
      %v1297 = vpack.c.bf16 %v1293, %v1292
      %v1299 = vsel %vm634, %v1294, 0
      %v1302 = vsel %vm634, %v1295, 0
      %v1305 = vsel %vm634, %v1296, 0
      %v1308 = vsel %vm634, %v1297, 0
      %1310 = vmatprep.subr.bf16.mxu0 0
      %1311 = vmatpush1.bf16.msra.mxu0 %v743
      %1312 = vmatprep.subr.bf16.mxu0 0
      %1313 = vmatpush1.bf16.msra.mxu0 %v744
      %1314 = vmatprep.subr.bf16.mxu0 0
      %1315 = vmatpush1.bf16.msra.mxu0 %v745
      %1316 = vmatprep.subr.bf16.mxu0 0
      %1317 = vmatpush1.bf16.msra.mxu0 %v746
      %1318 = vmatprep.subr.bf16.mxu0 0
      %1319 = vmatpush1.bf16.msra.mxu0 0
      %1320 = vmatprep.subr.bf16.mxu0 0
      %1321 = vmatpush1.bf16.msra.mxu0 0
      %1322 = vmatprep.subr.bf16.mxu0 0
      %1323 = vmatpush1.bf16.msra.mxu0 0
      %1324 = vmatprep.subr.bf16.mxu0 0
      %1325 = vmatpush1.bf16.msra.mxu0 0
      %1326 = vmatprep.subr.bf16.mxu0 0
      %1327 = vmatpush1.bf16.msra.mxu0 0
      %1328 = vmatprep.subr.bf16.mxu0 0
      %1329 = vmatpush1.bf16.msra.mxu0 0
      %1330 = vmatprep.subr.bf16.mxu0 0
      %1331 = vmatpush1.bf16.msra.mxu0 0
      %1332 = vmatprep.subr.bf16.mxu0 0
      %1333 = vmatpush1.bf16.msra.mxu0 0
      %1334 = vmatprep.subr.bf16.mxu0 0
      %1335 = vmatpush1.bf16.msra.mxu0 0
      %1336 = vmatprep.subr.bf16.mxu0 0
      %1337 = vmatpush1.bf16.msra.mxu0 0
      %1338 = vmatprep.subr.bf16.mxu0 0
      %1339 = vmatpush1.bf16.msra.mxu0 0
      %1340 = vmatprep.subr.bf16.mxu0 0
      %1341 = vmatpush1.bf16.msra.mxu0 0
      %1342 = vmatprep.mubr.bf16.mxu0 0
      %1343 = vmatmul.mubr.bf16.gmra.mrb[0].mxu0 %v1299
      %v1344 = vpop.f32.mrb[0].mxu0
      %v1345 = vadd.f32 0.0, %v1344
      %v1346 = vpop.f32.mrb[0].mxu0
      %v1347 = vpop.f32.mrb[0].mxu0
      %v1348 = vadd.f32 0.0, %v1347
      %v1349 = vpop.f32.mrb[0].mxu0
      %1350 = vmatprep.mubr.bf16.mxu0 0
      %1351 = vmatmul.mubr.bf16.gmra.mrb[0].mxu0 %v1302
      %v1352 = vpop.f32.mrb[0].mxu0
      %v1353 = vadd.f32 0.0, %v1352
      %v1354 = vpop.f32.mrb[0].mxu0
      %v1355 = vpop.f32.mrb[0].mxu0
      %v1356 = vadd.f32 0.0, %v1355
      %v1357 = vpop.f32.mrb[0].mxu0
      %1358 = vmatprep.mubr.bf16.mxu0 0
      %1359 = vmatmul.mubr.bf16.gmra.mrb[0].mxu0 %v1305
      %v1360 = vpop.f32.mrb[0].mxu0
      %v1361 = vadd.f32 0.0, %v1360
      %v1362 = vpop.f32.mrb[0].mxu0
      %v1363 = vpop.f32.mrb[0].mxu0
      %v1364 = vadd.f32 0.0, %v1363
      %v1365 = vpop.f32.mrb[0].mxu0
      %1366 = vmatprep.mubr.bf16.mxu0 0
      %1367 = vmatmul.mubr.bf16.gmra.mrb[0].mxu0 %v1308
      %v1368 = vpop.f32.mrb[0].mxu0
      %v1369 = vadd.f32 0.0, %v1368
      %v1370 = vpop.f32.mrb[0].mxu0
      %v1371 = vpop.f32.mrb[0].mxu0
      %v1372 = vadd.f32 0.0, %v1371
      %v1373 = vpop.f32.mrb[0].mxu0
      %1374 = vdwg.mxu0
      %v1375 = vmax.f32 %v1190, %v1345
      %v1376 = vmax.f32 %v1191, %v1348
      %v1377 = vmax.f32 %v1192, %v1353
      %v1378 = vmax.f32 %v1193, %v1356
      %v1379 = vmax.f32 %v1194, %v1361
      %v1380 = vmax.f32 %v1195, %v1364
      %v1381 = vmax.f32 %v1196, %v1369
      %v1382 = vmax.f32 %v1197, %v1372
      %v1383 = vld [vmem:[%s337] sm:$0xff]
      %v1384 = vld [vmem:[%s337 + $0x8] sm:$0xff]
      %v1385 = vld [vmem:[%s337 + $0x10] sm:$0xff]
      %v1386 = vld [vmem:[%s337 + $0x18] sm:$0xff]
      %v1387 = vld [vmem:[%s337 + $0x20] sm:$0xff]
      %v1388 = vld [vmem:[%s337 + $0x28] sm:$0xff]
      %v1389 = vld [vmem:[%s337 + $0x30] sm:$0xff]
      %v1390 = vld [vmem:[%s337 + $0x38] sm:$0xff]
      %v1391 = vadd.f32 %v1383, %v1375
      %v1392 = vadd.f32 %v1384, %v1376
      %v1393 = vadd.f32 %v1385, %v1377
      %v1394 = vadd.f32 %v1386, %v1378
      %v1395 = vadd.f32 %v1387, %v1379
      %v1396 = vadd.f32 %v1388, %v1380
      %v1397 = vadd.f32 %v1389, %v1381
      %v1398 = vadd.f32 %v1390, %v1382
      %v1399 = vmax.f32 %v1391, 0.0
      %v1400 = vmax.f32 %v1392, 0.0
      %v1401 = vmax.f32 %v1393, 0.0
      %v1402 = vmax.f32 %v1394, 0.0
      %v1403 = vmax.f32 %v1395, 0.0
      %v1404 = vmax.f32 %v1396, 0.0
      %v1405 = vmax.f32 %v1397, 0.0
      %v1406 = vmax.f32 %v1398, 0.0
      %v1407 = vadd.f32 %v1399, %v355
      %v1408 = vadd.f32 %v1400, %v356
      %v1409 = vadd.f32 %v1401, %v357
      %v1410 = vadd.f32 %v1402, %v358
      %v1411 = vadd.f32 %v1403, %v359
      %v1412 = vadd.f32 %v1404, %v360
      %v1413 = vadd.f32 %v1405, %v361
      %v1414 = vadd.f32 %v1406, %v362
      %1415 = vst.msk [vmem:[%s352] sm:$0xff] %vm379, %v1407
      %1416 = vst.msk [vmem:[%s352 + $0x8] sm:$0xff] %vm379, %v1408
      %1417 = vst.msk [vmem:[%s352 + $0x10] sm:$0xff] %vm379, %v1409
      %1418 = vst.msk [vmem:[%s352 + $0x18] sm:$0xff] %vm379, %v1410
      %1419 = vst.msk [vmem:[%s352 + $0x20] sm:$0xff] %vm379, %v1411
      %1420 = vst.msk [vmem:[%s352 + $0x28] sm:$0xff] %vm379, %v1412
      %1421 = vst.msk [vmem:[%s352 + $0x30] sm:$0xff] %vm379, %v1413
      %1422 = vst.msk [vmem:[%s352 + $0x38] sm:$0xff] %vm379, %v1414
      %s1423 = smul.u32 8, %s21
      %p1424 = scmp.lt.s32.totalorder %s20, 1
      %s1425 = scalar_select %p1424, %s20, 1
      %p1426 = scmp.lt.s32.totalorder %s1423, 7
      %s1427 = scalar_select %p1426, %s1423, 7
      %s1428 = smul.addr %s1425, 8
      %s1429 = sadd.s32 %s1427, %s1428
      %s1430 = smul.addr %s1429, 8
      %s1431 = scalar_lea.vmem %s5, %s1430
      // Predicated region
      $region41: #{sparse_deepgcn_forward.6} parent=39 // pred_check
        %p1432 = pneg %p182
      $region42: #{sparse_deepgcn_forward.6} parent=39 // pred_check_branch
        %1434 = sbr.rel (%p1432) target = $region44
      $region43: #{sparse_deepgcn_forward.6} parent=39 // pred_region
        %s1435 = smul.u32 8, %s21
      $region44: #{sparse_deepgcn_forward.6} parent=39 // pred_fallthru
        _
    $region40: #{sparse_deepgcn_forward.6} parent=5 // pred_fallthru
      _
    %p1436 = scmp.le.s32.totalorder 2, %s11
    // Predicated region
    $region45: #{sparse_deepgcn_forward.6} parent=5 // pred_check
      %p1437 = pneg %p1436
    $region46: #{sparse_deepgcn_forward.6} parent=5 // pred_check_branch
      %1439 = sbr.rel (%p1437) target = $region48
    $region47: #{sparse_deepgcn_forward.6} parent=5 // pred_region
      %s1440 = ssub.s32 %s11, 2
      // Predicated region
      $region49: #{sparse_deepgcn_forward.6} parent=47 // pred_check
        %p1441 = pneg %p188
      $region50: #{sparse_deepgcn_forward.6} parent=47 // pred_check_branch
        %1443 = sbr.rel (%p1441) target = $region52
      $region51: #{sparse_deepgcn_forward.6} parent=47 // pred_region
        %s1444 = smul.u32 8, %s23
        %p1445 = scmp.lt.s32.totalorder %s22, 1
        %s1446 = scalar_select %p1445, %s22, 1
        %p1447 = scmp.lt.s32.totalorder %s1444, 7
        %s1448 = scalar_select %p1447, %s1444, 7
        %s1449 = smul.addr %s1446, 8
        %s1450 = sadd.s32 %s1448, %s1449
        %s1451 = smul.addr %s1450, 8
        %s1452 = scalar_lea.vmem %s5, %s1451
      $region52: #{sparse_deepgcn_forward.6} parent=47 // pred_fallthru
        _
    $region48: #{sparse_deepgcn_forward.6} parent=5 // pred_fallthru
      _
  $region6: #{sparse_deepgcn_forward.6} parent=0 // loop_footer
    %s15 = sadd.s32 1, %s11
  $region7: #{sparse_deepgcn_forward.6} parent=0 // loop_footer_branch
    %10 = sbr.rel target = $region3
  $region8: #{sparse_deepgcn_forward.6} parent=0 // loop_exit
    _

// kernel: sparse_deepgcn_forward.9
$region0: #{sparse_deepgcn_forward.9}
  #allocation0 [shape = 'u32[]', space=smem, size = 0x4, offset = 0x4, fixed_abs, tag = 'smem constant byte address 0x4 - core index']
  #allocation1 [shape = 'u32[144,128]{1,0:T(1,128)}', space=vmem, size = 0x12000, scoped, tag = 'internal scratch']
  %s0 = inlined_call_operand.vmem [shape: f32[2,1,512], index: 0, kind: input, shape index: {}]
  %s1 = inlined_call_operand.vmem [shape: f32[2,64,48], index: 1, kind: input, shape index: {}]
  %s2 = inlined_call_operand.vmem [shape: bf16[48,512], index: 2, kind: input, shape index: {}]
  %s3 = inlined_call_operand.vmem [shape: bf16[512,256], index: 3, kind: input, shape index: {}]
  %s4 = inlined_call_operand.vmem [shape: f32[1,256], index: 4, kind: input, shape index: {}]
  %s5 = inlined_call_operand.vmem [shape: bf16[256,128], index: 5, kind: input, shape index: {}]
  %s6 = inlined_call_operand.vmem [shape: f32[1,128], index: 6, kind: input, shape index: {}]
  %s7 = inlined_call_operand.vmem [shape: f32[2,64,128], index: 7, kind: output, shape index: {}]
  %s8 = sld [smem:[#allocation0]]
  $region61: #{sparse_deepgcn_forward.9} parent=0
    _
  %s10 = ssub.s32 1, %s8
  %s11 = scalar_select 0, %s10, %s8
  loop: start=0, step=1, limit=4
  $region2: #{sparse_deepgcn_forward.9} parent=0 // loop_pre_header
    _
  $region3: #{sparse_deepgcn_forward.9} parent=0 // loop_header
    %s13 = sphi 0, %s17
    %p14 = scmp.ge.s32.totalorder %s13, 4
    %s20 = sphi 0, %s32
    %s21 = sphi 0, %s28
    %s22 = sphi 0, %s20
    %s23 = sphi 0, %s21
    %s24 = sphi 0, %s22
    %s25 = sphi 0, %s23
    %s35 = sphi 0, %s37
    %s38 = sphi 0, %s35
    %s39 = sphi 0, %s38
    %s55 = sphi 0, %s39
    %s63 = sphi 0, %s65
    %s66 = sphi 0, %s63
    %s67 = sphi 0, %s66
    %s83 = sphi 0, %s67
    %s87 = sphi 0, %s87
    %s89 = sphi 0, %s87
    %s90 = sphi 0, %s89
    %s104 = sphi 0, %s90
    %s108 = sphi 0, %s108
    %s110 = sphi 0, %s108
    %s111 = sphi 0, %s110
    %s125 = sphi 0, %s111
    %s129 = sphi 0, %s129
    %s131 = sphi 0, %s129
    %s132 = sphi 0, %s131
    %s146 = sphi 0, %s132
    %s150 = sphi 0, %s150
    %s152 = sphi 0, %s150
    %s153 = sphi 0, %s152
    %s167 = sphi 0, %s153
    %s171 = sphi 0, %s171
    %s173 = sphi 0, %s171
    %s174 = sphi 0, %s173
    %s188 = sphi 0, %s174
    %s196 = sphi 0, %s198
    %s199 = sphi 0, %s196
    %s200 = sphi 0, %s199
    %s216 = sphi 0, %s200
  $region4: #{sparse_deepgcn_forward.9} parent=0 // loop_header_branch
    %16 = sbr.rel (%p14) target = $region8
  $region5: #{sparse_deepgcn_forward.9} parent=0 // loop_body
    %s18 = ssub.s32 %s13, 1
    %s19 = ssub.s32 %s13, 2
    %s26 = sadd.s32 1, %s21
    %p27 = scmp.ge.s32.totalorder %s26, 1
    %s28 = scalar_select %p27, 0, %s26
    %s29 = sadd.s32 1, %s20
    %s30 = scalar_select %p27, %s29, %s20
    %p31 = scmp.ge.s32.totalorder %s30, 2
    %s32 = scalar_select %p31, 0, %s30
    %s33 = ssub.s32 %s20, %s32
    %p34 = scmp.eq.s32.totalorder %s33, 0
    %s36 = sadd.s32 %s35, 1
    %s37 = scalar_select %p34, %s35, %s36
    %p40 = pneg %p34
    %p41 = scmp.eq.s32.totalorder %s13, 1
    %p42 = por %p40, %p41
    %p43 = scmp.ne.s32.totalorder %s35, %s38
    %p44 = scmp.eq.s32.totalorder %s13, 0
    %p45 = por %p43, %p44
    %p46 = scmp.ne.s32.totalorder %s35, %s38
    %p47 = scmp.eq.s32.totalorder %s18, 1
    %p48 = por %p46, %p47
    %p49 = scmp.ne.s32.totalorder %s38, %s39
    %p50 = scmp.eq.s32.totalorder %s18, 0
    %p51 = por %p49, %p50
    %p52 = scmp.ne.s32.totalorder %s38, %s39
    %p53 = scmp.eq.s32.totalorder %s19, 1
    %p54 = por %p52, %p53
    %p56 = scmp.ne.s32.totalorder %s39, %s55
    %p57 = scmp.eq.s32.totalorder %s19, 0
    %p58 = por %p56, %p57
    %s59 = ssub.s32 %s20, %s32
    %s60 = ssub.s32 %s21, %s28
    %s61 = sor.u32 %s59, %s60
    %p62 = scmp.eq.s32.totalorder %s61, 0
    %s64 = sadd.s32 %s63, 1
    %s65 = scalar_select %p62, %s63, %s64
    %p68 = pneg %p62
    %p69 = scmp.eq.s32.totalorder %s13, 1
    %p70 = por %p68, %p69
    %p71 = scmp.ne.s32.totalorder %s63, %s66
    %p72 = scmp.eq.s32.totalorder %s13, 0
    %p73 = por %p71, %p72
    %p74 = scmp.ne.s32.totalorder %s63, %s66
    %p75 = scmp.eq.s32.totalorder %s18, 1
    %p76 = por %p74, %p75
    %p77 = scmp.ne.s32.totalorder %s66, %s67
    %p78 = scmp.eq.s32.totalorder %s18, 0
    %p79 = por %p77, %p78
    %p80 = scmp.ne.s32.totalorder %s66, %s67
    %p81 = scmp.eq.s32.totalorder %s19, 1
    %p82 = por %p80, %p81
    %p84 = scmp.ne.s32.totalorder %s67, %s83
    %p85 = scmp.eq.s32.totalorder %s19, 0
    %p86 = por %p84, %p85
    %s88 = sadd.s32 %s87, 1
    %p91 = scmp.eq.s32.totalorder %s13, 1
    %p92 = scmp.ne.s32.totalorder %s87, %s89
    %p93 = scmp.eq.s32.totalorder %s13, 0
    %p94 = por %p92, %p93
    %p95 = scmp.ne.s32.totalorder %s87, %s89
    %p96 = scmp.eq.s32.totalorder %s18, 1
    %p97 = por %p95, %p96
    %p98 = scmp.ne.s32.totalorder %s89, %s90
    %p99 = scmp.eq.s32.totalorder %s18, 0
    %p100 = por %p98, %p99
    %p101 = scmp.ne.s32.totalorder %s89, %s90
    %p102 = scmp.eq.s32.totalorder %s19, 1
    %p103 = por %p101, %p102
    %p105 = scmp.ne.s32.totalorder %s90, %s104
    %p106 = scmp.eq.s32.totalorder %s19, 0
    %p107 = por %p105, %p106
    %s109 = sadd.s32 %s108, 1
    %p112 = scmp.eq.s32.totalorder %s13, 1
    %p113 = scmp.ne.s32.totalorder %s108, %s110
    %p114 = scmp.eq.s32.totalorder %s13, 0
    %p115 = por %p113, %p114
    %p116 = scmp.ne.s32.totalorder %s108, %s110
    %p117 = scmp.eq.s32.totalorder %s18, 1
    %p118 = por %p116, %p117
    %p119 = scmp.ne.s32.totalorder %s110, %s111
    %p120 = scmp.eq.s32.totalorder %s18, 0
    %p121 = por %p119, %p120
    %p122 = scmp.ne.s32.totalorder %s110, %s111
    %p123 = scmp.eq.s32.totalorder %s19, 1
    %p124 = por %p122, %p123
    %p126 = scmp.ne.s32.totalorder %s111, %s125
    %p127 = scmp.eq.s32.totalorder %s19, 0
    %p128 = por %p126, %p127
    %s130 = sadd.s32 %s129, 1
    %p133 = scmp.eq.s32.totalorder %s13, 1
    %p134 = scmp.ne.s32.totalorder %s129, %s131
    %p135 = scmp.eq.s32.totalorder %s13, 0
    %p136 = por %p134, %p135
    %p137 = scmp.ne.s32.totalorder %s129, %s131
    %p138 = scmp.eq.s32.totalorder %s18, 1
    %p139 = por %p137, %p138
    %p140 = scmp.ne.s32.totalorder %s131, %s132
    %p141 = scmp.eq.s32.totalorder %s18, 0
    %p142 = por %p140, %p141
    %p143 = scmp.ne.s32.totalorder %s131, %s132
    %p144 = scmp.eq.s32.totalorder %s19, 1
    %p145 = por %p143, %p144
    %p147 = scmp.ne.s32.totalorder %s132, %s146
    %p148 = scmp.eq.s32.totalorder %s19, 0
    %p149 = por %p147, %p148
    %s151 = sadd.s32 %s150, 1
    %p154 = scmp.eq.s32.totalorder %s13, 1
    %p155 = scmp.ne.s32.totalorder %s150, %s152
    %p156 = scmp.eq.s32.totalorder %s13, 0
    %p157 = por %p155, %p156
    %p158 = scmp.ne.s32.totalorder %s150, %s152
    %p159 = scmp.eq.s32.totalorder %s18, 1
    %p160 = por %p158, %p159
    %p161 = scmp.ne.s32.totalorder %s152, %s153
    %p162 = scmp.eq.s32.totalorder %s18, 0
    %p163 = por %p161, %p162
    %p164 = scmp.ne.s32.totalorder %s152, %s153
    %p165 = scmp.eq.s32.totalorder %s19, 1
    %p166 = por %p164, %p165
    %p168 = scmp.ne.s32.totalorder %s153, %s167
    %p169 = scmp.eq.s32.totalorder %s19, 0
    %p170 = por %p168, %p169
    %s172 = sadd.s32 %s171, 1
    %p175 = scmp.eq.s32.totalorder %s13, 1
    %p176 = scmp.ne.s32.totalorder %s171, %s173
    %p177 = scmp.eq.s32.totalorder %s13, 0
    %p178 = por %p176, %p177
    %p179 = scmp.ne.s32.totalorder %s171, %s173
    %p180 = scmp.eq.s32.totalorder %s18, 1
    %p181 = por %p179, %p180
    %p182 = scmp.ne.s32.totalorder %s173, %s174
    %p183 = scmp.eq.s32.totalorder %s18, 0
    %p184 = por %p182, %p183
    %p185 = scmp.ne.s32.totalorder %s173, %s174
    %p186 = scmp.eq.s32.totalorder %s19, 1
    %p187 = por %p185, %p186
    %p189 = scmp.ne.s32.totalorder %s174, %s188
    %p190 = scmp.eq.s32.totalorder %s19, 0
    %p191 = por %p189, %p190
    %s192 = ssub.s32 %s20, %s32
    %s193 = ssub.s32 %s21, %s28
    %s194 = sor.u32 %s192, %s193
    %p195 = scmp.eq.s32.totalorder %s194, 0
    %s197 = sadd.s32 %s196, 1
    %s198 = scalar_select %p195, %s196, %s197
    %p201 = pneg %p195
    %p202 = scmp.eq.s32.totalorder %s13, 1
    %p203 = por %p201, %p202
    %p204 = scmp.ne.s32.totalorder %s196, %s199
    %p205 = scmp.eq.s32.totalorder %s13, 0
    %p206 = por %p204, %p205
    %p207 = scmp.ne.s32.totalorder %s196, %s199
    %p208 = scmp.eq.s32.totalorder %s18, 1
    %p209 = por %p207, %p208
    %p210 = scmp.ne.s32.totalorder %s199, %s200
    %p211 = scmp.eq.s32.totalorder %s18, 0
    %p212 = por %p210, %p211
    %p213 = scmp.ne.s32.totalorder %s199, %s200
    %p214 = scmp.eq.s32.totalorder %s19, 1
    %p215 = por %p213, %p214
    %p217 = scmp.ne.s32.totalorder %s200, %s216
    %p218 = scmp.eq.s32.totalorder %s19, 0
    %p219 = por %p217, %p218
    %p220 = scmp.le.s32.totalorder 1, %s13
    %p221 = scmp.lt.s32.totalorder %s13, 3
    %p222 = pnand %p220, %p221
    %p223 = pneg %p222
    // Predicated region
    $region9: #{sparse_deepgcn_forward.9} parent=5 // pred_check
      _
    $region10: #{sparse_deepgcn_forward.9} parent=5 // pred_check_branch
      %225 = sbr.rel (%p222) target = $region12
    $region11: #{sparse_deepgcn_forward.9} parent=5 // pred_region
      %s226 = ssub.s32 %s13, 1
      // Predicated region
      $region13: #{sparse_deepgcn_forward.9} parent=11 // pred_check
        %p227 = pneg %p100
      $region14: #{sparse_deepgcn_forward.9} parent=11 // pred_check_branch
        %229 = sbr.rel (%p227) target = $region16
      $region15: #{sparse_deepgcn_forward.9} parent=11 // pred_region
        _
      $region16: #{sparse_deepgcn_forward.9} parent=11 // pred_fallthru
        _
      // Predicated region
      $region17: #{sparse_deepgcn_forward.9} parent=11 // pred_check
        %p230 = pneg %p121
      $region18: #{sparse_deepgcn_forward.9} parent=11 // pred_check_branch
        %232 = sbr.rel (%p230) target = $region20
      $region19: #{sparse_deepgcn_forward.9} parent=11 // pred_region
        _
      $region20: #{sparse_deepgcn_forward.9} parent=11 // pred_fallthru
        _
      // Predicated region
      $region21: #{sparse_deepgcn_forward.9} parent=11 // pred_check
        %p233 = pneg %p142
      $region22: #{sparse_deepgcn_forward.9} parent=11 // pred_check_branch
        %235 = sbr.rel (%p233) target = $region24
      $region23: #{sparse_deepgcn_forward.9} parent=11 // pred_region
        _
      $region24: #{sparse_deepgcn_forward.9} parent=11 // pred_fallthru
        _
      // Predicated region
      $region25: #{sparse_deepgcn_forward.9} parent=11 // pred_check
        %p236 = pneg %p163
      $region26: #{sparse_deepgcn_forward.9} parent=11 // pred_check_branch
        %238 = sbr.rel (%p236) target = $region28
      $region27: #{sparse_deepgcn_forward.9} parent=11 // pred_region
        _
      $region28: #{sparse_deepgcn_forward.9} parent=11 // pred_fallthru
        _
      // Predicated region
      $region29: #{sparse_deepgcn_forward.9} parent=11 // pred_check
        %p239 = pneg %p184
      $region30: #{sparse_deepgcn_forward.9} parent=11 // pred_check_branch
        %241 = sbr.rel (%p239) target = $region32
      $region31: #{sparse_deepgcn_forward.9} parent=11 // pred_region
        _
      $region32: #{sparse_deepgcn_forward.9} parent=11 // pred_fallthru
        _
    $region12: #{sparse_deepgcn_forward.9} parent=5 // pred_fallthru
      _
    %p242 = scmp.lt.s32.totalorder %s13, 2
    // Predicated region
    $region33: #{sparse_deepgcn_forward.9} parent=5 // pred_check
      %p243 = pneg %p242
    $region34: #{sparse_deepgcn_forward.9} parent=5 // pred_check_branch
      %245 = sbr.rel (%p243) target = $region36
    $region35: #{sparse_deepgcn_forward.9} parent=5 // pred_region
      // Predicated region
      $region37: #{sparse_deepgcn_forward.9} parent=35 // pred_check
        %p246 = pneg %p45
      $region38: #{sparse_deepgcn_forward.9} parent=35 // pred_check_branch
        %248 = sbr.rel (%p246) target = $region40
      $region39: #{sparse_deepgcn_forward.9} parent=35 // pred_region
        %p249 = scmp.lt.s32.totalorder %s20, 1
        %s250 = scalar_select %p249, %s20, 1
        %s251 = smul.addr %s250, 4
        %s252 = scalar_lea.vmem %s0, %s251
      $region40: #{sparse_deepgcn_forward.9} parent=35 // pred_fallthru
        _
      // Predicated region
      $region41: #{sparse_deepgcn_forward.9} parent=35 // pred_check
        %p253 = pneg %p73
      $region42: #{sparse_deepgcn_forward.9} parent=35 // pred_check_branch
        %255 = sbr.rel (%p253) target = $region44
      $region43: #{sparse_deepgcn_forward.9} parent=35 // pred_region
        %s256 = smul.u32 8, %s21
        %p257 = scmp.lt.s32.totalorder %s20, 1
        %s258 = scalar_select %p257, %s20, 1
        %p259 = scmp.lt.s32.totalorder %s256, 7
        %s260 = scalar_select %p259, %s256, 7
        %s261 = smul.addr %s258, 8
        %s262 = sadd.s32 %s260, %s261
        %s263 = smul.addr %s262, 8
        %s264 = scalar_lea.vmem %s1, %s263
        %s265 = smul.u32 8, %s21
      $region44: #{sparse_deepgcn_forward.9} parent=35 // pred_fallthru
        _
    $region36: #{sparse_deepgcn_forward.9} parent=5 // pred_fallthru
      _
    %p266 = scmp.le.s32.totalorder 1, %s13
    %p267 = scmp.lt.s32.totalorder %s13, 3
    %p268 = pnand %p266, %p267
    %p269 = pneg %p268
    // Predicated region
    $region45: #{sparse_deepgcn_forward.9} parent=5 // pred_check
      _
    $region46: #{sparse_deepgcn_forward.9} parent=5 // pred_check_branch
      %271 = sbr.rel (%p268) target = $region48
    $region47: #{sparse_deepgcn_forward.9} parent=5 // pred_region
      %s272 = ssub.s32 %s13, 1
      %p273 = scmp.lt.s32.totalorder %s22, 1
      %s274 = scalar_select %p273, %s22, 1
      %s275 = smul.addr %s274, 4
      %s276 = scalar_lea.vmem %s0, %s275
      %p277 = pneg %p51
      %p278 = pneg %p48
      %s279 = smul.u32 8, %s23
      %p280 = scmp.lt.s32.totalorder %s22, 1
      %s281 = scalar_select %p280, %s22, 1
      %p282 = scmp.lt.s32.totalorder %s279, 7
      %s283 = scalar_select %p282, %s279, 7
      %s284 = smul.addr %s281, 8
      %s285 = sadd.s32 %s283, %s284
      %s286 = smul.addr %s285, 8
      %s287 = scalar_lea.vmem %s1, %s286
      %p288 = pneg %p79
      %p289 = pneg %p76
      %p290 = pneg %p100
      %p291 = pneg %p97
      %p292 = pneg %p121
      %p293 = pneg %p118
      %p294 = pneg %p142
      %p295 = pneg %p139
      %p296 = pneg %p163
      %p297 = pneg %p160
      %p298 = pneg %p184
      %p299 = pneg %p181
      %p300 = pneg %p212
      %p301 = pneg %p209
      %s302 = smul.u32 8, %s23
      %p303 = scmp.lt.s32.totalorder %s22, 1
      %s304 = scalar_select %p303, %s22, 1
      %p305 = scmp.lt.s32.totalorder %s302, 7
      %s306 = scalar_select %p305, %s302, 7
      %s307 = smul.addr %s304, 8
      %s308 = sadd.s32 %s306, %s307
      %s309 = smul.addr %s308, 8
      %s310 = scalar_lea.vmem %s7, %s309
      %p311 = scmp.lt.s32.totalorder %s22, 1
      %s312 = scalar_select %p311, %s22, 1
      %s313 = smul.addr %s312, 4
      %s314 = scalar_lea.vmem %s0, %s313
      %s315 = smul.u32 8, %s23
      %p316 = scmp.lt.s32.totalorder %s22, 1
      %s317 = scalar_select %p316, %s22, 1
      %p318 = scmp.lt.s32.totalorder %s315, 7
      %s319 = scalar_select %p318, %s315, 7
      %s320 = smul.addr %s317, 8
      %s321 = sadd.s32 %s319, %s320
      %s322 = smul.addr %s321, 8
      %s323 = scalar_lea.vmem %s1, %s322
      %s324 = smul.u32 8, %s23
      %s325 = smul.u32 8, %s23
      %p326 = scmp.lt.s32.totalorder %s22, 1
      %s327 = scalar_select %p326, %s22, 1
      %p328 = scmp.lt.s32.totalorder %s325, 7
      %s329 = scalar_select %p328, %s325, 7
      %s330 = smul.addr %s327, 8
      %s331 = sadd.s32 %s329, %s330
      %s332 = smul.addr %s331, 8
      %s333 = scalar_lea.vmem %s7, %s332
      %s334 = smul.u32 8, %s23
      %v336 = vld [vmem:[%s314] sm:$0xf]
      %v337 = vld [vmem:[%s323] sm:$0xff]
      %v338 = vld [vmem:[%s323 + $0x8] sm:$0xff]
      %v339 = vld [vmem:[%s323 + $0x10] sm:$0xff]
      %v340 = vld [vmem:[%s323 + $0x18] sm:$0xff]
      %v341 = vld [vmem:[%s323 + $0x20] sm:$0xff]
      %v342 = vld [vmem:[%s323 + $0x28] sm:$0xff]
      %v343 = vld [vmem:[%s323 + $0x30] sm:$0xff]
      %v344 = vld [vmem:[%s323 + $0x38] sm:$0xff]
      %v345 = vpack.c.bf16 %v338, %v337
      %v346 = vpack.c.bf16 %v340, %v339
      %v347 = vpack.c.bf16 %v342, %v341
      %v348 = vpack.c.bf16 %v344, %v343
      %v349 = vld [vmem:[%s2] sm:$0xff]
      %v350 = vld [vmem:[%s2 + $0x8] sm:$0xff]
      %v351 = vld [vmem:[%s2 + $0x10] sm:$0xff]
      %v352 = vld [vmem:[%s2 + $0x18] sm:$0xff]
      %v353 = vld [vmem:[%s2 + $0x20] sm:$0xff]
      %v354 = vld [vmem:[%s2 + $0x28] sm:$0xff]
      %v355 = vld [vmem:[%s2 + $0x30] sm:$0xff]
      %v356 = vld [vmem:[%s2 + $0x38] sm:$0xff]
      %v357 = vld [vmem:[%s2 + $0x40] sm:$0xff]
      %v358 = vld [vmem:[%s2 + $0x48] sm:$0xff]
      %v359 = vld [vmem:[%s2 + $0x50] sm:$0xff]
      %v360 = vld [vmem:[%s2 + $0x58] sm:$0xff]
      %v373 = vunpack.c.l.b16 %v349
      %v374 = vunpack.c.h.b16 %v349
      %v375 = vunpack.c.l.b16 %v350
      %v376 = vunpack.c.h.b16 %v350
      %v377 = vunpack.c.l.b16 %v351
      %v378 = vunpack.c.h.b16 %v351
      %v379 = vunpack.c.l.b16 %v352
      %v380 = vunpack.c.h.b16 %v352
      %v381 = vunpack.c.l.b16 %v353
      %v382 = vunpack.c.h.b16 %v353
      %v383 = vunpack.c.l.b16 %v354
      %v384 = vunpack.c.h.b16 %v354
      %v385 = vunpack.c.l.b16 %v355
      %v386 = vunpack.c.h.b16 %v355
      %v387 = vunpack.c.l.b16 %v356
      %v388 = vunpack.c.h.b16 %v356
      %v389 = vunpack.c.l.b16 %v357
      %v390 = vunpack.c.h.b16 %v357
      %v391 = vunpack.c.l.b16 %v358
      %v392 = vunpack.c.h.b16 %v358
      %v393 = vunpack.c.l.b16 %v359
      %v394 = vunpack.c.h.b16 %v359
      %v395 = vunpack.c.l.b16 %v360
      %v396 = vunpack.c.h.b16 %v360
      %v397 = vpack.c.b16 %v377, %v373
      %v398 = vpack.c.b16 %v378, %v374
      %v399 = vpack.c.b16 %v379, %v375
      %v400 = vpack.c.b16 %v380, %v376
      %v401 = vpack.c.b16 %v385, %v381
      %v402 = vpack.c.b16 %v386, %v382
      %v403 = vpack.c.b16 %v387, %v383
      %v404 = vpack.c.b16 %v388, %v384
      %v405 = vpack.c.b16 %v393, %v389
      %v406 = vpack.c.b16 %v394, %v390
      %v407 = vpack.c.b16 %v395, %v391
      %v408 = vpack.c.b16 %v396, %v392
      %vm421 = vcmask 392192
      %v423 = vsel %vm421, %v345, 0
      %v426 = vsel %vm421, %v346, 0
      %v429 = vsel %vm421, %v347, 0
      %v432 = vsel %vm421, %v348, 0
      %434 = vmatprep.subr.bf16.mxu0 %v398
      %435 = vmatpush1.bf16.msra.mxu0 %v397
      %436 = vmatprep.subr.bf16.mxu0 %v402
      %437 = vmatpush1.bf16.msra.mxu0 %v401
      %438 = vmatprep.subr.bf16.mxu0 %v406
      %439 = vmatpush1.bf16.msra.mxu0 %v405
      %440 = vmatprep.subr.bf16.mxu0 0
      %441 = vmatpush1.bf16.msra.mxu0 0
      %442 = vmatprep.subr.bf16.mxu0 0
      %443 = vmatpush1.bf16.msra.mxu0 0
      %444 = vmatprep.subr.bf16.mxu0 0
      %445 = vmatpush1.bf16.msra.mxu0 0
      %446 = vmatprep.subr.bf16.mxu0 0
      %447 = vmatpush1.bf16.msra.mxu0 0
      %448 = vmatprep.subr.bf16.mxu0 0
      %449 = vmatpush1.bf16.msra.mxu0 0
      %450 = vmatprep.subr.bf16.mxu0 0
      %451 = vmatpush1.bf16.msra.mxu0 0
      %452 = vmatprep.subr.bf16.mxu0 0
      %453 = vmatpush1.bf16.msra.mxu0 0
      %454 = vmatprep.subr.bf16.mxu0 0
      %455 = vmatpush1.bf16.msra.mxu0 0
      %456 = vmatprep.subr.bf16.mxu0 0
      %457 = vmatpush1.bf16.msra.mxu0 0
      %458 = vmatprep.subr.bf16.mxu0 0
      %459 = vmatpush1.bf16.msra.mxu0 0
      %460 = vmatprep.subr.bf16.mxu0 0
      %461 = vmatpush1.bf16.msra.mxu0 0
      %462 = vmatprep.subr.bf16.mxu0 0
      %463 = vmatpush1.bf16.msra.mxu0 0
      %464 = vmatprep.subr.bf16.mxu0 0
      %465 = vmatpush1.bf16.msra.mxu0 0
      %466 = vmatprep.mubr.bf16.mxu0 0
      %467 = vmatmul.mubr.bf16.gmra.mrb[0].mxu0 %v423
      %v468 = vpop.f32.mrb[0].mxu0
      %v469 = vadd.f32 0.0, %v468
      %v470 = vpop.f32.mrb[0].mxu0
      %v471 = vadd.f32 0.0, %v470
      %v472 = vpop.f32.mrb[0].mxu0
      %v473 = vadd.f32 0.0, %v472
      %v474 = vpop.f32.mrb[0].mxu0
      %v475 = vadd.f32 0.0, %v474
      %476 = vmatprep.mubr.bf16.mxu0 0
      %477 = vmatmul.mubr.bf16.gmra.mrb[0].mxu0 %v426
      %v478 = vpop.f32.mrb[0].mxu0
      %v479 = vadd.f32 0.0, %v478
      %v480 = vpop.f32.mrb[0].mxu0
      %v481 = vadd.f32 0.0, %v480
      %v482 = vpop.f32.mrb[0].mxu0
      %v483 = vadd.f32 0.0, %v482
      %v484 = vpop.f32.mrb[0].mxu0
      %v485 = vadd.f32 0.0, %v484
      %486 = vmatprep.mubr.bf16.mxu0 0
      %487 = vmatmul.mubr.bf16.gmra.mrb[0].mxu0 %v429
      %v488 = vpop.f32.mrb[0].mxu0
      %v489 = vadd.f32 0.0, %v488
      %v490 = vpop.f32.mrb[0].mxu0
      %v491 = vadd.f32 0.0, %v490
      %v492 = vpop.f32.mrb[0].mxu0
      %v493 = vadd.f32 0.0, %v492
      %v494 = vpop.f32.mrb[0].mxu0
      %v495 = vadd.f32 0.0, %v494
      %496 = vmatprep.mubr.bf16.mxu0 0
      %497 = vmatmul.mubr.bf16.gmra.mrb[0].mxu0 %v432
      %v498 = vpop.f32.mrb[0].mxu0
      %v499 = vadd.f32 0.0, %v498
      %v500 = vpop.f32.mrb[0].mxu0
      %v501 = vadd.f32 0.0, %v500
      %v502 = vpop.f32.mrb[0].mxu0
      %v503 = vadd.f32 0.0, %v502
      %v504 = vpop.f32.mrb[0].mxu0
      %v505 = vadd.f32 0.0, %v504
      %506 = vdwg.mxu0
      %507 = vmatprep.subr.bf16.mxu0 %v400
      %508 = vmatpush1.bf16.msra.mxu0 %v399
      %509 = vmatprep.subr.bf16.mxu0 %v404
      %510 = vmatpush1.bf16.msra.mxu0 %v403
      %511 = vmatprep.subr.bf16.mxu0 %v408
      %512 = vmatpush1.bf16.msra.mxu0 %v407
      %513 = vmatprep.subr.bf16.mxu0 0
      %514 = vmatpush1.bf16.msra.mxu0 0
      %515 = vmatprep.subr.bf16.mxu0 0
      %516 = vmatpush1.bf16.msra.mxu0 0
      %517 = vmatprep.subr.bf16.mxu0 0
      %518 = vmatpush1.bf16.msra.mxu0 0
      %519 = vmatprep.subr.bf16.mxu0 0
      %520 = vmatpush1.bf16.msra.mxu0 0
      %521 = vmatprep.subr.bf16.mxu0 0
      %522 = vmatpush1.bf16.msra.mxu0 0
      %523 = vmatprep.subr.bf16.mxu0 0
      %524 = vmatpush1.bf16.msra.mxu0 0
      %525 = vmatprep.subr.bf16.mxu0 0
      %526 = vmatpush1.bf16.msra.mxu0 0
      %527 = vmatprep.subr.bf16.mxu0 0
      %528 = vmatpush1.bf16.msra.mxu0 0
      %529 = vmatprep.subr.bf16.mxu0 0
      %530 = vmatpush1.bf16.msra.mxu0 0
      %531 = vmatprep.subr.bf16.mxu0 0
      %532 = vmatpush1.bf16.msra.mxu0 0
      %533 = vmatprep.subr.bf16.mxu0 0
      %534 = vmatpush1.bf16.msra.mxu0 0
      %535 = vmatprep.subr.bf16.mxu0 0
      %536 = vmatpush1.bf16.msra.mxu0 0
      %537 = vmatprep.subr.bf16.mxu0 0
      %538 = vmatpush1.bf16.msra.mxu0 0
      %539 = vmatprep.mubr.bf16.mxu0 0
      %540 = vmatmul.mubr.bf16.gmra.mrb[0].mxu0 %v423
      %v541 = vpop.f32.mrb[0].mxu0
      %v542 = vadd.f32 0.0, %v541
      %v543 = vpop.f32.mrb[0].mxu0
      %v544 = vadd.f32 0.0, %v543
      %v545 = vpop.f32.mrb[0].mxu0
      %v546 = vadd.f32 0.0, %v545
      %v547 = vpop.f32.mrb[0].mxu0
      %v548 = vadd.f32 0.0, %v547
      %549 = vmatprep.mubr.bf16.mxu0 0
      %550 = vmatmul.mubr.bf16.gmra.mrb[0].mxu0 %v426
      %v551 = vpop.f32.mrb[0].mxu0
      %v552 = vadd.f32 0.0, %v551
      %v553 = vpop.f32.mrb[0].mxu0
      %v554 = vadd.f32 0.0, %v553
      %v555 = vpop.f32.mrb[0].mxu0
      %v556 = vadd.f32 0.0, %v555
      %v557 = vpop.f32.mrb[0].mxu0
      %v558 = vadd.f32 0.0, %v557
      %559 = vmatprep.mubr.bf16.mxu0 0
      %560 = vmatmul.mubr.bf16.gmra.mrb[0].mxu0 %v429
      %v561 = vpop.f32.mrb[0].mxu0
      %v562 = vadd.f32 0.0, %v561
      %v563 = vpop.f32.mrb[0].mxu0
      %v564 = vadd.f32 0.0, %v563
      %v565 = vpop.f32.mrb[0].mxu0
      %v566 = vadd.f32 0.0, %v565
      %v567 = vpop.f32.mrb[0].mxu0
      %v568 = vadd.f32 0.0, %v567
      %569 = vmatprep.mubr.bf16.mxu0 0
      %570 = vmatmul.mubr.bf16.gmra.mrb[0].mxu0 %v432
      %v571 = vpop.f32.mrb[0].mxu0
      %v572 = vadd.f32 0.0, %v571
      %v573 = vpop.f32.mrb[0].mxu0
      %v574 = vadd.f32 0.0, %v573
      %v575 = vpop.f32.mrb[0].mxu0
      %v576 = vadd.f32 0.0, %v575
      %v577 = vpop.f32.mrb[0].mxu0
      %v578 = vadd.f32 0.0, %v577
      %579 = vdwg.mxu0
      %v581 = vlaneseq
      %v582 = vshrl.u32 %v581, 7
      %v583 = vsub.s32 0, %v582
      %v584 = vrot.slane %v336, %v583
      %v585 = vlaneseq
      %v586 = vshrl.u32 %v585, 7
      %v587 = vsub.s32 1, %v586
      %v588 = vrot.slane %v336, %v587
      %v589 = vlaneseq
      %v590 = vshrl.u32 %v589, 7
      %v591 = vsub.s32 2, %v590
      %v592 = vrot.slane %v336, %v591
      %v593 = vlaneseq
      %v594 = vshrl.u32 %v593, 7
      %v595 = vsub.s32 3, %v594
      %v596 = vrot.slane %v336, %v595
      %v601 = vadd.f32 %v584, %v469
      %v602 = vadd.f32 %v588, %v471
      %v603 = vadd.f32 %v592, %v542
      %v604 = vadd.f32 %v596, %v544
      %v605 = vadd.f32 %v584, %v473
      %v606 = vadd.f32 %v588, %v475
      %v607 = vadd.f32 %v592, %v546
      %v608 = vadd.f32 %v596, %v548
      %v609 = vadd.f32 %v584, %v479
      %v610 = vadd.f32 %v588, %v481
      %v611 = vadd.f32 %v592, %v552
      %v612 = vadd.f32 %v596, %v554
      %v613 = vadd.f32 %v584, %v483
      %v614 = vadd.f32 %v588, %v485
      %v615 = vadd.f32 %v592, %v556
      %v616 = vadd.f32 %v596, %v558
      %v617 = vadd.f32 %v584, %v489
      %v618 = vadd.f32 %v588, %v491
      %v619 = vadd.f32 %v592, %v562
      %v620 = vadd.f32 %v596, %v564
      %v621 = vadd.f32 %v584, %v493
      %v622 = vadd.f32 %v588, %v495
      %v623 = vadd.f32 %v592, %v566
      %v624 = vadd.f32 %v596, %v568
      %v625 = vadd.f32 %v584, %v499
      %v626 = vadd.f32 %v588, %v501
      %v627 = vadd.f32 %v592, %v572
      %v628 = vadd.f32 %v596, %v574
      %v629 = vadd.f32 %v584, %v503
      %v630 = vadd.f32 %v588, %v505
      %v631 = vadd.f32 %v592, %v576
      %v632 = vadd.f32 %v596, %v578
      %v633 = vmax.f32 %v601, 0.0
      %v634 = vmax.f32 %v602, 0.0
      %v635 = vmax.f32 %v603, 0.0
      %v636 = vmax.f32 %v604, 0.0
      %v637 = vmax.f32 %v605, 0.0
      %v638 = vmax.f32 %v606, 0.0
      %v639 = vmax.f32 %v607, 0.0
      %v640 = vmax.f32 %v608, 0.0
      %v641 = vmax.f32 %v609, 0.0
      %v642 = vmax.f32 %v610, 0.0
      %v643 = vmax.f32 %v611, 0.0
      %v644 = vmax.f32 %v612, 0.0
      %v645 = vmax.f32 %v613, 0.0
      %v646 = vmax.f32 %v614, 0.0
      %v647 = vmax.f32 %v615, 0.0
      %v648 = vmax.f32 %v616, 0.0
      %v649 = vmax.f32 %v617, 0.0
      %v650 = vmax.f32 %v618, 0.0
      %v651 = vmax.f32 %v619, 0.0
      %v652 = vmax.f32 %v620, 0.0
      %v653 = vmax.f32 %v621, 0.0
      %v654 = vmax.f32 %v622, 0.0
      %v655 = vmax.f32 %v623, 0.0
      %v656 = vmax.f32 %v624, 0.0
      %v657 = vmax.f32 %v625, 0.0
      %v658 = vmax.f32 %v626, 0.0
      %v659 = vmax.f32 %v627, 0.0
      %v660 = vmax.f32 %v628, 0.0
      %v661 = vmax.f32 %v629, 0.0
      %v662 = vmax.f32 %v630, 0.0
      %v663 = vmax.f32 %v631, 0.0
      %v664 = vmax.f32 %v632, 0.0
      %v665 = vpack.c.bf16 %v637, %v633
      %v666 = vpack.c.bf16 %v638, %v634
      %v667 = vpack.c.bf16 %v639, %v635
      %v668 = vpack.c.bf16 %v640, %v636
      %v669 = vpack.c.bf16 %v645, %v641
      %v670 = vpack.c.bf16 %v646, %v642
      %v671 = vpack.c.bf16 %v647, %v643
      %v672 = vpack.c.bf16 %v648, %v644
      %v673 = vpack.c.bf16 %v653, %v649
      %v674 = vpack.c.bf16 %v654, %v650
      %v675 = vpack.c.bf16 %v655, %v651
      %v676 = vpack.c.bf16 %v656, %v652
      %v677 = vpack.c.bf16 %v661, %v657
      %v678 = vpack.c.bf16 %v662, %v658
      %v679 = vpack.c.bf16 %v663, %v659
      %v680 = vpack.c.bf16 %v664, %v660
      %v681 = vld [vmem:[%s3] sm:$0xff]
      %v682 = vld [vmem:[%s3 + $0x8] sm:$0xff]
      %v683 = vld [vmem:[%s3 + $0x10] sm:$0xff]
      %v684 = vld [vmem:[%s3 + $0x18] sm:$0xff]
      %v685 = vld [vmem:[%s3 + $0x20] sm:$0xff]
      %v686 = vld [vmem:[%s3 + $0x28] sm:$0xff]
      %v687 = vld [vmem:[%s3 + $0x30] sm:$0xff]
      %v688 = vld [vmem:[%s3 + $0x38] sm:$0xff]
      %v689 = vld [vmem:[%s3 + $0x40] sm:$0xff]
      %v690 = vld [vmem:[%s3 + $0x48] sm:$0xff]
      %v691 = vld [vmem:[%s3 + $0x50] sm:$0xff]
      %v692 = vld [vmem:[%s3 + $0x58] sm:$0xff]
      %v693 = vld [vmem:[%s3 + $0x60] sm:$0xff]
      %v694 = vld [vmem:[%s3 + $0x68] sm:$0xff]
      %v695 = vld [vmem:[%s3 + $0x70] sm:$0xff]
      %v696 = vld [vmem:[%s3 + $0x78] sm:$0xff]
      %v697 = vld [vmem:[%s3 + $0x80] sm:$0xff]
      %v698 = vld [vmem:[%s3 + $0x88] sm:$0xff]
      %v699 = vld [vmem:[%s3 + $0x90] sm:$0xff]
      %v700 = vld [vmem:[%s3 + $0x98] sm:$0xff]
      %v701 = vld [vmem:[%s3 + $0xa0] sm:$0xff]
      %v702 = vld [vmem:[%s3 + $0xa8] sm:$0xff]
      %v703 = vld [vmem:[%s3 + $0xb0] sm:$0xff]
      %v704 = vld [vmem:[%s3 + $0xb8] sm:$0xff]
      %v705 = vld [vmem:[%s3 + $0xc0] sm:$0xff]
      %v706 = vld [vmem:[%s3 + $0xc8] sm:$0xff]
      %v707 = vld [vmem:[%s3 + $0xd0] sm:$0xff]
      %v708 = vld [vmem:[%s3 + $0xd8] sm:$0xff]
      %v709 = vld [vmem:[%s3 + $0xe0] sm:$0xff]
      %v710 = vld [vmem:[%s3 + $0xe8] sm:$0xff]
      %v711 = vld [vmem:[%s3 + $0xf0] sm:$0xff]
      %v712 = vld [vmem:[%s3 + $0xf8] sm:$0xff]
      %v713 = vld [vmem:[%s3 + $0x100] sm:$0xff]
      %v714 = vld [vmem:[%s3 + $0x108] sm:$0xff]
      %v715 = vld [vmem:[%s3 + $0x110] sm:$0xff]
      %v716 = vld [vmem:[%s3 + $0x118] sm:$0xff]
      %v717 = vld [vmem:[%s3 + $0x120] sm:$0xff]
      %v718 = vld [vmem:[%s3 + $0x128] sm:$0xff]
      %v719 = vld [vmem:[%s3 + $0x130] sm:$0xff]
      %v720 = vld [vmem:[%s3 + $0x138] sm:$0xff]
      %v721 = vld [vmem:[%s3 + $0x140] sm:$0xff]
      %v722 = vld [vmem:[%s3 + $0x148] sm:$0xff]
      %v723 = vld [vmem:[%s3 + $0x150] sm:$0xff]
      %v724 = vld [vmem:[%s3 + $0x158] sm:$0xff]
      %v725 = vld [vmem:[%s3 + $0x160] sm:$0xff]
      %v726 = vld [vmem:[%s3 + $0x168] sm:$0xff]
      %v727 = vld [vmem:[%s3 + $0x170] sm:$0xff]
      %v728 = vld [vmem:[%s3 + $0x178] sm:$0xff]
      %v729 = vld [vmem:[%s3 + $0x180] sm:$0xff]
      %v730 = vld [vmem:[%s3 + $0x188] sm:$0xff]
      %v731 = vld [vmem:[%s3 + $0x190] sm:$0xff]
      %v732 = vld [vmem:[%s3 + $0x198] sm:$0xff]
      %v733 = vld [vmem:[%s3 + $0x1a0] sm:$0xff]
      %v734 = vld [vmem:[%s3 + $0x1a8] sm:$0xff]
      %v735 = vld [vmem:[%s3 + $0x1b0] sm:$0xff]
      %v736 = vld [vmem:[%s3 + $0x1b8] sm:$0xff]
      %v737 = vld [vmem:[%s3 + $0x1c0] sm:$0xff]
      %v738 = vld [vmem:[%s3 + $0x1c8] sm:$0xff]
      %v739 = vld [vmem:[%s3 + $0x1d0] sm:$0xff]
      %v740 = vld [vmem:[%s3 + $0x1d8] sm:$0xff]
      %v741 = vld [vmem:[%s3 + $0x1e0] sm:$0xff]
      %v742 = vld [vmem:[%s3 + $0x1e8] sm:$0xff]
      %v743 = vld [vmem:[%s3 + $0x1f0] sm:$0xff]
      %v744 = vld [vmem:[%s3 + $0x1f8] sm:$0xff]
      %v745 = vld [vmem:[%s4] sm:$0x3]
      %v747 = vlaneseq
      %v748 = vshrl.u32 %v747, 7
      %v749 = vsub.s32 0, %v748
      %v750 = vrot.slane %v745, %v749
      %v751 = vlaneseq
      %v752 = vshrl.u32 %v751, 7
      %v753 = vsub.s32 1, %v752
      %v754 = vrot.slane %v745, %v753
      %v821 = vunpack.c.l.b16 %v681
      %v822 = vunpack.c.h.b16 %v681
      %v823 = vunpack.c.l.b16 %v682
      %v824 = vunpack.c.h.b16 %v682
      %v825 = vunpack.c.l.b16 %v683
      %v826 = vunpack.c.h.b16 %v683
      %v827 = vunpack.c.l.b16 %v684
      %v828 = vunpack.c.h.b16 %v684
      %v829 = vunpack.c.l.b16 %v685
      %v830 = vunpack.c.h.b16 %v685
      %v831 = vunpack.c.l.b16 %v686
      %v832 = vunpack.c.h.b16 %v686
      %v833 = vunpack.c.l.b16 %v687
      %v834 = vunpack.c.h.b16 %v687
      %v835 = vunpack.c.l.b16 %v688
      %v836 = vunpack.c.h.b16 %v688
      %v837 = vunpack.c.l.b16 %v689
      %v838 = vunpack.c.h.b16 %v689
      %v839 = vunpack.c.l.b16 %v690
      %v840 = vunpack.c.h.b16 %v690
      %v841 = vunpack.c.l.b16 %v691
      %v842 = vunpack.c.h.b16 %v691
      %v843 = vunpack.c.l.b16 %v692
      %v844 = vunpack.c.h.b16 %v692
      %v845 = vunpack.c.l.b16 %v693
      %v846 = vunpack.c.h.b16 %v693
      %v847 = vunpack.c.l.b16 %v694
      %v848 = vunpack.c.h.b16 %v694
      %v849 = vunpack.c.l.b16 %v695
      %v850 = vunpack.c.h.b16 %v695
      %v851 = vunpack.c.l.b16 %v696
      %v852 = vunpack.c.h.b16 %v696
      %v853 = vunpack.c.l.b16 %v697
      %v854 = vunpack.c.h.b16 %v697
      %v855 = vunpack.c.l.b16 %v698
      %v856 = vunpack.c.h.b16 %v698
      %v857 = vunpack.c.l.b16 %v699
      %v858 = vunpack.c.h.b16 %v699
      %v859 = vunpack.c.l.b16 %v700
      %v860 = vunpack.c.h.b16 %v700
      %v861 = vunpack.c.l.b16 %v701
      %v862 = vunpack.c.h.b16 %v701
      %v863 = vunpack.c.l.b16 %v702
      %v864 = vunpack.c.h.b16 %v702
      %v865 = vunpack.c.l.b16 %v703
      %v866 = vunpack.c.h.b16 %v703
      %v867 = vunpack.c.l.b16 %v704
      %v868 = vunpack.c.h.b16 %v704
      %v869 = vunpack.c.l.b16 %v705
      %v870 = vunpack.c.h.b16 %v705
      %v871 = vunpack.c.l.b16 %v706
      %v872 = vunpack.c.h.b16 %v706
      %v873 = vunpack.c.l.b16 %v707
      %v874 = vunpack.c.h.b16 %v707
      %v875 = vunpack.c.l.b16 %v708
      %v876 = vunpack.c.h.b16 %v708
      %v877 = vunpack.c.l.b16 %v709
      %v878 = vunpack.c.h.b16 %v709
      %v879 = vunpack.c.l.b16 %v710
      %v880 = vunpack.c.h.b16 %v710
      %v881 = vunpack.c.l.b16 %v711
      %v882 = vunpack.c.h.b16 %v711
      %v883 = vunpack.c.l.b16 %v712
      %v884 = vunpack.c.h.b16 %v712
      %v885 = vunpack.c.l.b16 %v713
      %v886 = vunpack.c.h.b16 %v713
      %v887 = vunpack.c.l.b16 %v714
      %v888 = vunpack.c.h.b16 %v714
      %v889 = vunpack.c.l.b16 %v715
      %v890 = vunpack.c.h.b16 %v715
      %v891 = vunpack.c.l.b16 %v716
      %v892 = vunpack.c.h.b16 %v716
      %v893 = vunpack.c.l.b16 %v717
      %v894 = vunpack.c.h.b16 %v717
      %v895 = vunpack.c.l.b16 %v718
      %v896 = vunpack.c.h.b16 %v718
      %v897 = vunpack.c.l.b16 %v719
      %v898 = vunpack.c.h.b16 %v719
      %v899 = vunpack.c.l.b16 %v720
      %v900 = vunpack.c.h.b16 %v720
      %v901 = vunpack.c.l.b16 %v721
      %v902 = vunpack.c.h.b16 %v721
      %v903 = vunpack.c.l.b16 %v722
      %v904 = vunpack.c.h.b16 %v722
      %v905 = vunpack.c.l.b16 %v723
      %v906 = vunpack.c.h.b16 %v723
      %v907 = vunpack.c.l.b16 %v724
      %v908 = vunpack.c.h.b16 %v724
      %v909 = vunpack.c.l.b16 %v725
      %v910 = vunpack.c.h.b16 %v725
      %v911 = vunpack.c.l.b16 %v726
      %v912 = vunpack.c.h.b16 %v726
      %v913 = vunpack.c.l.b16 %v727
      %v914 = vunpack.c.h.b16 %v727
      %v915 = vunpack.c.l.b16 %v728
      %v916 = vunpack.c.h.b16 %v728
      %v917 = vunpack.c.l.b16 %v729
      %v918 = vunpack.c.h.b16 %v729
      %v919 = vunpack.c.l.b16 %v730
      %v920 = vunpack.c.h.b16 %v730
      %v921 = vunpack.c.l.b16 %v731
      %v922 = vunpack.c.h.b16 %v731
      %v923 = vunpack.c.l.b16 %v732
      %v924 = vunpack.c.h.b16 %v732
      %v925 = vunpack.c.l.b16 %v733
      %v926 = vunpack.c.h.b16 %v733
      %v927 = vunpack.c.l.b16 %v734
      %v928 = vunpack.c.h.b16 %v734
      %v929 = vunpack.c.l.b16 %v735
      %v930 = vunpack.c.h.b16 %v735
      %v931 = vunpack.c.l.b16 %v736
      %v932 = vunpack.c.h.b16 %v736
      %v933 = vunpack.c.l.b16 %v737
      %v934 = vunpack.c.h.b16 %v737
      %v935 = vunpack.c.l.b16 %v738
      %v936 = vunpack.c.h.b16 %v738
      %v937 = vunpack.c.l.b16 %v739
      %v938 = vunpack.c.h.b16 %v739
      %v939 = vunpack.c.l.b16 %v740
      %v940 = vunpack.c.h.b16 %v740
      %v941 = vunpack.c.l.b16 %v741
      %v942 = vunpack.c.h.b16 %v741
      %v943 = vunpack.c.l.b16 %v742
      %v944 = vunpack.c.h.b16 %v742
      %v945 = vunpack.c.l.b16 %v743
      %v946 = vunpack.c.h.b16 %v743
      %v947 = vunpack.c.l.b16 %v744
      %v948 = vunpack.c.h.b16 %v744
      %v949 = vpack.c.b16 %v823, %v821
      %v950 = vpack.c.b16 %v824, %v822
      %v951 = vpack.c.b16 %v827, %v825
      %v952 = vpack.c.b16 %v828, %v826
      %v953 = vpack.c.b16 %v831, %v829
      %v954 = vpack.c.b16 %v832, %v830
      %v955 = vpack.c.b16 %v835, %v833
      %v956 = vpack.c.b16 %v836, %v834
      %v957 = vpack.c.b16 %v839, %v837
      %v958 = vpack.c.b16 %v840, %v838
      %v959 = vpack.c.b16 %v843, %v841
      %v960 = vpack.c.b16 %v844, %v842
      %v961 = vpack.c.b16 %v847, %v845
      %v962 = vpack.c.b16 %v848, %v846
      %v963 = vpack.c.b16 %v851, %v849
      %v964 = vpack.c.b16 %v852, %v850
      %v965 = vpack.c.b16 %v855, %v853
      %v966 = vpack.c.b16 %v856, %v854
      %v967 = vpack.c.b16 %v859, %v857
      %v968 = vpack.c.b16 %v860, %v858
      %v969 = vpack.c.b16 %v863, %v861
      %v970 = vpack.c.b16 %v864, %v862
      %v971 = vpack.c.b16 %v867, %v865
      %v972 = vpack.c.b16 %v868, %v866
      %v973 = vpack.c.b16 %v871, %v869
      %v974 = vpack.c.b16 %v872, %v870
      %v975 = vpack.c.b16 %v875, %v873
      %v976 = vpack.c.b16 %v876, %v874
      %v977 = vpack.c.b16 %v879, %v877
      %v978 = vpack.c.b16 %v880, %v878
      %v979 = vpack.c.b16 %v883, %v881
      %v980 = vpack.c.b16 %v884, %v882
      %v981 = vpack.c.b16 %v887, %v885
      %v982 = vpack.c.b16 %v888, %v886
      %v983 = vpack.c.b16 %v891, %v889
      %v984 = vpack.c.b16 %v892, %v890
      %v985 = vpack.c.b16 %v895, %v893
      %v986 = vpack.c.b16 %v896, %v894
      %v987 = vpack.c.b16 %v899, %v897
      %v988 = vpack.c.b16 %v900, %v898
      %v989 = vpack.c.b16 %v903, %v901
      %v990 = vpack.c.b16 %v904, %v902
      %v991 = vpack.c.b16 %v907, %v905
      %v992 = vpack.c.b16 %v908, %v906
      %v993 = vpack.c.b16 %v911, %v909
      %v994 = vpack.c.b16 %v912, %v910
      %v995 = vpack.c.b16 %v915, %v913
      %v996 = vpack.c.b16 %v916, %v914
      %v997 = vpack.c.b16 %v919, %v917
      %v998 = vpack.c.b16 %v920, %v918
      %v999 = vpack.c.b16 %v923, %v921
      %v1000 = vpack.c.b16 %v924, %v922
      %v1001 = vpack.c.b16 %v927, %v925
      %v1002 = vpack.c.b16 %v928, %v926
      %v1003 = vpack.c.b16 %v931, %v929
      %v1004 = vpack.c.b16 %v932, %v930
      %v1005 = vpack.c.b16 %v935, %v933
      %v1006 = vpack.c.b16 %v936, %v934
      %v1007 = vpack.c.b16 %v939, %v937
      %v1008 = vpack.c.b16 %v940, %v938
      %v1009 = vpack.c.b16 %v943, %v941
      %v1010 = vpack.c.b16 %v944, %v942
      %v1011 = vpack.c.b16 %v947, %v945
      %v1012 = vpack.c.b16 %v948, %v946
      %1077 = vmatprep.subr.bf16.mxu0 %v950
      %1078 = vmatpush1.bf16.msra.mxu0 %v949
      %1079 = vmatprep.subr.bf16.mxu0 %v952
      %1080 = vmatpush1.bf16.msra.mxu0 %v951
      %1081 = vmatprep.subr.bf16.mxu0 %v954
      %1082 = vmatpush1.bf16.msra.mxu0 %v953
      %1083 = vmatprep.subr.bf16.mxu0 %v956
      %1084 = vmatpush1.bf16.msra.mxu0 %v955
      %1085 = vmatprep.subr.bf16.mxu0 %v958
      %1086 = vmatpush1.bf16.msra.mxu0 %v957
      %1087 = vmatprep.subr.bf16.mxu0 %v960
      %1088 = vmatpush1.bf16.msra.mxu0 %v959
      %1089 = vmatprep.subr.bf16.mxu0 %v962
      %1090 = vmatpush1.bf16.msra.mxu0 %v961
      %1091 = vmatprep.subr.bf16.mxu0 %v964
      %1092 = vmatpush1.bf16.msra.mxu0 %v963
      %1093 = vmatprep.subr.bf16.mxu0 %v966
      %1094 = vmatpush1.bf16.msra.mxu0 %v965
      %1095 = vmatprep.subr.bf16.mxu0 %v968
      %1096 = vmatpush1.bf16.msra.mxu0 %v967
      %1097 = vmatprep.subr.bf16.mxu0 %v970
      %1098 = vmatpush1.bf16.msra.mxu0 %v969
      %1099 = vmatprep.subr.bf16.mxu0 %v972
      %1100 = vmatpush1.bf16.msra.mxu0 %v971
      %1101 = vmatprep.subr.bf16.mxu0 %v974
      %1102 = vmatpush1.bf16.msra.mxu0 %v973
      %1103 = vmatprep.subr.bf16.mxu0 %v976
      %1104 = vmatpush1.bf16.msra.mxu0 %v975
      %1105 = vmatprep.subr.bf16.mxu0 %v978
      %1106 = vmatpush1.bf16.msra.mxu0 %v977
      %1107 = vmatprep.subr.bf16.mxu0 %v980
      %1108 = vmatpush1.bf16.msra.mxu0 %v979
      %1109 = vmatprep.mubr.bf16.mxu0 %v666
      %1110 = vmatmul.mubr.bf16.gmra.mrb[0].mxu0 %v665
      %v1111 = vpop.f32.mrb[0].mxu0
      %v1112 = vadd.f32 %v750, %v1111
      %v1113 = vpop.f32.mrb[0].mxu0
      %v1114 = vadd.f32 %v754, %v1113
      %v1115 = vpop.f32.mrb[0].mxu0
      %v1116 = vadd.f32 %v750, %v1115
      %v1117 = vpop.f32.mrb[0].mxu0
      %v1118 = vadd.f32 %v754, %v1117
      %1119 = vmatprep.mubr.bf16.mxu0 %v670
      %1120 = vmatmul.mubr.bf16.gmra.mrb[0].mxu0 %v669
      %v1121 = vpop.f32.mrb[0].mxu0
      %v1122 = vadd.f32 %v750, %v1121
      %v1123 = vpop.f32.mrb[0].mxu0
      %v1124 = vadd.f32 %v754, %v1123
      %v1125 = vpop.f32.mrb[0].mxu0
      %v1126 = vadd.f32 %v750, %v1125
      %v1127 = vpop.f32.mrb[0].mxu0
      %v1128 = vadd.f32 %v754, %v1127
      %1129 = vmatprep.mubr.bf16.mxu0 %v674
      %1130 = vmatmul.mubr.bf16.gmra.mrb[0].mxu0 %v673
      %v1131 = vpop.f32.mrb[0].mxu0
      %v1132 = vadd.f32 %v750, %v1131
      %v1133 = vpop.f32.mrb[0].mxu0
      %v1134 = vadd.f32 %v754, %v1133
      %v1135 = vpop.f32.mrb[0].mxu0
      %v1136 = vadd.f32 %v750, %v1135
      %v1137 = vpop.f32.mrb[0].mxu0
      %v1138 = vadd.f32 %v754, %v1137
      %1139 = vmatprep.mubr.bf16.mxu0 %v678
      %1140 = vmatmul.mubr.bf16.gmra.mrb[0].mxu0 %v677
      %v1141 = vpop.f32.mrb[0].mxu0
      %v1142 = vadd.f32 %v750, %v1141
      %v1143 = vpop.f32.mrb[0].mxu0
      %v1144 = vadd.f32 %v754, %v1143
      %v1145 = vpop.f32.mrb[0].mxu0
      %v1146 = vadd.f32 %v750, %v1145
      %v1147 = vpop.f32.mrb[0].mxu0
      %v1148 = vadd.f32 %v754, %v1147
      %1149 = vdwg.mxu0
      %1150 = vmatprep.subr.bf16.mxu0 %v982
      %1151 = vmatpush1.bf16.msra.mxu0 %v981
      %1152 = vmatprep.subr.bf16.mxu0 %v984
      %1153 = vmatpush1.bf16.msra.mxu0 %v983
      %1154 = vmatprep.subr.bf16.mxu0 %v986
      %1155 = vmatpush1.bf16.msra.mxu0 %v985
      %1156 = vmatprep.subr.bf16.mxu0 %v988
      %1157 = vmatpush1.bf16.msra.mxu0 %v987
      %1158 = vmatprep.subr.bf16.mxu0 %v990
      %1159 = vmatpush1.bf16.msra.mxu0 %v989
      %1160 = vmatprep.subr.bf16.mxu0 %v992
      %1161 = vmatpush1.bf16.msra.mxu0 %v991
      %1162 = vmatprep.subr.bf16.mxu0 %v994
      %1163 = vmatpush1.bf16.msra.mxu0 %v993
      %1164 = vmatprep.subr.bf16.mxu0 %v996
      %1165 = vmatpush1.bf16.msra.mxu0 %v995
      %1166 = vmatprep.subr.bf16.mxu0 %v998
      %1167 = vmatpush1.bf16.msra.mxu0 %v997
      %1168 = vmatprep.subr.bf16.mxu0 %v1000
      %1169 = vmatpush1.bf16.msra.mxu0 %v999
      %1170 = vmatprep.subr.bf16.mxu0 %v1002
      %1171 = vmatpush1.bf16.msra.mxu0 %v1001
      %1172 = vmatprep.subr.bf16.mxu0 %v1004
      %1173 = vmatpush1.bf16.msra.mxu0 %v1003
      %1174 = vmatprep.subr.bf16.mxu0 %v1006
      %1175 = vmatpush1.bf16.msra.mxu0 %v1005
      %1176 = vmatprep.subr.bf16.mxu0 %v1008
      %1177 = vmatpush1.bf16.msra.mxu0 %v1007
      %1178 = vmatprep.subr.bf16.mxu0 %v1010
      %1179 = vmatpush1.bf16.msra.mxu0 %v1009
      %1180 = vmatprep.subr.bf16.mxu0 %v1012
      %1181 = vmatpush1.bf16.msra.mxu0 %v1011
      %1182 = vmatprep.mubr.bf16.mxu0 %v668
      %1183 = vmatmul.mubr.bf16.gmra.mrb[0].mxu0 %v667
      %v1184 = vpop.f32.mrb[0].mxu0
      %v1185 = vadd.f32 %v1112, %v1184
      %v1186 = vpop.f32.mrb[0].mxu0
      %v1187 = vadd.f32 %v1114, %v1186
      %v1188 = vpop.f32.mrb[0].mxu0
      %v1189 = vadd.f32 %v1116, %v1188
      %v1190 = vpop.f32.mrb[0].mxu0
      %v1191 = vadd.f32 %v1118, %v1190
      %1192 = vmatprep.mubr.bf16.mxu0 %v672
      %1193 = vmatmul.mubr.bf16.gmra.mrb[0].mxu0 %v671
      %v1194 = vpop.f32.mrb[0].mxu0
      %v1195 = vadd.f32 %v1122, %v1194
      %v1196 = vpop.f32.mrb[0].mxu0
      %v1197 = vadd.f32 %v1124, %v1196
      %v1198 = vpop.f32.mrb[0].mxu0
      %v1199 = vadd.f32 %v1126, %v1198
      %v1200 = vpop.f32.mrb[0].mxu0
      %v1201 = vadd.f32 %v1128, %v1200
      %1202 = vmatprep.mubr.bf16.mxu0 %v676
      %1203 = vmatmul.mubr.bf16.gmra.mrb[0].mxu0 %v675
      %v1204 = vpop.f32.mrb[0].mxu0
      %v1205 = vadd.f32 %v1132, %v1204
      %v1206 = vpop.f32.mrb[0].mxu0
      %v1207 = vadd.f32 %v1134, %v1206
      %v1208 = vpop.f32.mrb[0].mxu0
      %v1209 = vadd.f32 %v1136, %v1208
      %v1210 = vpop.f32.mrb[0].mxu0
      %v1211 = vadd.f32 %v1138, %v1210
      %1212 = vmatprep.mubr.bf16.mxu0 %v680
      %1213 = vmatmul.mubr.bf16.gmra.mrb[0].mxu0 %v679
      %v1214 = vpop.f32.mrb[0].mxu0
      %v1215 = vadd.f32 %v1142, %v1214
      %v1216 = vpop.f32.mrb[0].mxu0
      %v1217 = vadd.f32 %v1144, %v1216
      %v1218 = vpop.f32.mrb[0].mxu0
      %v1219 = vadd.f32 %v1146, %v1218
      %v1220 = vpop.f32.mrb[0].mxu0
      %v1221 = vadd.f32 %v1148, %v1220
      %1222 = vdwg.mxu0
      %v1223 = vmax.f32 %v1185, 0.0
      %v1224 = vmax.f32 %v1187, 0.0
      %v1225 = vmax.f32 %v1189, 0.0
      %v1226 = vmax.f32 %v1191, 0.0
      %v1227 = vmax.f32 %v1195, 0.0
      %v1228 = vmax.f32 %v1197, 0.0
      %v1229 = vmax.f32 %v1199, 0.0
      %v1230 = vmax.f32 %v1201, 0.0
      %v1231 = vmax.f32 %v1205, 0.0
      %v1232 = vmax.f32 %v1207, 0.0
      %v1233 = vmax.f32 %v1209, 0.0
      %v1234 = vmax.f32 %v1211, 0.0
      %v1235 = vmax.f32 %v1215, 0.0
      %v1236 = vmax.f32 %v1217, 0.0
      %v1237 = vmax.f32 %v1219, 0.0
      %v1238 = vmax.f32 %v1221, 0.0
      %v1239 = vpack.c.bf16 %v1225, %v1223
      %v1240 = vpack.c.bf16 %v1226, %v1224
      %v1241 = vpack.c.bf16 %v1229, %v1227
      %v1242 = vpack.c.bf16 %v1230, %v1228
      %v1243 = vpack.c.bf16 %v1233, %v1231
      %v1244 = vpack.c.bf16 %v1234, %v1232
      %v1245 = vpack.c.bf16 %v1237, %v1235
      %v1246 = vpack.c.bf16 %v1238, %v1236
      %v1247 = vld [vmem:[%s5] sm:$0xf]
      %v1248 = vld [vmem:[%s5 + $0x4] sm:$0xf]
      %v1249 = vld [vmem:[%s5 + $0x8] sm:$0xf]
      %v1250 = vld [vmem:[%s5 + $0xc] sm:$0xf]
      %v1251 = vld [vmem:[%s5 + $0x10] sm:$0xf]
      %v1252 = vld [vmem:[%s5 + $0x14] sm:$0xf]
      %v1253 = vld [vmem:[%s5 + $0x18] sm:$0xf]
      %v1254 = vld [vmem:[%s5 + $0x1c] sm:$0xf]
      %v1255 = vld [vmem:[%s5 + $0x20] sm:$0xf]
      %v1256 = vld [vmem:[%s5 + $0x24] sm:$0xf]
      %v1257 = vld [vmem:[%s5 + $0x28] sm:$0xf]
      %v1258 = vld [vmem:[%s5 + $0x2c] sm:$0xf]
      %v1259 = vld [vmem:[%s5 + $0x30] sm:$0xf]
      %v1260 = vld [vmem:[%s5 + $0x34] sm:$0xf]
      %v1261 = vld [vmem:[%s5 + $0x38] sm:$0xf]
      %v1262 = vld [vmem:[%s5 + $0x3c] sm:$0xf]
      %v1263 = vld [vmem:[%s5 + $0x40] sm:$0xf]
      %v1264 = vld [vmem:[%s5 + $0x44] sm:$0xf]
      %v1265 = vld [vmem:[%s5 + $0x48] sm:$0xf]
      %v1266 = vld [vmem:[%s5 + $0x4c] sm:$0xf]
      %v1267 = vld [vmem:[%s5 + $0x50] sm:$0xf]
      %v1268 = vld [vmem:[%s5 + $0x54] sm:$0xf]
      %v1269 = vld [vmem:[%s5 + $0x58] sm:$0xf]
      %v1270 = vld [vmem:[%s5 + $0x5c] sm:$0xf]
      %v1271 = vld [vmem:[%s5 + $0x60] sm:$0xf]
      %v1272 = vld [vmem:[%s5 + $0x64] sm:$0xf]
      %v1273 = vld [vmem:[%s5 + $0x68] sm:$0xf]
      %v1274 = vld [vmem:[%s5 + $0x6c] sm:$0xf]
      %v1275 = vld [vmem:[%s5 + $0x70] sm:$0xf]
      %v1276 = vld [vmem:[%s5 + $0x74] sm:$0xf]
      %v1277 = vld [vmem:[%s5 + $0x78] sm:$0xf]
      %v1278 = vld [vmem:[%s5 + $0x7c] sm:$0xf]
      %v1279 = vld [vmem:[%s6] sm:$0x1]
      %v1281 = vlaneseq
      %v1282 = vshrl.u32 %v1281, 7
      %v1283 = vsub.s32 0, %v1282
      %v1284 = vrot.slane %v1279, %v1283
      %v1318 = vunpack.c.l.b16 %v1247
      %v1319 = vunpack.c.l.b16 %v1248
      %v1320 = vunpack.c.l.b16 %v1249
      %v1321 = vunpack.c.l.b16 %v1250
      %v1322 = vunpack.c.l.b16 %v1251
      %v1323 = vunpack.c.l.b16 %v1252
      %v1324 = vunpack.c.l.b16 %v1253
      %v1325 = vunpack.c.l.b16 %v1254
      %v1326 = vunpack.c.l.b16 %v1255
      %v1327 = vunpack.c.l.b16 %v1256
      %v1328 = vunpack.c.l.b16 %v1257
      %v1329 = vunpack.c.l.b16 %v1258
      %v1330 = vunpack.c.l.b16 %v1259
      %v1331 = vunpack.c.l.b16 %v1260
      %v1332 = vunpack.c.l.b16 %v1261
      %v1333 = vunpack.c.l.b16 %v1262
      %v1334 = vunpack.c.l.b16 %v1263
      %v1335 = vunpack.c.l.b16 %v1264
      %v1336 = vunpack.c.l.b16 %v1265
      %v1337 = vunpack.c.l.b16 %v1266
      %v1338 = vunpack.c.l.b16 %v1267
      %v1339 = vunpack.c.l.b16 %v1268
      %v1340 = vunpack.c.l.b16 %v1269
      %v1341 = vunpack.c.l.b16 %v1270
      %v1342 = vunpack.c.l.b16 %v1271
      %v1343 = vunpack.c.l.b16 %v1272
      %v1344 = vunpack.c.l.b16 %v1273
      %v1345 = vunpack.c.l.b16 %v1274
      %v1346 = vunpack.c.l.b16 %v1275
      %v1347 = vunpack.c.l.b16 %v1276
      %v1348 = vunpack.c.l.b16 %v1277
      %v1349 = vunpack.c.l.b16 %v1278
      %v1350 = vpack.c.b16 %v1319, %v1318
      %v1351 = vpack.c.b16 %v1321, %v1320
      %v1352 = vpack.c.b16 %v1323, %v1322
      %v1353 = vpack.c.b16 %v1325, %v1324
      %v1354 = vpack.c.b16 %v1327, %v1326
      %v1355 = vpack.c.b16 %v1329, %v1328
      %v1356 = vpack.c.b16 %v1331, %v1330
      %v1357 = vpack.c.b16 %v1333, %v1332
      %v1358 = vpack.c.b16 %v1335, %v1334
      %v1359 = vpack.c.b16 %v1337, %v1336
      %v1360 = vpack.c.b16 %v1339, %v1338
      %v1361 = vpack.c.b16 %v1341, %v1340
      %v1362 = vpack.c.b16 %v1343, %v1342
      %v1363 = vpack.c.b16 %v1345, %v1344
      %v1364 = vpack.c.b16 %v1347, %v1346
      %v1365 = vpack.c.b16 %v1349, %v1348
      %1382 = vmatprep.subr.bf16.mxu0 0
      %1383 = vmatpush1.bf16.msra.mxu0 %v1350
      %1384 = vmatprep.subr.bf16.mxu0 0
      %1385 = vmatpush1.bf16.msra.mxu0 %v1351
      %1386 = vmatprep.subr.bf16.mxu0 0
      %1387 = vmatpush1.bf16.msra.mxu0 %v1352
      %1388 = vmatprep.subr.bf16.mxu0 0
      %1389 = vmatpush1.bf16.msra.mxu0 %v1353
      %1390 = vmatprep.subr.bf16.mxu0 0
      %1391 = vmatpush1.bf16.msra.mxu0 %v1354
      %1392 = vmatprep.subr.bf16.mxu0 0
      %1393 = vmatpush1.bf16.msra.mxu0 %v1355
      %1394 = vmatprep.subr.bf16.mxu0 0
      %1395 = vmatpush1.bf16.msra.mxu0 %v1356
      %1396 = vmatprep.subr.bf16.mxu0 0
      %1397 = vmatpush1.bf16.msra.mxu0 %v1357
      %1398 = vmatprep.subr.bf16.mxu0 0
      %1399 = vmatpush1.bf16.msra.mxu0 %v1358
      %1400 = vmatprep.subr.bf16.mxu0 0
      %1401 = vmatpush1.bf16.msra.mxu0 %v1359
      %1402 = vmatprep.subr.bf16.mxu0 0
      %1403 = vmatpush1.bf16.msra.mxu0 %v1360
      %1404 = vmatprep.subr.bf16.mxu0 0
      %1405 = vmatpush1.bf16.msra.mxu0 %v1361
      %1406 = vmatprep.subr.bf16.mxu0 0
      %1407 = vmatpush1.bf16.msra.mxu0 %v1362
      %1408 = vmatprep.subr.bf16.mxu0 0
      %1409 = vmatpush1.bf16.msra.mxu0 %v1363
      %1410 = vmatprep.subr.bf16.mxu0 0
      %1411 = vmatpush1.bf16.msra.mxu0 %v1364
      %1412 = vmatprep.subr.bf16.mxu0 0
      %1413 = vmatpush1.bf16.msra.mxu0 %v1365
      %1414 = vmatprep.mubr.bf16.mxu0 %v1240
      %1415 = vmatmul.mubr.bf16.gmra.mrb[0].mxu0 %v1239
      %v1416 = vpop.f32.mrb[0].mxu0
      %v1417 = vadd.f32 %v1284, %v1416
      %v1418 = vpop.f32.mrb[0].mxu0
      %v1419 = vpop.f32.mrb[0].mxu0
      %v1420 = vadd.f32 %v1284, %v1419
      %v1421 = vpop.f32.mrb[0].mxu0
      %1422 = vmatprep.mubr.bf16.mxu0 %v1242
      %1423 = vmatmul.mubr.bf16.gmra.mrb[0].mxu0 %v1241
      %v1424 = vpop.f32.mrb[0].mxu0
      %v1425 = vadd.f32 %v1284, %v1424
      %v1426 = vpop.f32.mrb[0].mxu0
      %v1427 = vpop.f32.mrb[0].mxu0
      %v1428 = vadd.f32 %v1284, %v1427
      %v1429 = vpop.f32.mrb[0].mxu0
      %1430 = vmatprep.mubr.bf16.mxu0 %v1244
      %1431 = vmatmul.mubr.bf16.gmra.mrb[0].mxu0 %v1243
      %v1432 = vpop.f32.mrb[0].mxu0
      %v1433 = vadd.f32 %v1284, %v1432
      %v1434 = vpop.f32.mrb[0].mxu0
      %v1435 = vpop.f32.mrb[0].mxu0
      %v1436 = vadd.f32 %v1284, %v1435
      %v1437 = vpop.f32.mrb[0].mxu0
      %1438 = vmatprep.mubr.bf16.mxu0 %v1246
      %1439 = vmatmul.mubr.bf16.gmra.mrb[0].mxu0 %v1245
      %v1440 = vpop.f32.mrb[0].mxu0
      %v1441 = vadd.f32 %v1284, %v1440
      %v1442 = vpop.f32.mrb[0].mxu0
      %v1443 = vpop.f32.mrb[0].mxu0
      %v1444 = vadd.f32 %v1284, %v1443
      %v1445 = vpop.f32.mrb[0].mxu0
      %1446 = vdwg.mxu0
      %1447 = vst [vmem:[%s333] sm:$0xff] %v1417
      %1448 = vst [vmem:[%s333 + $0x8] sm:$0xff] %v1420
      %1449 = vst [vmem:[%s333 + $0x10] sm:$0xff] %v1425
      %1450 = vst [vmem:[%s333 + $0x18] sm:$0xff] %v1428
      %1451 = vst [vmem:[%s333 + $0x20] sm:$0xff] %v1433
      %1452 = vst [vmem:[%s333 + $0x28] sm:$0xff] %v1436
      %1453 = vst [vmem:[%s333 + $0x30] sm:$0xff] %v1441
      %1454 = vst [vmem:[%s333 + $0x38] sm:$0xff] %v1444
      %s1455 = smul.u32 8, %s23
      %p1456 = scmp.lt.s32.totalorder %s22, 1
      %s1457 = scalar_select %p1456, %s22, 1
      %p1458 = scmp.lt.s32.totalorder %s1455, 7
      %s1459 = scalar_select %p1458, %s1455, 7
      %s1460 = smul.addr %s1457, 8
      %s1461 = sadd.s32 %s1459, %s1460
      %s1462 = smul.addr %s1461, 8
      %s1463 = scalar_lea.vmem %s7, %s1462
      // Predicated region
      $region49: #{sparse_deepgcn_forward.9} parent=47 // pred_check
        %p1464 = pneg %p209
      $region50: #{sparse_deepgcn_forward.9} parent=47 // pred_check_branch
        %1466 = sbr.rel (%p1464) target = $region52
      $region51: #{sparse_deepgcn_forward.9} parent=47 // pred_region
        %s1467 = smul.u32 8, %s23
      $region52: #{sparse_deepgcn_forward.9} parent=47 // pred_fallthru
        _
    $region48: #{sparse_deepgcn_forward.9} parent=5 // pred_fallthru
      _
    %p1468 = scmp.le.s32.totalorder 2, %s13
    // Predicated region
    $region53: #{sparse_deepgcn_forward.9} parent=5 // pred_check
      %p1469 = pneg %p1468
    $region54: #{sparse_deepgcn_forward.9} parent=5 // pred_check_branch
      %1471 = sbr.rel (%p1469) target = $region56
    $region55: #{sparse_deepgcn_forward.9} parent=5 // pred_region
      %s1472 = ssub.s32 %s13, 2
      // Predicated region
      $region57: #{sparse_deepgcn_forward.9} parent=55 // pred_check
        %p1473 = pneg %p215
      $region58: #{sparse_deepgcn_forward.9} parent=55 // pred_check_branch
        %1475 = sbr.rel (%p1473) target = $region60
      $region59: #{sparse_deepgcn_forward.9} parent=55 // pred_region
        %s1476 = smul.u32 8, %s25
        %p1477 = scmp.lt.s32.totalorder %s24, 1
        %s1478 = scalar_select %p1477, %s24, 1
        %p1479 = scmp.lt.s32.totalorder %s1476, 7
        %s1480 = scalar_select %p1479, %s1476, 7
        %s1481 = smul.addr %s1478, 8
        %s1482 = sadd.s32 %s1480, %s1481
        %s1483 = smul.addr %s1482, 8
        %s1484 = scalar_lea.vmem %s7, %s1483
      $region60: #{sparse_deepgcn_forward.9} parent=55 // pred_fallthru
        _
    $region56: #{sparse_deepgcn_forward.9} parent=5 // pred_fallthru
      _
  $region6: #{sparse_deepgcn_forward.9} parent=0 // loop_footer
    %s17 = sadd.s32 1, %s13
  $region7: #{sparse_deepgcn_forward.9} parent=0 // loop_footer_branch
    %12 = sbr.rel target = $region3
  $region8: #{sparse_deepgcn_forward.9} parent=0 // loop_exit
    _

</llo_original>
